<compile_context>
chip_gen: v6e
topology: v6e:2x2x1
jax: 0.10.0
libtpu: 0.0.40
codegen_flags: <defaults>
</compile_context>

<pallas_src>
import functools

import jax
import jax.numpy as jnp
from jax import lax
from jax.experimental import pallas as pl
from jax.experimental.pallas import tpu as pltpu


# ----------------------------- kernels -----------------------------


def _gn_stats_kernel(x_ref, gamma_ref, beta_ref, agg_ref,
                     scale_ref, bias_ref, s_ref, s2_ref):
    """GroupNorm(32) statistics pass.

    Grid = (N, HW // th).  Accumulates per-channel sum / sum-of-squares over the
    HW tiles of one sample, then folds gamma/beta into a per-sample per-channel
    affine:  GN(x)*gamma + beta == x * scale + bias.

    x block    : (1, th, C)
    gamma/beta : (1, 1, C)
    agg        : (C, C)  agg[ci, cj] = 1/(HW*group_size) if same group else 0
    scale/bias : (1, 1, C) outputs (resident across the HW reduction axis)
    s/s2       : (1, C) f32 VMEM scratch accumulators
    """
    r = pl.program_id(1)

    @pl.when(r == 0)
    def _():
        s_ref[...] = jnp.zeros_like(s_ref)
        s2_ref[...] = jnp.zeros_like(s2_ref)

    x = x_ref[0].astype(jnp.float32)                       # (th, C)
    s_ref[...] += jnp.sum(x, axis=0, keepdims=True)        # per-channel sum
    s2_ref[...] += jnp.sum(x * x, axis=0, keepdims=True)   # per-channel sum sq

    @pl.when(r == pl.num_programs(1) - 1)
    def _():
        # per-group mean / E[x^2] broadcast back to channels via the agg matmul
        gm = jnp.dot(s_ref[...], agg_ref[...], preferred_element_type=jnp.float32)
        gm2 = jnp.dot(s2_ref[...], agg_ref[...], preferred_element_type=jnp.float32)
        # NOTE: E[x^2]-E[x]^2 in f32 -- fine at this tolerance for normalized
        # activations; use a centered two-pass form if reused elsewhere.
        inv_std = lax.rsqrt(gm2 - gm * gm + 1e-5)          # PyTorch GN eps
        sc = gamma_ref[0].astype(jnp.float32) * inv_std
        scale_ref[0] = sc
        bias_ref[0] = beta_ref[0].astype(jnp.float32) - gm * sc


def _norm_silu_pad_tile(xpad_ref, scale_ref, bias_ref, *, th, hh, ww, row0):
    """Slice padded rows [row0, row0+th+2) of one sample, apply the fused GN
    affine + SiLU and re-zero the zero-padding positions (so the halo behaves
    as if SiLU(GN(x)) had been padded).  Returns a bf16 (th+2, W+2, C) tile."""
    xp = xpad_ref[0, pl.ds(row0, th + 2), :, :].astype(jnp.float32)
    y = xp * scale_ref[0].astype(jnp.float32) + bias_ref[0].astype(jnp.float32)
    y = y * jax.nn.sigmoid(y)                              # SiLU
    c = xp.shape[-1]
    rows = lax.broadcasted_iota(jnp.int32, (th + 2, ww + 2, c), 0) + row0
    cols = lax.broadcasted_iota(jnp.int32, (th + 2, ww + 2, c), 1)
    interior = (rows >= 1) & (rows <= hh) & (cols >= 1) & (cols <= ww)
    return jnp.where(interior, y, 0.0).astype(jnp.bfloat16)


def _conv1_kernel(xpad_ref, scale_ref, bias_ref, w_ref, cb_ref, o_ref,
                  *, th, hh, ww):
    """conv1 fused with GN1-normalize + SiLU and (conv1 bias + temb bias).

    xpad : (1, H+2, W+2, Cin) whole padded sample (block revisited across row tiles)
    w    : (9, Cin, Cout) bf16
    cb   : (1, 1, Cout) per-sample conv1 bias + temb bias
    out  : (1, th, W, Cout)
    """
    r = pl.program_id(1)
    row0 = pl.multiple_of(r * th, th)
    hp = _norm_silu_pad_tile(xpad_ref, scale_ref, bias_ref,
                             th=th, hh=hh, ww=ww, row0=row0)
    cin = hp.shape[-1]
    cout = w_ref.shape[-1]
    acc = jnp.zeros((th * ww, cout), jnp.float32)
    for k in range(9):                                     # in-VMEM im2col: 9 shifted taps
        kh, kw = k // 3, k % 3
        tap = hp[kh:kh + th, kw:kw + ww, :].reshape(th * ww, cin)
        acc += jnp.dot(tap, w_ref[k], preferred_element_type=jnp.float32)
    acc += cb_ref[0].astype(jnp.float32)
    o_ref[0] = acc.reshape(th, ww, cout).astype(o_ref.dtype)


def _conv2_kernel(hpad_ref, scale_ref, bias_ref, w_ref, cb_ref, xs_ref, ws_ref,
                  o_ref, *, th, hh, ww):
    """conv2 fused with GN2-normalize + SiLU, the 1x1 shortcut conv and the
    residual/bias adds.  dropout(p=0.0) == identity.

    hpad : (1, H+2, W+2, Cmid) padded conv1 output (revisited across row tiles)
    w    : (9, Cmid, Cout) bf16
    cb   : (1, 1, Cout) conv2 bias + shortcut bias
    xs   : (1, th, W, Cin) raw input tile (shortcut path)
    ws   : (Cin, Cout) bf16 (identity when Cin == Cout)
    """
    r = pl.program_id(1)
    row0 = pl.multiple_of(r * th, th)
    hp = _norm_silu_pad_tile(hpad_ref, scale_ref, bias_ref,
                             th=th, hh=hh, ww=ww, row0=row0)
    cmid = hp.shape[-1]
    cout = w_ref.shape[-1]
    acc = jnp.zeros((th * ww, cout), jnp.float32)
    for k in range(9):
        kh, kw = k // 3, k % 3
        tap = hp[kh:kh + th, kw:kw + ww, :].reshape(th * ww, cmid)
        acc += jnp.dot(tap, w_ref[k], preferred_element_type=jnp.float32)
    # fused 1x1 shortcut conv -- the 10th accumulating matmul (no separate pass)
    xs = xs_ref[0].reshape(th * ww, xs_ref.shape[-1]).astype(jnp.bfloat16)
    acc += jnp.dot(xs, ws_ref[...], preferred_element_type=jnp.float32)
    acc += cb_ref[0].astype(jnp.float32)
    o_ref[0] = acc.reshape(th, ww, cout).astype(o_ref.dtype)


# ------------------------- pallas_call wrappers -------------------------


def _compiler_params(dims):
    return pltpu.CompilerParams(
        dimension_semantics=dims,
        vmem_limit_bytes=32 << 20,   # per-step working set is ~1-2 MiB
    )


def gn_stats(x_flat, gamma, beta, num_groups=32):
    """Per-sample fused GroupNorm affine: GN(x)*gamma+beta == x*scale+bias.

    x_flat: (N, HW, C) -> (scale, bias), each (N, 1, C) float32.
    """
    n, hw, c = x_flat.shape
    gs = c // num_groups
    th = 128 if hw % 128 == 0 else hw            # HW reduction tile
    gid = jnp.arange(c) // gs
    agg = (gid[:, None] == gid[None, :]).astype(jnp.float32) / (hw * gs)
    scale, bias = pl.pallas_call(
        _gn_stats_kernel,
        out_shape=(jax.ShapeDtypeStruct((n, 1, c), jnp.float32),
                   jax.ShapeDtypeStruct((n, 1, c), jnp.float32)),
        grid=(n, hw // th),
        in_specs=[
            pl.BlockSpec((1, th, c), lambda i, r: (i, r, 0)),
            pl.BlockSpec((1, 1, c), lambda i, r: (0, 0, 0)),
            pl.BlockSpec((1, 1, c), lambda i, r: (0, 0, 0)),
            pl.BlockSpec((c, c), lambda i, r: (0, 0)),
        ],
        out_specs=(pl.BlockSpec((1, 1, c), lambda i, r: (i, 0, 0)),
                   pl.BlockSpec((1, 1, c), lambda i, r: (i, 0, 0))),
        scratch_shapes=[pltpu.VMEM((1, c), jnp.float32),
                        pltpu.VMEM((1, c), jnp.float32)],
        compiler_params=_compiler_params(("parallel", "arbitrary")),
    )(x_flat, gamma.reshape(1, 1, c), beta.reshape(1, 1, c), agg)
    return scale, bias


def conv1_fused(x_pad, scale, bias, w9, cb, th):
    """GN1-normalize + SiLU + Conv2d(3x3, pad=1) + conv bias + temb bias (NHWC)."""
    n, hp2, wp2, cin = x_pad.shape
    h, w = hp2 - 2, wp2 - 2
    cout = w9.shape[-1]
    kernel = functools.partial(_conv1_kernel, th=th, hh=h, ww=w)
    return pl.pallas_call(
        kernel,
        out_shape=jax.ShapeDtypeStruct((n, h, w, cout), jnp.float32),
        grid=(n, h // th),
        in_specs=[
            # whole padded sample; same block across row tiles -> DMA'd once per sample
            pl.BlockSpec((1, hp2, wp2, cin), lambda i, r: (i, 0, 0, 0)),
            pl.BlockSpec((1, 1, cin), lambda i, r: (i, 0, 0)),
            pl.BlockSpec((1, 1, cin), lambda i, r: (i, 0, 0)),
            # constant-index blocks (weights / biases); small enough that the
            # extra pipeline buffer is harmless (use pl.Buffered(1) if VMEM-tight).
            pl.BlockSpec((9, cin, cout), lambda i, r: (0, 0, 0)),
            pl.BlockSpec((1, 1, cout), lambda i, r: (i, 0, 0)),
        ],
        out_specs=pl.BlockSpec((1, th, w, cout), lambda i, r: (i, r, 0, 0)),
        compiler_params=_compiler_params(("parallel", "parallel")),
    )(x_pad, scale, bias, w9, cb)


def conv2_shortcut_fused(h_pad, scale, bias, w9, cb, x_nhwc, ws, th):
    """GN2-normalize + SiLU + Conv2d(3x3) + bias + 1x1 shortcut conv + residual."""
    n, hp2, wp2, cmid = h_pad.shape
    h, w = hp2 - 2, wp2 - 2
    cin = x_nhwc.shape[-1]
    cout = w9.shape[-1]
    kernel = functools.partial(_conv2_kernel, th=th, hh=h, ww=w)
    return pl.pallas_call(
        kernel,
        out_shape=jax.ShapeDtypeStruct((n, h, w, cout), jnp.float32),
        grid=(n, h // th),
        in_specs=[
            pl.BlockSpec((1, hp2, wp2, cmid), lambda i, r: (i, 0, 0, 0)),
            pl.BlockSpec((1, 1, cmid), lambda i, r: (i, 0, 0)),
            pl.BlockSpec((1, 1, cmid), lambda i, r: (i, 0, 0)),
            pl.BlockSpec((9, cmid, cout), lambda i, r: (0, 0, 0)),
            pl.BlockSpec((1, 1, cout), lambda i, r: (0, 0, 0)),
            pl.BlockSpec((1, th, w, cin), lambda i, r: (i, r, 0, 0)),
            pl.BlockSpec((cin, cout), lambda i, r: (0, 0)),
        ],
        out_specs=pl.BlockSpec((1, th, w, cout), lambda i, r: (i, r, 0, 0)),
        compiler_params=_compiler_params(("parallel", "parallel")),
    )(h_pad, scale, bias, w9, cb, x_nhwc, ws)


# ------------------------- ResnetBlock forward -------------------------


def _pick_row_tile(h):
    """Row-tile: >=2 tiles per sample when possible (pipelining / v7x megacore),
    growing with H so bigger images get bigger M-tiles per grid step."""
    for th in (32, 16, 8, 4, 2):
        if h % th == 0 and h // th >= 2:
            return th
    return h


def resnet_block(x_nchw, temb, p):
    n, cin, h, w = x_nchw.shape
    cout = p["conv1_b"].shape[0]
    hw = h * w
    th = _pick_row_tile(h)

    # TODO(synk): boundary NCHW<->NHWC transposes kept because the PyTorch spec
    # is NCHW; in an NHWC end-to-end model they disappear entirely.
    x = jnp.transpose(x_nchw, (0, 2, 3, 1))                   # (N, H, W, Cin)

    # GN1 stats -> per-sample fused affine (normalize+SiLU applied inside conv1)
    s1, b1 = gn_stats(x.reshape(n, hw, cin), p["gn1_g"], p["gn1_b"])

    # temb projection is tiny -> plain XLA (no dedicated kernel launch)
    tb = jax.nn.silu(temb) @ p["temb_w"] + p["temb_b"]        # (N, Cout)
    cb1 = (tb + p["conv1_b"]).reshape(n, 1, cout)

    # conv1 fused with GN1-normalize + SiLU; im2col happens inside the kernel
    x_pad = jnp.pad(x, ((0, 0), (1, 1), (1, 1), (0, 0)))
    h1 = conv1_fused(x_pad, s1, b1, p["conv1_w"], cb1, th)    # (N, H, W, Cout)

    # GN2 stats; dropout(p=0.0) == identity
    # TODO(synk): training-mode dropout not implemented (would need
    # pltpu.prng_seed / prng_random_bits inside the conv2 kernel).
    s2, b2 = gn_stats(h1.reshape(n, hw, cout), p["gn2_g"], p["gn2_b"])

    # conv2 fused with GN2-normalize + SiLU, 1x1 shortcut conv and residual add
    h1_pad = jnp.pad(h1, ((0, 0), (1, 1), (1, 1), (0, 0)))
    cb2 = (p["conv2_b"] + p["sc_b"]).reshape(1, 1, cout)
    out = conv2_shortcut_fused(h1_pad, s2, b2, p["conv2_w"], cb2, x, p["sc_w"], th)
    return jnp.transpose(out, (0, 3, 1, 2))                   # back to NCHW


# ------------------------- parameters -------------------------


def init_params(key, cin, cout, tc):
    ks = jax.random.split(key, 12)
    rn = lambda k, shape, s=0.1: s * jax.random.normal(k, shape, dtype=jnp.float32)
    p = {
        "gn1_g": 1.0 + rn(ks[0], (cin,)),
        "gn1_b": rn(ks[1], (cin,)),
        "conv1_w_pt": rn(ks[2], (cout, cin, 3, 3)),    # PyTorch OIHW
        "conv1_b": rn(ks[3], (cout,)),
        "temb_w_pt": rn(ks[4], (cout, tc)),            # nn.Linear weight (out, in)
        "temb_b": rn(ks[5], (cout,)),
        "gn2_g": 1.0 + rn(ks[6], (cout,)),
        "gn2_b": rn(ks[7], (cout,)),
        "conv2_w_pt": rn(ks[8], (cout, cout, 3, 3)),
        "conv2_b": rn(ks[9], (cout,)),
    }
    if cin != cout:
        p["sc_w_pt"] = rn(ks[10], (cout, cin, 1, 1))
        p["sc_b"] = rn(ks[11], (cout,))
    # folded channels-last matmul layouts; MXU operands in bf16 (f32 accumulation)
    p["conv1_w"] = (jnp.transpose(p["conv1_w_pt"], (2, 3, 1, 0))
                    .reshape(9, cin, cout).astype(jnp.bfloat16))
    p["conv2_w"] = (jnp.transpose(p["conv2_w_pt"], (2, 3, 1, 0))
                    .reshape(9, cout, cout).astype(jnp.bfloat16))
    p["temb_w"] = p["temb_w_pt"].T                     # f32, computed in XLA
    if cin != cout:
        p["sc_w"] = p["sc_w_pt"][:, :, 0, 0].T.astype(jnp.bfloat16)
    else:   # shortcut is identity when in_channels == out_channels
        p["sc_w"] = jnp.eye(cin, dtype=jnp.bfloat16)
        p["sc_b"] = jnp.zeros((cin,), jnp.float32)
    return p


# ------------------------- pure-JAX reference -------------------------


def _silu(x):
    return x * jax.nn.sigmoid(x)


def _groupnorm_ref(x, gamma, beta, num_groups=32, eps=1e-5):
    N, C, H, W = x.shape
    xr = x.reshape(N, num_groups, -1)
    mean = xr.mean(axis=2, keepdims=True)
    var = ((xr - mean) ** 2).mean(axis=2, keepdims=True)
    xn = ((xr - mean) / jnp.sqrt(var + eps)).reshape(N, C, H, W)
    return xn * gamma[None, :, None, None] + beta[None, :, None, None]


def _conv3x3_ref(x, w, b):
    y = lax.conv_general_dilated(x, w, (1, 1), ((1, 1), (1, 1)),
                                 dimension_numbers=("NCHW", "OIHW", "NCHW"))
    return y + b[None, :, None, None]


def resnet_block_ref(x, temb, p):
    h = _silu(_groupnorm_ref(x, p["gn1_g"], p["gn1_b"]))
    h = _conv3x3_ref(h, p["conv1_w_pt"], p["conv1_b"])
    tb = _silu(temb) @ p["temb_w_pt"].T + p["temb_b"]
    h = h + tb[:, :, None, None]
    h = _silu(_groupnorm_ref(h, p["gn2_g"], p["gn2_b"]))
    h = _conv3x3_ref(h, p["conv2_w_pt"], p["conv2_b"])
    if "sc_w_pt" in p:
        sc = lax.conv_general_dilated(x, p["sc_w_pt"], (1, 1), ((0, 0), (0, 0)),
                                      dimension_numbers=("NCHW", "OIHW", "NCHW"))
        sc = sc + p["sc_b"][None, :, None, None]
    else:
        sc = x
    return h + sc


# ------------------------- main -------------------------


if __name__ == "__main__":
    key = jax.random.PRNGKey(0)
    kx, kt, kp = jax.random.split(key, 3)

    # GroupNorm(32, C) requires channels % 32 == 0; Cout = 128 keeps MXU operands
    # and output stores lane-dense.
    N, Cin, Cout, Tc, H, W = 2, 64, 128, 128, 16, 16
    x = jax.random.normal(kx, (N, Cin, H, W), dtype=jnp.float32)
    temb = jax.random.normal(kt, (N, Tc), dtype=jnp.float32)
    params = init_params(kp, Cin, Cout, Tc)

    y = jax.jit(resnet_block)(x, temb, params)
    y = jax.block_until_ready(y)

    y_ref = resnet_block_ref(x, temb, params)
    assert y.shape == (N, Cout, H, W)
    err_max = float(jnp.max(jnp.abs(y - y_ref)))
    err_mean = float(jnp.mean(jnp.abs(y - y_ref)))
    # bf16 MXU operands vs a pure-f32 reference: output std ~ 2.5, expected max
    # abs err a few e-2 (K up to 1152).  Structural bugs would show as O(1) errors.
    assert err_mean < 2e-2 and jnp.allclose(y, y_ref, atol=1e-1, rtol=5e-2), (
        f"max abs err {err_max}, mean abs err {err_mean}")

    print("KERNEL_OK")
</pallas_src>

<mosaic_0001>
module attributes {stable_mosaic.version = 11 : i64} {
  func.func @_gn_stats_kernel(%arg0: i32, %arg1: i32, %arg2: memref<1x128x64xf32, #tpu.memory_space<vmem>>, %arg3: memref<1x1x64xf32, #tpu.memory_space<vmem>>, %arg4: memref<1x1x64xf32, #tpu.memory_space<vmem>>, %arg5: memref<64x64xf32, #tpu.memory_space<vmem>>, %arg6: memref<1x1x64xf32, #tpu.memory_space<vmem>>, %arg7: memref<1x1x64xf32, #tpu.memory_space<vmem>>, %arg8: memref<1x64xf32, #tpu.memory_space<vmem>>, %arg9: memref<1x64xf32, #tpu.memory_space<vmem>>) attributes {dimension_semantics = [#tpu.dimension_semantics<parallel>, #tpu.dimension_semantics<arbitrary>], iteration_bounds = array<i64: 2, 2>, scalar_prefetch = 0 : i64, scratch_operands = 2 : i64, tpu.core_type = #tpu.core_type<tc>, window_params = [{transform_indices = @transform_0, window_bounds = array<i64: 1, 128, 64>}, {pipeline_mode = #tpu.pipeline_mode<synchronous>, transform_indices = @transform_1, window_bounds = array<i64: 1, 1, 64>}, {pipeline_mode = #tpu.pipeline_mode<synchronous>, transform_indices = @transform_2, window_bounds = array<i64: 1, 1, 64>}, {pipeline_mode = #tpu.pipeline_mode<synchronous>, transform_indices = @transform_3, window_bounds = array<i64: 64, 64>}, {transform_indices = @transform_4, window_bounds = array<i64: 1, 1, 64>}, {transform_indices = @transform_5, window_bounds = array<i64: 1, 1, 64>}]} {
    %c0_i32 = arith.constant 0 : i32
    %0 = arith.cmpi eq, %arg1, %c0_i32 : i32
    %1 = arith.extui %0 : i1 to i32
    %c0_i32_0 = arith.constant 0 : i32
    %2 = arith.cmpi ne, %1, %c0_i32_0 : i32
    scf.if %2 {
      %cst_13 = arith.constant 0.000000e+00 : f32
      %19 = vector.broadcast %cst_13 : f32 to vector<1x64xf32>
      %c0_14 = arith.constant 0 : index
      %c0_15 = arith.constant 0 : index
      %20 = vector.load %arg8[%c0_14, %c0_15] : memref<1x64xf32, #tpu.memory_space<vmem>>, vector<1x64xf32>
      tpu.vector_store %arg8[%c0_14, %c0_15], %19 {strides = array<i32>} : memref<1x64xf32, #tpu.memory_space<vmem>>, vector<1x64xf32>,
      %cst_16 = arith.constant 0.000000e+00 : f32
      %21 = vector.broadcast %cst_16 : f32 to vector<1x64xf32>
      %c0_17 = arith.constant 0 : index
      %c0_18 = arith.constant 0 : index
      %22 = vector.load %arg9[%c0_17, %c0_18] : memref<1x64xf32, #tpu.memory_space<vmem>>, vector<1x64xf32>
      tpu.vector_store %arg9[%c0_17, %c0_18], %21 {strides = array<i32>} : memref<1x64xf32, #tpu.memory_space<vmem>>, vector<1x64xf32>,
    } else {
    }
    %c0 = arith.constant 0 : index
    %c0_1 = arith.constant 0 : index
    %c0_2 = arith.constant 0 : index
    %3 = vector.load %arg2[%c0, %c0_1, %c0_2] : memref<1x128x64xf32, #tpu.memory_space<vmem>>, vector<1x128x64xf32>
    %4 = vector.shape_cast %3 : vector<1x128x64xf32> to vector<128x64xf32>
    %c0_3 = arith.constant 0 : index
    %c0_4 = arith.constant 0 : index
    %5 = vector.load %arg8[%c0_3, %c0_4] : memref<1x64xf32, #tpu.memory_space<vmem>>, vector<1x64xf32>
    %cst = arith.constant dense<0.000000e+00> : vector<64xf32>
    %6 = vector.multi_reduction <add>, %4, %cst [0] : vector<128x64xf32> to vector<64xf32>
    %7 = vector.shape_cast %6 : vector<64xf32> to vector<1x64xf32>
    %8 = arith.addf %5, %7 : vector<1x64xf32>
    %c0_5 = arith.constant 0 : index
    %c0_6 = arith.constant 0 : index
    %9 = vector.load %arg8[%c0_5, %c0_6] : memref<1x64xf32, #tpu.memory_space<vmem>>, vector<1x64xf32>
    tpu.vector_store %arg8[%c0_5, %c0_6], %8 {strides = array<i32>} : memref<1x64xf32, #tpu.memory_space<vmem>>, vector<1x64xf32>,
    %c0_7 = arith.constant 0 : index
    %c0_8 = arith.constant 0 : index
    %10 = vector.load %arg9[%c0_7, %c0_8] : memref<1x64xf32, #tpu.memory_space<vmem>>, vector<1x64xf32>
    %11 = arith.mulf %4, %4 : vector<128x64xf32>
    %cst_9 = arith.constant dense<0.000000e+00> : vector<64xf32>
    %12 = vector.multi_reduction <add>, %11, %cst_9 [0] : vector<128x64xf32> to vector<64xf32>
    %13 = vector.shape_cast %12 : vector<64xf32> to vector<1x64xf32>
    %14 = arith.addf %10, %13 : vector<1x64xf32>
    %c0_10 = arith.constant 0 : index
    %c0_11 = arith.constant 0 : index
    %15 = vector.load %arg9[%c0_10, %c0_11] : memref<1x64xf32, #tpu.memory_space<vmem>>, vector<1x64xf32>
    tpu.vector_store %arg9[%c0_10, %c0_11], %14 {strides = array<i32>} : memref<1x64xf32, #tpu.memory_space<vmem>>, vector<1x64xf32>,
    %c1_i32 = arith.constant 1 : i32
    %16 = arith.cmpi eq, %arg1, %c1_i32 : i32
    %17 = arith.extui %16 : i1 to i32
    %c0_i32_12 = arith.constant 0 : i32
    %18 = arith.cmpi ne, %17, %c0_i32_12 : i32
    scf.if %18 {
      %c0_13 = arith.constant 0 : index
      %c0_14 = arith.constant 0 : index
      %19 = vector.load %arg8[%c0_13, %c0_14] : memref<1x64xf32, #tpu.memory_space<vmem>>, vector<1x64xf32>
      %c0_15 = arith.constant 0 : index
      %c0_16 = arith.constant 0 : index
      %20 = vector.load %arg5[%c0_15, %c0_16] : memref<64x64xf32, #tpu.memory_space<vmem>>, vector<64x64xf32>
      %cst_17 = arith.constant dense<0.000000e+00> : vector<1x64xf32>
      %21 = tpu.matmul %19, %20, %cst_17 {dimension_numbers = #tpu.dot_dimension_numbers<[1], [0], [0], [1], [0, 0, 1, 1], [], []>} : vector<1x64xf32>, vector<64x64xf32>, vector<1x64xf32> -> vector<1x64xf32>
      %c0_18 = arith.constant 0 : index
      %c0_19 = arith.constant 0 : index
      %22 = vector.load %arg9[%c0_18, %c0_19] : memref<1x64xf32, #tpu.memory_space<vmem>>, vector<1x64xf32>
      %c0_20 = arith.constant 0 : index
      %c0_21 = arith.constant 0 : index
      %23 = vector.load %arg5[%c0_20, %c0_21] : memref<64x64xf32, #tpu.memory_space<vmem>>, vector<64x64xf32>
      %cst_22 = arith.constant dense<0.000000e+00> : vector<1x64xf32>
      %24 = tpu.matmul %22, %23, %cst_22 {dimension_numbers = #tpu.dot_dimension_numbers<[1], [0], [0], [1], [0, 0, 1, 1], [], []>} : vector<1x64xf32>, vector<64x64xf32>, vector<1x64xf32> -> vector<1x64xf32>
      %25 = arith.mulf %21, %21 : vector<1x64xf32>
      %26 = arith.subf %24, %25 : vector<1x64xf32>
      %cst_23 = arith.constant 9.99999974E-6 : f32
      %27 = vector.broadcast %cst_23 : f32 to vector<1x64xf32>
      %28 = arith.addf %26, %27 : vector<1x64xf32>
      %29 = math.rsqrt %28 : vector<1x64xf32>
      %c0_24 = arith.constant 0 : index
      %c0_25 = arith.constant 0 : index
      %c0_26 = arith.constant 0 : index
      %30 = vector.load %arg3[%c0_24, %c0_25, %c0_26] : memref<1x1x64xf32, #tpu.memory_space<vmem>>, vector<1x1x64xf32>
      %31 = vector.shape_cast %30 : vector<1x1x64xf32> to vector<1x64xf32>
      %32 = arith.mulf %31, %29 : vector<1x64xf32>
      %c0_27 = arith.constant 0 : index
      %c0_28 = arith.constant 0 : index
      %c0_29 = arith.constant 0 : index
      %33 = vector.load %arg6[%c0_27, %c0_28, %c0_29] : memref<1x1x64xf32, #tpu.memory_space<vmem>>, vector<1x1x64xf32>
      %34 = vector.shape_cast %33 : vector<1x1x64xf32> to vector<1x64xf32>
      %35 = vector.shape_cast %32 : vector<1x64xf32> to vector<1x1x64xf32>
      tpu.vector_store %arg6[%c0_27, %c0_28, %c0_29], %35 {strides = array<i32>} : memref<1x1x64xf32, #tpu.memory_space<vmem>>, vector<1x1x64xf32>,
      %c0_30 = arith.constant 0 : index
      %c0_31 = arith.constant 0 : index
      %c0_32 = arith.constant 0 : index
      %36 = vector.load %arg4[%c0_30, %c0_31, %c0_32] : memref<1x1x64xf32, #tpu.memory_space<vmem>>, vector<1x1x64xf32>
      %37 = vector.shape_cast %36 : vector<1x1x64xf32> to vector<1x64xf32>
      %38 = arith.mulf %21, %32 : vector<1x64xf32>
      %39 = arith.subf %37, %38 : vector<1x64xf32>
      %c0_33 = arith.constant 0 : index
      %c0_34 = arith.constant 0 : index
      %c0_35 = arith.constant 0 : index
      %40 = vector.load %arg7[%c0_33, %c0_34, %c0_35] : memref<1x1x64xf32, #tpu.memory_space<vmem>>, vector<1x1x64xf32>
      %41 = vector.shape_cast %40 : vector<1x1x64xf32> to vector<1x64xf32>
      %42 = vector.shape_cast %39 : vector<1x64xf32> to vector<1x1x64xf32>
      tpu.vector_store %arg7[%c0_33, %c0_34, %c0_35], %42 {strides = array<i32>} : memref<1x1x64xf32, #tpu.memory_space<vmem>>, vector<1x1x64xf32>,
    } else {
    }
    return
  }
  func.func @transform_0(%arg0: i32, %arg1: i32) -> (i32, i32, i32) {
    %c0_i32 = arith.constant 0 : i32
    %c0_i32_0 = arith.constant 0 : i32
    return %arg0, %arg1, %c0_i32 : i32, i32, i32
  }
  func.func @transform_1(%arg0: i32, %arg1: i32) -> (i32, i32, i32) {
    %c0_i32 = arith.constant 0 : i32
    %c0_i32_0 = arith.constant 0 : i32
    %c0_i32_1 = arith.constant 0 : i32
    %c0_i32_2 = arith.constant 0 : i32
    return %c0_i32, %c0_i32_0, %c0_i32_1 : i32, i32, i32
  }
  func.func @transform_2(%arg0: i32, %arg1: i32) -> (i32, i32, i32) {
    %c0_i32 = arith.constant 0 : i32
    %c0_i32_0 = arith.constant 0 : i32
    %c0_i32_1 = arith.constant 0 : i32
    %c0_i32_2 = arith.constant 0 : i32
    return %c0_i32, %c0_i32_0, %c0_i32_1 : i32, i32, i32
  }
  func.func @transform_3(%arg0: i32, %arg1: i32) -> (i32, i32) {
    %c0_i32 = arith.constant 0 : i32
    %c0_i32_0 = arith.constant 0 : i32
    %c0_i32_1 = arith.constant 0 : i32
    return %c0_i32, %c0_i32_0 : i32, i32
  }
  func.func @transform_4(%arg0: i32, %arg1: i32) -> (i32, i32, i32) {
    %c0_i32 = arith.constant 0 : i32
    %c0_i32_0 = arith.constant 0 : i32
    %c0_i32_1 = arith.constant 0 : i32
    return %arg0, %c0_i32, %c0_i32_0 : i32, i32, i32
  }
  func.func @transform_5(%arg0: i32, %arg1: i32) -> (i32, i32, i32) {
    %c0_i32 = arith.constant 0 : i32
    %c0_i32_0 = arith.constant 0 : i32
    %c0_i32_1 = arith.constant 0 : i32
    return %arg0, %c0_i32, %c0_i32_0 : i32, i32, i32
  }
}

module attributes {stable_mosaic.version = 11 : i64} {
  func.func @_conv1_kernel(%arg0: i32, %arg1: i32, %arg2: memref<1x18x18x64xf32, #tpu.memory_space<vmem>>, %arg3: memref<1x1x64xf32, #tpu.memory_space<vmem>>, %arg4: memref<1x1x64xf32, #tpu.memory_space<vmem>>, %arg5: memref<9x64x128xbf16, #tpu.memory_space<vmem>>, %arg6: memref<1x1x128xf32, #tpu.memory_space<vmem>>, %arg7: memref<1x8x16x128xf32, #tpu.memory_space<vmem>>) attributes {dimension_semantics = [#tpu.dimension_semantics<parallel>, #tpu.dimension_semantics<parallel>], iteration_bounds = array<i64: 2, 2>, scalar_prefetch = 0 : i64, scratch_operands = 0 : i64, tpu.core_type = #tpu.core_type<tc>, window_params = [{transform_indices = @transform_0, window_bounds = array<i64: 1, 18, 18, 64>}, {transform_indices = @transform_1, window_bounds = array<i64: 1, 1, 64>}, {transform_indices = @transform_2, window_bounds = array<i64: 1, 1, 64>}, {pipeline_mode = #tpu.pipeline_mode<synchronous>, transform_indices = @transform_3, window_bounds = array<i64: 9, 64, 128>}, {transform_indices = @transform_4, window_bounds = array<i64: 1, 1, 128>}, {transform_indices = @transform_5, window_bounds = array<i64: 1, 8, 16, 128>}]} {
    %c8_i32 = arith.constant 8 : i32
    %0 = arith.muli %arg1, %c8_i32 : i32
    %1 = tpu.assume_multiple %0, 8 : i32
    %c0 = arith.constant 0 : index
    %2 = arith.index_cast %1 : i32 to index
    %c0_0 = arith.constant 0 : index
    %c0_1 = arith.constant 0 : index
    %3 = vector.load %arg2[%c0, %2, %c0_0, %c0_1] : memref<1x18x18x64xf32, #tpu.memory_space<vmem>>, vector<1x10x18x64xf32>
    %4 = vector.shape_cast %3 : vector<1x10x18x64xf32> to vector<10x18x64xf32>
    %c0_2 = arith.constant 0 : index
    %c0_3 = arith.constant 0 : index
    %c0_4 = arith.constant 0 : index
    %5 = vector.load %arg3[%c0_2, %c0_3, %c0_4] : memref<1x1x64xf32, #tpu.memory_space<vmem>>, vector<1x1x64xf32>
    %6 = vector.shape_cast %5 : vector<1x1x64xf32> to vector<1x64xf32>
    %7 = vector.shape_cast %6 : vector<1x64xf32> to vector<1x1x64xf32>
    %8 = vector.broadcast %7 : vector<1x1x64xf32> to vector<10x18x64xf32>
    %9 = arith.mulf %4, %8 : vector<10x18x64xf32>
    %c0_5 = arith.constant 0 : index
    %c0_6 = arith.constant 0 : index
    %c0_7 = arith.constant 0 : index
    %10 = vector.load %arg4[%c0_5, %c0_6, %c0_7] : memref<1x1x64xf32, #tpu.memory_space<vmem>>, vector<1x1x64xf32>
    %11 = vector.shape_cast %10 : vector<1x1x64xf32> to vector<1x64xf32>
    %12 = vector.shape_cast %11 : vector<1x64xf32> to vector<1x1x64xf32>
    %13 = vector.broadcast %12 : vector<1x1x64xf32> to vector<10x18x64xf32>
    %14 = arith.addf %9, %13 : vector<10x18x64xf32>
    %15 = arith.negf %14 : vector<10x18x64xf32>
    %16 = math.exp %15 : vector<10x18x64xf32>
    %cst = arith.constant 1.000000e+00 : f32
    %17 = vector.broadcast %cst : f32 to vector<10x18x64xf32>
    %18 = arith.addf %17, %16 : vector<10x18x64xf32>
    %19 = arith.divf %17, %18 : vector<10x18x64xf32>
    %20 = arith.mulf %14, %19 : vector<10x18x64xf32>
    %21 = tpu.iota {dimensions = array<i32: 0>} : vector<10x18x64xi32>
    %22 = vector.broadcast %1 : i32 to vector<10x18x64xi32>
    %23 = arith.addi %21, %22 : vector<10x18x64xi32>
    %24 = tpu.iota {dimensions = array<i32: 1>} : vector<10x18x64xi32>
    %c1_i32 = arith.constant 1 : i32
    %25 = vector.broadcast %c1_i32 : i32 to vector<10x18x64xi32>
    %26 = arith.cmpi sge, %23, %25 : vector<10x18x64xi32>
    %c16_i32 = arith.constant 16 : i32
    %27 = vector.broadcast %c16_i32 : i32 to vector<10x18x64xi32>
    %28 = arith.cmpi sle, %23, %27 : vector<10x18x64xi32>
    %29 = arith.andi %26, %28 : vector<10x18x64xi1>
    %c1_i32_8 = arith.constant 1 : i32
    %30 = vector.broadcast %c1_i32_8 : i32 to vector<10x18x64xi32>
    %31 = arith.cmpi sge, %24, %30 : vector<10x18x64xi32>
    %32 = arith.andi %29, %31 : vector<10x18x64xi1>
    %c16_i32_9 = arith.constant 16 : i32
    %33 = vector.broadcast %c16_i32_9 : i32 to vector<10x18x64xi32>
    %34 = arith.cmpi sle, %24, %33 : vector<10x18x64xi32>
    %35 = arith.andi %32, %34 : vector<10x18x64xi1>
    %cst_10 = arith.constant 0.000000e+00 : f32
    %36 = vector.broadcast %cst_10 : f32 to vector<10x18x64xf32>
    %37 = arith.select %35, %20, %36 : vector<10x18x64xi1>, vector<10x18x64xf32>
    %38 = arith.truncf %37 : vector<10x18x64xf32> to vector<10x18x64xbf16>
    %cst_11 = arith.constant 0.000000e+00 : f32
    %39 = vector.broadcast %cst_11 : f32 to vector<128x128xf32>
    %40 = vector.extract_strided_slice %38 {offsets = [0, 0, 0], sizes = [8, 16, 64], strides = [1, 1, 1]} : vector<10x18x64xbf16> to vector<8x16x64xbf16>
    %41 = vector.shape_cast %40 : vector<8x16x64xbf16> to vector<128x64xbf16>
    %c0_12 = arith.constant 0 : index
    %c0_13 = arith.constant 0 : index
    %c0_14 = arith.constant 0 : index
    %42 = vector.load %arg5[%c0_12, %c0_13, %c0_14] : memref<9x64x128xbf16, #tpu.memory_space<vmem>>, vector<1x64x128xbf16>
    %43 = vector.shape_cast %42 : vector<1x64x128xbf16> to vector<64x128xbf16>
    %cst_15 = arith.constant dense<0.000000e+00> : vector<128x128xf32>
    %44 = tpu.matmul %41, %43, %cst_15 {dimension_numbers = #tpu.dot_dimension_numbers<[1], [0], [0], [1], [0, 0, 1, 1], [], []>} : vector<128x64xbf16>, vector<64x128xbf16>, vector<128x128xf32> -> vector<128x128xf32>
    %45 = arith.addf %39, %44 : vector<128x128xf32>
    %46 = vector.extract_strided_slice %38 {offsets = [0, 1, 0], sizes = [8, 16, 64], strides = [1, 1, 1]} : vector<10x18x64xbf16> to vector<8x16x64xbf16>
    %47 = vector.shape_cast %46 : vector<8x16x64xbf16> to vector<128x64xbf16>
    %c1 = arith.constant 1 : index
    %c0_16 = arith.constant 0 : index
    %c0_17 = arith.constant 0 : index
    %48 = vector.load %arg5[%c1, %c0_16, %c0_17] : memref<9x64x128xbf16, #tpu.memory_space<vmem>>, vector<1x64x128xbf16>
    %49 = vector.shape_cast %48 : vector<1x64x128xbf16> to vector<64x128xbf16>
    %cst_18 = arith.constant dense<0.000000e+00> : vector<128x128xf32>
    %50 = tpu.matmul %47, %49, %cst_18 {dimension_numbers = #tpu.dot_dimension_numbers<[1], [0], [0], [1], [0, 0, 1, 1], [], []>} : vector<128x64xbf16>, vector<64x128xbf16>, vector<128x128xf32> -> vector<128x128xf32>
    %51 = arith.addf %45, %50 : vector<128x128xf32>
    %52 = vector.extract_strided_slice %38 {offsets = [0, 2, 0], sizes = [8, 16, 64], strides = [1, 1, 1]} : vector<10x18x64xbf16> to vector<8x16x64xbf16>
    %53 = vector.shape_cast %52 : vector<8x16x64xbf16> to vector<128x64xbf16>
    %c2 = arith.constant 2 : index
    %c0_19 = arith.constant 0 : index
    %c0_20 = arith.constant 0 : index
    %54 = vector.load %arg5[%c2, %c0_19, %c0_20] : memref<9x64x128xbf16, #tpu.memory_space<vmem>>, vector<1x64x128xbf16>
    %55 = vector.shape_cast %54 : vector<1x64x128xbf16> to vector<64x128xbf16>
    %cst_21 = arith.constant dense<0.000000e+00> : vector<128x128xf32>
    %56 = tpu.matmul %53, %55, %cst_21 {dimension_numbers = #tpu.dot_dimension_numbers<[1], [0], [0], [1], [0, 0, 1, 1], [], []>} : vector<128x64xbf16>, vector<64x128xbf16>, vector<128x128xf32> -> vector<128x128xf32>
    %57 = arith.addf %51, %56 : vector<128x128xf32>
    %58 = vector.extract_strided_slice %38 {offsets = [1, 0, 0], sizes = [8, 16, 64], strides = [1, 1, 1]} : vector<10x18x64xbf16> to vector<8x16x64xbf16>
    %59 = vector.shape_cast %58 : vector<8x16x64xbf16> to vector<128x64xbf16>
    %c3 = arith.constant 3 : index
    %c0_22 = arith.constant 0 : index
    %c0_23 = arith.constant 0 : index
    %60 = vector.load %arg5[%c3, %c0_22, %c0_23] : memref<9x64x128xbf16, #tpu.memory_space<vmem>>, vector<1x64x128xbf16>
    %61 = vector.shape_cast %60 : vector<1x64x128xbf16> to vector<64x128xbf16>
    %cst_24 = arith.constant dense<0.000000e+00> : vector<128x128xf32>
    %62 = tpu.matmul %59, %61, %cst_24 {dimension_numbers = #tpu.dot_dimension_numbers<[1], [0], [0], [1], [0, 0, 1, 1], [], []>} : vector<128x64xbf16>, vector<64x128xbf16>, vector<128x128xf32> -> vector<128x128xf32>
    %63 = arith.addf %57, %62 : vector<128x128xf32>
    %64 = vector.extract_strided_slice %38 {offsets = [1, 1, 0], sizes = [8, 16, 64], strides = [1, 1, 1]} : vector<10x18x64xbf16> to vector<8x16x64xbf16>
    %65 = vector.shape_cast %64 : vector<8x16x64xbf16> to vector<128x64xbf16>
    %c4 = arith.constant 4 : index
    %c0_25 = arith.constant 0 : index
    %c0_26 = arith.constant 0 : index
    %66 = vector.load %arg5[%c4, %c0_25, %c0_26] : memref<9x64x128xbf16, #tpu.memory_space<vmem>>, vector<1x64x128xbf16>
    %67 = vector.shape_cast %66 : vector<1x64x128xbf16> to vector<64x128xbf16>
    %cst_27 = arith.constant dense<0.000000e+00> : vector<128x128xf32>
    %68 = tpu.matmul %65, %67, %cst_27 {dimension_numbers = #tpu.dot_dimension_numbers<[1], [0], [0], [1], [0, 0, 1, 1], [], []>} : vector<128x64xbf16>, vector<64x128xbf16>, vector<128x128xf32> -> vector<128x128xf32>
    %69 = arith.addf %63, %68 : vector<128x128xf32>
    %70 = vector.extract_strided_slice %38 {offsets = [1, 2, 0], sizes = [8, 16, 64], strides = [1, 1, 1]} : vector<10x18x64xbf16> to vector<8x16x64xbf16>
    %71 = vector.shape_cast %70 : vector<8x16x64xbf16> to vector<128x64xbf16>
    %c5 = arith.constant 5 : index
    %c0_28 = arith.constant 0 : index
    %c0_29 = arith.constant 0 : index
    %72 = vector.load %arg5[%c5, %c0_28, %c0_29] : memref<9x64x128xbf16, #tpu.memory_space<vmem>>, vector<1x64x128xbf16>
    %73 = vector.shape_cast %72 : vector<1x64x128xbf16> to vector<64x128xbf16>
    %cst_30 = arith.constant dense<0.000000e+00> : vector<128x128xf32>
    %74 = tpu.matmul %71, %73, %cst_30 {dimension_numbers = #tpu.dot_dimension_numbers<[1], [0], [0], [1], [0, 0, 1, 1], [], []>} : vector<128x64xbf16>, vector<64x128xbf16>, vector<128x128xf32> -> vector<128x128xf32>
    %75 = arith.addf %69, %74 : vector<128x128xf32>
    %76 = vector.extract_strided_slice %38 {offsets = [2, 0, 0], sizes = [8, 16, 64], strides = [1, 1, 1]} : vector<10x18x64xbf16> to vector<8x16x64xbf16>
    %77 = vector.shape_cast %76 : vector<8x16x64xbf16> to vector<128x64xbf16>
    %c6 = arith.constant 6 : index
    %c0_31 = arith.constant 0 : index
    %c0_32 = arith.constant 0 : index
    %78 = vector.load %arg5[%c6, %c0_31, %c0_32] : memref<9x64x128xbf16, #tpu.memory_space<vmem>>, vector<1x64x128xbf16>
    %79 = vector.shape_cast %78 : vector<1x64x128xbf16> to vector<64x128xbf16>
    %cst_33 = arith.constant dense<0.000000e+00> : vector<128x128xf32>
    %80 = tpu.matmul %77, %79, %cst_33 {dimension_numbers = #tpu.dot_dimension_numbers<[1], [0], [0], [1], [0, 0, 1, 1], [], []>} : vector<128x64xbf16>, vector<64x128xbf16>, vector<128x128xf32> -> vector<128x128xf32>
    %81 = arith.addf %75, %80 : vector<128x128xf32>
    %82 = vector.extract_strided_slice %38 {offsets = [2, 1, 0], sizes = [8, 16, 64], strides = [1, 1, 1]} : vector<10x18x64xbf16> to vector<8x16x64xbf16>
    %83 = vector.shape_cast %82 : vector<8x16x64xbf16> to vector<128x64xbf16>
    %c7 = arith.constant 7 : index
    %c0_34 = arith.constant 0 : index
    %c0_35 = arith.constant 0 : index
    %84 = vector.load %arg5[%c7, %c0_34, %c0_35] : memref<9x64x128xbf16, #tpu.memory_space<vmem>>, vector<1x64x128xbf16>
    %85 = vector.shape_cast %84 : vector<1x64x128xbf16> to vector<64x128xbf16>
    %cst_36 = arith.constant dense<0.000000e+00> : vector<128x128xf32>
    %86 = tpu.matmul %83, %85, %cst_36 {dimension_numbers = #tpu.dot_dimension_numbers<[1], [0], [0], [1], [0, 0, 1, 1], [], []>} : vector<128x64xbf16>, vector<64x128xbf16>, vector<128x128xf32> -> vector<128x128xf32>
    %87 = arith.addf %81, %86 : vector<128x128xf32>
    %88 = vector.extract_strided_slice %38 {offsets = [2, 2, 0], sizes = [8, 16, 64], strides = [1, 1, 1]} : vector<10x18x64xbf16> to vector<8x16x64xbf16>
    %89 = vector.shape_cast %88 : vector<8x16x64xbf16> to vector<128x64xbf16>
    %c8 = arith.constant 8 : index
    %c0_37 = arith.constant 0 : index
    %c0_38 = arith.constant 0 : index
    %90 = vector.load %arg5[%c8, %c0_37, %c0_38] : memref<9x64x128xbf16, #tpu.memory_space<vmem>>, vector<1x64x128xbf16>
    %91 = vector.shape_cast %90 : vector<1x64x128xbf16> to vector<64x128xbf16>
    %cst_39 = arith.constant dense<0.000000e+00> : vector<128x128xf32>
    %92 = tpu.matmul %89, %91, %cst_39 {dimension_numbers = #tpu.dot_dimension_numbers<[1], [0], [0], [1], [0, 0, 1, 1], [], []>} : vector<128x64xbf16>, vector<64x128xbf16>, vector<128x128xf32> -> vector<128x128xf32>
    %93 = arith.addf %87, %92 : vector<128x128xf32>
    %c0_40 = arith.constant 0 : index
    %c0_41 = arith.constant 0 : index
    %c0_42 = arith.constant 0 : index
    %94 = vector.load %arg6[%c0_40, %c0_41, %c0_42] : memref<1x1x128xf32, #tpu.memory_space<vmem>>, vector<1x1x128xf32>
    %95 = vector.shape_cast %94 : vector<1x1x128xf32> to vector<1x128xf32>
    %96 = vector.broadcast %95 : vector<1x128xf32> to vector<128x128xf32>
    %97 = arith.addf %93, %96 : vector<128x128xf32>
    %98 = vector.shape_cast %97 : vector<128x128xf32> to vector<8x16x128xf32>
    %c0_43 = arith.constant 0 : index
    %c0_44 = arith.constant 0 : index
    %c0_45 = arith.constant 0 : index
    %c0_46 = arith.constant 0 : index
    %99 = vector.load %arg7[%c0_43, %c0_44, %c0_45, %c0_46] : memref<1x8x16x128xf32, #tpu.memory_space<vmem>>, vector<1x8x16x128xf32>
    %100 = vector.shape_cast %99 : vector<1x8x16x128xf32> to vector<8x16x128xf32>
    %101 = vector.shape_cast %98 : vector<8x16x128xf32> to vector<1x8x16x128xf32>
    tpu.vector_store %arg7[%c0_43, %c0_44, %c0_45, %c0_46], %101 {strides = array<i32>} : memref<1x8x16x128xf32, #tpu.memory_space<vmem>>, vector<1x8x16x128xf32>,
    return
  }
  func.func @transform_0(%arg0: i32, %arg1: i32) -> (i32, i32, i32, i32) {
    %c0_i32 = arith.constant 0 : i32
    %c0_i32_0 = arith.constant 0 : i32
    %c0_i32_1 = arith.constant 0 : i32
    %c0_i32_2 = arith.constant 0 : i32
    return %arg0, %c0_i32, %c0_i32_0, %c0_i32_1 : i32, i32, i32, i32
  }
  func.func @transform_1(%arg0: i32, %arg1: i32) -> (i32, i32, i32) {
    %c0_i32 = arith.constant 0 : i32
    %c0_i32_0 = arith.constant 0 : i32
    %c0_i32_1 = arith.constant 0 : i32
    return %arg0, %c0_i32, %c0_i32_0 : i32, i32, i32
  }
  func.func @transform_2(%arg0: i32, %arg1: i32) -> (i32, i32, i32) {
    %c0_i32 = arith.constant 0 : i32
    %c0_i32_0 = arith.constant 0 : i32
    %c0_i32_1 = arith.constant 0 : i32
    return %arg0, %c0_i32, %c0_i32_0 : i32, i32, i32
  }
  func.func @transform_3(%arg0: i32, %arg1: i32) -> (i32, i32, i32) {
    %c0_i32 = arith.constant 0 : i32
    %c0_i32_0 = arith.constant 0 : i32
    %c0_i32_1 = arith.constant 0 : i32
    %c0_i32_2 = arith.constant 0 : i32
    return %c0_i32, %c0_i32_0, %c0_i32_1 : i32, i32, i32
  }
  func.func @transform_4(%arg0: i32, %arg1: i32) -> (i32, i32, i32) {
    %c0_i32 = arith.constant 0 : i32
    %c0_i32_0 = arith.constant 0 : i32
    %c0_i32_1 = arith.constant 0 : i32
    return %arg0, %c0_i32, %c0_i32_0 : i32, i32, i32
  }
  func.func @transform_5(%arg0: i32, %arg1: i32) -> (i32, i32, i32, i32) {
    %c0_i32 = arith.constant 0 : i32
    %c0_i32_0 = arith.constant 0 : i32
    %c0_i32_1 = arith.constant 0 : i32
    return %arg0, %arg1, %c0_i32, %c0_i32_0 : i32, i32, i32, i32
  }
}

module attributes {stable_mosaic.version = 11 : i64} {
  func.func @_gn_stats_kernel(%arg0: i32, %arg1: i32, %arg2: memref<1x128x128xf32, #tpu.memory_space<vmem>>, %arg3: memref<1x1x128xf32, #tpu.memory_space<vmem>>, %arg4: memref<1x1x128xf32, #tpu.memory_space<vmem>>, %arg5: memref<128x128xf32, #tpu.memory_space<vmem>>, %arg6: memref<1x1x128xf32, #tpu.memory_space<vmem>>, %arg7: memref<1x1x128xf32, #tpu.memory_space<vmem>>, %arg8: memref<1x128xf32, #tpu.memory_space<vmem>>, %arg9: memref<1x128xf32, #tpu.memory_space<vmem>>) attributes {dimension_semantics = [#tpu.dimension_semantics<parallel>, #tpu.dimension_semantics<arbitrary>], iteration_bounds = array<i64: 2, 2>, scalar_prefetch = 0 : i64, scratch_operands = 2 : i64, tpu.core_type = #tpu.core_type<tc>, window_params = [{transform_indices = @transform_0, window_bounds = array<i64: 1, 128, 128>}, {pipeline_mode = #tpu.pipeline_mode<synchronous>, transform_indices = @transform_1, window_bounds = array<i64: 1, 1, 128>}, {pipeline_mode = #tpu.pipeline_mode<synchronous>, transform_indices = @transform_2, window_bounds = array<i64: 1, 1, 128>}, {pipeline_mode = #tpu.pipeline_mode<synchronous>, transform_indices = @transform_3, window_bounds = array<i64: 128, 128>}, {transform_indices = @transform_4, window_bounds = array<i64: 1, 1, 128>}, {transform_indices = @transform_5, window_bounds = array<i64: 1, 1, 128>}]} {
    %c0_i32 = arith.constant 0 : i32
    %0 = arith.cmpi eq, %arg1, %c0_i32 : i32
    %1 = arith.extui %0 : i1 to i32
    %c0_i32_0 = arith.constant 0 : i32
    %2 = arith.cmpi ne, %1, %c0_i32_0 : i32
    scf.if %2 {
      %cst_13 = arith.constant 0.000000e+00 : f32
      %19 = vector.broadcast %cst_13 : f32 to vector<1x128xf32>
      %c0_14 = arith.constant 0 : index
      %c0_15 = arith.constant 0 : index
      %20 = vector.load %arg8[%c0_14, %c0_15] : memref<1x128xf32, #tpu.memory_space<vmem>>, vector<1x128xf32>
      tpu.vector_store %arg8[%c0_14, %c0_15], %19 {strides = array<i32>} : memref<1x128xf32, #tpu.memory_space<vmem>>, vector<1x128xf32>,
      %cst_16 = arith.constant 0.000000e+00 : f32
      %21 = vector.broadcast %cst_16 : f32 to vector<1x128xf32>
      %c0_17 = arith.constant 0 : index
      %c0_18 = arith.constant 0 : index
      %22 = vector.load %arg9[%c0_17, %c0_18] : memref<1x128xf32, #tpu.memory_space<vmem>>, vector<1x128xf32>
      tpu.vector_store %arg9[%c0_17, %c0_18], %21 {strides = array<i32>} : memref<1x128xf32, #tpu.memory_space<vmem>>, vector<1x128xf32>,
    } else {
    }
    %c0 = arith.constant 0 : index
    %c0_1 = arith.constant 0 : index
    %c0_2 = arith.constant 0 : index
    %3 = vector.load %arg2[%c0, %c0_1, %c0_2] : memref<1x128x128xf32, #tpu.memory_space<vmem>>, vector<1x128x128xf32>
    %4 = vector.shape_cast %3 : vector<1x128x128xf32> to vector<128x128xf32>
    %c0_3 = arith.constant 0 : index
    %c0_4 = arith.constant 0 : index
    %5 = vector.load %arg8[%c0_3, %c0_4] : memref<1x128xf32, #tpu.memory_space<vmem>>, vector<1x128xf32>
    %cst = arith.constant dense<0.000000e+00> : vector<128xf32>
    %6 = vector.multi_reduction <add>, %4, %cst [0] : vector<128x128xf32> to vector<128xf32>
    %7 = vector.shape_cast %6 : vector<128xf32> to vector<1x128xf32>
    %8 = arith.addf %5, %7 : vector<1x128xf32>
    %c0_5 = arith.constant 0 : index
    %c0_6 = arith.constant 0 : index
    %9 = vector.load %arg8[%c0_5, %c0_6] : memref<1x128xf32, #tpu.memory_space<vmem>>, vector<1x128xf32>
    tpu.vector_store %arg8[%c0_5, %c0_6], %8 {strides = array<i32>} : memref<1x128xf32, #tpu.memory_space<vmem>>, vector<1x128xf32>,
    %c0_7 = arith.constant 0 : index
    %c0_8 = arith.constant 0 : index
    %10 = vector.load %arg9[%c0_7, %c0_8] : memref<1x128xf32, #tpu.memory_space<vmem>>, vector<1x128xf32>
    %11 = arith.mulf %4, %4 : vector<128x128xf32>
    %cst_9 = arith.constant dense<0.000000e+00> : vector<128xf32>
    %12 = vector.multi_reduction <add>, %11, %cst_9 [0] : vector<128x128xf32> to vector<128xf32>
    %13 = vector.shape_cast %12 : vector<128xf32> to vector<1x128xf32>
    %14 = arith.addf %10, %13 : vector<1x128xf32>
    %c0_10 = arith.constant 0 : index
    %c0_11 = arith.constant 0 : index
    %15 = vector.load %arg9[%c0_10, %c0_11] : memref<1x128xf32, #tpu.memory_space<vmem>>, vector<1x128xf32>
    tpu.vector_store %arg9[%c0_10, %c0_11], %14 {strides = array<i32>} : memref<1x128xf32, #tpu.memory_space<vmem>>, vector<1x128xf32>,
    %c1_i32 = arith.constant 1 : i32
    %16 = arith.cmpi eq, %arg1, %c1_i32 : i32
    %17 = arith.extui %16 : i1 to i32
    %c0_i32_12 = arith.constant 0 : i32
    %18 = arith.cmpi ne, %17, %c0_i32_12 : i32
    scf.if %18 {
      %c0_13 = arith.constant 0 : index
      %c0_14 = arith.constant 0 : index
      %19 = vector.load %arg8[%c0_13, %c0_14] : memref<1x128xf32, #tpu.memory_space<vmem>>, vector<1x128xf32>
      %c0_15 = arith.constant 0 : index
      %c0_16 = arith.constant 0 : index
      %20 = vector.load %arg5[%c0_15, %c0_16] : memref<128x128xf32, #tpu.memory_space<vmem>>, vector<128x128xf32>
      %cst_17 = arith.constant dense<0.000000e+00> : vector<1x128xf32>
      %21 = tpu.matmul %19, %20, %cst_17 {dimension_numbers = #tpu.dot_dimension_numbers<[1], [0], [0], [1], [0, 0, 1, 1], [], []>} : vector<1x128xf32>, vector<128x128xf32>, vector<1x128xf32> -> vector<1x128xf32>
      %c0_18 = arith.constant 0 : index
      %c0_19 = arith.constant 0 : index
      %22 = vector.load %arg9[%c0_18, %c0_19] : memref<1x128xf32, #tpu.memory_space<vmem>>, vector<1x128xf32>
      %c0_20 = arith.constant 0 : index
      %c0_21 = arith.constant 0 : index
      %23 = vector.load %arg5[%c0_20, %c0_21] : memref<128x128xf32, #tpu.memory_space<vmem>>, vector<128x128xf32>
      %cst_22 = arith.constant dense<0.000000e+00> : vector<1x128xf32>
      %24 = tpu.matmul %22, %23, %cst_22 {dimension_numbers = #tpu.dot_dimension_numbers<[1], [0], [0], [1], [0, 0, 1, 1], [], []>} : vector<1x128xf32>, vector<128x128xf32>, vector<1x128xf32> -> vector<1x128xf32>
      %25 = arith.mulf %21, %21 : vector<1x128xf32>
      %26 = arith.subf %24, %25 : vector<1x128xf32>
      %cst_23 = arith.constant 9.99999974E-6 : f32
      %27 = vector.broadcast %cst_23 : f32 to vector<1x128xf32>
      %28 = arith.addf %26, %27 : vector<1x128xf32>
      %29 = math.rsqrt %28 : vector<1x128xf32>
      %c0_24 = arith.constant 0 : index
      %c0_25 = arith.constant 0 : index
      %c0_26 = arith.constant 0 : index
      %30 = vector.load %arg3[%c0_24, %c0_25, %c0_26] : memref<1x1x128xf32, #tpu.memory_space<vmem>>, vector<1x1x128xf32>
      %31 = vector.shape_cast %30 : vector<1x1x128xf32> to vector<1x128xf32>
      %32 = arith.mulf %31, %29 : vector<1x128xf32>
      %c0_27 = arith.constant 0 : index
      %c0_28 = arith.constant 0 : index
      %c0_29 = arith.constant 0 : index
      %33 = vector.load %arg6[%c0_27, %c0_28, %c0_29] : memref<1x1x128xf32, #tpu.memory_space<vmem>>, vector<1x1x128xf32>
      %34 = vector.shape_cast %33 : vector<1x1x128xf32> to vector<1x128xf32>
      %35 = vector.shape_cast %32 : vector<1x128xf32> to vector<1x1x128xf32>
      tpu.vector_store %arg6[%c0_27, %c0_28, %c0_29], %35 {strides = array<i32>} : memref<1x1x128xf32, #tpu.memory_space<vmem>>, vector<1x1x128xf32>,
      %c0_30 = arith.constant 0 : index
      %c0_31 = arith.constant 0 : index
      %c0_32 = arith.constant 0 : index
      %36 = vector.load %arg4[%c0_30, %c0_31, %c0_32] : memref<1x1x128xf32, #tpu.memory_space<vmem>>, vector<1x1x128xf32>
      %37 = vector.shape_cast %36 : vector<1x1x128xf32> to vector<1x128xf32>
      %38 = arith.mulf %21, %32 : vector<1x128xf32>
      %39 = arith.subf %37, %38 : vector<1x128xf32>
      %c0_33 = arith.constant 0 : index
      %c0_34 = arith.constant 0 : index
      %c0_35 = arith.constant 0 : index
      %40 = vector.load %arg7[%c0_33, %c0_34, %c0_35] : memref<1x1x128xf32, #tpu.memory_space<vmem>>, vector<1x1x128xf32>
      %41 = vector.shape_cast %40 : vector<1x1x128xf32> to vector<1x128xf32>
      %42 = vector.shape_cast %39 : vector<1x128xf32> to vector<1x1x128xf32>
      tpu.vector_store %arg7[%c0_33, %c0_34, %c0_35], %42 {strides = array<i32>} : memref<1x1x128xf32, #tpu.memory_space<vmem>>, vector<1x1x128xf32>,
    } else {
    }
    return
  }
  func.func @transform_0(%arg0: i32, %arg1: i32) -> (i32, i32, i32) {
    %c0_i32 = arith.constant 0 : i32
    %c0_i32_0 = arith.constant 0 : i32
    return %arg0, %arg1, %c0_i32 : i32, i32, i32
  }
  func.func @transform_1(%arg0: i32, %arg1: i32) -> (i32, i32, i32) {
    %c0_i32 = arith.constant 0 : i32
    %c0_i32_0 = arith.constant 0 : i32
    %c0_i32_1 = arith.constant 0 : i32
    %c0_i32_2 = arith.constant 0 : i32
    return %c0_i32, %c0_i32_0, %c0_i32_1 : i32, i32, i32
  }
  func.func @transform_2(%arg0: i32, %arg1: i32) -> (i32, i32, i32) {
    %c0_i32 = arith.constant 0 : i32
    %c0_i32_0 = arith.constant 0 : i32
    %c0_i32_1 = arith.constant 0 : i32
    %c0_i32_2 = arith.constant 0 : i32
    return %c0_i32, %c0_i32_0, %c0_i32_1 : i32, i32, i32
  }
  func.func @transform_3(%arg0: i32, %arg1: i32) -> (i32, i32) {
    %c0_i32 = arith.constant 0 : i32
    %c0_i32_0 = arith.constant 0 : i32
    %c0_i32_1 = arith.constant 0 : i32
    return %c0_i32, %c0_i32_0 : i32, i32
  }
  func.func @transform_4(%arg0: i32, %arg1: i32) -> (i32, i32, i32) {
    %c0_i32 = arith.constant 0 : i32
    %c0_i32_0 = arith.constant 0 : i32
    %c0_i32_1 = arith.constant 0 : i32
    return %arg0, %c0_i32, %c0_i32_0 : i32, i32, i32
  }
  func.func @transform_5(%arg0: i32, %arg1: i32) -> (i32, i32, i32) {
    %c0_i32 = arith.constant 0 : i32
    %c0_i32_0 = arith.constant 0 : i32
    %c0_i32_1 = arith.constant 0 : i32
    return %arg0, %c0_i32, %c0_i32_0 : i32, i32, i32
  }
}

module attributes {stable_mosaic.version = 11 : i64} {
  func.func @_conv2_kernel(%arg0: i32, %arg1: i32, %arg2: memref<1x18x18x128xf32, #tpu.memory_space<vmem>>, %arg3: memref<1x1x128xf32, #tpu.memory_space<vmem>>, %arg4: memref<1x1x128xf32, #tpu.memory_space<vmem>>, %arg5: memref<9x128x128xbf16, #tpu.memory_space<vmem>>, %arg6: memref<1x1x128xf32, #tpu.memory_space<vmem>>, %arg7: memref<1x8x16x64xf32, #tpu.memory_space<vmem>>, %arg8: memref<64x128xbf16, #tpu.memory_space<vmem>>, %arg9: memref<1x8x16x128xf32, #tpu.memory_space<vmem>>) attributes {dimension_semantics = [#tpu.dimension_semantics<parallel>, #tpu.dimension_semantics<parallel>], iteration_bounds = array<i64: 2, 2>, scalar_prefetch = 0 : i64, scratch_operands = 0 : i64, tpu.core_type = #tpu.core_type<tc>, window_params = [{transform_indices = @transform_0, window_bounds = array<i64: 1, 18, 18, 128>}, {transform_indices = @transform_1, window_bounds = array<i64: 1, 1, 128>}, {transform_indices = @transform_2, window_bounds = array<i64: 1, 1, 128>}, {pipeline_mode = #tpu.pipeline_mode<synchronous>, transform_indices = @transform_3, window_bounds = array<i64: 9, 128, 128>}, {pipeline_mode = #tpu.pipeline_mode<synchronous>, transform_indices = @transform_4, window_bounds = array<i64: 1, 1, 128>}, {transform_indices = @transform_5, window_bounds = array<i64: 1, 8, 16, 64>}, {pipeline_mode = #tpu.pipeline_mode<synchronous>, transform_indices = @transform_6, window_bounds = array<i64: 64, 128>}, {transform_indices = @transform_7, window_bounds = array<i64: 1, 8, 16, 128>}]} {
    %c8_i32 = arith.constant 8 : i32
    %0 = arith.muli %arg1, %c8_i32 : i32
    %1 = tpu.assume_multiple %0, 8 : i32
    %c0 = arith.constant 0 : index
    %2 = arith.index_cast %1 : i32 to index
    %c0_0 = arith.constant 0 : index
    %c0_1 = arith.constant 0 : index
    %3 = vector.load %arg2[%c0, %2, %c0_0, %c0_1] : memref<1x18x18x128xf32, #tpu.memory_space<vmem>>, vector<1x10x18x128xf32>
    %4 = vector.shape_cast %3 : vector<1x10x18x128xf32> to vector<10x18x128xf32>
    %c0_2 = arith.constant 0 : index
    %c0_3 = arith.constant 0 : index
    %c0_4 = arith.constant 0 : index
    %5 = vector.load %arg3[%c0_2, %c0_3, %c0_4] : memref<1x1x128xf32, #tpu.memory_space<vmem>>, vector<1x1x128xf32>
    %6 = vector.shape_cast %5 : vector<1x1x128xf32> to vector<1x128xf32>
    %7 = vector.shape_cast %6 : vector<1x128xf32> to vector<1x1x128xf32>
    %8 = vector.broadcast %7 : vector<1x1x128xf32> to vector<10x18x128xf32>
    %9 = arith.mulf %4, %8 : vector<10x18x128xf32>
    %c0_5 = arith.constant 0 : index
    %c0_6 = arith.constant 0 : index
    %c0_7 = arith.constant 0 : index
    %10 = vector.load %arg4[%c0_5, %c0_6, %c0_7] : memref<1x1x128xf32, #tpu.memory_space<vmem>>, vector<1x1x128xf32>
    %11 = vector.shape_cast %10 : vector<1x1x128xf32> to vector<1x128xf32>
    %12 = vector.shape_cast %11 : vector<1x128xf32> to vector<1x1x128xf32>
    %13 = vector.broadcast %12 : vector<1x1x128xf32> to vector<10x18x128xf32>
    %14 = arith.addf %9, %13 : vector<10x18x128xf32>
    %15 = arith.negf %14 : vector<10x18x128xf32>
    %16 = math.exp %15 : vector<10x18x128xf32>
    %cst = arith.constant 1.000000e+00 : f32
    %17 = vector.broadcast %cst : f32 to vector<10x18x128xf32>
    %18 = arith.addf %17, %16 : vector<10x18x128xf32>
    %19 = arith.divf %17, %18 : vector<10x18x128xf32>
    %20 = arith.mulf %14, %19 : vector<10x18x128xf32>
    %21 = tpu.iota {dimensions = array<i32: 0>} : vector<10x18x128xi32>
    %22 = vector.broadcast %1 : i32 to vector<10x18x128xi32>
    %23 = arith.addi %21, %22 : vector<10x18x128xi32>
    %24 = tpu.iota {dimensions = array<i32: 1>} : vector<10x18x128xi32>
    %c1_i32 = arith.constant 1 : i32
    %25 = vector.broadcast %c1_i32 : i32 to vector<10x18x128xi32>
    %26 = arith.cmpi sge, %23, %25 : vector<10x18x128xi32>
    %c16_i32 = arith.constant 16 : i32
    %27 = vector.broadcast %c16_i32 : i32 to vector<10x18x128xi32>
    %28 = arith.cmpi sle, %23, %27 : vector<10x18x128xi32>
    %29 = arith.andi %26, %28 : vector<10x18x128xi1>
    %c1_i32_8 = arith.constant 1 : i32
    %30 = vector.broadcast %c1_i32_8 : i32 to vector<10x18x128xi32>
    %31 = arith.cmpi sge, %24, %30 : vector<10x18x128xi32>
    %32 = arith.andi %29, %31 : vector<10x18x128xi1>
    %c16_i32_9 = arith.constant 16 : i32
    %33 = vector.broadcast %c16_i32_9 : i32 to vector<10x18x128xi32>
    %34 = arith.cmpi sle, %24, %33 : vector<10x18x128xi32>
    %35 = arith.andi %32, %34 : vector<10x18x128xi1>
    %cst_10 = arith.constant 0.000000e+00 : f32
    %36 = vector.broadcast %cst_10 : f32 to vector<10x18x128xf32>
    %37 = arith.select %35, %20, %36 : vector<10x18x128xi1>, vector<10x18x128xf32>
    %38 = arith.truncf %37 : vector<10x18x128xf32> to vector<10x18x128xbf16>
    %cst_11 = arith.constant 0.000000e+00 : f32
    %39 = vector.broadcast %cst_11 : f32 to vector<128x128xf32>
    %40 = vector.extract_strided_slice %38 {offsets = [0, 0, 0], sizes = [8, 16, 128], strides = [1, 1, 1]} : vector<10x18x128xbf16> to vector<8x16x128xbf16>
    %41 = vector.shape_cast %40 : vector<8x16x128xbf16> to vector<128x128xbf16>
    %c0_12 = arith.constant 0 : index
    %c0_13 = arith.constant 0 : index
    %c0_14 = arith.constant 0 : index
    %42 = vector.load %arg5[%c0_12, %c0_13, %c0_14] : memref<9x128x128xbf16, #tpu.memory_space<vmem>>, vector<1x128x128xbf16>
    %43 = vector.shape_cast %42 : vector<1x128x128xbf16> to vector<128x128xbf16>
    %cst_15 = arith.constant dense<0.000000e+00> : vector<128x128xf32>
    %44 = tpu.matmul %41, %43, %cst_15 {dimension_numbers = #tpu.dot_dimension_numbers<[1], [0], [0], [1], [0, 0, 1, 1], [], []>} : vector<128x128xbf16>, vector<128x128xbf16>, vector<128x128xf32> -> vector<128x128xf32>
    %45 = arith.addf %39, %44 : vector<128x128xf32>
    %46 = vector.extract_strided_slice %38 {offsets = [0, 1, 0], sizes = [8, 16, 128], strides = [1, 1, 1]} : vector<10x18x128xbf16> to vector<8x16x128xbf16>
    %47 = vector.shape_cast %46 : vector<8x16x128xbf16> to vector<128x128xbf16>
    %c1 = arith.constant 1 : index
    %c0_16 = arith.constant 0 : index
    %c0_17 = arith.constant 0 : index
    %48 = vector.load %arg5[%c1, %c0_16, %c0_17] : memref<9x128x128xbf16, #tpu.memory_space<vmem>>, vector<1x128x128xbf16>
    %49 = vector.shape_cast %48 : vector<1x128x128xbf16> to vector<128x128xbf16>
    %cst_18 = arith.constant dense<0.000000e+00> : vector<128x128xf32>
    %50 = tpu.matmul %47, %49, %cst_18 {dimension_numbers = #tpu.dot_dimension_numbers<[1], [0], [0], [1], [0, 0, 1, 1], [], []>} : vector<128x128xbf16>, vector<128x128xbf16>, vector<128x128xf32> -> vector<128x128xf32>
    %51 = arith.addf %45, %50 : vector<128x128xf32>
    %52 = vector.extract_strided_slice %38 {offsets = [0, 2, 0], sizes = [8, 16, 128], strides = [1, 1, 1]} : vector<10x18x128xbf16> to vector<8x16x128xbf16>
    %53 = vector.shape_cast %52 : vector<8x16x128xbf16> to vector<128x128xbf16>
    %c2 = arith.constant 2 : index
    %c0_19 = arith.constant 0 : index
    %c0_20 = arith.constant 0 : index
    %54 = vector.load %arg5[%c2, %c0_19, %c0_20] : memref<9x128x128xbf16, #tpu.memory_space<vmem>>, vector<1x128x128xbf16>
    %55 = vector.shape_cast %54 : vector<1x128x128xbf16> to vector<128x128xbf16>
    %cst_21 = arith.constant dense<0.000000e+00> : vector<128x128xf32>
    %56 = tpu.matmul %53, %55, %cst_21 {dimension_numbers = #tpu.dot_dimension_numbers<[1], [0], [0], [1], [0, 0, 1, 1], [], []>} : vector<128x128xbf16>, vector<128x128xbf16>, vector<128x128xf32> -> vector<128x128xf32>
    %57 = arith.addf %51, %56 : vector<128x128xf32>
    %58 = vector.extract_strided_slice %38 {offsets = [1, 0, 0], sizes = [8, 16, 128], strides = [1, 1, 1]} : vector<10x18x128xbf16> to vector<8x16x128xbf16>
    %59 = vector.shape_cast %58 : vector<8x16x128xbf16> to vector<128x128xbf16>
    %c3 = arith.constant 3 : index
    %c0_22 = arith.constant 0 : index
    %c0_23 = arith.constant 0 : index
    %60 = vector.load %arg5[%c3, %c0_22, %c0_23] : memref<9x128x128xbf16, #tpu.memory_space<vmem>>, vector<1x128x128xbf16>
    %61 = vector.shape_cast %60 : vector<1x128x128xbf16> to vector<128x128xbf16>
    %cst_24 = arith.constant dense<0.000000e+00> : vector<128x128xf32>
    %62 = tpu.matmul %59, %61, %cst_24 {dimension_numbers = #tpu.dot_dimension_numbers<[1], [0], [0], [1], [0, 0, 1, 1], [], []>} : vector<128x128xbf16>, vector<128x128xbf16>, vector<128x128xf32> -> vector<128x128xf32>
    %63 = arith.addf %57, %62 : vector<128x128xf32>
    %64 = vector.extract_strided_slice %38 {offsets = [1, 1, 0], sizes = [8, 16, 128], strides = [1, 1, 1]} : vector<10x18x128xbf16> to vector<8x16x128xbf16>
    %65 = vector.shape_cast %64 : vector<8x16x128xbf16> to vector<128x128xbf16>
    %c4 = arith.constant 4 : index
    %c0_25 = arith.constant 0 : index
    %c0_26 = arith.constant 0 : index
    %66 = vector.load %arg5[%c4, %c0_25, %c0_26] : memref<9x128x128xbf16, #tpu.memory_space<vmem>>, vector<1x128x128xbf16>
    %67 = vector.shape_cast %66 : vector<1x128x128xbf16> to vector<128x128xbf16>
    %cst_27 = arith.constant dense<0.000000e+00> : vector<128x128xf32>
    %68 = tpu.matmul %65, %67, %cst_27 {dimension_numbers = #tpu.dot_dimension_numbers<[1], [0], [0], [1], [0, 0, 1, 1], [], []>} : vector<128x128xbf16>, vector<128x128xbf16>, vector<128x128xf32> -> vector<128x128xf32>
    %69 = arith.addf %63, %68 : vector<128x128xf32>
    %70 = vector.extract_strided_slice %38 {offsets = [1, 2, 0], sizes = [8, 16, 128], strides = [1, 1, 1]} : vector<10x18x128xbf16> to vector<8x16x128xbf16>
    %71 = vector.shape_cast %70 : vector<8x16x128xbf16> to vector<128x128xbf16>
    %c5 = arith.constant 5 : index
    %c0_28 = arith.constant 0 : index
    %c0_29 = arith.constant 0 : index
    %72 = vector.load %arg5[%c5, %c0_28, %c0_29] : memref<9x128x128xbf16, #tpu.memory_space<vmem>>, vector<1x128x128xbf16>
    %73 = vector.shape_cast %72 : vector<1x128x128xbf16> to vector<128x128xbf16>
    %cst_30 = arith.constant dense<0.000000e+00> : vector<128x128xf32>
    %74 = tpu.matmul %71, %73, %cst_30 {dimension_numbers = #tpu.dot_dimension_numbers<[1], [0], [0], [1], [0, 0, 1, 1], [], []>} : vector<128x128xbf16>, vector<128x128xbf16>, vector<128x128xf32> -> vector<128x128xf32>
    %75 = arith.addf %69, %74 : vector<128x128xf32>
    %76 = vector.extract_strided_slice %38 {offsets = [2, 0, 0], sizes = [8, 16, 128], strides = [1, 1, 1]} : vector<10x18x128xbf16> to vector<8x16x128xbf16>
    %77 = vector.shape_cast %76 : vector<8x16x128xbf16> to vector<128x128xbf16>
    %c6 = arith.constant 6 : index
    %c0_31 = arith.constant 0 : index
    %c0_32 = arith.constant 0 : index
    %78 = vector.load %arg5[%c6, %c0_31, %c0_32] : memref<9x128x128xbf16, #tpu.memory_space<vmem>>, vector<1x128x128xbf16>
    %79 = vector.shape_cast %78 : vector<1x128x128xbf16> to vector<128x128xbf16>
    %cst_33 = arith.constant dense<0.000000e+00> : vector<128x128xf32>
    %80 = tpu.matmul %77, %79, %cst_33 {dimension_numbers = #tpu.dot_dimension_numbers<[1], [0], [0], [1], [0, 0, 1, 1], [], []>} : vector<128x128xbf16>, vector<128x128xbf16>, vector<128x128xf32> -> vector<128x128xf32>
    %81 = arith.addf %75, %80 : vector<128x128xf32>
    %82 = vector.extract_strided_slice %38 {offsets = [2, 1, 0], sizes = [8, 16, 128], strides = [1, 1, 1]} : vector<10x18x128xbf16> to vector<8x16x128xbf16>
    %83 = vector.shape_cast %82 : vector<8x16x128xbf16> to vector<128x128xbf16>
    %c7 = arith.constant 7 : index
    %c0_34 = arith.constant 0 : index
    %c0_35 = arith.constant 0 : index
    %84 = vector.load %arg5[%c7, %c0_34, %c0_35] : memref<9x128x128xbf16, #tpu.memory_space<vmem>>, vector<1x128x128xbf16>
    %85 = vector.shape_cast %84 : vector<1x128x128xbf16> to vector<128x128xbf16>
    %cst_36 = arith.constant dense<0.000000e+00> : vector<128x128xf32>
    %86 = tpu.matmul %83, %85, %cst_36 {dimension_numbers = #tpu.dot_dimension_numbers<[1], [0], [0], [1], [0, 0, 1, 1], [], []>} : vector<128x128xbf16>, vector<128x128xbf16>, vector<128x128xf32> -> vector<128x128xf32>
    %87 = arith.addf %81, %86 : vector<128x128xf32>
    %88 = vector.extract_strided_slice %38 {offsets = [2, 2, 0], sizes = [8, 16, 128], strides = [1, 1, 1]} : vector<10x18x128xbf16> to vector<8x16x128xbf16>
    %89 = vector.shape_cast %88 : vector<8x16x128xbf16> to vector<128x128xbf16>
    %c8 = arith.constant 8 : index
    %c0_37 = arith.constant 0 : index
    %c0_38 = arith.constant 0 : index
    %90 = vector.load %arg5[%c8, %c0_37, %c0_38] : memref<9x128x128xbf16, #tpu.memory_space<vmem>>, vector<1x128x128xbf16>
    %91 = vector.shape_cast %90 : vector<1x128x128xbf16> to vector<128x128xbf16>
    %cst_39 = arith.constant dense<0.000000e+00> : vector<128x128xf32>
    %92 = tpu.matmul %89, %91, %cst_39 {dimension_numbers = #tpu.dot_dimension_numbers<[1], [0], [0], [1], [0, 0, 1, 1], [], []>} : vector<128x128xbf16>, vector<128x128xbf16>, vector<128x128xf32> -> vector<128x128xf32>
    %93 = arith.addf %87, %92 : vector<128x128xf32>
    %c0_40 = arith.constant 0 : index
    %c0_41 = arith.constant 0 : index
    %c0_42 = arith.constant 0 : index
    %c0_43 = arith.constant 0 : index
    %94 = vector.load %arg7[%c0_40, %c0_41, %c0_42, %c0_43] : memref<1x8x16x64xf32, #tpu.memory_space<vmem>>, vector<1x8x16x64xf32>
    %95 = vector.shape_cast %94 : vector<1x8x16x64xf32> to vector<8x16x64xf32>
    %96 = vector.shape_cast %95 : vector<8x16x64xf32> to vector<128x64xf32>
    %97 = arith.truncf %96 : vector<128x64xf32> to vector<128x64xbf16>
    %c0_44 = arith.constant 0 : index
    %c0_45 = arith.constant 0 : index
    %98 = vector.load %arg8[%c0_44, %c0_45] : memref<64x128xbf16, #tpu.memory_space<vmem>>, vector<64x128xbf16>
    %cst_46 = arith.constant dense<0.000000e+00> : vector<128x128xf32>
    %99 = tpu.matmul %97, %98, %cst_46 {dimension_numbers = #tpu.dot_dimension_numbers<[1], [0], [0], [1], [0, 0, 1, 1], [], []>} : vector<128x64xbf16>, vector<64x128xbf16>, vector<128x128xf32> -> vector<128x128xf32>
    %100 = arith.addf %93, %99 : vector<128x128xf32>
    %c0_47 = arith.constant 0 : index
    %c0_48 = arith.constant 0 : index
    %c0_49 = arith.constant 0 : index
    %101 = vector.load %arg6[%c0_47, %c0_48, %c0_49] : memref<1x1x128xf32, #tpu.memory_space<vmem>>, vector<1x1x128xf32>
    %102 = vector.shape_cast %101 : vector<1x1x128xf32> to vector<1x128xf32>
    %103 = vector.broadcast %102 : vector<1x128xf32> to vector<128x128xf32>
    %104 = arith.addf %100, %103 : vector<128x128xf32>
    %105 = vector.shape_cast %104 : vector<128x128xf32> to vector<8x16x128xf32>
    %c0_50 = arith.constant 0 : index
    %c0_51 = arith.constant 0 : index
    %c0_52 = arith.constant 0 : index
    %c0_53 = arith.constant 0 : index
    %106 = vector.load %arg9[%c0_50, %c0_51, %c0_52, %c0_53] : memref<1x8x16x128xf32, #tpu.memory_space<vmem>>, vector<1x8x16x128xf32>
    %107 = vector.shape_cast %106 : vector<1x8x16x128xf32> to vector<8x16x128xf32>
    %108 = vector.shape_cast %105 : vector<8x16x128xf32> to vector<1x8x16x128xf32>
    tpu.vector_store %arg9[%c0_50, %c0_51, %c0_52, %c0_53], %108 {strides = array<i32>} : memref<1x8x16x128xf32, #tpu.memory_space<vmem>>, vector<1x8x16x128xf32>,
    return
  }
  func.func @transform_0(%arg0: i32, %arg1: i32) -> (i32, i32, i32, i32) {
    %c0_i32 = arith.constant 0 : i32
    %c0_i32_0 = arith.constant 0 : i32
    %c0_i32_1 = arith.constant 0 : i32
    %c0_i32_2 = arith.constant 0 : i32
    return %arg0, %c0_i32, %c0_i32_0, %c0_i32_1 : i32, i32, i32, i32
  }
  func.func @transform_1(%arg0: i32, %arg1: i32) -> (i32, i32, i32) {
    %c0_i32 = arith.constant 0 : i32
    %c0_i32_0 = arith.constant 0 : i32
    %c0_i32_1 = arith.constant 0 : i32
    return %arg0, %c0_i32, %c0_i32_0 : i32, i32, i32
  }
  func.func @transform_2(%arg0: i32, %arg1: i32) -> (i32, i32, i32) {
    %c0_i32 = arith.constant 0 : i32
    %c0_i32_0 = arith.constant 0 : i32
    %c0_i32_1 = arith.constant 0 : i32
    return %arg0, %c0_i32, %c0_i32_0 : i32, i32, i32
  }
  func.func @transform_3(%arg0: i32, %arg1: i32) -> (i32, i32, i32) {
    %c0_i32 = arith.constant 0 : i32
    %c0_i32_0 = arith.constant 0 : i32
    %c0_i32_1 = arith.constant 0 : i32
    %c0_i32_2 = arith.constant 0 : i32
    return %c0_i32, %c0_i32_0, %c0_i32_1 : i32, i32, i32
  }
  func.func @transform_4(%arg0: i32, %arg1: i32) -> (i32, i32, i32) {
    %c0_i32 = arith.constant 0 : i32
    %c0_i32_0 = arith.constant 0 : i32
    %c0_i32_1 = arith.constant 0 : i32
    %c0_i32_2 = arith.constant 0 : i32
    return %c0_i32, %c0_i32_0, %c0_i32_1 : i32, i32, i32
  }
  func.func @transform_5(%arg0: i32, %arg1: i32) -> (i32, i32, i32, i32) {
    %c0_i32 = arith.constant 0 : i32
    %c0_i32_0 = arith.constant 0 : i32
    %c0_i32_1 = arith.constant 0 : i32
    return %arg0, %arg1, %c0_i32, %c0_i32_0 : i32, i32, i32, i32
  }
  func.func @transform_6(%arg0: i32, %arg1: i32) -> (i32, i32) {
    %c0_i32 = arith.constant 0 : i32
    %c0_i32_0 = arith.constant 0 : i32
    %c0_i32_1 = arith.constant 0 : i32
    return %c0_i32, %c0_i32_0 : i32, i32
  }
  func.func @transform_7(%arg0: i32, %arg1: i32) -> (i32, i32, i32, i32) {
    %c0_i32 = arith.constant 0 : i32
    %c0_i32_0 = arith.constant 0 : i32
    %c0_i32_1 = arith.constant 0 : i32
    return %arg0, %arg1, %c0_i32, %c0_i32_0 : i32, i32, i32, i32
  }
}

</mosaic_0001>

<llo_original>
// kernel: resnet_block.4
$region0: #{resnet_block.4}
  #allocation0 [shape = 'u32[]', space=smem, size = 0x4, offset = 0x4, fixed_abs, tag = 'smem constant byte address 0x4 - core index']
  #allocation1 [shape = 'u32[144,128]{1,0:T(1,128)}', space=vmem, size = 0x12000, scoped, tag = 'internal scratch']
  #allocation2 [shape = 'f32[1,64]{1,0:T(1,128)}', space=vmem, size = 0x200, scoped, tag = 'scratch operand']
  #allocation3 [shape = 'f32[1,64]{1,0:T(1,128)}', space=vmem, size = 0x200, scoped, tag = 'scratch operand']
  %s0 = inlined_call_operand.vmem [shape: f32[2,256,64], index: 0, kind: input, shape index: {}]
  %s1 = inlined_call_operand.vmem [shape: f32[1,1,64], index: 1, kind: input, shape index: {}]
  %s2 = inlined_call_operand.vmem [shape: f32[1,1,64], index: 2, kind: input, shape index: {}]
  %s3 = inlined_call_operand.vmem [shape: f32[64,64], index: 3, kind: input, shape index: {}]
  %s4 = inlined_call_operand.vmem [shape: f32[2,1,64], index: 4, kind: output, shape index: {0}]
  %s5 = inlined_call_operand.vmem [shape: f32[2,1,64], index: 5, kind: output, shape index: {1}]
  %6 = xla_tuple %s4, %s5
  %s7 = sld [smem:[#allocation0]]
  $region65: #{resnet_block.4} parent=0
    _
  %s9 = ssub.s32 1, %s7
  %s10 = scalar_select 0, %s9, %s7
  loop: start=0, step=1, limit=6
  $region2: #{resnet_block.4} parent=0 // loop_pre_header
    _
  $region3: #{resnet_block.4} parent=0 // loop_header
    %s12 = sphi 0, %s16
    %p13 = scmp.ge.s32.totalorder %s12, 6
    %s19 = sphi 0, %s31
    %s20 = sphi 0, %s27
    %s21 = sphi 0, %s19
    %s22 = sphi 0, %s20
    %s23 = sphi 0, %s21
    %s24 = sphi 0, %s22
    %s36 = sphi 0, %s38
    %s39 = sphi 0, %s36
    %s40 = sphi 0, %s39
    %s56 = sphi 0, %s40
    %s60 = sphi 0, %s60
    %s62 = sphi 0, %s60
    %s63 = sphi 0, %s62
    %s77 = sphi 0, %s63
    %s81 = sphi 0, %s81
    %s83 = sphi 0, %s81
    %s84 = sphi 0, %s83
    %s98 = sphi 0, %s84
    %s102 = sphi 0, %s102
    %s104 = sphi 0, %s102
    %s105 = sphi 0, %s104
    %s119 = sphi 0, %s105
    %s125 = sphi 0, %s127
    %s128 = sphi 0, %s125
    %s129 = sphi 0, %s128
    %s145 = sphi 0, %s129
    %s151 = sphi 0, %s153
    %s154 = sphi 0, %s151
    %s155 = sphi 0, %s154
    %s171 = sphi 0, %s155
  $region4: #{resnet_block.4} parent=0 // loop_header_branch
    %15 = sbr.rel (%p13) target = $region8
  $region5: #{resnet_block.4} parent=0 // loop_body
    %s17 = ssub.s32 %s12, 1
    %s18 = ssub.s32 %s12, 2
    %s25 = sadd.s32 1, %s20
    %p26 = scmp.ge.s32.totalorder %s25, 2
    %s27 = scalar_select %p26, 0, %s25
    %s28 = sadd.s32 1, %s19
    %s29 = scalar_select %p26, %s28, %s19
    %p30 = scmp.ge.s32.totalorder %s29, 2
    %s31 = scalar_select %p30, 0, %s29
    %s32 = ssub.s32 %s19, %s31
    %s33 = ssub.s32 %s20, %s27
    %s34 = sor.u32 %s32, %s33
    %p35 = scmp.eq.s32.totalorder %s34, 0
    %s37 = sadd.s32 %s36, 1
    %s38 = scalar_select %p35, %s36, %s37
    %p41 = pneg %p35
    %p42 = scmp.eq.s32.totalorder %s12, 3
    %p43 = por %p41, %p42
    %p44 = scmp.ne.s32.totalorder %s36, %s39
    %p45 = scmp.eq.s32.totalorder %s12, 0
    %p46 = por %p44, %p45
    %p47 = scmp.ne.s32.totalorder %s36, %s39
    %p48 = scmp.eq.s32.totalorder %s17, 3
    %p49 = por %p47, %p48
    %p50 = scmp.ne.s32.totalorder %s39, %s40
    %p51 = scmp.eq.s32.totalorder %s17, 0
    %p52 = por %p50, %p51
    %p53 = scmp.ne.s32.totalorder %s39, %s40
    %p54 = scmp.eq.s32.totalorder %s18, 3
    %p55 = por %p53, %p54
    %p57 = scmp.ne.s32.totalorder %s40, %s56
    %p58 = scmp.eq.s32.totalorder %s18, 0
    %p59 = por %p57, %p58
    %s61 = sadd.s32 %s60, 1
    %p64 = scmp.eq.s32.totalorder %s12, 3
    %p65 = scmp.ne.s32.totalorder %s60, %s62
    %p66 = scmp.eq.s32.totalorder %s12, 0
    %p67 = por %p65, %p66
    %p68 = scmp.ne.s32.totalorder %s60, %s62
    %p69 = scmp.eq.s32.totalorder %s17, 3
    %p70 = por %p68, %p69
    %p71 = scmp.ne.s32.totalorder %s62, %s63
    %p72 = scmp.eq.s32.totalorder %s17, 0
    %p73 = por %p71, %p72
    %p74 = scmp.ne.s32.totalorder %s62, %s63
    %p75 = scmp.eq.s32.totalorder %s18, 3
    %p76 = por %p74, %p75
    %p78 = scmp.ne.s32.totalorder %s63, %s77
    %p79 = scmp.eq.s32.totalorder %s18, 0
    %p80 = por %p78, %p79
    %s82 = sadd.s32 %s81, 1
    %p85 = scmp.eq.s32.totalorder %s12, 3
    %p86 = scmp.ne.s32.totalorder %s81, %s83
    %p87 = scmp.eq.s32.totalorder %s12, 0
    %p88 = por %p86, %p87
    %p89 = scmp.ne.s32.totalorder %s81, %s83
    %p90 = scmp.eq.s32.totalorder %s17, 3
    %p91 = por %p89, %p90
    %p92 = scmp.ne.s32.totalorder %s83, %s84
    %p93 = scmp.eq.s32.totalorder %s17, 0
    %p94 = por %p92, %p93
    %p95 = scmp.ne.s32.totalorder %s83, %s84
    %p96 = scmp.eq.s32.totalorder %s18, 3
    %p97 = por %p95, %p96
    %p99 = scmp.ne.s32.totalorder %s84, %s98
    %p100 = scmp.eq.s32.totalorder %s18, 0
    %p101 = por %p99, %p100
    %s103 = sadd.s32 %s102, 1
    %p106 = scmp.eq.s32.totalorder %s12, 3
    %p107 = scmp.ne.s32.totalorder %s102, %s104
    %p108 = scmp.eq.s32.totalorder %s12, 0
    %p109 = por %p107, %p108
    %p110 = scmp.ne.s32.totalorder %s102, %s104
    %p111 = scmp.eq.s32.totalorder %s17, 3
    %p112 = por %p110, %p111
    %p113 = scmp.ne.s32.totalorder %s104, %s105
    %p114 = scmp.eq.s32.totalorder %s17, 0
    %p115 = por %p113, %p114
    %p116 = scmp.ne.s32.totalorder %s104, %s105
    %p117 = scmp.eq.s32.totalorder %s18, 3
    %p118 = por %p116, %p117
    %p120 = scmp.ne.s32.totalorder %s105, %s119
    %p121 = scmp.eq.s32.totalorder %s18, 0
    %p122 = por %p120, %p121
    %s123 = ssub.s32 %s19, %s31
    %p124 = scmp.eq.s32.totalorder %s123, 0
    %s126 = sadd.s32 %s125, 1
    %s127 = scalar_select %p124, %s125, %s126
    %p130 = pneg %p124
    %p131 = scmp.eq.s32.totalorder %s12, 3
    %p132 = por %p130, %p131
    %p133 = scmp.ne.s32.totalorder %s125, %s128
    %p134 = scmp.eq.s32.totalorder %s12, 0
    %p135 = por %p133, %p134
    %p136 = scmp.ne.s32.totalorder %s125, %s128
    %p137 = scmp.eq.s32.totalorder %s17, 3
    %p138 = por %p136, %p137
    %p139 = scmp.ne.s32.totalorder %s128, %s129
    %p140 = scmp.eq.s32.totalorder %s17, 0
    %p141 = por %p139, %p140
    %p142 = scmp.ne.s32.totalorder %s128, %s129
    %p143 = scmp.eq.s32.totalorder %s18, 3
    %p144 = por %p142, %p143
    %p146 = scmp.ne.s32.totalorder %s129, %s145
    %p147 = scmp.eq.s32.totalorder %s18, 0
    %p148 = por %p146, %p147
    %s149 = ssub.s32 %s19, %s31
    %p150 = scmp.eq.s32.totalorder %s149, 0
    %s152 = sadd.s32 %s151, 1
    %s153 = scalar_select %p150, %s151, %s152
    %p156 = pneg %p150
    %p157 = scmp.eq.s32.totalorder %s12, 3
    %p158 = por %p156, %p157
    %p159 = scmp.ne.s32.totalorder %s151, %s154
    %p160 = scmp.eq.s32.totalorder %s12, 0
    %p161 = por %p159, %p160
    %p162 = scmp.ne.s32.totalorder %s151, %s154
    %p163 = scmp.eq.s32.totalorder %s17, 3
    %p164 = por %p162, %p163
    %p165 = scmp.ne.s32.totalorder %s154, %s155
    %p166 = scmp.eq.s32.totalorder %s17, 0
    %p167 = por %p165, %p166
    %p168 = scmp.ne.s32.totalorder %s154, %s155
    %p169 = scmp.eq.s32.totalorder %s18, 3
    %p170 = por %p168, %p169
    %p172 = scmp.ne.s32.totalorder %s155, %s171
    %p173 = scmp.eq.s32.totalorder %s18, 0
    %p174 = por %p172, %p173
    %p175 = scmp.le.s32.totalorder 1, %s12
    %p176 = scmp.lt.s32.totalorder %s12, 5
    %p177 = pnand %p175, %p176
    %p178 = pneg %p177
    // Predicated region
    $region9: #{resnet_block.4} parent=5 // pred_check
      _
    $region10: #{resnet_block.4} parent=5 // pred_check_branch
      %180 = sbr.rel (%p177) target = $region12
    $region11: #{resnet_block.4} parent=5 // pred_region
      %s181 = ssub.s32 %s12, 1
      // Predicated region
      $region13: #{resnet_block.4} parent=11 // pred_check
        %p182 = pneg %p73
      $region14: #{resnet_block.4} parent=11 // pred_check_branch
        %184 = sbr.rel (%p182) target = $region16
      $region15: #{resnet_block.4} parent=11 // pred_region
        _
      $region16: #{resnet_block.4} parent=11 // pred_fallthru
        _
      // Predicated region
      $region17: #{resnet_block.4} parent=11 // pred_check
        %p185 = pneg %p94
      $region18: #{resnet_block.4} parent=11 // pred_check_branch
        %187 = sbr.rel (%p185) target = $region20
      $region19: #{resnet_block.4} parent=11 // pred_region
        _
      $region20: #{resnet_block.4} parent=11 // pred_fallthru
        _
      // Predicated region
      $region21: #{resnet_block.4} parent=11 // pred_check
        %p188 = pneg %p115
      $region22: #{resnet_block.4} parent=11 // pred_check_branch
        %190 = sbr.rel (%p188) target = $region24
      $region23: #{resnet_block.4} parent=11 // pred_region
        _
      $region24: #{resnet_block.4} parent=11 // pred_fallthru
        _
    $region12: #{resnet_block.4} parent=5 // pred_fallthru
      _
    %p191 = scmp.lt.s32.totalorder %s12, 4
    // Predicated region
    $region25: #{resnet_block.4} parent=5 // pred_check
      %p192 = pneg %p191
    $region26: #{resnet_block.4} parent=5 // pred_check_branch
      %194 = sbr.rel (%p192) target = $region28
    $region27: #{resnet_block.4} parent=5 // pred_region
      // Predicated region
      $region29: #{resnet_block.4} parent=27 // pred_check
        %p195 = pneg %p46
      $region30: #{resnet_block.4} parent=27 // pred_check_branch
        %197 = sbr.rel (%p195) target = $region32
      $region31: #{resnet_block.4} parent=27 // pred_region
        %s198 = smul.u32 16, %s20
        %p199 = scmp.lt.s32.totalorder %s19, 1
        %s200 = scalar_select %p199, %s19, 1
        %p201 = scmp.lt.s32.totalorder %s198, 31
        %s202 = scalar_select %p201, %s198, 31
        %s203 = smul.addr %s200, 32
        %s204 = sadd.s32 %s202, %s203
        %s205 = smul.addr %s204, 8
        %s206 = scalar_lea.vmem %s0, %s205
        %s207 = smul.u32 16, %s20
      $region32: #{resnet_block.4} parent=27 // pred_fallthru
        _
    $region28: #{resnet_block.4} parent=5 // pred_fallthru
      _
    %p208 = scmp.le.s32.totalorder 1, %s12
    %p209 = scmp.lt.s32.totalorder %s12, 5
    %p210 = pnand %p208, %p209
    %p211 = pneg %p210
    // Predicated region
    $region33: #{resnet_block.4} parent=5 // pred_check
      _
    $region34: #{resnet_block.4} parent=5 // pred_check_branch
      %213 = sbr.rel (%p210) target = $region36
    $region35: #{resnet_block.4} parent=5 // pred_region
      %s214 = ssub.s32 %s12, 1
      %s215 = smul.u32 16, %s22
      %p216 = scmp.lt.s32.totalorder %s21, 1
      %s217 = scalar_select %p216, %s21, 1
      %p218 = scmp.lt.s32.totalorder %s215, 31
      %s219 = scalar_select %p218, %s215, 31
      %s220 = smul.addr %s217, 32
      %s221 = sadd.s32 %s219, %s220
      %s222 = smul.addr %s221, 8
      %s223 = scalar_lea.vmem %s0, %s222
      %p224 = pneg %p52
      %p225 = pneg %p49
      %p226 = pneg %p73
      %p227 = pneg %p70
      %p228 = pneg %p94
      %p229 = pneg %p91
      %p230 = pneg %p115
      %p231 = pneg %p112
      %p232 = pneg %p141
      %p233 = pneg %p138
      %p234 = scmp.lt.s32.totalorder %s21, 1
      %s235 = scalar_select %p234, %s21, 1
      %s236 = scalar_lea.vmem %s4, %s235
      %p237 = pneg %p167
      %p238 = pneg %p164
      %p239 = scmp.lt.s32.totalorder %s21, 1
      %s240 = scalar_select %p239, %s21, 1
      %s241 = scalar_lea.vmem %s5, %s240
      %s242 = smul.u32 16, %s22
      %p243 = scmp.lt.s32.totalorder %s21, 1
      %s244 = scalar_select %p243, %s21, 1
      %p245 = scmp.lt.s32.totalorder %s242, 31
      %s246 = scalar_select %p245, %s242, 31
      %s247 = smul.addr %s244, 32
      %s248 = sadd.s32 %s246, %s247
      %s249 = smul.addr %s248, 8
      %s250 = scalar_lea.vmem %s0, %s249
      %s251 = smul.u32 16, %s22
      %p252 = scmp.lt.s32.totalorder %s21, 1
      %s253 = scalar_select %p252, %s21, 1
      %s254 = scalar_lea.vmem %s4, %s253
      %p255 = scmp.lt.s32.totalorder %s21, 1
      %s256 = scalar_select %p255, %s21, 1
      %s257 = scalar_lea.vmem %s5, %s256
      %p258 = scmp.eq.s32.totalorder %s22, 0
      // Predicated region
      $region37: #{resnet_block.4} parent=35 // pred_check
        %p259 = pneg %p258
      $region38: #{resnet_block.4} parent=35 // pred_check_branch
        %261 = sbr.rel (%p259) target = $region40
      $region39: #{resnet_block.4} parent=35 // pred_region
        %vm262 = vcmask 516096
        %263 = vst.msk [vmem:[#allocation2] sm:$0x1] %vm262, 0.0
        %264 = vst.msk [vmem:[#allocation3] sm:$0x1] %vm262, 0.0
      $region40: #{resnet_block.4} parent=35 // pred_fallthru
        _
      %v265 = vld [vmem:[%s250] sm:$0xff]
      %v266 = vld [vmem:[%s250 + $0x8] sm:$0xff]
      %v267 = vld [vmem:[%s250 + $0x10] sm:$0xff]
      %v268 = vld [vmem:[%s250 + $0x18] sm:$0xff]
      %v269 = vld [vmem:[%s250 + $0x20] sm:$0xff]
      %v270 = vld [vmem:[%s250 + $0x28] sm:$0xff]
      %v271 = vld [vmem:[%s250 + $0x30] sm:$0xff]
      %v272 = vld [vmem:[%s250 + $0x38] sm:$0xff]
      %v273 = vld [vmem:[%s250 + $0x40] sm:$0xff]
      %v274 = vld [vmem:[%s250 + $0x48] sm:$0xff]
      %v275 = vld [vmem:[%s250 + $0x50] sm:$0xff]
      %v276 = vld [vmem:[%s250 + $0x58] sm:$0xff]
      %v277 = vld [vmem:[%s250 + $0x60] sm:$0xff]
      %v278 = vld [vmem:[%s250 + $0x68] sm:$0xff]
      %v279 = vld [vmem:[%s250 + $0x70] sm:$0xff]
      %v280 = vld [vmem:[%s250 + $0x78] sm:$0xff]
      %v281 = vld [vmem:[#allocation2] sm:$0x1]
      %vm282 = vcmask 523264
      %v283 = vsel %vm282, %v265, 0.0
      %v284 = vsel %vm282, %v266, 0.0
      %v285 = vadd.f32 %v283, %v284
      %v286 = vsel %vm282, %v267, 0.0
      %v287 = vadd.f32 %v285, %v286
      %v288 = vsel %vm282, %v268, 0.0
      %v289 = vadd.f32 %v287, %v288
      %v290 = vsel %vm282, %v269, 0.0
      %v291 = vadd.f32 %v289, %v290
      %v292 = vsel %vm282, %v270, 0.0
      %v293 = vadd.f32 %v291, %v292
      %v294 = vsel %vm282, %v271, 0.0
      %v295 = vadd.f32 %v293, %v294
      %v296 = vsel %vm282, %v272, 0.0
      %v297 = vadd.f32 %v295, %v296
      %v298 = vsel %vm282, %v273, 0.0
      %v299 = vadd.f32 %v297, %v298
      %v300 = vsel %vm282, %v274, 0.0
      %v301 = vadd.f32 %v299, %v300
      %v302 = vsel %vm282, %v275, 0.0
      %v303 = vadd.f32 %v301, %v302
      %v304 = vsel %vm282, %v276, 0.0
      %v305 = vadd.f32 %v303, %v304
      %v306 = vsel %vm282, %v277, 0.0
      %v307 = vadd.f32 %v305, %v306
      %v308 = vsel %vm282, %v278, 0.0
      %v309 = vadd.f32 %v307, %v308
      %v310 = vsel %vm282, %v279, 0.0
      %v311 = vadd.f32 %v309, %v310
      %v312 = vsel %vm282, %v280, 0.0
      %v313 = vadd.f32 %v311, %v312
      %v314 = vrot.slane %v313, 4
      %v315 = vadd.f32 %v313, %v314
      %v316 = vrot.slane %v315, 2
      %v317 = vadd.f32 %v315, %v316
      %v318 = vrot.slane %v317, 1
      %v319 = vadd.f32 %v317, %v318
      %v320 = vadd.f32 %v281, %v319
      %vm321 = vcmask 516096
      %322 = vst.msk [vmem:[#allocation2] sm:$0x1] %vm321, %v320
      %v323 = vld [vmem:[#allocation3] sm:$0x1]
      %v324 = vmul.f32 %v265, %v265
      %v325 = vmul.f32 %v266, %v266
      %v326 = vmul.f32 %v267, %v267
      %v327 = vmul.f32 %v268, %v268
      %v328 = vmul.f32 %v269, %v269
      %v329 = vmul.f32 %v270, %v270
      %v330 = vmul.f32 %v271, %v271
      %v331 = vmul.f32 %v272, %v272
      %v332 = vmul.f32 %v273, %v273
      %v333 = vmul.f32 %v274, %v274
      %v334 = vmul.f32 %v275, %v275
      %v335 = vmul.f32 %v276, %v276
      %v336 = vmul.f32 %v277, %v277
      %v337 = vmul.f32 %v278, %v278
      %v338 = vmul.f32 %v279, %v279
      %v339 = vmul.f32 %v280, %v280
      %v340 = vsel %vm282, %v324, 0.0
      %v341 = vsel %vm282, %v325, 0.0
      %v342 = vadd.f32 %v340, %v341
      %v343 = vsel %vm282, %v326, 0.0
      %v344 = vadd.f32 %v342, %v343
      %v345 = vsel %vm282, %v327, 0.0
      %v346 = vadd.f32 %v344, %v345
      %v347 = vsel %vm282, %v328, 0.0
      %v348 = vadd.f32 %v346, %v347
      %v349 = vsel %vm282, %v329, 0.0
      %v350 = vadd.f32 %v348, %v349
      %v351 = vsel %vm282, %v330, 0.0
      %v352 = vadd.f32 %v350, %v351
      %v353 = vsel %vm282, %v331, 0.0
      %v354 = vadd.f32 %v352, %v353
      %v355 = vsel %vm282, %v332, 0.0
      %v356 = vadd.f32 %v354, %v355
      %v357 = vsel %vm282, %v333, 0.0
      %v358 = vadd.f32 %v356, %v357
      %v359 = vsel %vm282, %v334, 0.0
      %v360 = vadd.f32 %v358, %v359
      %v361 = vsel %vm282, %v335, 0.0
      %v362 = vadd.f32 %v360, %v361
      %v363 = vsel %vm282, %v336, 0.0
      %v364 = vadd.f32 %v362, %v363
      %v365 = vsel %vm282, %v337, 0.0
      %v366 = vadd.f32 %v364, %v365
      %v367 = vsel %vm282, %v338, 0.0
      %v368 = vadd.f32 %v366, %v367
      %v369 = vsel %vm282, %v339, 0.0
      %v370 = vadd.f32 %v368, %v369
      %v371 = vrot.slane %v370, 4
      %v372 = vadd.f32 %v370, %v371
      %v373 = vrot.slane %v372, 2
      %v374 = vadd.f32 %v372, %v373
      %v375 = vrot.slane %v374, 1
      %v376 = vadd.f32 %v374, %v375
      %v377 = vadd.f32 %v323, %v376
      %378 = vst.msk [vmem:[#allocation3] sm:$0x1] %vm321, %v377
      %p379 = scmp.eq.s32.totalorder %s22, 1
      // Predicated region
      $region41: #{resnet_block.4} parent=35 // pred_check
        %p380 = pneg %p379
      $region42: #{resnet_block.4} parent=35 // pred_check_branch
        %382 = sbr.rel (%p380) target = $region44
      $region43: #{resnet_block.4} parent=35 // pred_region
        %v383 = vld [vmem:[#allocation2] sm:$0x1]
        %v384 = vld [vmem:[%s3] sm:$0xff]
        %v385 = vld [vmem:[%s3 + $0x8] sm:$0xff]
        %v386 = vld [vmem:[%s3 + $0x10] sm:$0xff]
        %v387 = vld [vmem:[%s3 + $0x18] sm:$0xff]
        %v388 = vld [vmem:[%s3 + $0x20] sm:$0xff]
        %v389 = vld [vmem:[%s3 + $0x28] sm:$0xff]
        %v390 = vld [vmem:[%s3 + $0x30] sm:$0xff]
        %v391 = vld [vmem:[%s3 + $0x38] sm:$0xff]
        %v393 = vsel %vm282, %v383, 0
        %395 = vmatprep.subr.mxu0 0.0
        %396 = vmatpush1.msra.mxu0 0.0
        %397 = vmatprep.subr.mxu0 0.0
        %398 = vmatpush1.msra.mxu0 0.0
        %399 = vmatprep.subr.mxu0 0.0
        %400 = vmatpush1.msra.mxu0 0.0
        %401 = vmatprep.subr.mxu0 0.0
        %402 = vmatpush1.msra.mxu0 0.0
        %403 = vmatprep.subr.mxu0 0.0
        %404 = vmatpush1.msra.mxu0 0.0
        %405 = vmatprep.subr.mxu0 0.0
        %406 = vmatpush1.msra.mxu0 0.0
        %407 = vmatprep.subr.mxu0 0.0
        %408 = vmatpush1.msra.mxu0 0.0
        %409 = vmatprep.subr.mxu0 0.0
        %410 = vmatpush1.msra.mxu0 0.0
        %411 = vmatprep.subr.mxu0 0.0
        %412 = vmatpush1.msra.mxu0 %v391
        %413 = vmatprep.subr.mxu0 0.0
        %414 = vmatpush1.msra.mxu0 %v390
        %415 = vmatprep.subr.mxu0 0.0
        %416 = vmatpush1.msra.mxu0 %v389
        %417 = vmatprep.subr.mxu0 0.0
        %418 = vmatpush1.msra.mxu0 %v388
        %419 = vmatprep.subr.mxu0 0.0
        %420 = vmatpush1.msra.mxu0 %v387
        %421 = vmatprep.subr.mxu0 0.0
        %422 = vmatpush1.msra.mxu0 %v386
        %423 = vmatprep.subr.mxu0 0.0
        %424 = vmatpush1.msra.mxu0 %v385
        %425 = vmatprep.subr.mxu0 0.0
        %426 = vmatpush1.msra.mxu0 %v384
        %427 = vmatprep.subr.mxu0 0.0
        %428 = vmatpush2.msra.mxu0 0.0
        %429 = vmatprep.subr.mxu0 0.0
        %430 = vmatpush2.msra.mxu0 0.0
        %431 = vmatprep.subr.mxu0 0.0
        %432 = vmatpush2.msra.mxu0 0.0
        %433 = vmatprep.subr.mxu0 0.0
        %434 = vmatpush2.msra.mxu0 0.0
        %435 = vmatprep.subr.mxu0 0.0
        %436 = vmatpush2.msra.mxu0 0.0
        %437 = vmatprep.subr.mxu0 0.0
        %438 = vmatpush2.msra.mxu0 0.0
        %439 = vmatprep.subr.mxu0 0.0
        %440 = vmatpush2.msra.mxu0 0.0
        %441 = vmatprep.subr.mxu0 0.0
        %442 = vmatpush2.msra.mxu0 0.0
        %443 = vmatprep.subr.mxu0 0.0
        %444 = vmatpush2.msra.mxu0 0.0
        %445 = vmatprep.subr.mxu0 0.0
        %446 = vmatpush2.msra.mxu0 0.0
        %447 = vmatprep.subr.mxu0 0.0
        %448 = vmatpush2.msra.mxu0 0.0
        %449 = vmatprep.subr.mxu0 0.0
        %450 = vmatpush2.msra.mxu0 0.0
        %451 = vmatprep.subr.mxu0 0.0
        %452 = vmatpush2.msra.mxu0 0.0
        %453 = vmatprep.subr.mxu0 0.0
        %454 = vmatpush2.msra.mxu0 0.0
        %455 = vmatprep.subr.mxu0 0.0
        %456 = vmatpush2.msra.mxu0 0.0
        %457 = vmatprep.subr.mxu0 0.0
        %458 = vmatpush2.msra.mxu0 0.0
        %459 = vmatprep.mubr.f32.mxu0 0.0
        %460 = vmatmul.mubr.f32.gmra.mxu0 %v393
        %v461 = vpop.f32.mrf.mxu0
        %v462 = vadd.f32 0.0, %v461
        %v463 = vpop.f32.mrf.mxu0
        %464 = vdwg.mxu0
        %v465 = vld [vmem:[#allocation3] sm:$0x1]
        %v467 = vsel %vm282, %v465, 0
        %469 = vmatprep.subr.mxu0 0.0
        %470 = vmatpush1.msra.mxu0 0.0
        %471 = vmatprep.subr.mxu0 0.0
        %472 = vmatpush1.msra.mxu0 0.0
        %473 = vmatprep.subr.mxu0 0.0
        %474 = vmatpush1.msra.mxu0 0.0
        %475 = vmatprep.subr.mxu0 0.0
        %476 = vmatpush1.msra.mxu0 0.0
        %477 = vmatprep.subr.mxu0 0.0
        %478 = vmatpush1.msra.mxu0 0.0
        %479 = vmatprep.subr.mxu0 0.0
        %480 = vmatpush1.msra.mxu0 0.0
        %481 = vmatprep.subr.mxu0 0.0
        %482 = vmatpush1.msra.mxu0 0.0
        %483 = vmatprep.subr.mxu0 0.0
        %484 = vmatpush1.msra.mxu0 0.0
        %485 = vmatprep.subr.mxu0 0.0
        %486 = vmatpush1.msra.mxu0 %v391
        %487 = vmatprep.subr.mxu0 0.0
        %488 = vmatpush1.msra.mxu0 %v390
        %489 = vmatprep.subr.mxu0 0.0
        %490 = vmatpush1.msra.mxu0 %v389
        %491 = vmatprep.subr.mxu0 0.0
        %492 = vmatpush1.msra.mxu0 %v388
        %493 = vmatprep.subr.mxu0 0.0
        %494 = vmatpush1.msra.mxu0 %v387
        %495 = vmatprep.subr.mxu0 0.0
        %496 = vmatpush1.msra.mxu0 %v386
        %497 = vmatprep.subr.mxu0 0.0
        %498 = vmatpush1.msra.mxu0 %v385
        %499 = vmatprep.subr.mxu0 0.0
        %500 = vmatpush1.msra.mxu0 %v384
        %501 = vmatprep.subr.mxu0 0.0
        %502 = vmatpush2.msra.mxu0 0.0
        %503 = vmatprep.subr.mxu0 0.0
        %504 = vmatpush2.msra.mxu0 0.0
        %505 = vmatprep.subr.mxu0 0.0
        %506 = vmatpush2.msra.mxu0 0.0
        %507 = vmatprep.subr.mxu0 0.0
        %508 = vmatpush2.msra.mxu0 0.0
        %509 = vmatprep.subr.mxu0 0.0
        %510 = vmatpush2.msra.mxu0 0.0
        %511 = vmatprep.subr.mxu0 0.0
        %512 = vmatpush2.msra.mxu0 0.0
        %513 = vmatprep.subr.mxu0 0.0
        %514 = vmatpush2.msra.mxu0 0.0
        %515 = vmatprep.subr.mxu0 0.0
        %516 = vmatpush2.msra.mxu0 0.0
        %517 = vmatprep.subr.mxu0 0.0
        %518 = vmatpush2.msra.mxu0 0.0
        %519 = vmatprep.subr.mxu0 0.0
        %520 = vmatpush2.msra.mxu0 0.0
        %521 = vmatprep.subr.mxu0 0.0
        %522 = vmatpush2.msra.mxu0 0.0
        %523 = vmatprep.subr.mxu0 0.0
        %524 = vmatpush2.msra.mxu0 0.0
        %525 = vmatprep.subr.mxu0 0.0
        %526 = vmatpush2.msra.mxu0 0.0
        %527 = vmatprep.subr.mxu0 0.0
        %528 = vmatpush2.msra.mxu0 0.0
        %529 = vmatprep.subr.mxu0 0.0
        %530 = vmatpush2.msra.mxu0 0.0
        %531 = vmatprep.subr.mxu0 0.0
        %532 = vmatpush2.msra.mxu0 0.0
        %533 = vmatprep.mubr.f32.mxu0 0.0
        %534 = vmatmul.mubr.f32.gmra.mxu0 %v467
        %v535 = vpop.f32.mrf.mxu0
        %v536 = vadd.f32 0.0, %v535
        %v537 = vpop.f32.mrf.mxu0
        %538 = vdwg.mxu0
        %v539 = vmul.f32 %v462, %v462
        %v540 = vsub.f32 %v536, %v539
        %v541 = vadd.f32 %v540, 1e-05
        %v542 = vrsqrt.pop %v541
        %v543 = vld [vmem:[%s1] sm:$0x1]
        %v544 = vmul.f32 %v543, %v542
        %545 = vst.msk [vmem:[%s254] sm:$0x1] %vm321, %v544
        %v546 = vld [vmem:[%s2] sm:$0x1]
        %v547 = vmul.f32 %v462, %v544
        %v548 = vsub.f32 %v546, %v547
        %549 = vst.msk [vmem:[%s257] sm:$0x1] %vm321, %v548
      $region44: #{resnet_block.4} parent=35 // pred_fallthru
        _
      %p550 = scmp.lt.s32.totalorder %s21, 1
      %s551 = scalar_select %p550, %s21, 1
      %s552 = scalar_lea.vmem %s4, %s551
      %p553 = scmp.lt.s32.totalorder %s21, 1
      %s554 = scalar_select %p553, %s21, 1
      %s555 = scalar_lea.vmem %s5, %s554
      // Predicated region
      $region45: #{resnet_block.4} parent=35 // pred_check
        %p556 = pneg %p138
      $region46: #{resnet_block.4} parent=35 // pred_check_branch
        %558 = sbr.rel (%p556) target = $region48
      $region47: #{resnet_block.4} parent=35 // pred_region
        _
      $region48: #{resnet_block.4} parent=35 // pred_fallthru
        _
      // Predicated region
      $region49: #{resnet_block.4} parent=35 // pred_check
        %p559 = pneg %p164
      $region50: #{resnet_block.4} parent=35 // pred_check_branch
        %561 = sbr.rel (%p559) target = $region52
      $region51: #{resnet_block.4} parent=35 // pred_region
        _
      $region52: #{resnet_block.4} parent=35 // pred_fallthru
        _
    $region36: #{resnet_block.4} parent=5 // pred_fallthru
      _
    %p562 = scmp.le.s32.totalorder 2, %s12
    // Predicated region
    $region53: #{resnet_block.4} parent=5 // pred_check
      %p563 = pneg %p562
    $region54: #{resnet_block.4} parent=5 // pred_check_branch
      %565 = sbr.rel (%p563) target = $region56
    $region55: #{resnet_block.4} parent=5 // pred_region
      %s566 = ssub.s32 %s12, 2
      // Predicated region
      $region57: #{resnet_block.4} parent=55 // pred_check
        %p567 = pneg %p144
      $region58: #{resnet_block.4} parent=55 // pred_check_branch
        %569 = sbr.rel (%p567) target = $region60
      $region59: #{resnet_block.4} parent=55 // pred_region
        %p570 = scmp.lt.s32.totalorder %s23, 1
        %s571 = scalar_select %p570, %s23, 1
        %s572 = scalar_lea.vmem %s4, %s571
      $region60: #{resnet_block.4} parent=55 // pred_fallthru
        _
      // Predicated region
      $region61: #{resnet_block.4} parent=55 // pred_check
        %p573 = pneg %p170
      $region62: #{resnet_block.4} parent=55 // pred_check_branch
        %575 = sbr.rel (%p573) target = $region64
      $region63: #{resnet_block.4} parent=55 // pred_region
        %p576 = scmp.lt.s32.totalorder %s23, 1
        %s577 = scalar_select %p576, %s23, 1
        %s578 = scalar_lea.vmem %s5, %s577
      $region64: #{resnet_block.4} parent=55 // pred_fallthru
        _
    $region56: #{resnet_block.4} parent=5 // pred_fallthru
      _
  $region6: #{resnet_block.4} parent=0 // loop_footer
    %s16 = sadd.s32 1, %s12
  $region7: #{resnet_block.4} parent=0 // loop_footer_branch
    %11 = sbr.rel target = $region3
  $region8: #{resnet_block.4} parent=0 // loop_exit
    _

// kernel: resnet_block.6
$region0: #{resnet_block.6}
  #allocation0 [shape = 'u32[]', space=smem, size = 0x4, offset = 0x4, fixed_abs, tag = 'smem constant byte address 0x4 - core index']
  #allocation1 [shape = 'u32[144,128]{1,0:T(1,128)}', space=vmem, size = 0x12000, scoped, tag = 'internal scratch']
  #allocation2 [shape = 'f32[1,128]{1,0:T(1,128)}', space=vmem, size = 0x200, scoped, tag = 'scratch operand']
  #allocation3 [shape = 'f32[1,128]{1,0:T(1,128)}', space=vmem, size = 0x200, scoped, tag = 'scratch operand']
  %s0 = inlined_call_operand.vmem [shape: f32[2,256,128], index: 0, kind: input, shape index: {}]
  %s1 = inlined_call_operand.vmem [shape: f32[1,1,128], index: 1, kind: input, shape index: {}]
  %s2 = inlined_call_operand.vmem [shape: f32[1,1,128], index: 2, kind: input, shape index: {}]
  %s3 = inlined_call_operand.vmem [shape: f32[128,128], index: 3, kind: input, shape index: {}]
  %s4 = inlined_call_operand.vmem [shape: f32[2,1,128], index: 4, kind: output, shape index: {0}]
  %s5 = inlined_call_operand.vmem [shape: f32[2,1,128], index: 5, kind: output, shape index: {1}]
  %6 = xla_tuple %s4, %s5
  %s7 = sld [smem:[#allocation0]]
  $region65: #{resnet_block.6} parent=0
    _
  %s9 = ssub.s32 1, %s7
  %s10 = scalar_select 0, %s9, %s7
  loop: start=0, step=1, limit=6
  $region2: #{resnet_block.6} parent=0 // loop_pre_header
    _
  $region3: #{resnet_block.6} parent=0 // loop_header
    %s12 = sphi 0, %s16
    %p13 = scmp.ge.s32.totalorder %s12, 6
    %s19 = sphi 0, %s31
    %s20 = sphi 0, %s27
    %s21 = sphi 0, %s19
    %s22 = sphi 0, %s20
    %s23 = sphi 0, %s21
    %s24 = sphi 0, %s22
    %s36 = sphi 0, %s38
    %s39 = sphi 0, %s36
    %s40 = sphi 0, %s39
    %s56 = sphi 0, %s40
    %s60 = sphi 0, %s60
    %s62 = sphi 0, %s60
    %s63 = sphi 0, %s62
    %s77 = sphi 0, %s63
    %s81 = sphi 0, %s81
    %s83 = sphi 0, %s81
    %s84 = sphi 0, %s83
    %s98 = sphi 0, %s84
    %s102 = sphi 0, %s102
    %s104 = sphi 0, %s102
    %s105 = sphi 0, %s104
    %s119 = sphi 0, %s105
    %s125 = sphi 0, %s127
    %s128 = sphi 0, %s125
    %s129 = sphi 0, %s128
    %s145 = sphi 0, %s129
    %s151 = sphi 0, %s153
    %s154 = sphi 0, %s151
    %s155 = sphi 0, %s154
    %s171 = sphi 0, %s155
  $region4: #{resnet_block.6} parent=0 // loop_header_branch
    %15 = sbr.rel (%p13) target = $region8
  $region5: #{resnet_block.6} parent=0 // loop_body
    %s17 = ssub.s32 %s12, 1
    %s18 = ssub.s32 %s12, 2
    %s25 = sadd.s32 1, %s20
    %p26 = scmp.ge.s32.totalorder %s25, 2
    %s27 = scalar_select %p26, 0, %s25
    %s28 = sadd.s32 1, %s19
    %s29 = scalar_select %p26, %s28, %s19
    %p30 = scmp.ge.s32.totalorder %s29, 2
    %s31 = scalar_select %p30, 0, %s29
    %s32 = ssub.s32 %s19, %s31
    %s33 = ssub.s32 %s20, %s27
    %s34 = sor.u32 %s32, %s33
    %p35 = scmp.eq.s32.totalorder %s34, 0
    %s37 = sadd.s32 %s36, 1
    %s38 = scalar_select %p35, %s36, %s37
    %p41 = pneg %p35
    %p42 = scmp.eq.s32.totalorder %s12, 3
    %p43 = por %p41, %p42
    %p44 = scmp.ne.s32.totalorder %s36, %s39
    %p45 = scmp.eq.s32.totalorder %s12, 0
    %p46 = por %p44, %p45
    %p47 = scmp.ne.s32.totalorder %s36, %s39
    %p48 = scmp.eq.s32.totalorder %s17, 3
    %p49 = por %p47, %p48
    %p50 = scmp.ne.s32.totalorder %s39, %s40
    %p51 = scmp.eq.s32.totalorder %s17, 0
    %p52 = por %p50, %p51
    %p53 = scmp.ne.s32.totalorder %s39, %s40
    %p54 = scmp.eq.s32.totalorder %s18, 3
    %p55 = por %p53, %p54
    %p57 = scmp.ne.s32.totalorder %s40, %s56
    %p58 = scmp.eq.s32.totalorder %s18, 0
    %p59 = por %p57, %p58
    %s61 = sadd.s32 %s60, 1
    %p64 = scmp.eq.s32.totalorder %s12, 3
    %p65 = scmp.ne.s32.totalorder %s60, %s62
    %p66 = scmp.eq.s32.totalorder %s12, 0
    %p67 = por %p65, %p66
    %p68 = scmp.ne.s32.totalorder %s60, %s62
    %p69 = scmp.eq.s32.totalorder %s17, 3
    %p70 = por %p68, %p69
    %p71 = scmp.ne.s32.totalorder %s62, %s63
    %p72 = scmp.eq.s32.totalorder %s17, 0
    %p73 = por %p71, %p72
    %p74 = scmp.ne.s32.totalorder %s62, %s63
    %p75 = scmp.eq.s32.totalorder %s18, 3
    %p76 = por %p74, %p75
    %p78 = scmp.ne.s32.totalorder %s63, %s77
    %p79 = scmp.eq.s32.totalorder %s18, 0
    %p80 = por %p78, %p79
    %s82 = sadd.s32 %s81, 1
    %p85 = scmp.eq.s32.totalorder %s12, 3
    %p86 = scmp.ne.s32.totalorder %s81, %s83
    %p87 = scmp.eq.s32.totalorder %s12, 0
    %p88 = por %p86, %p87
    %p89 = scmp.ne.s32.totalorder %s81, %s83
    %p90 = scmp.eq.s32.totalorder %s17, 3
    %p91 = por %p89, %p90
    %p92 = scmp.ne.s32.totalorder %s83, %s84
    %p93 = scmp.eq.s32.totalorder %s17, 0
    %p94 = por %p92, %p93
    %p95 = scmp.ne.s32.totalorder %s83, %s84
    %p96 = scmp.eq.s32.totalorder %s18, 3
    %p97 = por %p95, %p96
    %p99 = scmp.ne.s32.totalorder %s84, %s98
    %p100 = scmp.eq.s32.totalorder %s18, 0
    %p101 = por %p99, %p100
    %s103 = sadd.s32 %s102, 1
    %p106 = scmp.eq.s32.totalorder %s12, 3
    %p107 = scmp.ne.s32.totalorder %s102, %s104
    %p108 = scmp.eq.s32.totalorder %s12, 0
    %p109 = por %p107, %p108
    %p110 = scmp.ne.s32.totalorder %s102, %s104
    %p111 = scmp.eq.s32.totalorder %s17, 3
    %p112 = por %p110, %p111
    %p113 = scmp.ne.s32.totalorder %s104, %s105
    %p114 = scmp.eq.s32.totalorder %s17, 0
    %p115 = por %p113, %p114
    %p116 = scmp.ne.s32.totalorder %s104, %s105
    %p117 = scmp.eq.s32.totalorder %s18, 3
    %p118 = por %p116, %p117
    %p120 = scmp.ne.s32.totalorder %s105, %s119
    %p121 = scmp.eq.s32.totalorder %s18, 0
    %p122 = por %p120, %p121
    %s123 = ssub.s32 %s19, %s31
    %p124 = scmp.eq.s32.totalorder %s123, 0
    %s126 = sadd.s32 %s125, 1
    %s127 = scalar_select %p124, %s125, %s126
    %p130 = pneg %p124
    %p131 = scmp.eq.s32.totalorder %s12, 3
    %p132 = por %p130, %p131
    %p133 = scmp.ne.s32.totalorder %s125, %s128
    %p134 = scmp.eq.s32.totalorder %s12, 0
    %p135 = por %p133, %p134
    %p136 = scmp.ne.s32.totalorder %s125, %s128
    %p137 = scmp.eq.s32.totalorder %s17, 3
    %p138 = por %p136, %p137
    %p139 = scmp.ne.s32.totalorder %s128, %s129
    %p140 = scmp.eq.s32.totalorder %s17, 0
    %p141 = por %p139, %p140
    %p142 = scmp.ne.s32.totalorder %s128, %s129
    %p143 = scmp.eq.s32.totalorder %s18, 3
    %p144 = por %p142, %p143
    %p146 = scmp.ne.s32.totalorder %s129, %s145
    %p147 = scmp.eq.s32.totalorder %s18, 0
    %p148 = por %p146, %p147
    %s149 = ssub.s32 %s19, %s31
    %p150 = scmp.eq.s32.totalorder %s149, 0
    %s152 = sadd.s32 %s151, 1
    %s153 = scalar_select %p150, %s151, %s152
    %p156 = pneg %p150
    %p157 = scmp.eq.s32.totalorder %s12, 3
    %p158 = por %p156, %p157
    %p159 = scmp.ne.s32.totalorder %s151, %s154
    %p160 = scmp.eq.s32.totalorder %s12, 0
    %p161 = por %p159, %p160
    %p162 = scmp.ne.s32.totalorder %s151, %s154
    %p163 = scmp.eq.s32.totalorder %s17, 3
    %p164 = por %p162, %p163
    %p165 = scmp.ne.s32.totalorder %s154, %s155
    %p166 = scmp.eq.s32.totalorder %s17, 0
    %p167 = por %p165, %p166
    %p168 = scmp.ne.s32.totalorder %s154, %s155
    %p169 = scmp.eq.s32.totalorder %s18, 3
    %p170 = por %p168, %p169
    %p172 = scmp.ne.s32.totalorder %s155, %s171
    %p173 = scmp.eq.s32.totalorder %s18, 0
    %p174 = por %p172, %p173
    %p175 = scmp.le.s32.totalorder 1, %s12
    %p176 = scmp.lt.s32.totalorder %s12, 5
    %p177 = pnand %p175, %p176
    %p178 = pneg %p177
    // Predicated region
    $region9: #{resnet_block.6} parent=5 // pred_check
      _
    $region10: #{resnet_block.6} parent=5 // pred_check_branch
      %180 = sbr.rel (%p177) target = $region12
    $region11: #{resnet_block.6} parent=5 // pred_region
      %s181 = ssub.s32 %s12, 1
      // Predicated region
      $region13: #{resnet_block.6} parent=11 // pred_check
        %p182 = pneg %p73
      $region14: #{resnet_block.6} parent=11 // pred_check_branch
        %184 = sbr.rel (%p182) target = $region16
      $region15: #{resnet_block.6} parent=11 // pred_region
        _
      $region16: #{resnet_block.6} parent=11 // pred_fallthru
        _
      // Predicated region
      $region17: #{resnet_block.6} parent=11 // pred_check
        %p185 = pneg %p94
      $region18: #{resnet_block.6} parent=11 // pred_check_branch
        %187 = sbr.rel (%p185) target = $region20
      $region19: #{resnet_block.6} parent=11 // pred_region
        _
      $region20: #{resnet_block.6} parent=11 // pred_fallthru
        _
      // Predicated region
      $region21: #{resnet_block.6} parent=11 // pred_check
        %p188 = pneg %p115
      $region22: #{resnet_block.6} parent=11 // pred_check_branch
        %190 = sbr.rel (%p188) target = $region24
      $region23: #{resnet_block.6} parent=11 // pred_region
        _
      $region24: #{resnet_block.6} parent=11 // pred_fallthru
        _
    $region12: #{resnet_block.6} parent=5 // pred_fallthru
      _
    %p191 = scmp.lt.s32.totalorder %s12, 4
    // Predicated region
    $region25: #{resnet_block.6} parent=5 // pred_check
      %p192 = pneg %p191
    $region26: #{resnet_block.6} parent=5 // pred_check_branch
      %194 = sbr.rel (%p192) target = $region28
    $region27: #{resnet_block.6} parent=5 // pred_region
      // Predicated region
      $region29: #{resnet_block.6} parent=27 // pred_check
        %p195 = pneg %p46
      $region30: #{resnet_block.6} parent=27 // pred_check_branch
        %197 = sbr.rel (%p195) target = $region32
      $region31: #{resnet_block.6} parent=27 // pred_region
        %s198 = smul.u32 16, %s20
        %p199 = scmp.lt.s32.totalorder %s19, 1
        %s200 = scalar_select %p199, %s19, 1
        %p201 = scmp.lt.s32.totalorder %s198, 31
        %s202 = scalar_select %p201, %s198, 31
        %s203 = smul.addr %s200, 32
        %s204 = sadd.s32 %s202, %s203
        %s205 = smul.addr %s204, 8
        %s206 = scalar_lea.vmem %s0, %s205
        %s207 = smul.u32 16, %s20
      $region32: #{resnet_block.6} parent=27 // pred_fallthru
        _
    $region28: #{resnet_block.6} parent=5 // pred_fallthru
      _
    %p208 = scmp.le.s32.totalorder 1, %s12
    %p209 = scmp.lt.s32.totalorder %s12, 5
    %p210 = pnand %p208, %p209
    %p211 = pneg %p210
    // Predicated region
    $region33: #{resnet_block.6} parent=5 // pred_check
      _
    $region34: #{resnet_block.6} parent=5 // pred_check_branch
      %213 = sbr.rel (%p210) target = $region36
    $region35: #{resnet_block.6} parent=5 // pred_region
      %s214 = ssub.s32 %s12, 1
      %s215 = smul.u32 16, %s22
      %p216 = scmp.lt.s32.totalorder %s21, 1
      %s217 = scalar_select %p216, %s21, 1
      %p218 = scmp.lt.s32.totalorder %s215, 31
      %s219 = scalar_select %p218, %s215, 31
      %s220 = smul.addr %s217, 32
      %s221 = sadd.s32 %s219, %s220
      %s222 = smul.addr %s221, 8
      %s223 = scalar_lea.vmem %s0, %s222
      %p224 = pneg %p52
      %p225 = pneg %p49
      %p226 = pneg %p73
      %p227 = pneg %p70
      %p228 = pneg %p94
      %p229 = pneg %p91
      %p230 = pneg %p115
      %p231 = pneg %p112
      %p232 = pneg %p141
      %p233 = pneg %p138
      %p234 = scmp.lt.s32.totalorder %s21, 1
      %s235 = scalar_select %p234, %s21, 1
      %s236 = scalar_lea.vmem %s4, %s235
      %p237 = pneg %p167
      %p238 = pneg %p164
      %p239 = scmp.lt.s32.totalorder %s21, 1
      %s240 = scalar_select %p239, %s21, 1
      %s241 = scalar_lea.vmem %s5, %s240
      %s242 = smul.u32 16, %s22
      %p243 = scmp.lt.s32.totalorder %s21, 1
      %s244 = scalar_select %p243, %s21, 1
      %p245 = scmp.lt.s32.totalorder %s242, 31
      %s246 = scalar_select %p245, %s242, 31
      %s247 = smul.addr %s244, 32
      %s248 = sadd.s32 %s246, %s247
      %s249 = smul.addr %s248, 8
      %s250 = scalar_lea.vmem %s0, %s249
      %s251 = smul.u32 16, %s22
      %p252 = scmp.lt.s32.totalorder %s21, 1
      %s253 = scalar_select %p252, %s21, 1
      %s254 = scalar_lea.vmem %s4, %s253
      %p255 = scmp.lt.s32.totalorder %s21, 1
      %s256 = scalar_select %p255, %s21, 1
      %s257 = scalar_lea.vmem %s5, %s256
      %p258 = scmp.eq.s32.totalorder %s22, 0
      // Predicated region
      $region37: #{resnet_block.6} parent=35 // pred_check
        %p259 = pneg %p258
      $region38: #{resnet_block.6} parent=35 // pred_check_branch
        %261 = sbr.rel (%p259) target = $region40
      $region39: #{resnet_block.6} parent=35 // pred_region
        %262 = vst [vmem:[#allocation2] sm:$0x1] 0.0
        %263 = vst [vmem:[#allocation3] sm:$0x1] 0.0
      $region40: #{resnet_block.6} parent=35 // pred_fallthru
        _
      %v264 = vld [vmem:[%s250] sm:$0xff]
      %v265 = vld [vmem:[%s250 + $0x8] sm:$0xff]
      %v266 = vld [vmem:[%s250 + $0x10] sm:$0xff]
      %v267 = vld [vmem:[%s250 + $0x18] sm:$0xff]
      %v268 = vld [vmem:[%s250 + $0x20] sm:$0xff]
      %v269 = vld [vmem:[%s250 + $0x28] sm:$0xff]
      %v270 = vld [vmem:[%s250 + $0x30] sm:$0xff]
      %v271 = vld [vmem:[%s250 + $0x38] sm:$0xff]
      %v272 = vld [vmem:[%s250 + $0x40] sm:$0xff]
      %v273 = vld [vmem:[%s250 + $0x48] sm:$0xff]
      %v274 = vld [vmem:[%s250 + $0x50] sm:$0xff]
      %v275 = vld [vmem:[%s250 + $0x58] sm:$0xff]
      %v276 = vld [vmem:[%s250 + $0x60] sm:$0xff]
      %v277 = vld [vmem:[%s250 + $0x68] sm:$0xff]
      %v278 = vld [vmem:[%s250 + $0x70] sm:$0xff]
      %v279 = vld [vmem:[%s250 + $0x78] sm:$0xff]
      %v280 = vld [vmem:[#allocation2] sm:$0x1]
      %v281 = vadd.f32 %v264, %v265
      %v282 = vadd.f32 %v281, %v266
      %v283 = vadd.f32 %v282, %v267
      %v284 = vadd.f32 %v283, %v268
      %v285 = vadd.f32 %v284, %v269
      %v286 = vadd.f32 %v285, %v270
      %v287 = vadd.f32 %v286, %v271
      %v288 = vadd.f32 %v287, %v272
      %v289 = vadd.f32 %v288, %v273
      %v290 = vadd.f32 %v289, %v274
      %v291 = vadd.f32 %v290, %v275
      %v292 = vadd.f32 %v291, %v276
      %v293 = vadd.f32 %v292, %v277
      %v294 = vadd.f32 %v293, %v278
      %v295 = vadd.f32 %v294, %v279
      %v296 = vrot.slane %v295, 4
      %v297 = vadd.f32 %v295, %v296
      %v298 = vrot.slane %v297, 2
      %v299 = vadd.f32 %v297, %v298
      %v300 = vrot.slane %v299, 1
      %v301 = vadd.f32 %v299, %v300
      %v302 = vadd.f32 %v280, %v301
      %303 = vst [vmem:[#allocation2] sm:$0x1] %v302
      %v304 = vld [vmem:[#allocation3] sm:$0x1]
      %v305 = vmul.f32 %v264, %v264
      %v306 = vmul.f32 %v265, %v265
      %v307 = vmul.f32 %v266, %v266
      %v308 = vmul.f32 %v267, %v267
      %v309 = vmul.f32 %v268, %v268
      %v310 = vmul.f32 %v269, %v269
      %v311 = vmul.f32 %v270, %v270
      %v312 = vmul.f32 %v271, %v271
      %v313 = vmul.f32 %v272, %v272
      %v314 = vmul.f32 %v273, %v273
      %v315 = vmul.f32 %v274, %v274
      %v316 = vmul.f32 %v275, %v275
      %v317 = vmul.f32 %v276, %v276
      %v318 = vmul.f32 %v277, %v277
      %v319 = vmul.f32 %v278, %v278
      %v320 = vmul.f32 %v279, %v279
      %v321 = vadd.f32 %v305, %v306
      %v322 = vadd.f32 %v321, %v307
      %v323 = vadd.f32 %v322, %v308
      %v324 = vadd.f32 %v323, %v309
      %v325 = vadd.f32 %v324, %v310
      %v326 = vadd.f32 %v325, %v311
      %v327 = vadd.f32 %v326, %v312
      %v328 = vadd.f32 %v327, %v313
      %v329 = vadd.f32 %v328, %v314
      %v330 = vadd.f32 %v329, %v315
      %v331 = vadd.f32 %v330, %v316
      %v332 = vadd.f32 %v331, %v317
      %v333 = vadd.f32 %v332, %v318
      %v334 = vadd.f32 %v333, %v319
      %v335 = vadd.f32 %v334, %v320
      %v336 = vrot.slane %v335, 4
      %v337 = vadd.f32 %v335, %v336
      %v338 = vrot.slane %v337, 2
      %v339 = vadd.f32 %v337, %v338
      %v340 = vrot.slane %v339, 1
      %v341 = vadd.f32 %v339, %v340
      %v342 = vadd.f32 %v304, %v341
      %343 = vst [vmem:[#allocation3] sm:$0x1] %v342
      %p344 = scmp.eq.s32.totalorder %s22, 1
      // Predicated region
      $region41: #{resnet_block.6} parent=35 // pred_check
        %p345 = pneg %p344
      $region42: #{resnet_block.6} parent=35 // pred_check_branch
        %347 = sbr.rel (%p345) target = $region44
      $region43: #{resnet_block.6} parent=35 // pred_region
        %v348 = vld [vmem:[#allocation2] sm:$0x1]
        %v349 = vld [vmem:[%s3] sm:$0xff]
        %v350 = vld [vmem:[%s3 + $0x8] sm:$0xff]
        %v351 = vld [vmem:[%s3 + $0x10] sm:$0xff]
        %v352 = vld [vmem:[%s3 + $0x18] sm:$0xff]
        %v353 = vld [vmem:[%s3 + $0x20] sm:$0xff]
        %v354 = vld [vmem:[%s3 + $0x28] sm:$0xff]
        %v355 = vld [vmem:[%s3 + $0x30] sm:$0xff]
        %v356 = vld [vmem:[%s3 + $0x38] sm:$0xff]
        %v357 = vld [vmem:[%s3 + $0x40] sm:$0xff]
        %v358 = vld [vmem:[%s3 + $0x48] sm:$0xff]
        %v359 = vld [vmem:[%s3 + $0x50] sm:$0xff]
        %v360 = vld [vmem:[%s3 + $0x58] sm:$0xff]
        %v361 = vld [vmem:[%s3 + $0x60] sm:$0xff]
        %v362 = vld [vmem:[%s3 + $0x68] sm:$0xff]
        %v363 = vld [vmem:[%s3 + $0x70] sm:$0xff]
        %v364 = vld [vmem:[%s3 + $0x78] sm:$0xff]
        %365 = vmatprep.subr.mxu0 0.0
        %366 = vmatpush1.msra.mxu0 %v364
        %367 = vmatprep.subr.mxu0 0.0
        %368 = vmatpush1.msra.mxu0 %v363
        %369 = vmatprep.subr.mxu0 0.0
        %370 = vmatpush1.msra.mxu0 %v362
        %371 = vmatprep.subr.mxu0 0.0
        %372 = vmatpush1.msra.mxu0 %v361
        %373 = vmatprep.subr.mxu0 0.0
        %374 = vmatpush1.msra.mxu0 %v360
        %375 = vmatprep.subr.mxu0 0.0
        %376 = vmatpush1.msra.mxu0 %v359
        %377 = vmatprep.subr.mxu0 0.0
        %378 = vmatpush1.msra.mxu0 %v358
        %379 = vmatprep.subr.mxu0 0.0
        %380 = vmatpush1.msra.mxu0 %v357
        %381 = vmatprep.subr.mxu0 0.0
        %382 = vmatpush1.msra.mxu0 %v356
        %383 = vmatprep.subr.mxu0 0.0
        %384 = vmatpush1.msra.mxu0 %v355
        %385 = vmatprep.subr.mxu0 0.0
        %386 = vmatpush1.msra.mxu0 %v354
        %387 = vmatprep.subr.mxu0 0.0
        %388 = vmatpush1.msra.mxu0 %v353
        %389 = vmatprep.subr.mxu0 0.0
        %390 = vmatpush1.msra.mxu0 %v352
        %391 = vmatprep.subr.mxu0 0.0
        %392 = vmatpush1.msra.mxu0 %v351
        %393 = vmatprep.subr.mxu0 0.0
        %394 = vmatpush1.msra.mxu0 %v350
        %395 = vmatprep.subr.mxu0 0.0
        %396 = vmatpush1.msra.mxu0 %v349
        %397 = vmatprep.subr.mxu0 0.0
        %398 = vmatpush2.msra.mxu0 0.0
        %399 = vmatprep.subr.mxu0 0.0
        %400 = vmatpush2.msra.mxu0 0.0
        %401 = vmatprep.subr.mxu0 0.0
        %402 = vmatpush2.msra.mxu0 0.0
        %403 = vmatprep.subr.mxu0 0.0
        %404 = vmatpush2.msra.mxu0 0.0
        %405 = vmatprep.subr.mxu0 0.0
        %406 = vmatpush2.msra.mxu0 0.0
        %407 = vmatprep.subr.mxu0 0.0
        %408 = vmatpush2.msra.mxu0 0.0
        %409 = vmatprep.subr.mxu0 0.0
        %410 = vmatpush2.msra.mxu0 0.0
        %411 = vmatprep.subr.mxu0 0.0
        %412 = vmatpush2.msra.mxu0 0.0
        %413 = vmatprep.subr.mxu0 0.0
        %414 = vmatpush2.msra.mxu0 0.0
        %415 = vmatprep.subr.mxu0 0.0
        %416 = vmatpush2.msra.mxu0 0.0
        %417 = vmatprep.subr.mxu0 0.0
        %418 = vmatpush2.msra.mxu0 0.0
        %419 = vmatprep.subr.mxu0 0.0
        %420 = vmatpush2.msra.mxu0 0.0
        %421 = vmatprep.subr.mxu0 0.0
        %422 = vmatpush2.msra.mxu0 0.0
        %423 = vmatprep.subr.mxu0 0.0
        %424 = vmatpush2.msra.mxu0 0.0
        %425 = vmatprep.subr.mxu0 0.0
        %426 = vmatpush2.msra.mxu0 0.0
        %427 = vmatprep.subr.mxu0 0.0
        %428 = vmatpush2.msra.mxu0 0.0
        %429 = vmatprep.mubr.f32.mxu0 0.0
        %430 = vmatmul.mubr.f32.gmra.mxu0 %v348
        %v431 = vpop.f32.mrf.mxu0
        %v432 = vadd.f32 0.0, %v431
        %v433 = vpop.f32.mrf.mxu0
        %434 = vdwg.mxu0
        %v435 = vld [vmem:[#allocation3] sm:$0x1]
        %436 = vmatprep.subr.mxu0 0.0
        %437 = vmatpush1.msra.mxu0 %v364
        %438 = vmatprep.subr.mxu0 0.0
        %439 = vmatpush1.msra.mxu0 %v363
        %440 = vmatprep.subr.mxu0 0.0
        %441 = vmatpush1.msra.mxu0 %v362
        %442 = vmatprep.subr.mxu0 0.0
        %443 = vmatpush1.msra.mxu0 %v361
        %444 = vmatprep.subr.mxu0 0.0
        %445 = vmatpush1.msra.mxu0 %v360
        %446 = vmatprep.subr.mxu0 0.0
        %447 = vmatpush1.msra.mxu0 %v359
        %448 = vmatprep.subr.mxu0 0.0
        %449 = vmatpush1.msra.mxu0 %v358
        %450 = vmatprep.subr.mxu0 0.0
        %451 = vmatpush1.msra.mxu0 %v357
        %452 = vmatprep.subr.mxu0 0.0
        %453 = vmatpush1.msra.mxu0 %v356
        %454 = vmatprep.subr.mxu0 0.0
        %455 = vmatpush1.msra.mxu0 %v355
        %456 = vmatprep.subr.mxu0 0.0
        %457 = vmatpush1.msra.mxu0 %v354
        %458 = vmatprep.subr.mxu0 0.0
        %459 = vmatpush1.msra.mxu0 %v353
        %460 = vmatprep.subr.mxu0 0.0
        %461 = vmatpush1.msra.mxu0 %v352
        %462 = vmatprep.subr.mxu0 0.0
        %463 = vmatpush1.msra.mxu0 %v351
        %464 = vmatprep.subr.mxu0 0.0
        %465 = vmatpush1.msra.mxu0 %v350
        %466 = vmatprep.subr.mxu0 0.0
        %467 = vmatpush1.msra.mxu0 %v349
        %468 = vmatprep.subr.mxu0 0.0
        %469 = vmatpush2.msra.mxu0 0.0
        %470 = vmatprep.subr.mxu0 0.0
        %471 = vmatpush2.msra.mxu0 0.0
        %472 = vmatprep.subr.mxu0 0.0
        %473 = vmatpush2.msra.mxu0 0.0
        %474 = vmatprep.subr.mxu0 0.0
        %475 = vmatpush2.msra.mxu0 0.0
        %476 = vmatprep.subr.mxu0 0.0
        %477 = vmatpush2.msra.mxu0 0.0
        %478 = vmatprep.subr.mxu0 0.0
        %479 = vmatpush2.msra.mxu0 0.0
        %480 = vmatprep.subr.mxu0 0.0
        %481 = vmatpush2.msra.mxu0 0.0
        %482 = vmatprep.subr.mxu0 0.0
        %483 = vmatpush2.msra.mxu0 0.0
        %484 = vmatprep.subr.mxu0 0.0
        %485 = vmatpush2.msra.mxu0 0.0
        %486 = vmatprep.subr.mxu0 0.0
        %487 = vmatpush2.msra.mxu0 0.0
        %488 = vmatprep.subr.mxu0 0.0
        %489 = vmatpush2.msra.mxu0 0.0
        %490 = vmatprep.subr.mxu0 0.0
        %491 = vmatpush2.msra.mxu0 0.0
        %492 = vmatprep.subr.mxu0 0.0
        %493 = vmatpush2.msra.mxu0 0.0
        %494 = vmatprep.subr.mxu0 0.0
        %495 = vmatpush2.msra.mxu0 0.0
        %496 = vmatprep.subr.mxu0 0.0
        %497 = vmatpush2.msra.mxu0 0.0
        %498 = vmatprep.subr.mxu0 0.0
        %499 = vmatpush2.msra.mxu0 0.0
        %500 = vmatprep.mubr.f32.mxu0 0.0
        %501 = vmatmul.mubr.f32.gmra.mxu0 %v435
        %v502 = vpop.f32.mrf.mxu0
        %v503 = vadd.f32 0.0, %v502
        %v504 = vpop.f32.mrf.mxu0
        %505 = vdwg.mxu0
        %v506 = vmul.f32 %v432, %v432
        %v507 = vsub.f32 %v503, %v506
        %v508 = vadd.f32 %v507, 1e-05
        %v509 = vrsqrt.pop %v508
        %v510 = vld [vmem:[%s1] sm:$0x1]
        %v511 = vmul.f32 %v510, %v509
        %512 = vst [vmem:[%s254] sm:$0x1] %v511
        %v513 = vld [vmem:[%s2] sm:$0x1]
        %v514 = vmul.f32 %v432, %v511
        %v515 = vsub.f32 %v513, %v514
        %516 = vst [vmem:[%s257] sm:$0x1] %v515
      $region44: #{resnet_block.6} parent=35 // pred_fallthru
        _
      %p517 = scmp.lt.s32.totalorder %s21, 1
      %s518 = scalar_select %p517, %s21, 1
      %s519 = scalar_lea.vmem %s4, %s518
      %p520 = scmp.lt.s32.totalorder %s21, 1
      %s521 = scalar_select %p520, %s21, 1
      %s522 = scalar_lea.vmem %s5, %s521
      // Predicated region
      $region45: #{resnet_block.6} parent=35 // pred_check
        %p523 = pneg %p138
      $region46: #{resnet_block.6} parent=35 // pred_check_branch
        %525 = sbr.rel (%p523) target = $region48
      $region47: #{resnet_block.6} parent=35 // pred_region
        _
      $region48: #{resnet_block.6} parent=35 // pred_fallthru
        _
      // Predicated region
      $region49: #{resnet_block.6} parent=35 // pred_check
        %p526 = pneg %p164
      $region50: #{resnet_block.6} parent=35 // pred_check_branch
        %528 = sbr.rel (%p526) target = $region52
      $region51: #{resnet_block.6} parent=35 // pred_region
        _
      $region52: #{resnet_block.6} parent=35 // pred_fallthru
        _
    $region36: #{resnet_block.6} parent=5 // pred_fallthru
      _
    %p529 = scmp.le.s32.totalorder 2, %s12
    // Predicated region
    $region53: #{resnet_block.6} parent=5 // pred_check
      %p530 = pneg %p529
    $region54: #{resnet_block.6} parent=5 // pred_check_branch
      %532 = sbr.rel (%p530) target = $region56
    $region55: #{resnet_block.6} parent=5 // pred_region
      %s533 = ssub.s32 %s12, 2
      // Predicated region
      $region57: #{resnet_block.6} parent=55 // pred_check
        %p534 = pneg %p144
      $region58: #{resnet_block.6} parent=55 // pred_check_branch
        %536 = sbr.rel (%p534) target = $region60
      $region59: #{resnet_block.6} parent=55 // pred_region
        %p537 = scmp.lt.s32.totalorder %s23, 1
        %s538 = scalar_select %p537, %s23, 1
        %s539 = scalar_lea.vmem %s4, %s538
      $region60: #{resnet_block.6} parent=55 // pred_fallthru
        _
      // Predicated region
      $region61: #{resnet_block.6} parent=55 // pred_check
        %p540 = pneg %p170
      $region62: #{resnet_block.6} parent=55 // pred_check_branch
        %542 = sbr.rel (%p540) target = $region64
      $region63: #{resnet_block.6} parent=55 // pred_region
        %p543 = scmp.lt.s32.totalorder %s23, 1
        %s544 = scalar_select %p543, %s23, 1
        %s545 = scalar_lea.vmem %s5, %s544
      $region64: #{resnet_block.6} parent=55 // pred_fallthru
        _
    $region56: #{resnet_block.6} parent=5 // pred_fallthru
      _
  $region6: #{resnet_block.6} parent=0 // loop_footer
    %s16 = sadd.s32 1, %s12
  $region7: #{resnet_block.6} parent=0 // loop_footer_branch
    %11 = sbr.rel target = $region3
  $region8: #{resnet_block.6} parent=0 // loop_exit
    _

// kernel: resnet_block.5
$region0: #{resnet_block.5}
  #allocation0 [shape = 'u32[]', space=smem, size = 0x4, offset = 0x4, fixed_abs, tag = 'smem constant byte address 0x4 - core index']
  #allocation1 [shape = 'u32[144,128]{1,0:T(1,128)}', space=vmem, size = 0x12000, scoped, tag = 'internal scratch']
  %s0 = inlined_call_operand.vmem [shape: f32[2,18,18,64], index: 0, kind: input, shape index: {}]
  %s1 = inlined_call_operand.vmem [shape: f32[2,1,64], index: 1, kind: input, shape index: {}]
  %s2 = inlined_call_operand.vmem [shape: f32[2,1,64], index: 2, kind: input, shape index: {}]
  %s3 = inlined_call_operand.vmem [shape: bf16[9,64,128], index: 3, kind: input, shape index: {}]
  %s4 = inlined_call_operand.vmem [shape: f32[2,1,128], index: 4, kind: input, shape index: {}]
  %s5 = inlined_call_operand.vmem [shape: f32[2,16,16,128], index: 5, kind: output, shape index: {}]
  %s6 = sld [smem:[#allocation0]]
  $region53: #{resnet_block.5} parent=0
    _
  %s8 = ssub.s32 1, %s6
  %s9 = scalar_select 0, %s8, %s6
  loop: start=0, step=1, limit=6
  $region2: #{resnet_block.5} parent=0 // loop_pre_header
    _
  $region3: #{resnet_block.5} parent=0 // loop_header
    %s11 = sphi 0, %s15
    %p12 = scmp.ge.s32.totalorder %s11, 6
    %s18 = sphi 0, %s30
    %s19 = sphi 0, %s26
    %s20 = sphi 0, %s18
    %s21 = sphi 0, %s19
    %s22 = sphi 0, %s20
    %s23 = sphi 0, %s21
    %s33 = sphi 0, %s35
    %s36 = sphi 0, %s33
    %s37 = sphi 0, %s36
    %s53 = sphi 0, %s37
    %s59 = sphi 0, %s61
    %s62 = sphi 0, %s59
    %s63 = sphi 0, %s62
    %s79 = sphi 0, %s63
    %s85 = sphi 0, %s87
    %s88 = sphi 0, %s85
    %s89 = sphi 0, %s88
    %s105 = sphi 0, %s89
    %s109 = sphi 0, %s109
    %s111 = sphi 0, %s109
    %s112 = sphi 0, %s111
    %s126 = sphi 0, %s112
    %s132 = sphi 0, %s134
    %s135 = sphi 0, %s132
    %s136 = sphi 0, %s135
    %s152 = sphi 0, %s136
    %s160 = sphi 0, %s162
    %s163 = sphi 0, %s160
    %s164 = sphi 0, %s163
    %s180 = sphi 0, %s164
  $region4: #{resnet_block.5} parent=0 // loop_header_branch
    %14 = sbr.rel (%p12) target = $region8
  $region5: #{resnet_block.5} parent=0 // loop_body
    %s16 = ssub.s32 %s11, 1
    %s17 = ssub.s32 %s11, 2
    %s24 = sadd.s32 1, %s19
    %p25 = scmp.ge.s32.totalorder %s24, 2
    %s26 = scalar_select %p25, 0, %s24
    %s27 = sadd.s32 1, %s18
    %s28 = scalar_select %p25, %s27, %s18
    %p29 = scmp.ge.s32.totalorder %s28, 2
    %s30 = scalar_select %p29, 0, %s28
    %s31 = ssub.s32 %s18, %s30
    %p32 = scmp.eq.s32.totalorder %s31, 0
    %s34 = sadd.s32 %s33, 1
    %s35 = scalar_select %p32, %s33, %s34
    %p38 = pneg %p32
    %p39 = scmp.eq.s32.totalorder %s11, 3
    %p40 = por %p38, %p39
    %p41 = scmp.ne.s32.totalorder %s33, %s36
    %p42 = scmp.eq.s32.totalorder %s11, 0
    %p43 = por %p41, %p42
    %p44 = scmp.ne.s32.totalorder %s33, %s36
    %p45 = scmp.eq.s32.totalorder %s16, 3
    %p46 = por %p44, %p45
    %p47 = scmp.ne.s32.totalorder %s36, %s37
    %p48 = scmp.eq.s32.totalorder %s16, 0
    %p49 = por %p47, %p48
    %p50 = scmp.ne.s32.totalorder %s36, %s37
    %p51 = scmp.eq.s32.totalorder %s17, 3
    %p52 = por %p50, %p51
    %p54 = scmp.ne.s32.totalorder %s37, %s53
    %p55 = scmp.eq.s32.totalorder %s17, 0
    %p56 = por %p54, %p55
    %s57 = ssub.s32 %s18, %s30
    %p58 = scmp.eq.s32.totalorder %s57, 0
    %s60 = sadd.s32 %s59, 1
    %s61 = scalar_select %p58, %s59, %s60
    %p64 = pneg %p58
    %p65 = scmp.eq.s32.totalorder %s11, 3
    %p66 = por %p64, %p65
    %p67 = scmp.ne.s32.totalorder %s59, %s62
    %p68 = scmp.eq.s32.totalorder %s11, 0
    %p69 = por %p67, %p68
    %p70 = scmp.ne.s32.totalorder %s59, %s62
    %p71 = scmp.eq.s32.totalorder %s16, 3
    %p72 = por %p70, %p71
    %p73 = scmp.ne.s32.totalorder %s62, %s63
    %p74 = scmp.eq.s32.totalorder %s16, 0
    %p75 = por %p73, %p74
    %p76 = scmp.ne.s32.totalorder %s62, %s63
    %p77 = scmp.eq.s32.totalorder %s17, 3
    %p78 = por %p76, %p77
    %p80 = scmp.ne.s32.totalorder %s63, %s79
    %p81 = scmp.eq.s32.totalorder %s17, 0
    %p82 = por %p80, %p81
    %s83 = ssub.s32 %s18, %s30
    %p84 = scmp.eq.s32.totalorder %s83, 0
    %s86 = sadd.s32 %s85, 1
    %s87 = scalar_select %p84, %s85, %s86
    %p90 = pneg %p84
    %p91 = scmp.eq.s32.totalorder %s11, 3
    %p92 = por %p90, %p91
    %p93 = scmp.ne.s32.totalorder %s85, %s88
    %p94 = scmp.eq.s32.totalorder %s11, 0
    %p95 = por %p93, %p94
    %p96 = scmp.ne.s32.totalorder %s85, %s88
    %p97 = scmp.eq.s32.totalorder %s16, 3
    %p98 = por %p96, %p97
    %p99 = scmp.ne.s32.totalorder %s88, %s89
    %p100 = scmp.eq.s32.totalorder %s16, 0
    %p101 = por %p99, %p100
    %p102 = scmp.ne.s32.totalorder %s88, %s89
    %p103 = scmp.eq.s32.totalorder %s17, 3
    %p104 = por %p102, %p103
    %p106 = scmp.ne.s32.totalorder %s89, %s105
    %p107 = scmp.eq.s32.totalorder %s17, 0
    %p108 = por %p106, %p107
    %s110 = sadd.s32 %s109, 1
    %p113 = scmp.eq.s32.totalorder %s11, 3
    %p114 = scmp.ne.s32.totalorder %s109, %s111
    %p115 = scmp.eq.s32.totalorder %s11, 0
    %p116 = por %p114, %p115
    %p117 = scmp.ne.s32.totalorder %s109, %s111
    %p118 = scmp.eq.s32.totalorder %s16, 3
    %p119 = por %p117, %p118
    %p120 = scmp.ne.s32.totalorder %s111, %s112
    %p121 = scmp.eq.s32.totalorder %s16, 0
    %p122 = por %p120, %p121
    %p123 = scmp.ne.s32.totalorder %s111, %s112
    %p124 = scmp.eq.s32.totalorder %s17, 3
    %p125 = por %p123, %p124
    %p127 = scmp.ne.s32.totalorder %s112, %s126
    %p128 = scmp.eq.s32.totalorder %s17, 0
    %p129 = por %p127, %p128
    %s130 = ssub.s32 %s18, %s30
    %p131 = scmp.eq.s32.totalorder %s130, 0
    %s133 = sadd.s32 %s132, 1
    %s134 = scalar_select %p131, %s132, %s133
    %p137 = pneg %p131
    %p138 = scmp.eq.s32.totalorder %s11, 3
    %p139 = por %p137, %p138
    %p140 = scmp.ne.s32.totalorder %s132, %s135
    %p141 = scmp.eq.s32.totalorder %s11, 0
    %p142 = por %p140, %p141
    %p143 = scmp.ne.s32.totalorder %s132, %s135
    %p144 = scmp.eq.s32.totalorder %s16, 3
    %p145 = por %p143, %p144
    %p146 = scmp.ne.s32.totalorder %s135, %s136
    %p147 = scmp.eq.s32.totalorder %s16, 0
    %p148 = por %p146, %p147
    %p149 = scmp.ne.s32.totalorder %s135, %s136
    %p150 = scmp.eq.s32.totalorder %s17, 3
    %p151 = por %p149, %p150
    %p153 = scmp.ne.s32.totalorder %s136, %s152
    %p154 = scmp.eq.s32.totalorder %s17, 0
    %p155 = por %p153, %p154
    %s156 = ssub.s32 %s18, %s30
    %s157 = ssub.s32 %s19, %s26
    %s158 = sor.u32 %s156, %s157
    %p159 = scmp.eq.s32.totalorder %s158, 0
    %s161 = sadd.s32 %s160, 1
    %s162 = scalar_select %p159, %s160, %s161
    %p165 = pneg %p159
    %p166 = scmp.eq.s32.totalorder %s11, 3
    %p167 = por %p165, %p166
    %p168 = scmp.ne.s32.totalorder %s160, %s163
    %p169 = scmp.eq.s32.totalorder %s11, 0
    %p170 = por %p168, %p169
    %p171 = scmp.ne.s32.totalorder %s160, %s163
    %p172 = scmp.eq.s32.totalorder %s16, 3
    %p173 = por %p171, %p172
    %p174 = scmp.ne.s32.totalorder %s163, %s164
    %p175 = scmp.eq.s32.totalorder %s16, 0
    %p176 = por %p174, %p175
    %p177 = scmp.ne.s32.totalorder %s163, %s164
    %p178 = scmp.eq.s32.totalorder %s17, 3
    %p179 = por %p177, %p178
    %p181 = scmp.ne.s32.totalorder %s164, %s180
    %p182 = scmp.eq.s32.totalorder %s17, 0
    %p183 = por %p181, %p182
    %p184 = scmp.le.s32.totalorder 1, %s11
    %p185 = scmp.lt.s32.totalorder %s11, 5
    %p186 = pnand %p184, %p185
    %p187 = pneg %p186
    // Predicated region
    $region9: #{resnet_block.5} parent=5 // pred_check
      _
    $region10: #{resnet_block.5} parent=5 // pred_check_branch
      %189 = sbr.rel (%p186) target = $region12
    $region11: #{resnet_block.5} parent=5 // pred_region
      %s190 = ssub.s32 %s11, 1
      // Predicated region
      $region13: #{resnet_block.5} parent=11 // pred_check
        %p191 = pneg %p122
      $region14: #{resnet_block.5} parent=11 // pred_check_branch
        %193 = sbr.rel (%p191) target = $region16
      $region15: #{resnet_block.5} parent=11 // pred_region
        _
      $region16: #{resnet_block.5} parent=11 // pred_fallthru
        _
    $region12: #{resnet_block.5} parent=5 // pred_fallthru
      _
    %p194 = scmp.lt.s32.totalorder %s11, 4
    // Predicated region
    $region17: #{resnet_block.5} parent=5 // pred_check
      %p195 = pneg %p194
    $region18: #{resnet_block.5} parent=5 // pred_check_branch
      %197 = sbr.rel (%p195) target = $region20
    $region19: #{resnet_block.5} parent=5 // pred_region
      // Predicated region
      $region21: #{resnet_block.5} parent=19 // pred_check
        %p198 = pneg %p43
      $region22: #{resnet_block.5} parent=19 // pred_check_branch
        %200 = sbr.rel (%p198) target = $region24
      $region23: #{resnet_block.5} parent=19 // pred_region
        %p201 = scmp.lt.s32.totalorder %s18, 1
        %s202 = scalar_select %p201, %s18, 1
        %s203 = smul.addr %s202, 54
        %s204 = smul.addr %s203, 8
        %s205 = scalar_lea.vmem %s0, %s204
      $region24: #{resnet_block.5} parent=19 // pred_fallthru
        _
      // Predicated region
      $region25: #{resnet_block.5} parent=19 // pred_check
        %p206 = pneg %p69
      $region26: #{resnet_block.5} parent=19 // pred_check_branch
        %208 = sbr.rel (%p206) target = $region28
      $region27: #{resnet_block.5} parent=19 // pred_region
        %p209 = scmp.lt.s32.totalorder %s18, 1
        %s210 = scalar_select %p209, %s18, 1
        %s211 = scalar_lea.vmem %s1, %s210
      $region28: #{resnet_block.5} parent=19 // pred_fallthru
        _
      // Predicated region
      $region29: #{resnet_block.5} parent=19 // pred_check
        %p212 = pneg %p95
      $region30: #{resnet_block.5} parent=19 // pred_check_branch
        %214 = sbr.rel (%p212) target = $region32
      $region31: #{resnet_block.5} parent=19 // pred_region
        %p215 = scmp.lt.s32.totalorder %s18, 1
        %s216 = scalar_select %p215, %s18, 1
        %s217 = scalar_lea.vmem %s2, %s216
      $region32: #{resnet_block.5} parent=19 // pred_fallthru
        _
      // Predicated region
      $region33: #{resnet_block.5} parent=19 // pred_check
        %p218 = pneg %p142
      $region34: #{resnet_block.5} parent=19 // pred_check_branch
        %220 = sbr.rel (%p218) target = $region36
      $region35: #{resnet_block.5} parent=19 // pred_region
        %p221 = scmp.lt.s32.totalorder %s18, 1
        %s222 = scalar_select %p221, %s18, 1
        %s223 = scalar_lea.vmem %s4, %s222
      $region36: #{resnet_block.5} parent=19 // pred_fallthru
        _
    $region20: #{resnet_block.5} parent=5 // pred_fallthru
      _
    %p224 = scmp.le.s32.totalorder 1, %s11
    %p225 = scmp.lt.s32.totalorder %s11, 5
    %p226 = pnand %p224, %p225
    %p227 = pneg %p226
    // Predicated region
    $region37: #{resnet_block.5} parent=5 // pred_check
      _
    $region38: #{resnet_block.5} parent=5 // pred_check_branch
      %229 = sbr.rel (%p226) target = $region40
    $region39: #{resnet_block.5} parent=5 // pred_region
      %s230 = ssub.s32 %s11, 1
      %p231 = scmp.lt.s32.totalorder %s20, 1
      %s232 = scalar_select %p231, %s20, 1
      %s233 = smul.addr %s232, 54
      %s234 = smul.addr %s233, 8
      %s235 = scalar_lea.vmem %s0, %s234
      %p236 = pneg %p49
      %p237 = pneg %p46
      %p238 = scmp.lt.s32.totalorder %s20, 1
      %s239 = scalar_select %p238, %s20, 1
      %s240 = scalar_lea.vmem %s1, %s239
      %p241 = pneg %p75
      %p242 = pneg %p72
      %p243 = scmp.lt.s32.totalorder %s20, 1
      %s244 = scalar_select %p243, %s20, 1
      %s245 = scalar_lea.vmem %s2, %s244
      %p246 = pneg %p101
      %p247 = pneg %p98
      %p248 = pneg %p122
      %p249 = pneg %p119
      %p250 = scmp.lt.s32.totalorder %s20, 1
      %s251 = scalar_select %p250, %s20, 1
      %s252 = scalar_lea.vmem %s4, %s251
      %p253 = pneg %p148
      %p254 = pneg %p145
      %p255 = pneg %p176
      %p256 = pneg %p173
      %s257 = smul.u32 8, %s21
      %p258 = scmp.lt.s32.totalorder %s20, 1
      %s259 = scalar_select %p258, %s20, 1
      %p260 = scmp.lt.s32.totalorder %s257, 15
      %s261 = scalar_select %p260, %s257, 15
      %s262 = smul.addr %s261, 2
      %s263 = smul.addr %s259, 32
      %s264 = sadd.s32 %s262, %s263
      %s265 = smul.addr %s264, 8
      %s266 = scalar_lea.vmem %s5, %s265
      %p267 = scmp.lt.s32.totalorder %s20, 1
      %s268 = scalar_select %p267, %s20, 1
      %s269 = smul.addr %s268, 54
      %s270 = smul.addr %s269, 8
      %s271 = scalar_lea.vmem %s0, %s270
      %p272 = scmp.lt.s32.totalorder %s20, 1
      %s273 = scalar_select %p272, %s20, 1
      %s274 = scalar_lea.vmem %s1, %s273
      %p275 = scmp.lt.s32.totalorder %s20, 1
      %s276 = scalar_select %p275, %s20, 1
      %s277 = scalar_lea.vmem %s2, %s276
      %p278 = scmp.lt.s32.totalorder %s20, 1
      %s279 = scalar_select %p278, %s20, 1
      %s280 = scalar_lea.vmem %s4, %s279
      %s281 = smul.u32 8, %s21
      %p282 = scmp.lt.s32.totalorder %s20, 1
      %s283 = scalar_select %p282, %s20, 1
      %p284 = scmp.lt.s32.totalorder %s281, 15
      %s285 = scalar_select %p284, %s281, 15
      %s286 = smul.addr %s285, 2
      %s287 = smul.addr %s283, 32
      %s288 = sadd.s32 %s286, %s287
      %s289 = smul.addr %s288, 8
      %s290 = scalar_lea.vmem %s5, %s289
      %s291 = smul.u32 8, %s21
      %s293 = smul.u32 %s21, 8
      %s294 = smul.u32 %s293, 24
      %s295 = scalar_lea.vmem %s271, %s294
      %v296 = vld [vmem:[%s295] sm:$0xff]
      %v297 = vld [vmem:[%s295 + $0x8] sm:$0xff]
      %v298 = vld [vmem:[%s295 + $0x10] sm:$0x3]
      %v299 = vld [vmem:[%s295 + $0x18] sm:$0xff]
      %v300 = vld [vmem:[%s295 + $0x20] sm:$0xff]
      %v301 = vld [vmem:[%s295 + $0x28] sm:$0x3]
      %v302 = vld [vmem:[%s295 + $0x30] sm:$0xff]
      %v303 = vld [vmem:[%s295 + $0x38] sm:$0xff]
      %v304 = vld [vmem:[%s295 + $0x40] sm:$0x3]
      %v305 = vld [vmem:[%s295 + $0x48] sm:$0xff]
      %v306 = vld [vmem:[%s295 + $0x50] sm:$0xff]
      %v307 = vld [vmem:[%s295 + $0x58] sm:$0x3]
      %v308 = vld [vmem:[%s295 + $0x60] sm:$0xff]
      %v309 = vld [vmem:[%s295 + $0x68] sm:$0xff]
      %v310 = vld [vmem:[%s295 + $0x70] sm:$0x3]
      %v311 = vld [vmem:[%s295 + $0x78] sm:$0xff]
      %v312 = vld [vmem:[%s295 + $0x80] sm:$0xff]
      %v313 = vld [vmem:[%s295 + $0x88] sm:$0x3]
      %v314 = vld [vmem:[%s295 + $0x90] sm:$0xff]
      %v315 = vld [vmem:[%s295 + $0x98] sm:$0xff]
      %v316 = vld [vmem:[%s295 + $0xa0] sm:$0x3]
      %v317 = vld [vmem:[%s295 + $0xa8] sm:$0xff]
      %v318 = vld [vmem:[%s295 + $0xb0] sm:$0xff]
      %v319 = vld [vmem:[%s295 + $0xb8] sm:$0x3]
      %v320 = vld [vmem:[%s295 + $0xc0] sm:$0xff]
      %v321 = vld [vmem:[%s295 + $0xc8] sm:$0xff]
      %v322 = vld [vmem:[%s295 + $0xd0] sm:$0x3]
      %v323 = vld [vmem:[%s295 + $0xd8] sm:$0xff]
      %v324 = vld [vmem:[%s295 + $0xe0] sm:$0xff]
      %v325 = vld [vmem:[%s295 + $0xe8] sm:$0x3]
      %v326 = vld [vmem:[%s274] sm:$0x1]
      %v328 = vlaneseq
      %v329 = vshrl.u32 %v328, 7
      %v330 = vsub.s32 0, %v329
      %v331 = vrot.slane %v326, %v330
      %v333 = vmul.f32 %v296, %v331
      %v334 = vmul.f32 %v297, %v331
      %v335 = vmul.f32 %v298, %v331
      %v336 = vmul.f32 %v299, %v331
      %v337 = vmul.f32 %v300, %v331
      %v338 = vmul.f32 %v301, %v331
      %v339 = vmul.f32 %v302, %v331
      %v340 = vmul.f32 %v303, %v331
      %v341 = vmul.f32 %v304, %v331
      %v342 = vmul.f32 %v305, %v331
      %v343 = vmul.f32 %v306, %v331
      %v344 = vmul.f32 %v307, %v331
      %v345 = vmul.f32 %v308, %v331
      %v346 = vmul.f32 %v309, %v331
      %v347 = vmul.f32 %v310, %v331
      %v348 = vmul.f32 %v311, %v331
      %v349 = vmul.f32 %v312, %v331
      %v350 = vmul.f32 %v313, %v331
      %v351 = vmul.f32 %v314, %v331
      %v352 = vmul.f32 %v315, %v331
      %v353 = vmul.f32 %v316, %v331
      %v354 = vmul.f32 %v317, %v331
      %v355 = vmul.f32 %v318, %v331
      %v356 = vmul.f32 %v319, %v331
      %v357 = vmul.f32 %v320, %v331
      %v358 = vmul.f32 %v321, %v331
      %v359 = vmul.f32 %v322, %v331
      %v360 = vmul.f32 %v323, %v331
      %v361 = vmul.f32 %v324, %v331
      %v362 = vmul.f32 %v325, %v331
      %v363 = vld [vmem:[%s277] sm:$0x1]
      %v365 = vlaneseq
      %v366 = vshrl.u32 %v365, 7
      %v367 = vsub.s32 0, %v366
      %v368 = vrot.slane %v363, %v367
      %v370 = vadd.f32 %v333, %v368
      %v371 = vadd.f32 %v334, %v368
      %v372 = vadd.f32 %v335, %v368
      %v373 = vadd.f32 %v336, %v368
      %v374 = vadd.f32 %v337, %v368
      %v375 = vadd.f32 %v338, %v368
      %v376 = vadd.f32 %v339, %v368
      %v377 = vadd.f32 %v340, %v368
      %v378 = vadd.f32 %v341, %v368
      %v379 = vadd.f32 %v342, %v368
      %v380 = vadd.f32 %v343, %v368
      %v381 = vadd.f32 %v344, %v368
      %v382 = vadd.f32 %v345, %v368
      %v383 = vadd.f32 %v346, %v368
      %v384 = vadd.f32 %v347, %v368
      %v385 = vadd.f32 %v348, %v368
      %v386 = vadd.f32 %v349, %v368
      %v387 = vadd.f32 %v350, %v368
      %v388 = vadd.f32 %v351, %v368
      %v389 = vadd.f32 %v352, %v368
      %v390 = vadd.f32 %v353, %v368
      %v391 = vadd.f32 %v354, %v368
      %v392 = vadd.f32 %v355, %v368
      %v393 = vadd.f32 %v356, %v368
      %v394 = vadd.f32 %v357, %v368
      %v395 = vadd.f32 %v358, %v368
      %v396 = vadd.f32 %v359, %v368
      %v397 = vadd.f32 %v360, %v368
      %v398 = vadd.f32 %v361, %v368
      %v399 = vadd.f32 %v362, %v368
      %v400 = vxor.u32 %v370, 2147483648
      %v401 = vxor.u32 %v371, 2147483648
      %v402 = vxor.u32 %v372, 2147483648
      %v403 = vxor.u32 %v373, 2147483648
      %v404 = vxor.u32 %v374, 2147483648
      %v405 = vxor.u32 %v375, 2147483648
      %v406 = vxor.u32 %v376, 2147483648
      %v407 = vxor.u32 %v377, 2147483648
      %v408 = vxor.u32 %v378, 2147483648
      %v409 = vxor.u32 %v379, 2147483648
      %v410 = vxor.u32 %v380, 2147483648
      %v411 = vxor.u32 %v381, 2147483648
      %v412 = vxor.u32 %v382, 2147483648
      %v413 = vxor.u32 %v383, 2147483648
      %v414 = vxor.u32 %v384, 2147483648
      %v415 = vxor.u32 %v385, 2147483648
      %v416 = vxor.u32 %v386, 2147483648
      %v417 = vxor.u32 %v387, 2147483648
      %v418 = vxor.u32 %v388, 2147483648
      %v419 = vxor.u32 %v389, 2147483648
      %v420 = vxor.u32 %v390, 2147483648
      %v421 = vxor.u32 %v391, 2147483648
      %v422 = vxor.u32 %v392, 2147483648
      %v423 = vxor.u32 %v393, 2147483648
      %v424 = vxor.u32 %v394, 2147483648
      %v425 = vxor.u32 %v395, 2147483648
      %v426 = vxor.u32 %v396, 2147483648
      %v427 = vxor.u32 %v397, 2147483648
      %v428 = vxor.u32 %v398, 2147483648
      %v429 = vxor.u32 %v399, 2147483648
      %v430 = vmul.f32 %v400, 1.442695
      %v431 = vpow.pop %v430
      %v432 = vmul.f32 %v401, 1.442695
      %v433 = vpow.pop %v432
      %v434 = vmul.f32 %v402, 1.442695
      %v435 = vpow.pop %v434
      %v436 = vmul.f32 %v403, 1.442695
      %v437 = vpow.pop %v436
      %v438 = vmul.f32 %v404, 1.442695
      %v439 = vpow.pop %v438
      %v440 = vmul.f32 %v405, 1.442695
      %v441 = vpow.pop %v440
      %v442 = vmul.f32 %v406, 1.442695
      %v443 = vpow.pop %v442
      %v444 = vmul.f32 %v407, 1.442695
      %v445 = vpow.pop %v444
      %v446 = vmul.f32 %v408, 1.442695
      %v447 = vpow.pop %v446
      %v448 = vmul.f32 %v409, 1.442695
      %v449 = vpow.pop %v448
      %v450 = vmul.f32 %v410, 1.442695
      %v451 = vpow.pop %v450
      %v452 = vmul.f32 %v411, 1.442695
      %v453 = vpow.pop %v452
      %v454 = vmul.f32 %v412, 1.442695
      %v455 = vpow.pop %v454
      %v456 = vmul.f32 %v413, 1.442695
      %v457 = vpow.pop %v456
      %v458 = vmul.f32 %v414, 1.442695
      %v459 = vpow.pop %v458
      %v460 = vmul.f32 %v415, 1.442695
      %v461 = vpow.pop %v460
      %v462 = vmul.f32 %v416, 1.442695
      %v463 = vpow.pop %v462
      %v464 = vmul.f32 %v417, 1.442695
      %v465 = vpow.pop %v464
      %v466 = vmul.f32 %v418, 1.442695
      %v467 = vpow.pop %v466
      %v468 = vmul.f32 %v419, 1.442695
      %v469 = vpow.pop %v468
      %v470 = vmul.f32 %v420, 1.442695
      %v471 = vpow.pop %v470
      %v472 = vmul.f32 %v421, 1.442695
      %v473 = vpow.pop %v472
      %v474 = vmul.f32 %v422, 1.442695
      %v475 = vpow.pop %v474
      %v476 = vmul.f32 %v423, 1.442695
      %v477 = vpow.pop %v476
      %v478 = vmul.f32 %v424, 1.442695
      %v479 = vpow.pop %v478
      %v480 = vmul.f32 %v425, 1.442695
      %v481 = vpow.pop %v480
      %v482 = vmul.f32 %v426, 1.442695
      %v483 = vpow.pop %v482
      %v484 = vmul.f32 %v427, 1.442695
      %v485 = vpow.pop %v484
      %v486 = vmul.f32 %v428, 1.442695
      %v487 = vpow.pop %v486
      %v488 = vmul.f32 %v429, 1.442695
      %v489 = vpow.pop %v488
      %v490 = vadd.f32 %v431, 1.0
      %v491 = vadd.f32 %v433, 1.0
      %v492 = vadd.f32 %v435, 1.0
      %v493 = vadd.f32 %v437, 1.0
      %v494 = vadd.f32 %v439, 1.0
      %v495 = vadd.f32 %v441, 1.0
      %v496 = vadd.f32 %v443, 1.0
      %v497 = vadd.f32 %v445, 1.0
      %v498 = vadd.f32 %v447, 1.0
      %v499 = vadd.f32 %v449, 1.0
      %v500 = vadd.f32 %v451, 1.0
      %v501 = vadd.f32 %v453, 1.0
      %v502 = vadd.f32 %v455, 1.0
      %v503 = vadd.f32 %v457, 1.0
      %v504 = vadd.f32 %v459, 1.0
      %v505 = vadd.f32 %v461, 1.0
      %v506 = vadd.f32 %v463, 1.0
      %v507 = vadd.f32 %v465, 1.0
      %v508 = vadd.f32 %v467, 1.0
      %v509 = vadd.f32 %v469, 1.0
      %v510 = vadd.f32 %v471, 1.0
      %v511 = vadd.f32 %v473, 1.0
      %v512 = vadd.f32 %v475, 1.0
      %v513 = vadd.f32 %v477, 1.0
      %v514 = vadd.f32 %v479, 1.0
      %v515 = vadd.f32 %v481, 1.0
      %v516 = vadd.f32 %v483, 1.0
      %v517 = vadd.f32 %v485, 1.0
      %v518 = vadd.f32 %v487, 1.0
      %v519 = vadd.f32 %v489, 1.0
      %v520 = vrcp.pop %v490
      %v521 = vmul.f32 1.0, %v520
      %v522 = vrcp.pop %v491
      %v523 = vmul.f32 1.0, %v522
      %v524 = vrcp.pop %v492
      %v525 = vmul.f32 1.0, %v524
      %v526 = vrcp.pop %v493
      %v527 = vmul.f32 1.0, %v526
      %v528 = vrcp.pop %v494
      %v529 = vmul.f32 1.0, %v528
      %v530 = vrcp.pop %v495
      %v531 = vmul.f32 1.0, %v530
      %v532 = vrcp.pop %v496
      %v533 = vmul.f32 1.0, %v532
      %v534 = vrcp.pop %v497
      %v535 = vmul.f32 1.0, %v534
      %v536 = vrcp.pop %v498
      %v537 = vmul.f32 1.0, %v536
      %v538 = vrcp.pop %v499
      %v539 = vmul.f32 1.0, %v538
      %v540 = vrcp.pop %v500
      %v541 = vmul.f32 1.0, %v540
      %v542 = vrcp.pop %v501
      %v543 = vmul.f32 1.0, %v542
      %v544 = vrcp.pop %v502
      %v545 = vmul.f32 1.0, %v544
      %v546 = vrcp.pop %v503
      %v547 = vmul.f32 1.0, %v546
      %v548 = vrcp.pop %v504
      %v549 = vmul.f32 1.0, %v548
      %v550 = vrcp.pop %v505
      %v551 = vmul.f32 1.0, %v550
      %v552 = vrcp.pop %v506
      %v553 = vmul.f32 1.0, %v552
      %v554 = vrcp.pop %v507
      %v555 = vmul.f32 1.0, %v554
      %v556 = vrcp.pop %v508
      %v557 = vmul.f32 1.0, %v556
      %v558 = vrcp.pop %v509
      %v559 = vmul.f32 1.0, %v558
      %v560 = vrcp.pop %v510
      %v561 = vmul.f32 1.0, %v560
      %v562 = vrcp.pop %v511
      %v563 = vmul.f32 1.0, %v562
      %v564 = vrcp.pop %v512
      %v565 = vmul.f32 1.0, %v564
      %v566 = vrcp.pop %v513
      %v567 = vmul.f32 1.0, %v566
      %v568 = vrcp.pop %v514
      %v569 = vmul.f32 1.0, %v568
      %v570 = vrcp.pop %v515
      %v571 = vmul.f32 1.0, %v570
      %v572 = vrcp.pop %v516
      %v573 = vmul.f32 1.0, %v572
      %v574 = vrcp.pop %v517
      %v575 = vmul.f32 1.0, %v574
      %v576 = vrcp.pop %v518
      %v577 = vmul.f32 1.0, %v576
      %v578 = vrcp.pop %v519
      %v579 = vmul.f32 1.0, %v578
      %v580 = vmul.f32 %v370, %v521
      %v581 = vmul.f32 %v371, %v523
      %v582 = vmul.f32 %v372, %v525
      %v583 = vmul.f32 %v373, %v527
      %v584 = vmul.f32 %v374, %v529
      %v585 = vmul.f32 %v375, %v531
      %v586 = vmul.f32 %v376, %v533
      %v587 = vmul.f32 %v377, %v535
      %v588 = vmul.f32 %v378, %v537
      %v589 = vmul.f32 %v379, %v539
      %v590 = vmul.f32 %v380, %v541
      %v591 = vmul.f32 %v381, %v543
      %v592 = vmul.f32 %v382, %v545
      %v593 = vmul.f32 %v383, %v547
      %v594 = vmul.f32 %v384, %v549
      %v595 = vmul.f32 %v385, %v551
      %v596 = vmul.f32 %v386, %v553
      %v597 = vmul.f32 %v387, %v555
      %v598 = vmul.f32 %v388, %v557
      %v599 = vmul.f32 %v389, %v559
      %v600 = vmul.f32 %v390, %v561
      %v601 = vmul.f32 %v391, %v563
      %v602 = vmul.f32 %v392, %v565
      %v603 = vmul.f32 %v393, %v567
      %v604 = vmul.f32 %v394, %v569
      %v605 = vmul.f32 %v395, %v571
      %v606 = vmul.f32 %v396, %v573
      %v607 = vmul.f32 %v397, %v575
      %v608 = vmul.f32 %v398, %v577
      %v609 = vmul.f32 %v399, %v579
      %v610 = vstv %s293
      %v611 = vadd.s32 %v610, 1
      %v612 = vadd.s32 %v610, 2
      %v613 = vadd.s32 %v610, 3
      %v614 = vadd.s32 %v610, 4
      %v615 = vadd.s32 %v610, 5
      %v616 = vadd.s32 %v610, 6
      %v617 = vadd.s32 %v610, 7
      %v618 = vadd.s32 %v610, 8
      %v619 = vadd.s32 %v610, 9
      %v620 = vlaneseq
      %v621 = vshrl.u32 %v620, 7
      %v622 = vadd.s32 %v621, 8
      %v623 = vadd.s32 %v621, 16
      %vm624 = vcmp.ge.s32.totalorder %v610, 1
      %vm625 = vcmp.ge.s32.totalorder %v611, 1
      %vm626 = vcmp.ge.s32.totalorder %v612, 1
      %vm627 = vcmp.ge.s32.totalorder %v613, 1
      %vm628 = vcmp.ge.s32.totalorder %v614, 1
      %vm629 = vcmp.ge.s32.totalorder %v615, 1
      %vm630 = vcmp.ge.s32.totalorder %v616, 1
      %vm631 = vcmp.ge.s32.totalorder %v617, 1
      %vm632 = vcmp.ge.s32.totalorder %v618, 1
      %vm633 = vcmp.ge.s32.totalorder %v619, 1
      %vm634 = vcmp.le.s32.totalorder %v610, 16
      %vm635 = vcmp.le.s32.totalorder %v611, 16
      %vm636 = vcmp.le.s32.totalorder %v612, 16
      %vm637 = vcmp.le.s32.totalorder %v613, 16
      %vm638 = vcmp.le.s32.totalorder %v614, 16
      %vm639 = vcmp.le.s32.totalorder %v615, 16
      %vm640 = vcmp.le.s32.totalorder %v616, 16
      %vm641 = vcmp.le.s32.totalorder %v617, 16
      %vm642 = vcmp.le.s32.totalorder %v618, 16
      %vm643 = vcmp.le.s32.totalorder %v619, 16
      %vm644 = vmand %vm624, %vm634
      %vm645 = vmand %vm625, %vm635
      %vm646 = vmand %vm626, %vm636
      %vm647 = vmand %vm627, %vm637
      %vm648 = vmand %vm628, %vm638
      %vm649 = vmand %vm629, %vm639
      %vm650 = vmand %vm630, %vm640
      %vm651 = vmand %vm631, %vm641
      %vm652 = vmand %vm632, %vm642
      %vm653 = vmand %vm633, %vm643
      %vm654 = vcmp.ge.s32.totalorder %v621, 1
      %vm655 = vcmp.ge.s32.totalorder %v622, 1
      %vm656 = vcmp.ge.s32.totalorder %v623, 1
      %vm657 = vmand %vm644, %vm654
      %vm658 = vmand %vm644, %vm655
      %vm659 = vmand %vm644, %vm656
      %vm660 = vmand %vm645, %vm654
      %vm661 = vmand %vm645, %vm655
      %vm662 = vmand %vm645, %vm656
      %vm663 = vmand %vm646, %vm654
      %vm664 = vmand %vm646, %vm655
      %vm665 = vmand %vm646, %vm656
      %vm666 = vmand %vm647, %vm654
      %vm667 = vmand %vm647, %vm655
      %vm668 = vmand %vm647, %vm656
      %vm669 = vmand %vm648, %vm654
      %vm670 = vmand %vm648, %vm655
      %vm671 = vmand %vm648, %vm656
      %vm672 = vmand %vm649, %vm654
      %vm673 = vmand %vm649, %vm655
      %vm674 = vmand %vm649, %vm656
      %vm675 = vmand %vm650, %vm654
      %vm676 = vmand %vm650, %vm655
      %vm677 = vmand %vm650, %vm656
      %vm678 = vmand %vm651, %vm654
      %vm679 = vmand %vm651, %vm655
      %vm680 = vmand %vm651, %vm656
      %vm681 = vmand %vm652, %vm654
      %vm682 = vmand %vm652, %vm655
      %vm683 = vmand %vm652, %vm656
      %vm684 = vmand %vm653, %vm654
      %vm685 = vmand %vm653, %vm655
      %vm686 = vmand %vm653, %vm656
      %vm687 = vcmp.le.s32.totalorder %v621, 16
      %vm688 = vcmp.le.s32.totalorder %v622, 16
      %vm689 = vcmp.le.s32.totalorder %v623, 16
      %vm690 = vmand %vm657, %vm687
      %vm691 = vmand %vm658, %vm688
      %vm692 = vmand %vm659, %vm689
      %vm693 = vmand %vm660, %vm687
      %vm694 = vmand %vm661, %vm688
      %vm695 = vmand %vm662, %vm689
      %vm696 = vmand %vm663, %vm687
      %vm697 = vmand %vm664, %vm688
      %vm698 = vmand %vm665, %vm689
      %vm699 = vmand %vm666, %vm687
      %vm700 = vmand %vm667, %vm688
      %vm701 = vmand %vm668, %vm689
      %vm702 = vmand %vm669, %vm687
      %vm703 = vmand %vm670, %vm688
      %vm704 = vmand %vm671, %vm689
      %vm705 = vmand %vm672, %vm687
      %vm706 = vmand %vm673, %vm688
      %vm707 = vmand %vm674, %vm689
      %vm708 = vmand %vm675, %vm687
      %vm709 = vmand %vm676, %vm688
      %vm710 = vmand %vm677, %vm689
      %vm711 = vmand %vm678, %vm687
      %vm712 = vmand %vm679, %vm688
      %vm713 = vmand %vm680, %vm689
      %vm714 = vmand %vm681, %vm687
      %vm715 = vmand %vm682, %vm688
      %vm716 = vmand %vm683, %vm689
      %vm717 = vmand %vm684, %vm687
      %vm718 = vmand %vm685, %vm688
      %vm719 = vmand %vm686, %vm689
      %v720 = vsel %vm690, %v580, 0.0
      %v721 = vsel %vm691, %v581, 0.0
      %v722 = vsel %vm692, %v582, 0.0
      %v723 = vsel %vm693, %v583, 0.0
      %v724 = vsel %vm694, %v584, 0.0
      %v725 = vsel %vm695, %v585, 0.0
      %v726 = vsel %vm696, %v586, 0.0
      %v727 = vsel %vm697, %v587, 0.0
      %v728 = vsel %vm698, %v588, 0.0
      %v729 = vsel %vm699, %v589, 0.0
      %v730 = vsel %vm700, %v590, 0.0
      %v731 = vsel %vm701, %v591, 0.0
      %v732 = vsel %vm702, %v592, 0.0
      %v733 = vsel %vm703, %v593, 0.0
      %v734 = vsel %vm704, %v594, 0.0
      %v735 = vsel %vm705, %v595, 0.0
      %v736 = vsel %vm706, %v596, 0.0
      %v737 = vsel %vm707, %v597, 0.0
      %v738 = vsel %vm708, %v598, 0.0
      %v739 = vsel %vm709, %v599, 0.0
      %v740 = vsel %vm710, %v600, 0.0
      %v741 = vsel %vm711, %v601, 0.0
      %v742 = vsel %vm712, %v602, 0.0
      %v743 = vsel %vm713, %v603, 0.0
      %v744 = vsel %vm714, %v604, 0.0
      %v745 = vsel %vm715, %v605, 0.0
      %v746 = vsel %vm716, %v606, 0.0
      %v747 = vsel %vm717, %v607, 0.0
      %v748 = vsel %vm718, %v608, 0.0
      %v749 = vsel %vm719, %v609, 0.0
      %v750 = vpack.c.bf16 %v721, %v720
      %v751 = vpack.c.bf16 %v722, %v722
      %v752 = vpack.c.bf16 %v724, %v723
      %v753 = vpack.c.bf16 %v725, %v725
      %v754 = vpack.c.bf16 %v727, %v726
      %v755 = vpack.c.bf16 %v728, %v728
      %v756 = vpack.c.bf16 %v730, %v729
      %v757 = vpack.c.bf16 %v731, %v731
      %v758 = vpack.c.bf16 %v733, %v732
      %v759 = vpack.c.bf16 %v734, %v734
      %v760 = vpack.c.bf16 %v736, %v735
      %v761 = vpack.c.bf16 %v737, %v737
      %v762 = vpack.c.bf16 %v739, %v738
      %v763 = vpack.c.bf16 %v740, %v740
      %v764 = vpack.c.bf16 %v742, %v741
      %v765 = vpack.c.bf16 %v743, %v743
      %v766 = vpack.c.bf16 %v745, %v744
      %v767 = vpack.c.bf16 %v746, %v746
      %v768 = vpack.c.bf16 %v748, %v747
      %v769 = vpack.c.bf16 %v749, %v749
      %v770 = vld [vmem:[%s3] sm:$0xf]
      %v771 = vld [vmem:[%s3 + $0x4] sm:$0xf]
      %v772 = vld [vmem:[%s3 + $0x8] sm:$0xf]
      %v773 = vld [vmem:[%s3 + $0xc] sm:$0xf]
      %v774 = vld [vmem:[%s3 + $0x10] sm:$0xf]
      %v775 = vld [vmem:[%s3 + $0x14] sm:$0xf]
      %v776 = vld [vmem:[%s3 + $0x18] sm:$0xf]
      %v777 = vld [vmem:[%s3 + $0x1c] sm:$0xf]
      %vm778 = vsmask.f32 7424
      %v780 = vshrl.u32 %v750, 16
      %v782 = vshll.u32 %v750, 16
      %v784 = vrot.slane %v782, 1
      %v785 = vor.u32 %v780, %v784
      %v787 = vshll.u32 %v751, 16
      %v789 = vrot.slane %v787, 1
      %v790 = vsel %vm778, %v785, %v789
      %v792 = vshrl.u32 %v752, 16
      %v794 = vshll.u32 %v752, 16
      %v796 = vrot.slane %v794, 1
      %v797 = vor.u32 %v792, %v796
      %v799 = vshll.u32 %v753, 16
      %v801 = vrot.slane %v799, 1
      %v802 = vsel %vm778, %v797, %v801
      %v804 = vshrl.u32 %v754, 16
      %v806 = vshll.u32 %v754, 16
      %v808 = vrot.slane %v806, 1
      %v809 = vor.u32 %v804, %v808
      %v811 = vshll.u32 %v755, 16
      %v813 = vrot.slane %v811, 1
      %v814 = vsel %vm778, %v809, %v813
      %v816 = vshrl.u32 %v756, 16
      %v818 = vshll.u32 %v756, 16
      %v820 = vrot.slane %v818, 1
      %v821 = vor.u32 %v816, %v820
      %v823 = vshll.u32 %v757, 16
      %v825 = vrot.slane %v823, 1
      %v826 = vsel %vm778, %v821, %v825
      %v828 = vshrl.u32 %v758, 16
      %v830 = vshll.u32 %v758, 16
      %v832 = vrot.slane %v830, 1
      %v833 = vor.u32 %v828, %v832
      %v835 = vshll.u32 %v759, 16
      %v837 = vrot.slane %v835, 1
      %v838 = vsel %vm778, %v833, %v837
      %v840 = vshrl.u32 %v760, 16
      %v842 = vshll.u32 %v760, 16
      %v844 = vrot.slane %v842, 1
      %v845 = vor.u32 %v840, %v844
      %v847 = vshll.u32 %v761, 16
      %v849 = vrot.slane %v847, 1
      %v850 = vsel %vm778, %v845, %v849
      %v852 = vshrl.u32 %v762, 16
      %v854 = vshll.u32 %v762, 16
      %v856 = vrot.slane %v854, 1
      %v857 = vor.u32 %v852, %v856
      %v859 = vshll.u32 %v763, 16
      %v861 = vrot.slane %v859, 1
      %v862 = vsel %vm778, %v857, %v861
      %v864 = vshrl.u32 %v764, 16
      %v866 = vshll.u32 %v764, 16
      %v868 = vrot.slane %v866, 1
      %v869 = vor.u32 %v864, %v868
      %v871 = vshll.u32 %v765, 16
      %v873 = vrot.slane %v871, 1
      %v874 = vsel %vm778, %v869, %v873
      %s875 = scalar_lea.vmem %s3, 32
      %v876 = vld [vmem:[%s875] sm:$0xf]
      %v877 = vld [vmem:[%s875 + $0x4] sm:$0xf]
      %v878 = vld [vmem:[%s875 + $0x8] sm:$0xf]
      %v879 = vld [vmem:[%s875 + $0xc] sm:$0xf]
      %v880 = vld [vmem:[%s875 + $0x10] sm:$0xf]
      %v881 = vld [vmem:[%s875 + $0x14] sm:$0xf]
      %v882 = vld [vmem:[%s875 + $0x18] sm:$0xf]
      %v883 = vld [vmem:[%s875 + $0x1c] sm:$0xf]
      %v892 = vunpack.c.l.b16 %v876
      %v893 = vunpack.c.l.b16 %v877
      %v894 = vunpack.c.l.b16 %v878
      %v895 = vunpack.c.l.b16 %v879
      %v896 = vunpack.c.l.b16 %v880
      %v897 = vunpack.c.l.b16 %v881
      %v898 = vunpack.c.l.b16 %v882
      %v899 = vunpack.c.l.b16 %v883
      %v900 = vpack.c.b16 %v893, %v892
      %v901 = vpack.c.b16 %v895, %v894
      %v902 = vpack.c.b16 %v897, %v896
      %v903 = vpack.c.b16 %v899, %v898
      %vm908 = vcmask 523264
      %v910 = vsel %vm908, %v790, 0
      %v913 = vsel %vm908, %v802, 0
      %v916 = vsel %vm908, %v814, 0
      %v919 = vsel %vm908, %v826, 0
      %v922 = vsel %vm908, %v838, 0
      %v925 = vsel %vm908, %v850, 0
      %v928 = vsel %vm908, %v862, 0
      %v931 = vsel %vm908, %v874, 0
      %933 = vmatprep.subr.bf16.mxu0 0
      %934 = vmatpush1.bf16.msra.mxu0 0
      %935 = vmatprep.subr.bf16.mxu0 0
      %936 = vmatpush1.bf16.msra.mxu0 0
      %937 = vmatprep.subr.bf16.mxu0 0
      %938 = vmatpush1.bf16.msra.mxu0 0
      %939 = vmatprep.subr.bf16.mxu0 0
      %940 = vmatpush1.bf16.msra.mxu0 0
      %941 = vmatprep.subr.bf16.mxu0 0
      %942 = vmatpush1.bf16.msra.mxu0 %v903
      %943 = vmatprep.subr.bf16.mxu0 0
      %944 = vmatpush1.bf16.msra.mxu0 %v902
      %945 = vmatprep.subr.bf16.mxu0 0
      %946 = vmatpush1.bf16.msra.mxu0 %v901
      %947 = vmatprep.subr.bf16.mxu0 0
      %948 = vmatpush1.bf16.msra.mxu0 %v900
      %949 = vmatprep.subr.bf16.mxu0 0
      %950 = vmatpush2.bf16.msra.mxu0 0
      %951 = vmatprep.subr.bf16.mxu0 0
      %952 = vmatpush2.bf16.msra.mxu0 0
      %953 = vmatprep.subr.bf16.mxu0 0
      %954 = vmatpush2.bf16.msra.mxu0 0
      %955 = vmatprep.subr.bf16.mxu0 0
      %956 = vmatpush2.bf16.msra.mxu0 0
      %957 = vmatprep.subr.bf16.mxu0 0
      %958 = vmatpush2.bf16.msra.mxu0 0
      %959 = vmatprep.subr.bf16.mxu0 0
      %960 = vmatpush2.bf16.msra.mxu0 0
      %961 = vmatprep.subr.bf16.mxu0 0
      %962 = vmatpush2.bf16.msra.mxu0 0
      %963 = vmatprep.subr.bf16.mxu0 0
      %964 = vmatpush2.bf16.msra.mxu0 0
      %965 = vmatprep.mubr.bf16.mxu0 0
      %966 = vmatmul.mubr.bf16.gmra.mxu0 %v910
      %v967 = vpop.f32.mrf.mxu0
      %v968 = vadd.f32 0.0, %v967
      %v969 = vpop.f32.mrf.mxu0
      %v970 = vpop.f32.mrf.mxu0
      %v971 = vadd.f32 0.0, %v970
      %v972 = vpop.f32.mrf.mxu0
      %973 = vmatprep.mubr.bf16.mxu0 0
      %974 = vmatmul.mubr.bf16.gmra.mxu0 %v913
      %v975 = vpop.f32.mrf.mxu0
      %v976 = vadd.f32 0.0, %v975
      %v977 = vpop.f32.mrf.mxu0
      %v978 = vpop.f32.mrf.mxu0
      %v979 = vadd.f32 0.0, %v978
      %v980 = vpop.f32.mrf.mxu0
      %981 = vmatprep.mubr.bf16.mxu0 0
      %982 = vmatmul.mubr.bf16.gmra.mxu0 %v916
      %v983 = vpop.f32.mrf.mxu0
      %v984 = vadd.f32 0.0, %v983
      %v985 = vpop.f32.mrf.mxu0
      %v986 = vpop.f32.mrf.mxu0
      %v987 = vadd.f32 0.0, %v986
      %v988 = vpop.f32.mrf.mxu0
      %989 = vmatprep.mubr.bf16.mxu0 0
      %990 = vmatmul.mubr.bf16.gmra.mxu0 %v919
      %v991 = vpop.f32.mrf.mxu0
      %v992 = vadd.f32 0.0, %v991
      %v993 = vpop.f32.mrf.mxu0
      %v994 = vpop.f32.mrf.mxu0
      %v995 = vadd.f32 0.0, %v994
      %v996 = vpop.f32.mrf.mxu0
      %997 = vmatprep.mubr.bf16.mxu0 0
      %998 = vmatmul.mubr.bf16.gmra.mxu0 %v922
      %v999 = vpop.f32.mrf.mxu0
      %v1000 = vadd.f32 0.0, %v999
      %v1001 = vpop.f32.mrf.mxu0
      %v1002 = vpop.f32.mrf.mxu0
      %v1003 = vadd.f32 0.0, %v1002
      %v1004 = vpop.f32.mrf.mxu0
      %1005 = vmatprep.mubr.bf16.mxu0 0
      %1006 = vmatmul.mubr.bf16.gmra.mxu0 %v925
      %v1007 = vpop.f32.mrf.mxu0
      %v1008 = vadd.f32 0.0, %v1007
      %v1009 = vpop.f32.mrf.mxu0
      %v1010 = vpop.f32.mrf.mxu0
      %v1011 = vadd.f32 0.0, %v1010
      %v1012 = vpop.f32.mrf.mxu0
      %1013 = vmatprep.mubr.bf16.mxu0 0
      %1014 = vmatmul.mubr.bf16.gmra.mxu0 %v928
      %v1015 = vpop.f32.mrf.mxu0
      %v1016 = vadd.f32 0.0, %v1015
      %v1017 = vpop.f32.mrf.mxu0
      %v1018 = vpop.f32.mrf.mxu0
      %v1019 = vadd.f32 0.0, %v1018
      %v1020 = vpop.f32.mrf.mxu0
      %1021 = vmatprep.mubr.bf16.mxu0 0
      %1022 = vmatmul.mubr.bf16.gmra.mxu0 %v931
      %v1023 = vpop.f32.mrf.mxu0
      %v1024 = vadd.f32 0.0, %v1023
      %v1025 = vpop.f32.mrf.mxu0
      %v1026 = vpop.f32.mrf.mxu0
      %v1027 = vadd.f32 0.0, %v1026
      %v1028 = vpop.f32.mrf.mxu0
      %1029 = vdwg.mxu0
      %v1038 = vunpack.c.l.b16 %v770
      %v1039 = vunpack.c.l.b16 %v771
      %v1040 = vunpack.c.l.b16 %v772
      %v1041 = vunpack.c.l.b16 %v773
      %v1042 = vunpack.c.l.b16 %v774
      %v1043 = vunpack.c.l.b16 %v775
      %v1044 = vunpack.c.l.b16 %v776
      %v1045 = vunpack.c.l.b16 %v777
      %v1046 = vpack.c.b16 %v1039, %v1038
      %v1047 = vpack.c.b16 %v1041, %v1040
      %v1048 = vpack.c.b16 %v1043, %v1042
      %v1049 = vpack.c.b16 %v1045, %v1044
      %v1054 = vsel %vm908, %v750, 0
      %v1056 = vsel %vm908, %v752, 0
      %v1058 = vsel %vm908, %v754, 0
      %v1060 = vsel %vm908, %v756, 0
      %v1062 = vsel %vm908, %v758, 0
      %v1064 = vsel %vm908, %v760, 0
      %v1066 = vsel %vm908, %v762, 0
      %v1068 = vsel %vm908, %v764, 0
      %1070 = vmatprep.subr.bf16.mxu0 0
      %1071 = vmatpush1.bf16.msra.mxu0 0
      %1072 = vmatprep.subr.bf16.mxu0 0
      %1073 = vmatpush1.bf16.msra.mxu0 0
      %1074 = vmatprep.subr.bf16.mxu0 0
      %1075 = vmatpush1.bf16.msra.mxu0 0
      %1076 = vmatprep.subr.bf16.mxu0 0
      %1077 = vmatpush1.bf16.msra.mxu0 0
      %1078 = vmatprep.subr.bf16.mxu0 0
      %1079 = vmatpush1.bf16.msra.mxu0 %v1049
      %1080 = vmatprep.subr.bf16.mxu0 0
      %1081 = vmatpush1.bf16.msra.mxu0 %v1048
      %1082 = vmatprep.subr.bf16.mxu0 0
      %1083 = vmatpush1.bf16.msra.mxu0 %v1047
      %1084 = vmatprep.subr.bf16.mxu0 0
      %1085 = vmatpush1.bf16.msra.mxu0 %v1046
      %1086 = vmatprep.subr.bf16.mxu0 0
      %1087 = vmatpush2.bf16.msra.mxu0 0
      %1088 = vmatprep.subr.bf16.mxu0 0
      %1089 = vmatpush2.bf16.msra.mxu0 0
      %1090 = vmatprep.subr.bf16.mxu0 0
      %1091 = vmatpush2.bf16.msra.mxu0 0
      %1092 = vmatprep.subr.bf16.mxu0 0
      %1093 = vmatpush2.bf16.msra.mxu0 0
      %1094 = vmatprep.subr.bf16.mxu0 0
      %1095 = vmatpush2.bf16.msra.mxu0 0
      %1096 = vmatprep.subr.bf16.mxu0 0
      %1097 = vmatpush2.bf16.msra.mxu0 0
      %1098 = vmatprep.subr.bf16.mxu0 0
      %1099 = vmatpush2.bf16.msra.mxu0 0
      %1100 = vmatprep.subr.bf16.mxu0 0
      %1101 = vmatpush2.bf16.msra.mxu0 0
      %1102 = vmatprep.mubr.bf16.mxu0 0
      %1103 = vmatmul.mubr.bf16.gmra.mxu0 %v1054
      %v1104 = vpop.f32.mrf.mxu0
      %v1105 = vadd.f32 %v968, %v1104
      %v1106 = vpop.f32.mrf.mxu0
      %v1107 = vpop.f32.mrf.mxu0
      %v1108 = vadd.f32 %v971, %v1107
      %v1109 = vpop.f32.mrf.mxu0
      %1110 = vmatprep.mubr.bf16.mxu0 0
      %1111 = vmatmul.mubr.bf16.gmra.mxu0 %v1056
      %v1112 = vpop.f32.mrf.mxu0
      %v1113 = vadd.f32 %v976, %v1112
      %v1114 = vpop.f32.mrf.mxu0
      %v1115 = vpop.f32.mrf.mxu0
      %v1116 = vadd.f32 %v979, %v1115
      %v1117 = vpop.f32.mrf.mxu0
      %1118 = vmatprep.mubr.bf16.mxu0 0
      %1119 = vmatmul.mubr.bf16.gmra.mxu0 %v1058
      %v1120 = vpop.f32.mrf.mxu0
      %v1121 = vadd.f32 %v984, %v1120
      %v1122 = vpop.f32.mrf.mxu0
      %v1123 = vpop.f32.mrf.mxu0
      %v1124 = vadd.f32 %v987, %v1123
      %v1125 = vpop.f32.mrf.mxu0
      %1126 = vmatprep.mubr.bf16.mxu0 0
      %1127 = vmatmul.mubr.bf16.gmra.mxu0 %v1060
      %v1128 = vpop.f32.mrf.mxu0
      %v1129 = vadd.f32 %v992, %v1128
      %v1130 = vpop.f32.mrf.mxu0
      %v1131 = vpop.f32.mrf.mxu0
      %v1132 = vadd.f32 %v995, %v1131
      %v1133 = vpop.f32.mrf.mxu0
      %1134 = vmatprep.mubr.bf16.mxu0 0
      %1135 = vmatmul.mubr.bf16.gmra.mxu0 %v1062
      %v1136 = vpop.f32.mrf.mxu0
      %v1137 = vadd.f32 %v1000, %v1136
      %v1138 = vpop.f32.mrf.mxu0
      %v1139 = vpop.f32.mrf.mxu0
      %v1140 = vadd.f32 %v1003, %v1139
      %v1141 = vpop.f32.mrf.mxu0
      %1142 = vmatprep.mubr.bf16.mxu0 0
      %1143 = vmatmul.mubr.bf16.gmra.mxu0 %v1064
      %v1144 = vpop.f32.mrf.mxu0
      %v1145 = vadd.f32 %v1008, %v1144
      %v1146 = vpop.f32.mrf.mxu0
      %v1147 = vpop.f32.mrf.mxu0
      %v1148 = vadd.f32 %v1011, %v1147
      %v1149 = vpop.f32.mrf.mxu0
      %1150 = vmatprep.mubr.bf16.mxu0 0
      %1151 = vmatmul.mubr.bf16.gmra.mxu0 %v1066
      %v1152 = vpop.f32.mrf.mxu0
      %v1153 = vadd.f32 %v1016, %v1152
      %v1154 = vpop.f32.mrf.mxu0
      %v1155 = vpop.f32.mrf.mxu0
      %v1156 = vadd.f32 %v1019, %v1155
      %v1157 = vpop.f32.mrf.mxu0
      %1158 = vmatprep.mubr.bf16.mxu0 0
      %1159 = vmatmul.mubr.bf16.gmra.mxu0 %v1068
      %v1160 = vpop.f32.mrf.mxu0
      %v1161 = vadd.f32 %v1024, %v1160
      %v1162 = vpop.f32.mrf.mxu0
      %v1163 = vpop.f32.mrf.mxu0
      %v1164 = vadd.f32 %v1027, %v1163
      %v1165 = vpop.f32.mrf.mxu0
      %1166 = vdwg.mxu0
      %vm1183 = vcmask 1046528
      %v1184 = vrot.slane %v750, 1
      %v1185 = vrot.slane %v751, 1
      %v1186 = vsel %vm1183, %v1184, %v1185
      %v1187 = vrot.slane %v752, 1
      %v1188 = vrot.slane %v753, 1
      %v1189 = vsel %vm1183, %v1187, %v1188
      %v1190 = vrot.slane %v754, 1
      %v1191 = vrot.slane %v755, 1
      %v1192 = vsel %vm1183, %v1190, %v1191
      %v1193 = vrot.slane %v756, 1
      %v1194 = vrot.slane %v757, 1
      %v1195 = vsel %vm1183, %v1193, %v1194
      %v1196 = vrot.slane %v758, 1
      %v1197 = vrot.slane %v759, 1
      %v1198 = vsel %vm1183, %v1196, %v1197
      %v1199 = vrot.slane %v760, 1
      %v1200 = vrot.slane %v761, 1
      %v1201 = vsel %vm1183, %v1199, %v1200
      %v1202 = vrot.slane %v762, 1
      %v1203 = vrot.slane %v763, 1
      %v1204 = vsel %vm1183, %v1202, %v1203
      %v1205 = vrot.slane %v764, 1
      %v1206 = vrot.slane %v765, 1
      %v1207 = vsel %vm1183, %v1205, %v1206
      %s1208 = scalar_lea.vmem %s3, 64
      %v1209 = vld [vmem:[%s1208] sm:$0xf]
      %v1210 = vld [vmem:[%s1208 + $0x4] sm:$0xf]
      %v1211 = vld [vmem:[%s1208 + $0x8] sm:$0xf]
      %v1212 = vld [vmem:[%s1208 + $0xc] sm:$0xf]
      %v1213 = vld [vmem:[%s1208 + $0x10] sm:$0xf]
      %v1214 = vld [vmem:[%s1208 + $0x14] sm:$0xf]
      %v1215 = vld [vmem:[%s1208 + $0x18] sm:$0xf]
      %v1216 = vld [vmem:[%s1208 + $0x1c] sm:$0xf]
      %v1225 = vunpack.c.l.b16 %v1209
      %v1226 = vunpack.c.l.b16 %v1210
      %v1227 = vunpack.c.l.b16 %v1211
      %v1228 = vunpack.c.l.b16 %v1212
      %v1229 = vunpack.c.l.b16 %v1213
      %v1230 = vunpack.c.l.b16 %v1214
      %v1231 = vunpack.c.l.b16 %v1215
      %v1232 = vunpack.c.l.b16 %v1216
      %v1233 = vpack.c.b16 %v1226, %v1225
      %v1234 = vpack.c.b16 %v1228, %v1227
      %v1235 = vpack.c.b16 %v1230, %v1229
      %v1236 = vpack.c.b16 %v1232, %v1231
      %v1242 = vsel %vm908, %v1186, 0
      %v1245 = vsel %vm908, %v1189, 0
      %v1248 = vsel %vm908, %v1192, 0
      %v1251 = vsel %vm908, %v1195, 0
      %v1254 = vsel %vm908, %v1198, 0
      %v1257 = vsel %vm908, %v1201, 0
      %v1260 = vsel %vm908, %v1204, 0
      %v1263 = vsel %vm908, %v1207, 0
      %1265 = vmatprep.subr.bf16.mxu0 0
      %1266 = vmatpush1.bf16.msra.mxu0 0
      %1267 = vmatprep.subr.bf16.mxu0 0
      %1268 = vmatpush1.bf16.msra.mxu0 0
      %1269 = vmatprep.subr.bf16.mxu0 0
      %1270 = vmatpush1.bf16.msra.mxu0 0
      %1271 = vmatprep.subr.bf16.mxu0 0
      %1272 = vmatpush1.bf16.msra.mxu0 0
      %1273 = vmatprep.subr.bf16.mxu0 0
      %1274 = vmatpush1.bf16.msra.mxu0 %v1236
      %1275 = vmatprep.subr.bf16.mxu0 0
      %1276 = vmatpush1.bf16.msra.mxu0 %v1235
      %1277 = vmatprep.subr.bf16.mxu0 0
      %1278 = vmatpush1.bf16.msra.mxu0 %v1234
      %1279 = vmatprep.subr.bf16.mxu0 0
      %1280 = vmatpush1.bf16.msra.mxu0 %v1233
      %1281 = vmatprep.subr.bf16.mxu0 0
      %1282 = vmatpush2.bf16.msra.mxu0 0
      %1283 = vmatprep.subr.bf16.mxu0 0
      %1284 = vmatpush2.bf16.msra.mxu0 0
      %1285 = vmatprep.subr.bf16.mxu0 0
      %1286 = vmatpush2.bf16.msra.mxu0 0
      %1287 = vmatprep.subr.bf16.mxu0 0
      %1288 = vmatpush2.bf16.msra.mxu0 0
      %1289 = vmatprep.subr.bf16.mxu0 0
      %1290 = vmatpush2.bf16.msra.mxu0 0
      %1291 = vmatprep.subr.bf16.mxu0 0
      %1292 = vmatpush2.bf16.msra.mxu0 0
      %1293 = vmatprep.subr.bf16.mxu0 0
      %1294 = vmatpush2.bf16.msra.mxu0 0
      %1295 = vmatprep.subr.bf16.mxu0 0
      %1296 = vmatpush2.bf16.msra.mxu0 0
      %1297 = vmatprep.mubr.bf16.mxu0 0
      %1298 = vmatmul.mubr.bf16.gmra.mxu0 %v1242
      %v1299 = vpop.f32.mrf.mxu0
      %v1300 = vadd.f32 0.0, %v1299
      %v1301 = vpop.f32.mrf.mxu0
      %v1302 = vpop.f32.mrf.mxu0
      %v1303 = vadd.f32 0.0, %v1302
      %v1304 = vpop.f32.mrf.mxu0
      %1305 = vmatprep.mubr.bf16.mxu0 0
      %1306 = vmatmul.mubr.bf16.gmra.mxu0 %v1245
      %v1307 = vpop.f32.mrf.mxu0
      %v1308 = vadd.f32 0.0, %v1307
      %v1309 = vpop.f32.mrf.mxu0
      %v1310 = vpop.f32.mrf.mxu0
      %v1311 = vadd.f32 0.0, %v1310
      %v1312 = vpop.f32.mrf.mxu0
      %1313 = vmatprep.mubr.bf16.mxu0 0
      %1314 = vmatmul.mubr.bf16.gmra.mxu0 %v1248
      %v1315 = vpop.f32.mrf.mxu0
      %v1316 = vadd.f32 0.0, %v1315
      %v1317 = vpop.f32.mrf.mxu0
      %v1318 = vpop.f32.mrf.mxu0
      %v1319 = vadd.f32 0.0, %v1318
      %v1320 = vpop.f32.mrf.mxu0
      %1321 = vmatprep.mubr.bf16.mxu0 0
      %1322 = vmatmul.mubr.bf16.gmra.mxu0 %v1251
      %v1323 = vpop.f32.mrf.mxu0
      %v1324 = vadd.f32 0.0, %v1323
      %v1325 = vpop.f32.mrf.mxu0
      %v1326 = vpop.f32.mrf.mxu0
      %v1327 = vadd.f32 0.0, %v1326
      %v1328 = vpop.f32.mrf.mxu0
      %1329 = vmatprep.mubr.bf16.mxu0 0
      %1330 = vmatmul.mubr.bf16.gmra.mxu0 %v1254
      %v1331 = vpop.f32.mrf.mxu0
      %v1332 = vadd.f32 0.0, %v1331
      %v1333 = vpop.f32.mrf.mxu0
      %v1334 = vpop.f32.mrf.mxu0
      %v1335 = vadd.f32 0.0, %v1334
      %v1336 = vpop.f32.mrf.mxu0
      %1337 = vmatprep.mubr.bf16.mxu0 0
      %1338 = vmatmul.mubr.bf16.gmra.mxu0 %v1257
      %v1339 = vpop.f32.mrf.mxu0
      %v1340 = vadd.f32 0.0, %v1339
      %v1341 = vpop.f32.mrf.mxu0
      %v1342 = vpop.f32.mrf.mxu0
      %v1343 = vadd.f32 0.0, %v1342
      %v1344 = vpop.f32.mrf.mxu0
      %1345 = vmatprep.mubr.bf16.mxu0 0
      %1346 = vmatmul.mubr.bf16.gmra.mxu0 %v1260
      %v1347 = vpop.f32.mrf.mxu0
      %v1348 = vadd.f32 0.0, %v1347
      %v1349 = vpop.f32.mrf.mxu0
      %v1350 = vpop.f32.mrf.mxu0
      %v1351 = vadd.f32 0.0, %v1350
      %v1352 = vpop.f32.mrf.mxu0
      %1353 = vmatprep.mubr.bf16.mxu0 0
      %1354 = vmatmul.mubr.bf16.gmra.mxu0 %v1263
      %v1355 = vpop.f32.mrf.mxu0
      %v1356 = vadd.f32 0.0, %v1355
      %v1357 = vpop.f32.mrf.mxu0
      %v1358 = vpop.f32.mrf.mxu0
      %v1359 = vadd.f32 0.0, %v1358
      %v1360 = vpop.f32.mrf.mxu0
      %1361 = vdwg.mxu0
      %v1362 = vadd.f32 %v1105, %v1300
      %v1363 = vadd.f32 %v1108, %v1303
      %v1364 = vadd.f32 %v1113, %v1308
      %v1365 = vadd.f32 %v1116, %v1311
      %v1366 = vadd.f32 %v1121, %v1316
      %v1367 = vadd.f32 %v1124, %v1319
      %v1368 = vadd.f32 %v1129, %v1324
      %v1369 = vadd.f32 %v1132, %v1327
      %v1370 = vadd.f32 %v1137, %v1332
      %v1371 = vadd.f32 %v1140, %v1335
      %v1372 = vadd.f32 %v1145, %v1340
      %v1373 = vadd.f32 %v1148, %v1343
      %v1374 = vadd.f32 %v1153, %v1348
      %v1375 = vadd.f32 %v1156, %v1351
      %v1376 = vadd.f32 %v1161, %v1356
      %v1377 = vadd.f32 %v1164, %v1359
      %s1378 = scalar_lea.vmem %s3, 96
      %v1379 = vld [vmem:[%s1378] sm:$0xf]
      %v1380 = vld [vmem:[%s1378 + $0x4] sm:$0xf]
      %v1381 = vld [vmem:[%s1378 + $0x8] sm:$0xf]
      %v1382 = vld [vmem:[%s1378 + $0xc] sm:$0xf]
      %v1383 = vld [vmem:[%s1378 + $0x10] sm:$0xf]
      %v1384 = vld [vmem:[%s1378 + $0x14] sm:$0xf]
      %v1385 = vld [vmem:[%s1378 + $0x18] sm:$0xf]
      %v1386 = vld [vmem:[%s1378 + $0x1c] sm:$0xf]
      %v1395 = vunpack.c.l.b16 %v1379
      %v1396 = vunpack.c.l.b16 %v1380
      %v1397 = vunpack.c.l.b16 %v1381
      %v1398 = vunpack.c.l.b16 %v1382
      %v1399 = vunpack.c.l.b16 %v1383
      %v1400 = vunpack.c.l.b16 %v1384
      %v1401 = vunpack.c.l.b16 %v1385
      %v1402 = vunpack.c.l.b16 %v1386
      %v1403 = vpack.c.b16 %v1396, %v1395
      %v1404 = vpack.c.b16 %v1398, %v1397
      %v1405 = vpack.c.b16 %v1400, %v1399
      %v1406 = vpack.c.b16 %v1402, %v1401
      %v1412 = vsel %vm908, %v766, 0
      %1414 = vmatprep.subr.bf16.mxu0 0
      %1415 = vmatpush1.bf16.msra.mxu0 0
      %1416 = vmatprep.subr.bf16.mxu0 0
      %1417 = vmatpush1.bf16.msra.mxu0 0
      %1418 = vmatprep.subr.bf16.mxu0 0
      %1419 = vmatpush1.bf16.msra.mxu0 0
      %1420 = vmatprep.subr.bf16.mxu0 0
      %1421 = vmatpush1.bf16.msra.mxu0 0
      %1422 = vmatprep.subr.bf16.mxu0 0
      %1423 = vmatpush1.bf16.msra.mxu0 %v1406
      %1424 = vmatprep.subr.bf16.mxu0 0
      %1425 = vmatpush1.bf16.msra.mxu0 %v1405
      %1426 = vmatprep.subr.bf16.mxu0 0
      %1427 = vmatpush1.bf16.msra.mxu0 %v1404
      %1428 = vmatprep.subr.bf16.mxu0 0
      %1429 = vmatpush1.bf16.msra.mxu0 %v1403
      %1430 = vmatprep.subr.bf16.mxu0 0
      %1431 = vmatpush2.bf16.msra.mxu0 0
      %1432 = vmatprep.subr.bf16.mxu0 0
      %1433 = vmatpush2.bf16.msra.mxu0 0
      %1434 = vmatprep.subr.bf16.mxu0 0
      %1435 = vmatpush2.bf16.msra.mxu0 0
      %1436 = vmatprep.subr.bf16.mxu0 0
      %1437 = vmatpush2.bf16.msra.mxu0 0
      %1438 = vmatprep.subr.bf16.mxu0 0
      %1439 = vmatpush2.bf16.msra.mxu0 0
      %1440 = vmatprep.subr.bf16.mxu0 0
      %1441 = vmatpush2.bf16.msra.mxu0 0
      %1442 = vmatprep.subr.bf16.mxu0 0
      %1443 = vmatpush2.bf16.msra.mxu0 0
      %1444 = vmatprep.subr.bf16.mxu0 0
      %1445 = vmatpush2.bf16.msra.mxu0 0
      %1446 = vmatprep.mubr.bf16.mxu0 0
      %1447 = vmatmul.mubr.bf16.gmra.mxu0 %v1056
      %v1448 = vpop.f32.mrf.mxu0
      %v1449 = vadd.f32 0.0, %v1448
      %v1450 = vpop.f32.mrf.mxu0
      %v1451 = vpop.f32.mrf.mxu0
      %v1452 = vadd.f32 0.0, %v1451
      %v1453 = vpop.f32.mrf.mxu0
      %1454 = vmatprep.mubr.bf16.mxu0 0
      %1455 = vmatmul.mubr.bf16.gmra.mxu0 %v1058
      %v1456 = vpop.f32.mrf.mxu0
      %v1457 = vadd.f32 0.0, %v1456
      %v1458 = vpop.f32.mrf.mxu0
      %v1459 = vpop.f32.mrf.mxu0
      %v1460 = vadd.f32 0.0, %v1459
      %v1461 = vpop.f32.mrf.mxu0
      %1462 = vmatprep.mubr.bf16.mxu0 0
      %1463 = vmatmul.mubr.bf16.gmra.mxu0 %v1060
      %v1464 = vpop.f32.mrf.mxu0
      %v1465 = vadd.f32 0.0, %v1464
      %v1466 = vpop.f32.mrf.mxu0
      %v1467 = vpop.f32.mrf.mxu0
      %v1468 = vadd.f32 0.0, %v1467
      %v1469 = vpop.f32.mrf.mxu0
      %1470 = vmatprep.mubr.bf16.mxu0 0
      %1471 = vmatmul.mubr.bf16.gmra.mxu0 %v1062
      %v1472 = vpop.f32.mrf.mxu0
      %v1473 = vadd.f32 0.0, %v1472
      %v1474 = vpop.f32.mrf.mxu0
      %v1475 = vpop.f32.mrf.mxu0
      %v1476 = vadd.f32 0.0, %v1475
      %v1477 = vpop.f32.mrf.mxu0
      %1478 = vmatprep.mubr.bf16.mxu0 0
      %1479 = vmatmul.mubr.bf16.gmra.mxu0 %v1064
      %v1480 = vpop.f32.mrf.mxu0
      %v1481 = vadd.f32 0.0, %v1480
      %v1482 = vpop.f32.mrf.mxu0
      %v1483 = vpop.f32.mrf.mxu0
      %v1484 = vadd.f32 0.0, %v1483
      %v1485 = vpop.f32.mrf.mxu0
      %1486 = vmatprep.mubr.bf16.mxu0 0
      %1487 = vmatmul.mubr.bf16.gmra.mxu0 %v1066
      %v1488 = vpop.f32.mrf.mxu0
      %v1489 = vadd.f32 0.0, %v1488
      %v1490 = vpop.f32.mrf.mxu0
      %v1491 = vpop.f32.mrf.mxu0
      %v1492 = vadd.f32 0.0, %v1491
      %v1493 = vpop.f32.mrf.mxu0
      %1494 = vmatprep.mubr.bf16.mxu0 0
      %1495 = vmatmul.mubr.bf16.gmra.mxu0 %v1068
      %v1496 = vpop.f32.mrf.mxu0
      %v1497 = vadd.f32 0.0, %v1496
      %v1498 = vpop.f32.mrf.mxu0
      %v1499 = vpop.f32.mrf.mxu0
      %v1500 = vadd.f32 0.0, %v1499
      %v1501 = vpop.f32.mrf.mxu0
      %1502 = vmatprep.mubr.bf16.mxu0 0
      %1503 = vmatmul.mubr.bf16.gmra.mxu0 %v1412
      %v1504 = vpop.f32.mrf.mxu0
      %v1505 = vadd.f32 0.0, %v1504
      %v1506 = vpop.f32.mrf.mxu0
      %v1507 = vpop.f32.mrf.mxu0
      %v1508 = vadd.f32 0.0, %v1507
      %v1509 = vpop.f32.mrf.mxu0
      %1510 = vdwg.mxu0
      %v1511 = vadd.f32 %v1362, %v1449
      %v1512 = vadd.f32 %v1363, %v1452
      %v1513 = vadd.f32 %v1364, %v1457
      %v1514 = vadd.f32 %v1365, %v1460
      %v1515 = vadd.f32 %v1366, %v1465
      %v1516 = vadd.f32 %v1367, %v1468
      %v1517 = vadd.f32 %v1368, %v1473
      %v1518 = vadd.f32 %v1369, %v1476
      %v1519 = vadd.f32 %v1370, %v1481
      %v1520 = vadd.f32 %v1371, %v1484
      %v1521 = vadd.f32 %v1372, %v1489
      %v1522 = vadd.f32 %v1373, %v1492
      %v1523 = vadd.f32 %v1374, %v1497
      %v1524 = vadd.f32 %v1375, %v1500
      %v1525 = vadd.f32 %v1376, %v1505
      %v1526 = vadd.f32 %v1377, %v1508
      %v1527 = vshrl.u32 %v766, 16
      %v1529 = vshll.u32 %v766, 16
      %v1531 = vrot.slane %v1529, 1
      %v1532 = vor.u32 %v1527, %v1531
      %v1534 = vshll.u32 %v767, 16
      %v1536 = vrot.slane %v1534, 1
      %v1537 = vsel %vm778, %v1532, %v1536
      %s1538 = scalar_lea.vmem %s3, 128
      %v1539 = vld [vmem:[%s1538] sm:$0xf]
      %v1540 = vld [vmem:[%s1538 + $0x4] sm:$0xf]
      %v1541 = vld [vmem:[%s1538 + $0x8] sm:$0xf]
      %v1542 = vld [vmem:[%s1538 + $0xc] sm:$0xf]
      %v1543 = vld [vmem:[%s1538 + $0x10] sm:$0xf]
      %v1544 = vld [vmem:[%s1538 + $0x14] sm:$0xf]
      %v1545 = vld [vmem:[%s1538 + $0x18] sm:$0xf]
      %v1546 = vld [vmem:[%s1538 + $0x1c] sm:$0xf]
      %v1555 = vunpack.c.l.b16 %v1539
      %v1556 = vunpack.c.l.b16 %v1540
      %v1557 = vunpack.c.l.b16 %v1541
      %v1558 = vunpack.c.l.b16 %v1542
      %v1559 = vunpack.c.l.b16 %v1543
      %v1560 = vunpack.c.l.b16 %v1544
      %v1561 = vunpack.c.l.b16 %v1545
      %v1562 = vunpack.c.l.b16 %v1546
      %v1563 = vpack.c.b16 %v1556, %v1555
      %v1564 = vpack.c.b16 %v1558, %v1557
      %v1565 = vpack.c.b16 %v1560, %v1559
      %v1566 = vpack.c.b16 %v1562, %v1561
      %v1572 = vsel %vm908, %v1537, 0
      %1574 = vmatprep.subr.bf16.mxu0 0
      %1575 = vmatpush1.bf16.msra.mxu0 0
      %1576 = vmatprep.subr.bf16.mxu0 0
      %1577 = vmatpush1.bf16.msra.mxu0 0
      %1578 = vmatprep.subr.bf16.mxu0 0
      %1579 = vmatpush1.bf16.msra.mxu0 0
      %1580 = vmatprep.subr.bf16.mxu0 0
      %1581 = vmatpush1.bf16.msra.mxu0 0
      %1582 = vmatprep.subr.bf16.mxu0 0
      %1583 = vmatpush1.bf16.msra.mxu0 %v1566
      %1584 = vmatprep.subr.bf16.mxu0 0
      %1585 = vmatpush1.bf16.msra.mxu0 %v1565
      %1586 = vmatprep.subr.bf16.mxu0 0
      %1587 = vmatpush1.bf16.msra.mxu0 %v1564
      %1588 = vmatprep.subr.bf16.mxu0 0
      %1589 = vmatpush1.bf16.msra.mxu0 %v1563
      %1590 = vmatprep.subr.bf16.mxu0 0
      %1591 = vmatpush2.bf16.msra.mxu0 0
      %1592 = vmatprep.subr.bf16.mxu0 0
      %1593 = vmatpush2.bf16.msra.mxu0 0
      %1594 = vmatprep.subr.bf16.mxu0 0
      %1595 = vmatpush2.bf16.msra.mxu0 0
      %1596 = vmatprep.subr.bf16.mxu0 0
      %1597 = vmatpush2.bf16.msra.mxu0 0
      %1598 = vmatprep.subr.bf16.mxu0 0
      %1599 = vmatpush2.bf16.msra.mxu0 0
      %1600 = vmatprep.subr.bf16.mxu0 0
      %1601 = vmatpush2.bf16.msra.mxu0 0
      %1602 = vmatprep.subr.bf16.mxu0 0
      %1603 = vmatpush2.bf16.msra.mxu0 0
      %1604 = vmatprep.subr.bf16.mxu0 0
      %1605 = vmatpush2.bf16.msra.mxu0 0
      %1606 = vmatprep.mubr.bf16.mxu0 0
      %1607 = vmatmul.mubr.bf16.gmra.mxu0 %v913
      %v1608 = vpop.f32.mrf.mxu0
      %v1609 = vadd.f32 0.0, %v1608
      %v1610 = vpop.f32.mrf.mxu0
      %v1611 = vpop.f32.mrf.mxu0
      %v1612 = vadd.f32 0.0, %v1611
      %v1613 = vpop.f32.mrf.mxu0
      %1614 = vmatprep.mubr.bf16.mxu0 0
      %1615 = vmatmul.mubr.bf16.gmra.mxu0 %v916
      %v1616 = vpop.f32.mrf.mxu0
      %v1617 = vadd.f32 0.0, %v1616
      %v1618 = vpop.f32.mrf.mxu0
      %v1619 = vpop.f32.mrf.mxu0
      %v1620 = vadd.f32 0.0, %v1619
      %v1621 = vpop.f32.mrf.mxu0
      %1622 = vmatprep.mubr.bf16.mxu0 0
      %1623 = vmatmul.mubr.bf16.gmra.mxu0 %v919
      %v1624 = vpop.f32.mrf.mxu0
      %v1625 = vadd.f32 0.0, %v1624
      %v1626 = vpop.f32.mrf.mxu0
      %v1627 = vpop.f32.mrf.mxu0
      %v1628 = vadd.f32 0.0, %v1627
      %v1629 = vpop.f32.mrf.mxu0
      %1630 = vmatprep.mubr.bf16.mxu0 0
      %1631 = vmatmul.mubr.bf16.gmra.mxu0 %v922
      %v1632 = vpop.f32.mrf.mxu0
      %v1633 = vadd.f32 0.0, %v1632
      %v1634 = vpop.f32.mrf.mxu0
      %v1635 = vpop.f32.mrf.mxu0
      %v1636 = vadd.f32 0.0, %v1635
      %v1637 = vpop.f32.mrf.mxu0
      %1638 = vmatprep.mubr.bf16.mxu0 0
      %1639 = vmatmul.mubr.bf16.gmra.mxu0 %v925
      %v1640 = vpop.f32.mrf.mxu0
      %v1641 = vadd.f32 0.0, %v1640
      %v1642 = vpop.f32.mrf.mxu0
      %v1643 = vpop.f32.mrf.mxu0
      %v1644 = vadd.f32 0.0, %v1643
      %v1645 = vpop.f32.mrf.mxu0
      %1646 = vmatprep.mubr.bf16.mxu0 0
      %1647 = vmatmul.mubr.bf16.gmra.mxu0 %v928
      %v1648 = vpop.f32.mrf.mxu0
      %v1649 = vadd.f32 0.0, %v1648
      %v1650 = vpop.f32.mrf.mxu0
      %v1651 = vpop.f32.mrf.mxu0
      %v1652 = vadd.f32 0.0, %v1651
      %v1653 = vpop.f32.mrf.mxu0
      %1654 = vmatprep.mubr.bf16.mxu0 0
      %1655 = vmatmul.mubr.bf16.gmra.mxu0 %v931
      %v1656 = vpop.f32.mrf.mxu0
      %v1657 = vadd.f32 0.0, %v1656
      %v1658 = vpop.f32.mrf.mxu0
      %v1659 = vpop.f32.mrf.mxu0
      %v1660 = vadd.f32 0.0, %v1659
      %v1661 = vpop.f32.mrf.mxu0
      %1662 = vmatprep.mubr.bf16.mxu0 0
      %1663 = vmatmul.mubr.bf16.gmra.mxu0 %v1572
      %v1664 = vpop.f32.mrf.mxu0
      %v1665 = vadd.f32 0.0, %v1664
      %v1666 = vpop.f32.mrf.mxu0
      %v1667 = vpop.f32.mrf.mxu0
      %v1668 = vadd.f32 0.0, %v1667
      %v1669 = vpop.f32.mrf.mxu0
      %1670 = vdwg.mxu0
      %v1671 = vadd.f32 %v1511, %v1609
      %v1672 = vadd.f32 %v1512, %v1612
      %v1673 = vadd.f32 %v1513, %v1617
      %v1674 = vadd.f32 %v1514, %v1620
      %v1675 = vadd.f32 %v1515, %v1625
      %v1676 = vadd.f32 %v1516, %v1628
      %v1677 = vadd.f32 %v1517, %v1633
      %v1678 = vadd.f32 %v1518, %v1636
      %v1679 = vadd.f32 %v1519, %v1641
      %v1680 = vadd.f32 %v1520, %v1644
      %v1681 = vadd.f32 %v1521, %v1649
      %v1682 = vadd.f32 %v1522, %v1652
      %v1683 = vadd.f32 %v1523, %v1657
      %v1684 = vadd.f32 %v1524, %v1660
      %v1685 = vadd.f32 %v1525, %v1665
      %v1686 = vadd.f32 %v1526, %v1668
      %v1689 = vrot.slane %v766, 1
      %v1690 = vrot.slane %v767, 1
      %v1691 = vsel %vm1183, %v1689, %v1690
      %s1692 = scalar_lea.vmem %s3, 160
      %v1693 = vld [vmem:[%s1692] sm:$0xf]
      %v1694 = vld [vmem:[%s1692 + $0x4] sm:$0xf]
      %v1695 = vld [vmem:[%s1692 + $0x8] sm:$0xf]
      %v1696 = vld [vmem:[%s1692 + $0xc] sm:$0xf]
      %v1697 = vld [vmem:[%s1692 + $0x10] sm:$0xf]
      %v1698 = vld [vmem:[%s1692 + $0x14] sm:$0xf]
      %v1699 = vld [vmem:[%s1692 + $0x18] sm:$0xf]
      %v1700 = vld [vmem:[%s1692 + $0x1c] sm:$0xf]
      %v1709 = vunpack.c.l.b16 %v1693
      %v1710 = vunpack.c.l.b16 %v1694
      %v1711 = vunpack.c.l.b16 %v1695
      %v1712 = vunpack.c.l.b16 %v1696
      %v1713 = vunpack.c.l.b16 %v1697
      %v1714 = vunpack.c.l.b16 %v1698
      %v1715 = vunpack.c.l.b16 %v1699
      %v1716 = vunpack.c.l.b16 %v1700
      %v1717 = vpack.c.b16 %v1710, %v1709
      %v1718 = vpack.c.b16 %v1712, %v1711
      %v1719 = vpack.c.b16 %v1714, %v1713
      %v1720 = vpack.c.b16 %v1716, %v1715
      %v1726 = vsel %vm908, %v1691, 0
      %1728 = vmatprep.subr.bf16.mxu0 0
      %1729 = vmatpush1.bf16.msra.mxu0 0
      %1730 = vmatprep.subr.bf16.mxu0 0
      %1731 = vmatpush1.bf16.msra.mxu0 0
      %1732 = vmatprep.subr.bf16.mxu0 0
      %1733 = vmatpush1.bf16.msra.mxu0 0
      %1734 = vmatprep.subr.bf16.mxu0 0
      %1735 = vmatpush1.bf16.msra.mxu0 0
      %1736 = vmatprep.subr.bf16.mxu0 0
      %1737 = vmatpush1.bf16.msra.mxu0 %v1720
      %1738 = vmatprep.subr.bf16.mxu0 0
      %1739 = vmatpush1.bf16.msra.mxu0 %v1719
      %1740 = vmatprep.subr.bf16.mxu0 0
      %1741 = vmatpush1.bf16.msra.mxu0 %v1718
      %1742 = vmatprep.subr.bf16.mxu0 0
      %1743 = vmatpush1.bf16.msra.mxu0 %v1717
      %1744 = vmatprep.subr.bf16.mxu0 0
      %1745 = vmatpush2.bf16.msra.mxu0 0
      %1746 = vmatprep.subr.bf16.mxu0 0
      %1747 = vmatpush2.bf16.msra.mxu0 0
      %1748 = vmatprep.subr.bf16.mxu0 0
      %1749 = vmatpush2.bf16.msra.mxu0 0
      %1750 = vmatprep.subr.bf16.mxu0 0
      %1751 = vmatpush2.bf16.msra.mxu0 0
      %1752 = vmatprep.subr.bf16.mxu0 0
      %1753 = vmatpush2.bf16.msra.mxu0 0
      %1754 = vmatprep.subr.bf16.mxu0 0
      %1755 = vmatpush2.bf16.msra.mxu0 0
      %1756 = vmatprep.subr.bf16.mxu0 0
      %1757 = vmatpush2.bf16.msra.mxu0 0
      %1758 = vmatprep.subr.bf16.mxu0 0
      %1759 = vmatpush2.bf16.msra.mxu0 0
      %1760 = vmatprep.mubr.bf16.mxu0 0
      %1761 = vmatmul.mubr.bf16.gmra.mxu0 %v1245
      %v1762 = vpop.f32.mrf.mxu0
      %v1763 = vadd.f32 0.0, %v1762
      %v1764 = vpop.f32.mrf.mxu0
      %v1765 = vpop.f32.mrf.mxu0
      %v1766 = vadd.f32 0.0, %v1765
      %v1767 = vpop.f32.mrf.mxu0
      %1768 = vmatprep.mubr.bf16.mxu0 0
      %1769 = vmatmul.mubr.bf16.gmra.mxu0 %v1248
      %v1770 = vpop.f32.mrf.mxu0
      %v1771 = vadd.f32 0.0, %v1770
      %v1772 = vpop.f32.mrf.mxu0
      %v1773 = vpop.f32.mrf.mxu0
      %v1774 = vadd.f32 0.0, %v1773
      %v1775 = vpop.f32.mrf.mxu0
      %1776 = vmatprep.mubr.bf16.mxu0 0
      %1777 = vmatmul.mubr.bf16.gmra.mxu0 %v1251
      %v1778 = vpop.f32.mrf.mxu0
      %v1779 = vadd.f32 0.0, %v1778
      %v1780 = vpop.f32.mrf.mxu0
      %v1781 = vpop.f32.mrf.mxu0
      %v1782 = vadd.f32 0.0, %v1781
      %v1783 = vpop.f32.mrf.mxu0
      %1784 = vmatprep.mubr.bf16.mxu0 0
      %1785 = vmatmul.mubr.bf16.gmra.mxu0 %v1254
      %v1786 = vpop.f32.mrf.mxu0
      %v1787 = vadd.f32 0.0, %v1786
      %v1788 = vpop.f32.mrf.mxu0
      %v1789 = vpop.f32.mrf.mxu0
      %v1790 = vadd.f32 0.0, %v1789
      %v1791 = vpop.f32.mrf.mxu0
      %1792 = vmatprep.mubr.bf16.mxu0 0
      %1793 = vmatmul.mubr.bf16.gmra.mxu0 %v1257
      %v1794 = vpop.f32.mrf.mxu0
      %v1795 = vadd.f32 0.0, %v1794
      %v1796 = vpop.f32.mrf.mxu0
      %v1797 = vpop.f32.mrf.mxu0
      %v1798 = vadd.f32 0.0, %v1797
      %v1799 = vpop.f32.mrf.mxu0
      %1800 = vmatprep.mubr.bf16.mxu0 0
      %1801 = vmatmul.mubr.bf16.gmra.mxu0 %v1260
      %v1802 = vpop.f32.mrf.mxu0
      %v1803 = vadd.f32 0.0, %v1802
      %v1804 = vpop.f32.mrf.mxu0
      %v1805 = vpop.f32.mrf.mxu0
      %v1806 = vadd.f32 0.0, %v1805
      %v1807 = vpop.f32.mrf.mxu0
      %1808 = vmatprep.mubr.bf16.mxu0 0
      %1809 = vmatmul.mubr.bf16.gmra.mxu0 %v1263
      %v1810 = vpop.f32.mrf.mxu0
      %v1811 = vadd.f32 0.0, %v1810
      %v1812 = vpop.f32.mrf.mxu0
      %v1813 = vpop.f32.mrf.mxu0
      %v1814 = vadd.f32 0.0, %v1813
      %v1815 = vpop.f32.mrf.mxu0
      %1816 = vmatprep.mubr.bf16.mxu0 0
      %1817 = vmatmul.mubr.bf16.gmra.mxu0 %v1726
      %v1818 = vpop.f32.mrf.mxu0
      %v1819 = vadd.f32 0.0, %v1818
      %v1820 = vpop.f32.mrf.mxu0
      %v1821 = vpop.f32.mrf.mxu0
      %v1822 = vadd.f32 0.0, %v1821
      %v1823 = vpop.f32.mrf.mxu0
      %1824 = vdwg.mxu0
      %v1825 = vadd.f32 %v1671, %v1763
      %v1826 = vadd.f32 %v1672, %v1766
      %v1827 = vadd.f32 %v1673, %v1771
      %v1828 = vadd.f32 %v1674, %v1774
      %v1829 = vadd.f32 %v1675, %v1779
      %v1830 = vadd.f32 %v1676, %v1782
      %v1831 = vadd.f32 %v1677, %v1787
      %v1832 = vadd.f32 %v1678, %v1790
      %v1833 = vadd.f32 %v1679, %v1795
      %v1834 = vadd.f32 %v1680, %v1798
      %v1835 = vadd.f32 %v1681, %v1803
      %v1836 = vadd.f32 %v1682, %v1806
      %v1837 = vadd.f32 %v1683, %v1811
      %v1838 = vadd.f32 %v1684, %v1814
      %v1839 = vadd.f32 %v1685, %v1819
      %v1840 = vadd.f32 %v1686, %v1822
      %s1841 = scalar_lea.vmem %s3, 192
      %v1842 = vld [vmem:[%s1841] sm:$0xf]
      %v1843 = vld [vmem:[%s1841 + $0x4] sm:$0xf]
      %v1844 = vld [vmem:[%s1841 + $0x8] sm:$0xf]
      %v1845 = vld [vmem:[%s1841 + $0xc] sm:$0xf]
      %v1846 = vld [vmem:[%s1841 + $0x10] sm:$0xf]
      %v1847 = vld [vmem:[%s1841 + $0x14] sm:$0xf]
      %v1848 = vld [vmem:[%s1841 + $0x18] sm:$0xf]
      %v1849 = vld [vmem:[%s1841 + $0x1c] sm:$0xf]
      %v1858 = vunpack.c.l.b16 %v1842
      %v1859 = vunpack.c.l.b16 %v1843
      %v1860 = vunpack.c.l.b16 %v1844
      %v1861 = vunpack.c.l.b16 %v1845
      %v1862 = vunpack.c.l.b16 %v1846
      %v1863 = vunpack.c.l.b16 %v1847
      %v1864 = vunpack.c.l.b16 %v1848
      %v1865 = vunpack.c.l.b16 %v1849
      %v1866 = vpack.c.b16 %v1859, %v1858
      %v1867 = vpack.c.b16 %v1861, %v1860
      %v1868 = vpack.c.b16 %v1863, %v1862
      %v1869 = vpack.c.b16 %v1865, %v1864
      %v1875 = vsel %vm908, %v768, 0
      %1877 = vmatprep.subr.bf16.mxu0 0
      %1878 = vmatpush1.bf16.msra.mxu0 0
      %1879 = vmatprep.subr.bf16.mxu0 0
      %1880 = vmatpush1.bf16.msra.mxu0 0
      %1881 = vmatprep.subr.bf16.mxu0 0
      %1882 = vmatpush1.bf16.msra.mxu0 0
      %1883 = vmatprep.subr.bf16.mxu0 0
      %1884 = vmatpush1.bf16.msra.mxu0 0
      %1885 = vmatprep.subr.bf16.mxu0 0
      %1886 = vmatpush1.bf16.msra.mxu0 %v1869
      %1887 = vmatprep.subr.bf16.mxu0 0
      %1888 = vmatpush1.bf16.msra.mxu0 %v1868
      %1889 = vmatprep.subr.bf16.mxu0 0
      %1890 = vmatpush1.bf16.msra.mxu0 %v1867
      %1891 = vmatprep.subr.bf16.mxu0 0
      %1892 = vmatpush1.bf16.msra.mxu0 %v1866
      %1893 = vmatprep.subr.bf16.mxu0 0
      %1894 = vmatpush2.bf16.msra.mxu0 0
      %1895 = vmatprep.subr.bf16.mxu0 0
      %1896 = vmatpush2.bf16.msra.mxu0 0
      %1897 = vmatprep.subr.bf16.mxu0 0
      %1898 = vmatpush2.bf16.msra.mxu0 0
      %1899 = vmatprep.subr.bf16.mxu0 0
      %1900 = vmatpush2.bf16.msra.mxu0 0
      %1901 = vmatprep.subr.bf16.mxu0 0
      %1902 = vmatpush2.bf16.msra.mxu0 0
      %1903 = vmatprep.subr.bf16.mxu0 0
      %1904 = vmatpush2.bf16.msra.mxu0 0
      %1905 = vmatprep.subr.bf16.mxu0 0
      %1906 = vmatpush2.bf16.msra.mxu0 0
      %1907 = vmatprep.subr.bf16.mxu0 0
      %1908 = vmatpush2.bf16.msra.mxu0 0
      %1909 = vmatprep.mubr.bf16.mxu0 0
      %1910 = vmatmul.mubr.bf16.gmra.mxu0 %v1058
      %v1911 = vpop.f32.mrf.mxu0
      %v1912 = vadd.f32 0.0, %v1911
      %v1913 = vpop.f32.mrf.mxu0
      %v1914 = vpop.f32.mrf.mxu0
      %v1915 = vadd.f32 0.0, %v1914
      %v1916 = vpop.f32.mrf.mxu0
      %1917 = vmatprep.mubr.bf16.mxu0 0
      %1918 = vmatmul.mubr.bf16.gmra.mxu0 %v1060
      %v1919 = vpop.f32.mrf.mxu0
      %v1920 = vadd.f32 0.0, %v1919
      %v1921 = vpop.f32.mrf.mxu0
      %v1922 = vpop.f32.mrf.mxu0
      %v1923 = vadd.f32 0.0, %v1922
      %v1924 = vpop.f32.mrf.mxu0
      %1925 = vmatprep.mubr.bf16.mxu0 0
      %1926 = vmatmul.mubr.bf16.gmra.mxu0 %v1062
      %v1927 = vpop.f32.mrf.mxu0
      %v1928 = vadd.f32 0.0, %v1927
      %v1929 = vpop.f32.mrf.mxu0
      %v1930 = vpop.f32.mrf.mxu0
      %v1931 = vadd.f32 0.0, %v1930
      %v1932 = vpop.f32.mrf.mxu0
      %1933 = vmatprep.mubr.bf16.mxu0 0
      %1934 = vmatmul.mubr.bf16.gmra.mxu0 %v1064
      %v1935 = vpop.f32.mrf.mxu0
      %v1936 = vadd.f32 0.0, %v1935
      %v1937 = vpop.f32.mrf.mxu0
      %v1938 = vpop.f32.mrf.mxu0
      %v1939 = vadd.f32 0.0, %v1938
      %v1940 = vpop.f32.mrf.mxu0
      %1941 = vmatprep.mubr.bf16.mxu0 0
      %1942 = vmatmul.mubr.bf16.gmra.mxu0 %v1066
      %v1943 = vpop.f32.mrf.mxu0
      %v1944 = vadd.f32 0.0, %v1943
      %v1945 = vpop.f32.mrf.mxu0
      %v1946 = vpop.f32.mrf.mxu0
      %v1947 = vadd.f32 0.0, %v1946
      %v1948 = vpop.f32.mrf.mxu0
      %1949 = vmatprep.mubr.bf16.mxu0 0
      %1950 = vmatmul.mubr.bf16.gmra.mxu0 %v1068
      %v1951 = vpop.f32.mrf.mxu0
      %v1952 = vadd.f32 0.0, %v1951
      %v1953 = vpop.f32.mrf.mxu0
      %v1954 = vpop.f32.mrf.mxu0
      %v1955 = vadd.f32 0.0, %v1954
      %v1956 = vpop.f32.mrf.mxu0
      %1957 = vmatprep.mubr.bf16.mxu0 0
      %1958 = vmatmul.mubr.bf16.gmra.mxu0 %v1412
      %v1959 = vpop.f32.mrf.mxu0
      %v1960 = vadd.f32 0.0, %v1959
      %v1961 = vpop.f32.mrf.mxu0
      %v1962 = vpop.f32.mrf.mxu0
      %v1963 = vadd.f32 0.0, %v1962
      %v1964 = vpop.f32.mrf.mxu0
      %1965 = vmatprep.mubr.bf16.mxu0 0
      %1966 = vmatmul.mubr.bf16.gmra.mxu0 %v1875
      %v1967 = vpop.f32.mrf.mxu0
      %v1968 = vadd.f32 0.0, %v1967
      %v1969 = vpop.f32.mrf.mxu0
      %v1970 = vpop.f32.mrf.mxu0
      %v1971 = vadd.f32 0.0, %v1970
      %v1972 = vpop.f32.mrf.mxu0
      %1973 = vdwg.mxu0
      %v1974 = vadd.f32 %v1825, %v1912
      %v1975 = vadd.f32 %v1826, %v1915
      %v1976 = vadd.f32 %v1827, %v1920
      %v1977 = vadd.f32 %v1828, %v1923
      %v1978 = vadd.f32 %v1829, %v1928
      %v1979 = vadd.f32 %v1830, %v1931
      %v1980 = vadd.f32 %v1831, %v1936
      %v1981 = vadd.f32 %v1832, %v1939
      %v1982 = vadd.f32 %v1833, %v1944
      %v1983 = vadd.f32 %v1834, %v1947
      %v1984 = vadd.f32 %v1835, %v1952
      %v1985 = vadd.f32 %v1836, %v1955
      %v1986 = vadd.f32 %v1837, %v1960
      %v1987 = vadd.f32 %v1838, %v1963
      %v1988 = vadd.f32 %v1839, %v1968
      %v1989 = vadd.f32 %v1840, %v1971
      %v1990 = vshrl.u32 %v768, 16
      %v1992 = vshll.u32 %v768, 16
      %v1994 = vrot.slane %v1992, 1
      %v1995 = vor.u32 %v1990, %v1994
      %v1997 = vshll.u32 %v769, 16
      %v1999 = vrot.slane %v1997, 1
      %v2000 = vsel %vm778, %v1995, %v1999
      %s2001 = scalar_lea.vmem %s3, 224
      %v2002 = vld [vmem:[%s2001] sm:$0xf]
      %v2003 = vld [vmem:[%s2001 + $0x4] sm:$0xf]
      %v2004 = vld [vmem:[%s2001 + $0x8] sm:$0xf]
      %v2005 = vld [vmem:[%s2001 + $0xc] sm:$0xf]
      %v2006 = vld [vmem:[%s2001 + $0x10] sm:$0xf]
      %v2007 = vld [vmem:[%s2001 + $0x14] sm:$0xf]
      %v2008 = vld [vmem:[%s2001 + $0x18] sm:$0xf]
      %v2009 = vld [vmem:[%s2001 + $0x1c] sm:$0xf]
      %v2018 = vunpack.c.l.b16 %v2002
      %v2019 = vunpack.c.l.b16 %v2003
      %v2020 = vunpack.c.l.b16 %v2004
      %v2021 = vunpack.c.l.b16 %v2005
      %v2022 = vunpack.c.l.b16 %v2006
      %v2023 = vunpack.c.l.b16 %v2007
      %v2024 = vunpack.c.l.b16 %v2008
      %v2025 = vunpack.c.l.b16 %v2009
      %v2026 = vpack.c.b16 %v2019, %v2018
      %v2027 = vpack.c.b16 %v2021, %v2020
      %v2028 = vpack.c.b16 %v2023, %v2022
      %v2029 = vpack.c.b16 %v2025, %v2024
      %v2035 = vsel %vm908, %v2000, 0
      %2037 = vmatprep.subr.bf16.mxu0 0
      %2038 = vmatpush1.bf16.msra.mxu0 0
      %2039 = vmatprep.subr.bf16.mxu0 0
      %2040 = vmatpush1.bf16.msra.mxu0 0
      %2041 = vmatprep.subr.bf16.mxu0 0
      %2042 = vmatpush1.bf16.msra.mxu0 0
      %2043 = vmatprep.subr.bf16.mxu0 0
      %2044 = vmatpush1.bf16.msra.mxu0 0
      %2045 = vmatprep.subr.bf16.mxu0 0
      %2046 = vmatpush1.bf16.msra.mxu0 %v2029
      %2047 = vmatprep.subr.bf16.mxu0 0
      %2048 = vmatpush1.bf16.msra.mxu0 %v2028
      %2049 = vmatprep.subr.bf16.mxu0 0
      %2050 = vmatpush1.bf16.msra.mxu0 %v2027
      %2051 = vmatprep.subr.bf16.mxu0 0
      %2052 = vmatpush1.bf16.msra.mxu0 %v2026
      %2053 = vmatprep.subr.bf16.mxu0 0
      %2054 = vmatpush2.bf16.msra.mxu0 0
      %2055 = vmatprep.subr.bf16.mxu0 0
      %2056 = vmatpush2.bf16.msra.mxu0 0
      %2057 = vmatprep.subr.bf16.mxu0 0
      %2058 = vmatpush2.bf16.msra.mxu0 0
      %2059 = vmatprep.subr.bf16.mxu0 0
      %2060 = vmatpush2.bf16.msra.mxu0 0
      %2061 = vmatprep.subr.bf16.mxu0 0
      %2062 = vmatpush2.bf16.msra.mxu0 0
      %2063 = vmatprep.subr.bf16.mxu0 0
      %2064 = vmatpush2.bf16.msra.mxu0 0
      %2065 = vmatprep.subr.bf16.mxu0 0
      %2066 = vmatpush2.bf16.msra.mxu0 0
      %2067 = vmatprep.subr.bf16.mxu0 0
      %2068 = vmatpush2.bf16.msra.mxu0 0
      %2069 = vmatprep.mubr.bf16.mxu0 0
      %2070 = vmatmul.mubr.bf16.gmra.mxu0 %v916
      %v2071 = vpop.f32.mrf.mxu0
      %v2072 = vadd.f32 0.0, %v2071
      %v2073 = vpop.f32.mrf.mxu0
      %v2074 = vpop.f32.mrf.mxu0
      %v2075 = vadd.f32 0.0, %v2074
      %v2076 = vpop.f32.mrf.mxu0
      %2077 = vmatprep.mubr.bf16.mxu0 0
      %2078 = vmatmul.mubr.bf16.gmra.mxu0 %v919
      %v2079 = vpop.f32.mrf.mxu0
      %v2080 = vadd.f32 0.0, %v2079
      %v2081 = vpop.f32.mrf.mxu0
      %v2082 = vpop.f32.mrf.mxu0
      %v2083 = vadd.f32 0.0, %v2082
      %v2084 = vpop.f32.mrf.mxu0
      %2085 = vmatprep.mubr.bf16.mxu0 0
      %2086 = vmatmul.mubr.bf16.gmra.mxu0 %v922
      %v2087 = vpop.f32.mrf.mxu0
      %v2088 = vadd.f32 0.0, %v2087
      %v2089 = vpop.f32.mrf.mxu0
      %v2090 = vpop.f32.mrf.mxu0
      %v2091 = vadd.f32 0.0, %v2090
      %v2092 = vpop.f32.mrf.mxu0
      %2093 = vmatprep.mubr.bf16.mxu0 0
      %2094 = vmatmul.mubr.bf16.gmra.mxu0 %v925
      %v2095 = vpop.f32.mrf.mxu0
      %v2096 = vadd.f32 0.0, %v2095
      %v2097 = vpop.f32.mrf.mxu0
      %v2098 = vpop.f32.mrf.mxu0
      %v2099 = vadd.f32 0.0, %v2098
      %v2100 = vpop.f32.mrf.mxu0
      %2101 = vmatprep.mubr.bf16.mxu0 0
      %2102 = vmatmul.mubr.bf16.gmra.mxu0 %v928
      %v2103 = vpop.f32.mrf.mxu0
      %v2104 = vadd.f32 0.0, %v2103
      %v2105 = vpop.f32.mrf.mxu0
      %v2106 = vpop.f32.mrf.mxu0
      %v2107 = vadd.f32 0.0, %v2106
      %v2108 = vpop.f32.mrf.mxu0
      %2109 = vmatprep.mubr.bf16.mxu0 0
      %2110 = vmatmul.mubr.bf16.gmra.mxu0 %v931
      %v2111 = vpop.f32.mrf.mxu0
      %v2112 = vadd.f32 0.0, %v2111
      %v2113 = vpop.f32.mrf.mxu0
      %v2114 = vpop.f32.mrf.mxu0
      %v2115 = vadd.f32 0.0, %v2114
      %v2116 = vpop.f32.mrf.mxu0
      %2117 = vmatprep.mubr.bf16.mxu0 0
      %2118 = vmatmul.mubr.bf16.gmra.mxu0 %v1572
      %v2119 = vpop.f32.mrf.mxu0
      %v2120 = vadd.f32 0.0, %v2119
      %v2121 = vpop.f32.mrf.mxu0
      %v2122 = vpop.f32.mrf.mxu0
      %v2123 = vadd.f32 0.0, %v2122
      %v2124 = vpop.f32.mrf.mxu0
      %2125 = vmatprep.mubr.bf16.mxu0 0
      %2126 = vmatmul.mubr.bf16.gmra.mxu0 %v2035
      %v2127 = vpop.f32.mrf.mxu0
      %v2128 = vadd.f32 0.0, %v2127
      %v2129 = vpop.f32.mrf.mxu0
      %v2130 = vpop.f32.mrf.mxu0
      %v2131 = vadd.f32 0.0, %v2130
      %v2132 = vpop.f32.mrf.mxu0
      %2133 = vdwg.mxu0
      %v2134 = vadd.f32 %v1974, %v2072
      %v2135 = vadd.f32 %v1975, %v2075
      %v2136 = vadd.f32 %v1976, %v2080
      %v2137 = vadd.f32 %v1977, %v2083
      %v2138 = vadd.f32 %v1978, %v2088
      %v2139 = vadd.f32 %v1979, %v2091
      %v2140 = vadd.f32 %v1980, %v2096
      %v2141 = vadd.f32 %v1981, %v2099
      %v2142 = vadd.f32 %v1982, %v2104
      %v2143 = vadd.f32 %v1983, %v2107
      %v2144 = vadd.f32 %v1984, %v2112
      %v2145 = vadd.f32 %v1985, %v2115
      %v2146 = vadd.f32 %v1986, %v2120
      %v2147 = vadd.f32 %v1987, %v2123
      %v2148 = vadd.f32 %v1988, %v2128
      %v2149 = vadd.f32 %v1989, %v2131
      %v2152 = vrot.slane %v768, 1
      %v2153 = vrot.slane %v769, 1
      %v2154 = vsel %vm1183, %v2152, %v2153
      %s2155 = scalar_lea.vmem %s3, 256
      %v2156 = vld [vmem:[%s2155] sm:$0xf]
      %v2157 = vld [vmem:[%s2155 + $0x4] sm:$0xf]
      %v2158 = vld [vmem:[%s2155 + $0x8] sm:$0xf]
      %v2159 = vld [vmem:[%s2155 + $0xc] sm:$0xf]
      %v2160 = vld [vmem:[%s2155 + $0x10] sm:$0xf]
      %v2161 = vld [vmem:[%s2155 + $0x14] sm:$0xf]
      %v2162 = vld [vmem:[%s2155 + $0x18] sm:$0xf]
      %v2163 = vld [vmem:[%s2155 + $0x1c] sm:$0xf]
      %v2172 = vunpack.c.l.b16 %v2156
      %v2173 = vunpack.c.l.b16 %v2157
      %v2174 = vunpack.c.l.b16 %v2158
      %v2175 = vunpack.c.l.b16 %v2159
      %v2176 = vunpack.c.l.b16 %v2160
      %v2177 = vunpack.c.l.b16 %v2161
      %v2178 = vunpack.c.l.b16 %v2162
      %v2179 = vunpack.c.l.b16 %v2163
      %v2180 = vpack.c.b16 %v2173, %v2172
      %v2181 = vpack.c.b16 %v2175, %v2174
      %v2182 = vpack.c.b16 %v2177, %v2176
      %v2183 = vpack.c.b16 %v2179, %v2178
      %v2189 = vsel %vm908, %v2154, 0
      %2191 = vmatprep.subr.bf16.mxu0 0
      %2192 = vmatpush1.bf16.msra.mxu0 0
      %2193 = vmatprep.subr.bf16.mxu0 0
      %2194 = vmatpush1.bf16.msra.mxu0 0
      %2195 = vmatprep.subr.bf16.mxu0 0
      %2196 = vmatpush1.bf16.msra.mxu0 0
      %2197 = vmatprep.subr.bf16.mxu0 0
      %2198 = vmatpush1.bf16.msra.mxu0 0
      %2199 = vmatprep.subr.bf16.mxu0 0
      %2200 = vmatpush1.bf16.msra.mxu0 %v2183
      %2201 = vmatprep.subr.bf16.mxu0 0
      %2202 = vmatpush1.bf16.msra.mxu0 %v2182
      %2203 = vmatprep.subr.bf16.mxu0 0
      %2204 = vmatpush1.bf16.msra.mxu0 %v2181
      %2205 = vmatprep.subr.bf16.mxu0 0
      %2206 = vmatpush1.bf16.msra.mxu0 %v2180
      %2207 = vmatprep.subr.bf16.mxu0 0
      %2208 = vmatpush2.bf16.msra.mxu0 0
      %2209 = vmatprep.subr.bf16.mxu0 0
      %2210 = vmatpush2.bf16.msra.mxu0 0
      %2211 = vmatprep.subr.bf16.mxu0 0
      %2212 = vmatpush2.bf16.msra.mxu0 0
      %2213 = vmatprep.subr.bf16.mxu0 0
      %2214 = vmatpush2.bf16.msra.mxu0 0
      %2215 = vmatprep.subr.bf16.mxu0 0
      %2216 = vmatpush2.bf16.msra.mxu0 0
      %2217 = vmatprep.subr.bf16.mxu0 0
      %2218 = vmatpush2.bf16.msra.mxu0 0
      %2219 = vmatprep.subr.bf16.mxu0 0
      %2220 = vmatpush2.bf16.msra.mxu0 0
      %2221 = vmatprep.subr.bf16.mxu0 0
      %2222 = vmatpush2.bf16.msra.mxu0 0
      %2223 = vmatprep.mubr.bf16.mxu0 0
      %2224 = vmatmul.mubr.bf16.gmra.mxu0 %v1248
      %v2225 = vpop.f32.mrf.mxu0
      %v2226 = vadd.f32 0.0, %v2225
      %v2227 = vpop.f32.mrf.mxu0
      %v2228 = vpop.f32.mrf.mxu0
      %v2229 = vadd.f32 0.0, %v2228
      %v2230 = vpop.f32.mrf.mxu0
      %2231 = vmatprep.mubr.bf16.mxu0 0
      %2232 = vmatmul.mubr.bf16.gmra.mxu0 %v1251
      %v2233 = vpop.f32.mrf.mxu0
      %v2234 = vadd.f32 0.0, %v2233
      %v2235 = vpop.f32.mrf.mxu0
      %v2236 = vpop.f32.mrf.mxu0
      %v2237 = vadd.f32 0.0, %v2236
      %v2238 = vpop.f32.mrf.mxu0
      %2239 = vmatprep.mubr.bf16.mxu0 0
      %2240 = vmatmul.mubr.bf16.gmra.mxu0 %v1254
      %v2241 = vpop.f32.mrf.mxu0
      %v2242 = vadd.f32 0.0, %v2241
      %v2243 = vpop.f32.mrf.mxu0
      %v2244 = vpop.f32.mrf.mxu0
      %v2245 = vadd.f32 0.0, %v2244
      %v2246 = vpop.f32.mrf.mxu0
      %2247 = vmatprep.mubr.bf16.mxu0 0
      %2248 = vmatmul.mubr.bf16.gmra.mxu0 %v1257
      %v2249 = vpop.f32.mrf.mxu0
      %v2250 = vadd.f32 0.0, %v2249
      %v2251 = vpop.f32.mrf.mxu0
      %v2252 = vpop.f32.mrf.mxu0
      %v2253 = vadd.f32 0.0, %v2252
      %v2254 = vpop.f32.mrf.mxu0
      %2255 = vmatprep.mubr.bf16.mxu0 0
      %2256 = vmatmul.mubr.bf16.gmra.mxu0 %v1260
      %v2257 = vpop.f32.mrf.mxu0
      %v2258 = vadd.f32 0.0, %v2257
      %v2259 = vpop.f32.mrf.mxu0
      %v2260 = vpop.f32.mrf.mxu0
      %v2261 = vadd.f32 0.0, %v2260
      %v2262 = vpop.f32.mrf.mxu0
      %2263 = vmatprep.mubr.bf16.mxu0 0
      %2264 = vmatmul.mubr.bf16.gmra.mxu0 %v1263
      %v2265 = vpop.f32.mrf.mxu0
      %v2266 = vadd.f32 0.0, %v2265
      %v2267 = vpop.f32.mrf.mxu0
      %v2268 = vpop.f32.mrf.mxu0
      %v2269 = vadd.f32 0.0, %v2268
      %v2270 = vpop.f32.mrf.mxu0
      %2271 = vmatprep.mubr.bf16.mxu0 0
      %2272 = vmatmul.mubr.bf16.gmra.mxu0 %v1726
      %v2273 = vpop.f32.mrf.mxu0
      %v2274 = vadd.f32 0.0, %v2273
      %v2275 = vpop.f32.mrf.mxu0
      %v2276 = vpop.f32.mrf.mxu0
      %v2277 = vadd.f32 0.0, %v2276
      %v2278 = vpop.f32.mrf.mxu0
      %2279 = vmatprep.mubr.bf16.mxu0 0
      %2280 = vmatmul.mubr.bf16.gmra.mxu0 %v2189
      %v2281 = vpop.f32.mrf.mxu0
      %v2282 = vadd.f32 0.0, %v2281
      %v2283 = vpop.f32.mrf.mxu0
      %v2284 = vpop.f32.mrf.mxu0
      %v2285 = vadd.f32 0.0, %v2284
      %v2286 = vpop.f32.mrf.mxu0
      %2287 = vdwg.mxu0
      %v2288 = vadd.f32 %v2134, %v2226
      %v2289 = vadd.f32 %v2135, %v2229
      %v2290 = vadd.f32 %v2136, %v2234
      %v2291 = vadd.f32 %v2137, %v2237
      %v2292 = vadd.f32 %v2138, %v2242
      %v2293 = vadd.f32 %v2139, %v2245
      %v2294 = vadd.f32 %v2140, %v2250
      %v2295 = vadd.f32 %v2141, %v2253
      %v2296 = vadd.f32 %v2142, %v2258
      %v2297 = vadd.f32 %v2143, %v2261
      %v2298 = vadd.f32 %v2144, %v2266
      %v2299 = vadd.f32 %v2145, %v2269
      %v2300 = vadd.f32 %v2146, %v2274
      %v2301 = vadd.f32 %v2147, %v2277
      %v2302 = vadd.f32 %v2148, %v2282
      %v2303 = vadd.f32 %v2149, %v2285
      %v2304 = vld [vmem:[%s280] sm:$0x1]
      %v2306 = vlaneseq
      %v2307 = vshrl.u32 %v2306, 7
      %v2308 = vsub.s32 0, %v2307
      %v2309 = vrot.slane %v2304, %v2308
      %v2311 = vadd.f32 %v2288, %v2309
      %v2312 = vadd.f32 %v2289, %v2309
      %v2313 = vadd.f32 %v2290, %v2309
      %v2314 = vadd.f32 %v2291, %v2309
      %v2315 = vadd.f32 %v2292, %v2309
      %v2316 = vadd.f32 %v2293, %v2309
      %v2317 = vadd.f32 %v2294, %v2309
      %v2318 = vadd.f32 %v2295, %v2309
      %v2319 = vadd.f32 %v2296, %v2309
      %v2320 = vadd.f32 %v2297, %v2309
      %v2321 = vadd.f32 %v2298, %v2309
      %v2322 = vadd.f32 %v2299, %v2309
      %v2323 = vadd.f32 %v2300, %v2309
      %v2324 = vadd.f32 %v2301, %v2309
      %v2325 = vadd.f32 %v2302, %v2309
      %v2326 = vadd.f32 %v2303, %v2309
      %2327 = vst [vmem:[%s290] sm:$0xff] %v2311
      %2328 = vst [vmem:[%s290 + $0x8] sm:$0xff] %v2312
      %2329 = vst [vmem:[%s290 + $0x10] sm:$0xff] %v2313
      %2330 = vst [vmem:[%s290 + $0x18] sm:$0xff] %v2314
      %2331 = vst [vmem:[%s290 + $0x20] sm:$0xff] %v2315
      %2332 = vst [vmem:[%s290 + $0x28] sm:$0xff] %v2316
      %2333 = vst [vmem:[%s290 + $0x30] sm:$0xff] %v2317
      %2334 = vst [vmem:[%s290 + $0x38] sm:$0xff] %v2318
      %2335 = vst [vmem:[%s290 + $0x40] sm:$0xff] %v2319
      %2336 = vst [vmem:[%s290 + $0x48] sm:$0xff] %v2320
      %2337 = vst [vmem:[%s290 + $0x50] sm:$0xff] %v2321
      %2338 = vst [vmem:[%s290 + $0x58] sm:$0xff] %v2322
      %2339 = vst [vmem:[%s290 + $0x60] sm:$0xff] %v2323
      %2340 = vst [vmem:[%s290 + $0x68] sm:$0xff] %v2324
      %2341 = vst [vmem:[%s290 + $0x70] sm:$0xff] %v2325
      %2342 = vst [vmem:[%s290 + $0x78] sm:$0xff] %v2326
      %s2343 = smul.u32 8, %s21
      %p2344 = scmp.lt.s32.totalorder %s20, 1
      %s2345 = scalar_select %p2344, %s20, 1
      %p2346 = scmp.lt.s32.totalorder %s2343, 15
      %s2347 = scalar_select %p2346, %s2343, 15
      %s2348 = smul.addr %s2347, 2
      %s2349 = smul.addr %s2345, 32
      %s2350 = sadd.s32 %s2348, %s2349
      %s2351 = smul.addr %s2350, 8
      %s2352 = scalar_lea.vmem %s5, %s2351
      // Predicated region
      $region41: #{resnet_block.5} parent=39 // pred_check
        %p2353 = pneg %p173
      $region42: #{resnet_block.5} parent=39 // pred_check_branch
        %2355 = sbr.rel (%p2353) target = $region44
      $region43: #{resnet_block.5} parent=39 // pred_region
        %s2356 = smul.u32 8, %s21
      $region44: #{resnet_block.5} parent=39 // pred_fallthru
        _
    $region40: #{resnet_block.5} parent=5 // pred_fallthru
      _
    %p2357 = scmp.le.s32.totalorder 2, %s11
    // Predicated region
    $region45: #{resnet_block.5} parent=5 // pred_check
      %p2358 = pneg %p2357
    $region46: #{resnet_block.5} parent=5 // pred_check_branch
      %2360 = sbr.rel (%p2358) target = $region48
    $region47: #{resnet_block.5} parent=5 // pred_region
      %s2361 = ssub.s32 %s11, 2
      // Predicated region
      $region49: #{resnet_block.5} parent=47 // pred_check
        %p2362 = pneg %p179
      $region50: #{resnet_block.5} parent=47 // pred_check_branch
        %2364 = sbr.rel (%p2362) target = $region52
      $region51: #{resnet_block.5} parent=47 // pred_region
        %s2365 = smul.u32 8, %s23
        %p2366 = scmp.lt.s32.totalorder %s22, 1
        %s2367 = scalar_select %p2366, %s22, 1
        %p2368 = scmp.lt.s32.totalorder %s2365, 15
        %s2369 = scalar_select %p2368, %s2365, 15
        %s2370 = smul.addr %s2369, 2
        %s2371 = smul.addr %s2367, 32
        %s2372 = sadd.s32 %s2370, %s2371
        %s2373 = smul.addr %s2372, 8
        %s2374 = scalar_lea.vmem %s5, %s2373
      $region52: #{resnet_block.5} parent=47 // pred_fallthru
        _
    $region48: #{resnet_block.5} parent=5 // pred_fallthru
      _
  $region6: #{resnet_block.5} parent=0 // loop_footer
    %s15 = sadd.s32 1, %s11
  $region7: #{resnet_block.5} parent=0 // loop_footer_branch
    %10 = sbr.rel target = $region3
  $region8: #{resnet_block.5} parent=0 // loop_exit
    _

// kernel: resnet_block.7
$region0: #{resnet_block.7}
  #allocation0 [shape = 'u32[]', space=smem, size = 0x4, offset = 0x4, fixed_abs, tag = 'smem constant byte address 0x4 - core index']
  #allocation1 [shape = 'u32[144,128]{1,0:T(1,128)}', space=vmem, size = 0x12000, scoped, tag = 'internal scratch']
  %s0 = inlined_call_operand.vmem [shape: f32[2,18,18,128], index: 0, kind: input, shape index: {}]
  %s1 = inlined_call_operand.vmem [shape: f32[2,1,128], index: 1, kind: input, shape index: {}]
  %s2 = inlined_call_operand.vmem [shape: f32[2,1,128], index: 2, kind: input, shape index: {}]
  %s3 = inlined_call_operand.vmem [shape: bf16[9,128,128], index: 3, kind: input, shape index: {}]
  %s4 = inlined_call_operand.vmem [shape: f32[1,1,128], index: 4, kind: input, shape index: {}]
  %s5 = inlined_call_operand.vmem [shape: f32[2,16,16,64], index: 5, kind: input, shape index: {}]
  %s6 = inlined_call_operand.vmem [shape: bf16[64,128], index: 6, kind: input, shape index: {}]
  %s7 = inlined_call_operand.hbm [shape: f32[2,16,16,128], index: 7, kind: output, shape index: {}]
  %s8 = sld [smem:[#allocation0]]
  $region61: #{resnet_block.7} parent=0
    _
  %s10 = ssub.s32 1, %s8
  %s11 = scalar_select 0, %s10, %s8
  $region1: #{resnet_block.7} parent=0
    #allocation2 [shape = 'u8[131072]{0}', space=vmem, size = 0x20000, scoped, tag = 'output window, operand 0']
    #allocation3 [shape = 's32[2]{0}', space=sflag, size = 0x8, scoped, tag = 'scoped memory for resnet_block.7']
    %12 = vsyncpa [#allocation3], 0
    %s13 = scalar_lea.sflag [#allocation3], 1
    %14 = vsyncpa %s13, 0
    loop: start=0, step=1, limit=6
    $region2: #{resnet_block.7} parent=1 // loop_pre_header
      _
    $region3: #{resnet_block.7} parent=1 // loop_header
      %s16 = sphi 0, %s20
      %p17 = scmp.ge.s32.totalorder %s16, 6
      %s23 = sphi 0, %s35
      %s24 = sphi 0, %s31
      %s25 = sphi 0, %s23
      %s26 = sphi 0, %s24
      %s27 = sphi 0, %s25
      %s28 = sphi 0, %s26
      %s38 = sphi 0, %s40
      %s41 = sphi 0, %s38
      %s42 = sphi 0, %s41
      %s58 = sphi 0, %s42
      %s64 = sphi 0, %s66
      %s67 = sphi 0, %s64
      %s68 = sphi 0, %s67
      %s84 = sphi 0, %s68
      %s90 = sphi 0, %s92
      %s93 = sphi 0, %s90
      %s94 = sphi 0, %s93
      %s110 = sphi 0, %s94
      %s114 = sphi 0, %s114
      %s116 = sphi 0, %s114
      %s117 = sphi 0, %s116
      %s131 = sphi 0, %s117
      %s135 = sphi 0, %s135
      %s137 = sphi 0, %s135
      %s138 = sphi 0, %s137
      %s152 = sphi 0, %s138
      %s160 = sphi 0, %s162
      %s163 = sphi 0, %s160
      %s164 = sphi 0, %s163
      %s180 = sphi 0, %s164
      %s184 = sphi 0, %s184
      %s186 = sphi 0, %s184
      %s187 = sphi 0, %s186
      %s201 = sphi 0, %s187
      %s209 = sphi 0, %s211
      %s212 = sphi 0, %s209
      %s213 = sphi 0, %s212
      %s229 = sphi 0, %s213
    $region4: #{resnet_block.7} parent=1 // loop_header_branch
      %19 = sbr.rel (%p17) target = $region8
    $region5: #{resnet_block.7} parent=1 // loop_body
      %s21 = ssub.s32 %s16, 1
      %s22 = ssub.s32 %s16, 2
      %s29 = sadd.s32 1, %s24
      %p30 = scmp.ge.s32.totalorder %s29, 2
      %s31 = scalar_select %p30, 0, %s29
      %s32 = sadd.s32 1, %s23
      %s33 = scalar_select %p30, %s32, %s23
      %p34 = scmp.ge.s32.totalorder %s33, 2
      %s35 = scalar_select %p34, 0, %s33
      %s36 = ssub.s32 %s23, %s35
      %p37 = scmp.eq.s32.totalorder %s36, 0
      %s39 = sadd.s32 %s38, 1
      %s40 = scalar_select %p37, %s38, %s39
      %p43 = pneg %p37
      %p44 = scmp.eq.s32.totalorder %s16, 3
      %p45 = por %p43, %p44
      %p46 = scmp.ne.s32.totalorder %s38, %s41
      %p47 = scmp.eq.s32.totalorder %s16, 0
      %p48 = por %p46, %p47
      %p49 = scmp.ne.s32.totalorder %s38, %s41
      %p50 = scmp.eq.s32.totalorder %s21, 3
      %p51 = por %p49, %p50
      %p52 = scmp.ne.s32.totalorder %s41, %s42
      %p53 = scmp.eq.s32.totalorder %s21, 0
      %p54 = por %p52, %p53
      %p55 = scmp.ne.s32.totalorder %s41, %s42
      %p56 = scmp.eq.s32.totalorder %s22, 3
      %p57 = por %p55, %p56
      %p59 = scmp.ne.s32.totalorder %s42, %s58
      %p60 = scmp.eq.s32.totalorder %s22, 0
      %p61 = por %p59, %p60
      %s62 = ssub.s32 %s23, %s35
      %p63 = scmp.eq.s32.totalorder %s62, 0
      %s65 = sadd.s32 %s64, 1
      %s66 = scalar_select %p63, %s64, %s65
      %p69 = pneg %p63
      %p70 = scmp.eq.s32.totalorder %s16, 3
      %p71 = por %p69, %p70
      %p72 = scmp.ne.s32.totalorder %s64, %s67
      %p73 = scmp.eq.s32.totalorder %s16, 0
      %p74 = por %p72, %p73
      %p75 = scmp.ne.s32.totalorder %s64, %s67
      %p76 = scmp.eq.s32.totalorder %s21, 3
      %p77 = por %p75, %p76
      %p78 = scmp.ne.s32.totalorder %s67, %s68
      %p79 = scmp.eq.s32.totalorder %s21, 0
      %p80 = por %p78, %p79
      %p81 = scmp.ne.s32.totalorder %s67, %s68
      %p82 = scmp.eq.s32.totalorder %s22, 3
      %p83 = por %p81, %p82
      %p85 = scmp.ne.s32.totalorder %s68, %s84
      %p86 = scmp.eq.s32.totalorder %s22, 0
      %p87 = por %p85, %p86
      %s88 = ssub.s32 %s23, %s35
      %p89 = scmp.eq.s32.totalorder %s88, 0
      %s91 = sadd.s32 %s90, 1
      %s92 = scalar_select %p89, %s90, %s91
      %p95 = pneg %p89
      %p96 = scmp.eq.s32.totalorder %s16, 3
      %p97 = por %p95, %p96
      %p98 = scmp.ne.s32.totalorder %s90, %s93
      %p99 = scmp.eq.s32.totalorder %s16, 0
      %p100 = por %p98, %p99
      %p101 = scmp.ne.s32.totalorder %s90, %s93
      %p102 = scmp.eq.s32.totalorder %s21, 3
      %p103 = por %p101, %p102
      %p104 = scmp.ne.s32.totalorder %s93, %s94
      %p105 = scmp.eq.s32.totalorder %s21, 0
      %p106 = por %p104, %p105
      %p107 = scmp.ne.s32.totalorder %s93, %s94
      %p108 = scmp.eq.s32.totalorder %s22, 3
      %p109 = por %p107, %p108
      %p111 = scmp.ne.s32.totalorder %s94, %s110
      %p112 = scmp.eq.s32.totalorder %s22, 0
      %p113 = por %p111, %p112
      %s115 = sadd.s32 %s114, 1
      %p118 = scmp.eq.s32.totalorder %s16, 3
      %p119 = scmp.ne.s32.totalorder %s114, %s116
      %p120 = scmp.eq.s32.totalorder %s16, 0
      %p121 = por %p119, %p120
      %p122 = scmp.ne.s32.totalorder %s114, %s116
      %p123 = scmp.eq.s32.totalorder %s21, 3
      %p124 = por %p122, %p123
      %p125 = scmp.ne.s32.totalorder %s116, %s117
      %p126 = scmp.eq.s32.totalorder %s21, 0
      %p127 = por %p125, %p126
      %p128 = scmp.ne.s32.totalorder %s116, %s117
      %p129 = scmp.eq.s32.totalorder %s22, 3
      %p130 = por %p128, %p129
      %p132 = scmp.ne.s32.totalorder %s117, %s131
      %p133 = scmp.eq.s32.totalorder %s22, 0
      %p134 = por %p132, %p133
      %s136 = sadd.s32 %s135, 1
      %p139 = scmp.eq.s32.totalorder %s16, 3
      %p140 = scmp.ne.s32.totalorder %s135, %s137
      %p141 = scmp.eq.s32.totalorder %s16, 0
      %p142 = por %p140, %p141
      %p143 = scmp.ne.s32.totalorder %s135, %s137
      %p144 = scmp.eq.s32.totalorder %s21, 3
      %p145 = por %p143, %p144
      %p146 = scmp.ne.s32.totalorder %s137, %s138
      %p147 = scmp.eq.s32.totalorder %s21, 0
      %p148 = por %p146, %p147
      %p149 = scmp.ne.s32.totalorder %s137, %s138
      %p150 = scmp.eq.s32.totalorder %s22, 3
      %p151 = por %p149, %p150
      %p153 = scmp.ne.s32.totalorder %s138, %s152
      %p154 = scmp.eq.s32.totalorder %s22, 0
      %p155 = por %p153, %p154
      %s156 = ssub.s32 %s23, %s35
      %s157 = ssub.s32 %s24, %s31
      %s158 = sor.u32 %s156, %s157
      %p159 = scmp.eq.s32.totalorder %s158, 0
      %s161 = sadd.s32 %s160, 1
      %s162 = scalar_select %p159, %s160, %s161
      %p165 = pneg %p159
      %p166 = scmp.eq.s32.totalorder %s16, 3
      %p167 = por %p165, %p166
      %p168 = scmp.ne.s32.totalorder %s160, %s163
      %p169 = scmp.eq.s32.totalorder %s16, 0
      %p170 = por %p168, %p169
      %p171 = scmp.ne.s32.totalorder %s160, %s163
      %p172 = scmp.eq.s32.totalorder %s21, 3
      %p173 = por %p171, %p172
      %p174 = scmp.ne.s32.totalorder %s163, %s164
      %p175 = scmp.eq.s32.totalorder %s21, 0
      %p176 = por %p174, %p175
      %p177 = scmp.ne.s32.totalorder %s163, %s164
      %p178 = scmp.eq.s32.totalorder %s22, 3
      %p179 = por %p177, %p178
      %p181 = scmp.ne.s32.totalorder %s164, %s180
      %p182 = scmp.eq.s32.totalorder %s22, 0
      %p183 = por %p181, %p182
      %s185 = sadd.s32 %s184, 1
      %p188 = scmp.eq.s32.totalorder %s16, 3
      %p189 = scmp.ne.s32.totalorder %s184, %s186
      %p190 = scmp.eq.s32.totalorder %s16, 0
      %p191 = por %p189, %p190
      %p192 = scmp.ne.s32.totalorder %s184, %s186
      %p193 = scmp.eq.s32.totalorder %s21, 3
      %p194 = por %p192, %p193
      %p195 = scmp.ne.s32.totalorder %s186, %s187
      %p196 = scmp.eq.s32.totalorder %s21, 0
      %p197 = por %p195, %p196
      %p198 = scmp.ne.s32.totalorder %s186, %s187
      %p199 = scmp.eq.s32.totalorder %s22, 3
      %p200 = por %p198, %p199
      %p202 = scmp.ne.s32.totalorder %s187, %s201
      %p203 = scmp.eq.s32.totalorder %s22, 0
      %p204 = por %p202, %p203
      %s205 = ssub.s32 %s23, %s35
      %s206 = ssub.s32 %s24, %s31
      %s207 = sor.u32 %s205, %s206
      %p208 = scmp.eq.s32.totalorder %s207, 0
      %s210 = sadd.s32 %s209, 1
      %s211 = scalar_select %p208, %s209, %s210
      %p214 = pneg %p208
      %p215 = scmp.eq.s32.totalorder %s16, 3
      %p216 = por %p214, %p215
      %p217 = scmp.ne.s32.totalorder %s209, %s212
      %p218 = scmp.eq.s32.totalorder %s16, 0
      %p219 = por %p217, %p218
      %p220 = scmp.ne.s32.totalorder %s209, %s212
      %p221 = scmp.eq.s32.totalorder %s21, 3
      %p222 = por %p220, %p221
      %p223 = scmp.ne.s32.totalorder %s212, %s213
      %p224 = scmp.eq.s32.totalorder %s21, 0
      %p225 = por %p223, %p224
      %p226 = scmp.ne.s32.totalorder %s212, %s213
      %p227 = scmp.eq.s32.totalorder %s22, 3
      %p228 = por %p226, %p227
      %p230 = scmp.ne.s32.totalorder %s213, %s229
      %p231 = scmp.eq.s32.totalorder %s22, 0
      %p232 = por %p230, %p231
      %p233 = scmp.le.s32.totalorder 1, %s16
      %p234 = scmp.lt.s32.totalorder %s16, 5
      %p235 = pnand %p233, %p234
      %p236 = pneg %p235
      // Predicated region
      $region9: #{resnet_block.7} parent=5 // pred_check
        _
      $region10: #{resnet_block.7} parent=5 // pred_check_branch
        %238 = sbr.rel (%p235) target = $region12
      $region11: #{resnet_block.7} parent=5 // pred_region
        %s239 = ssub.s32 %s16, 1
        // Predicated region
        $region13: #{resnet_block.7} parent=11 // pred_check
          %p240 = pneg %p127
        $region14: #{resnet_block.7} parent=11 // pred_check_branch
          %242 = sbr.rel (%p240) target = $region16
        $region15: #{resnet_block.7} parent=11 // pred_region
          _
        $region16: #{resnet_block.7} parent=11 // pred_fallthru
          _
        // Predicated region
        $region17: #{resnet_block.7} parent=11 // pred_check
          %p243 = pneg %p148
        $region18: #{resnet_block.7} parent=11 // pred_check_branch
          %245 = sbr.rel (%p243) target = $region20
        $region19: #{resnet_block.7} parent=11 // pred_region
          _
        $region20: #{resnet_block.7} parent=11 // pred_fallthru
          _
        // Predicated region
        $region21: #{resnet_block.7} parent=11 // pred_check
          %p246 = pneg %p197
        $region22: #{resnet_block.7} parent=11 // pred_check_branch
          %248 = sbr.rel (%p246) target = $region24
        $region23: #{resnet_block.7} parent=11 // pred_region
          _
        $region24: #{resnet_block.7} parent=11 // pred_fallthru
          _
      $region12: #{resnet_block.7} parent=5 // pred_fallthru
        _
      %p249 = scmp.lt.s32.totalorder %s16, 4
      // Predicated region
      $region25: #{resnet_block.7} parent=5 // pred_check
        %p250 = pneg %p249
      $region26: #{resnet_block.7} parent=5 // pred_check_branch
        %252 = sbr.rel (%p250) target = $region28
      $region27: #{resnet_block.7} parent=5 // pred_region
        // Predicated region
        $region29: #{resnet_block.7} parent=27 // pred_check
          %p253 = pneg %p48
        $region30: #{resnet_block.7} parent=27 // pred_check_branch
          %255 = sbr.rel (%p253) target = $region32
        $region31: #{resnet_block.7} parent=27 // pred_region
          %p256 = scmp.lt.s32.totalorder %s23, 1
          %s257 = scalar_select %p256, %s23, 1
          %s258 = smul.addr %s257, 54
          %s259 = smul.addr %s258, 8
          %s260 = scalar_lea.vmem %s0, %s259
        $region32: #{resnet_block.7} parent=27 // pred_fallthru
          _
        // Predicated region
        $region33: #{resnet_block.7} parent=27 // pred_check
          %p261 = pneg %p74
        $region34: #{resnet_block.7} parent=27 // pred_check_branch
          %263 = sbr.rel (%p261) target = $region36
        $region35: #{resnet_block.7} parent=27 // pred_region
          %p264 = scmp.lt.s32.totalorder %s23, 1
          %s265 = scalar_select %p264, %s23, 1
          %s266 = scalar_lea.vmem %s1, %s265
        $region36: #{resnet_block.7} parent=27 // pred_fallthru
          _
        // Predicated region
        $region37: #{resnet_block.7} parent=27 // pred_check
          %p267 = pneg %p100
        $region38: #{resnet_block.7} parent=27 // pred_check_branch
          %269 = sbr.rel (%p267) target = $region40
        $region39: #{resnet_block.7} parent=27 // pred_region
          %p270 = scmp.lt.s32.totalorder %s23, 1
          %s271 = scalar_select %p270, %s23, 1
          %s272 = scalar_lea.vmem %s2, %s271
        $region40: #{resnet_block.7} parent=27 // pred_fallthru
          _
        // Predicated region
        $region41: #{resnet_block.7} parent=27 // pred_check
          %p273 = pneg %p170
        $region42: #{resnet_block.7} parent=27 // pred_check_branch
          %275 = sbr.rel (%p273) target = $region44
        $region43: #{resnet_block.7} parent=27 // pred_region
          %s276 = smul.u32 8, %s24
          %p277 = scmp.lt.s32.totalorder %s23, 1
          %s278 = scalar_select %p277, %s23, 1
          %p279 = scmp.lt.s32.totalorder %s276, 15
          %s280 = scalar_select %p279, %s276, 15
          %s281 = smul.addr %s280, 2
          %s282 = smul.addr %s278, 32
          %s283 = sadd.s32 %s281, %s282
          %s284 = smul.addr %s283, 8
          %s285 = scalar_lea.vmem %s5, %s284
          %s286 = smul.u32 8, %s24
        $region44: #{resnet_block.7} parent=27 // pred_fallthru
          _
      $region28: #{resnet_block.7} parent=5 // pred_fallthru
        _
      %p287 = scmp.le.s32.totalorder 1, %s16
      %p288 = scmp.lt.s32.totalorder %s16, 5
      %p289 = pnand %p287, %p288
      %p290 = pneg %p289
      // Predicated region
      $region45: #{resnet_block.7} parent=5 // pred_check
        _
      $region46: #{resnet_block.7} parent=5 // pred_check_branch
        %292 = sbr.rel (%p289) target = $region48
      $region47: #{resnet_block.7} parent=5 // pred_region
        %s293 = ssub.s32 %s16, 1
        %p294 = scmp.lt.s32.totalorder %s25, 1
        %s295 = scalar_select %p294, %s25, 1
        %s296 = smul.addr %s295, 54
        %s297 = smul.addr %s296, 8
        %s298 = scalar_lea.vmem %s0, %s297
        %p299 = pneg %p54
        %p300 = pneg %p51
        %p301 = scmp.lt.s32.totalorder %s25, 1
        %s302 = scalar_select %p301, %s25, 1
        %s303 = scalar_lea.vmem %s1, %s302
        %p304 = pneg %p80
        %p305 = pneg %p77
        %p306 = scmp.lt.s32.totalorder %s25, 1
        %s307 = scalar_select %p306, %s25, 1
        %s308 = scalar_lea.vmem %s2, %s307
        %p309 = pneg %p106
        %p310 = pneg %p103
        %p311 = pneg %p127
        %p312 = pneg %p124
        %p313 = pneg %p148
        %p314 = pneg %p145
        %s315 = smul.u32 8, %s26
        %p316 = scmp.lt.s32.totalorder %s25, 1
        %s317 = scalar_select %p316, %s25, 1
        %p318 = scmp.lt.s32.totalorder %s315, 15
        %s319 = scalar_select %p318, %s315, 15
        %s320 = smul.addr %s319, 2
        %s321 = smul.addr %s317, 32
        %s322 = sadd.s32 %s320, %s321
        %s323 = smul.addr %s322, 8
        %s324 = scalar_lea.vmem %s5, %s323
        %p325 = pneg %p176
        %p326 = pneg %p173
        %p327 = pneg %p197
        %p328 = pneg %p194
        %p329 = pneg %p225
        %p330 = pneg %p222
        %s331 = sand.u32 %s212, 1
        %s332 = scalar_lea.sflag [#allocation3], %s331
        %s333 = sand.u32 %s212, 1
        %s334 = smul.addr %s333, 128
        %s335 = scalar_lea.vmem [#allocation2], %s334
        %p336 = scmp.lt.s32.totalorder %s25, 1
        %s337 = scalar_select %p336, %s25, 1
        %s338 = smul.addr %s337, 54
        %s339 = smul.addr %s338, 8
        %s340 = scalar_lea.vmem %s0, %s339
        %p341 = scmp.lt.s32.totalorder %s25, 1
        %s342 = scalar_select %p341, %s25, 1
        %s343 = scalar_lea.vmem %s1, %s342
        %p344 = scmp.lt.s32.totalorder %s25, 1
        %s345 = scalar_select %p344, %s25, 1
        %s346 = scalar_lea.vmem %s2, %s345
        %s347 = smul.u32 8, %s26
        %p348 = scmp.lt.s32.totalorder %s25, 1
        %s349 = scalar_select %p348, %s25, 1
        %p350 = scmp.lt.s32.totalorder %s347, 15
        %s351 = scalar_select %p350, %s347, 15
        %s352 = smul.addr %s351, 2
        %s353 = smul.addr %s349, 32
        %s354 = sadd.s32 %s352, %s353
        %s355 = smul.addr %s354, 8
        %s356 = scalar_lea.vmem %s5, %s355
        %s357 = smul.u32 8, %s26
        %s358 = smul.u32 8, %s26
        %s360 = smul.u32 %s26, 8
        %s361 = smul.u32 %s360, 24
        %s362 = scalar_lea.vmem %s340, %s361
        %v363 = vld [vmem:[%s362] sm:$0xff]
        %v364 = vld [vmem:[%s362 + $0x8] sm:$0xff]
        %v365 = vld [vmem:[%s362 + $0x10] sm:$0x3]
        %v366 = vld [vmem:[%s362 + $0x18] sm:$0xff]
        %v367 = vld [vmem:[%s362 + $0x20] sm:$0xff]
        %v368 = vld [vmem:[%s362 + $0x28] sm:$0x3]
        %v369 = vld [vmem:[%s362 + $0x30] sm:$0xff]
        %v370 = vld [vmem:[%s362 + $0x38] sm:$0xff]
        %v371 = vld [vmem:[%s362 + $0x40] sm:$0x3]
        %v372 = vld [vmem:[%s362 + $0x48] sm:$0xff]
        %v373 = vld [vmem:[%s362 + $0x50] sm:$0xff]
        %v374 = vld [vmem:[%s362 + $0x58] sm:$0x3]
        %v375 = vld [vmem:[%s362 + $0x60] sm:$0xff]
        %v376 = vld [vmem:[%s362 + $0x68] sm:$0xff]
        %v377 = vld [vmem:[%s362 + $0x70] sm:$0x3]
        %v378 = vld [vmem:[%s362 + $0x78] sm:$0xff]
        %v379 = vld [vmem:[%s362 + $0x80] sm:$0xff]
        %v380 = vld [vmem:[%s362 + $0x88] sm:$0x3]
        %v381 = vld [vmem:[%s362 + $0x90] sm:$0xff]
        %v382 = vld [vmem:[%s362 + $0x98] sm:$0xff]
        %v383 = vld [vmem:[%s362 + $0xa0] sm:$0x3]
        %v384 = vld [vmem:[%s362 + $0xa8] sm:$0xff]
        %v385 = vld [vmem:[%s362 + $0xb0] sm:$0xff]
        %v386 = vld [vmem:[%s362 + $0xb8] sm:$0x3]
        %v387 = vld [vmem:[%s362 + $0xc0] sm:$0xff]
        %v388 = vld [vmem:[%s362 + $0xc8] sm:$0xff]
        %v389 = vld [vmem:[%s362 + $0xd0] sm:$0x3]
        %v390 = vld [vmem:[%s362 + $0xd8] sm:$0xff]
        %v391 = vld [vmem:[%s362 + $0xe0] sm:$0xff]
        %v392 = vld [vmem:[%s362 + $0xe8] sm:$0x3]
        %v393 = vld [vmem:[%s343] sm:$0x1]
        %v395 = vlaneseq
        %v396 = vshrl.u32 %v395, 7
        %v397 = vsub.s32 0, %v396
        %v398 = vrot.slane %v393, %v397
        %v400 = vmul.f32 %v363, %v398
        %v401 = vmul.f32 %v364, %v398
        %v402 = vmul.f32 %v365, %v398
        %v403 = vmul.f32 %v366, %v398
        %v404 = vmul.f32 %v367, %v398
        %v405 = vmul.f32 %v368, %v398
        %v406 = vmul.f32 %v369, %v398
        %v407 = vmul.f32 %v370, %v398
        %v408 = vmul.f32 %v371, %v398
        %v409 = vmul.f32 %v372, %v398
        %v410 = vmul.f32 %v373, %v398
        %v411 = vmul.f32 %v374, %v398
        %v412 = vmul.f32 %v375, %v398
        %v413 = vmul.f32 %v376, %v398
        %v414 = vmul.f32 %v377, %v398
        %v415 = vmul.f32 %v378, %v398
        %v416 = vmul.f32 %v379, %v398
        %v417 = vmul.f32 %v380, %v398
        %v418 = vmul.f32 %v381, %v398
        %v419 = vmul.f32 %v382, %v398
        %v420 = vmul.f32 %v383, %v398
        %v421 = vmul.f32 %v384, %v398
        %v422 = vmul.f32 %v385, %v398
        %v423 = vmul.f32 %v386, %v398
        %v424 = vmul.f32 %v387, %v398
        %v425 = vmul.f32 %v388, %v398
        %v426 = vmul.f32 %v389, %v398
        %v427 = vmul.f32 %v390, %v398
        %v428 = vmul.f32 %v391, %v398
        %v429 = vmul.f32 %v392, %v398
        %v430 = vld [vmem:[%s346] sm:$0x1]
        %v432 = vlaneseq
        %v433 = vshrl.u32 %v432, 7
        %v434 = vsub.s32 0, %v433
        %v435 = vrot.slane %v430, %v434
        %v437 = vadd.f32 %v400, %v435
        %v438 = vadd.f32 %v401, %v435
        %v439 = vadd.f32 %v402, %v435
        %v440 = vadd.f32 %v403, %v435
        %v441 = vadd.f32 %v404, %v435
        %v442 = vadd.f32 %v405, %v435
        %v443 = vadd.f32 %v406, %v435
        %v444 = vadd.f32 %v407, %v435
        %v445 = vadd.f32 %v408, %v435
        %v446 = vadd.f32 %v409, %v435
        %v447 = vadd.f32 %v410, %v435
        %v448 = vadd.f32 %v411, %v435
        %v449 = vadd.f32 %v412, %v435
        %v450 = vadd.f32 %v413, %v435
        %v451 = vadd.f32 %v414, %v435
        %v452 = vadd.f32 %v415, %v435
        %v453 = vadd.f32 %v416, %v435
        %v454 = vadd.f32 %v417, %v435
        %v455 = vadd.f32 %v418, %v435
        %v456 = vadd.f32 %v419, %v435
        %v457 = vadd.f32 %v420, %v435
        %v458 = vadd.f32 %v421, %v435
        %v459 = vadd.f32 %v422, %v435
        %v460 = vadd.f32 %v423, %v435
        %v461 = vadd.f32 %v424, %v435
        %v462 = vadd.f32 %v425, %v435
        %v463 = vadd.f32 %v426, %v435
        %v464 = vadd.f32 %v427, %v435
        %v465 = vadd.f32 %v428, %v435
        %v466 = vadd.f32 %v429, %v435
        %v467 = vxor.u32 %v437, 2147483648
        %v468 = vxor.u32 %v438, 2147483648
        %v469 = vxor.u32 %v439, 2147483648
        %v470 = vxor.u32 %v440, 2147483648
        %v471 = vxor.u32 %v441, 2147483648
        %v472 = vxor.u32 %v442, 2147483648
        %v473 = vxor.u32 %v443, 2147483648
        %v474 = vxor.u32 %v444, 2147483648
        %v475 = vxor.u32 %v445, 2147483648
        %v476 = vxor.u32 %v446, 2147483648
        %v477 = vxor.u32 %v447, 2147483648
        %v478 = vxor.u32 %v448, 2147483648
        %v479 = vxor.u32 %v449, 2147483648
        %v480 = vxor.u32 %v450, 2147483648
        %v481 = vxor.u32 %v451, 2147483648
        %v482 = vxor.u32 %v452, 2147483648
        %v483 = vxor.u32 %v453, 2147483648
        %v484 = vxor.u32 %v454, 2147483648
        %v485 = vxor.u32 %v455, 2147483648
        %v486 = vxor.u32 %v456, 2147483648
        %v487 = vxor.u32 %v457, 2147483648
        %v488 = vxor.u32 %v458, 2147483648
        %v489 = vxor.u32 %v459, 2147483648
        %v490 = vxor.u32 %v460, 2147483648
        %v491 = vxor.u32 %v461, 2147483648
        %v492 = vxor.u32 %v462, 2147483648
        %v493 = vxor.u32 %v463, 2147483648
        %v494 = vxor.u32 %v464, 2147483648
        %v495 = vxor.u32 %v465, 2147483648
        %v496 = vxor.u32 %v466, 2147483648
        %v497 = vmul.f32 %v467, 1.442695
        %v498 = vpow.pop %v497
        %v499 = vmul.f32 %v468, 1.442695
        %v500 = vpow.pop %v499
        %v501 = vmul.f32 %v469, 1.442695
        %v502 = vpow.pop %v501
        %v503 = vmul.f32 %v470, 1.442695
        %v504 = vpow.pop %v503
        %v505 = vmul.f32 %v471, 1.442695
        %v506 = vpow.pop %v505
        %v507 = vmul.f32 %v472, 1.442695
        %v508 = vpow.pop %v507
        %v509 = vmul.f32 %v473, 1.442695
        %v510 = vpow.pop %v509
        %v511 = vmul.f32 %v474, 1.442695
        %v512 = vpow.pop %v511
        %v513 = vmul.f32 %v475, 1.442695
        %v514 = vpow.pop %v513
        %v515 = vmul.f32 %v476, 1.442695
        %v516 = vpow.pop %v515
        %v517 = vmul.f32 %v477, 1.442695
        %v518 = vpow.pop %v517
        %v519 = vmul.f32 %v478, 1.442695
        %v520 = vpow.pop %v519
        %v521 = vmul.f32 %v479, 1.442695
        %v522 = vpow.pop %v521
        %v523 = vmul.f32 %v480, 1.442695
        %v524 = vpow.pop %v523
        %v525 = vmul.f32 %v481, 1.442695
        %v526 = vpow.pop %v525
        %v527 = vmul.f32 %v482, 1.442695
        %v528 = vpow.pop %v527
        %v529 = vmul.f32 %v483, 1.442695
        %v530 = vpow.pop %v529
        %v531 = vmul.f32 %v484, 1.442695
        %v532 = vpow.pop %v531
        %v533 = vmul.f32 %v485, 1.442695
        %v534 = vpow.pop %v533
        %v535 = vmul.f32 %v486, 1.442695
        %v536 = vpow.pop %v535
        %v537 = vmul.f32 %v487, 1.442695
        %v538 = vpow.pop %v537
        %v539 = vmul.f32 %v488, 1.442695
        %v540 = vpow.pop %v539
        %v541 = vmul.f32 %v489, 1.442695
        %v542 = vpow.pop %v541
        %v543 = vmul.f32 %v490, 1.442695
        %v544 = vpow.pop %v543
        %v545 = vmul.f32 %v491, 1.442695
        %v546 = vpow.pop %v545
        %v547 = vmul.f32 %v492, 1.442695
        %v548 = vpow.pop %v547
        %v549 = vmul.f32 %v493, 1.442695
        %v550 = vpow.pop %v549
        %v551 = vmul.f32 %v494, 1.442695
        %v552 = vpow.pop %v551
        %v553 = vmul.f32 %v495, 1.442695
        %v554 = vpow.pop %v553
        %v555 = vmul.f32 %v496, 1.442695
        %v556 = vpow.pop %v555
        %v557 = vadd.f32 %v498, 1.0
        %v558 = vadd.f32 %v500, 1.0
        %v559 = vadd.f32 %v502, 1.0
        %v560 = vadd.f32 %v504, 1.0
        %v561 = vadd.f32 %v506, 1.0
        %v562 = vadd.f32 %v508, 1.0
        %v563 = vadd.f32 %v510, 1.0
        %v564 = vadd.f32 %v512, 1.0
        %v565 = vadd.f32 %v514, 1.0
        %v566 = vadd.f32 %v516, 1.0
        %v567 = vadd.f32 %v518, 1.0
        %v568 = vadd.f32 %v520, 1.0
        %v569 = vadd.f32 %v522, 1.0
        %v570 = vadd.f32 %v524, 1.0
        %v571 = vadd.f32 %v526, 1.0
        %v572 = vadd.f32 %v528, 1.0
        %v573 = vadd.f32 %v530, 1.0
        %v574 = vadd.f32 %v532, 1.0
        %v575 = vadd.f32 %v534, 1.0
        %v576 = vadd.f32 %v536, 1.0
        %v577 = vadd.f32 %v538, 1.0
        %v578 = vadd.f32 %v540, 1.0
        %v579 = vadd.f32 %v542, 1.0
        %v580 = vadd.f32 %v544, 1.0
        %v581 = vadd.f32 %v546, 1.0
        %v582 = vadd.f32 %v548, 1.0
        %v583 = vadd.f32 %v550, 1.0
        %v584 = vadd.f32 %v552, 1.0
        %v585 = vadd.f32 %v554, 1.0
        %v586 = vadd.f32 %v556, 1.0
        %v587 = vrcp.pop %v557
        %v588 = vmul.f32 1.0, %v587
        %v589 = vrcp.pop %v558
        %v590 = vmul.f32 1.0, %v589
        %v591 = vrcp.pop %v559
        %v592 = vmul.f32 1.0, %v591
        %v593 = vrcp.pop %v560
        %v594 = vmul.f32 1.0, %v593
        %v595 = vrcp.pop %v561
        %v596 = vmul.f32 1.0, %v595
        %v597 = vrcp.pop %v562
        %v598 = vmul.f32 1.0, %v597
        %v599 = vrcp.pop %v563
        %v600 = vmul.f32 1.0, %v599
        %v601 = vrcp.pop %v564
        %v602 = vmul.f32 1.0, %v601
        %v603 = vrcp.pop %v565
        %v604 = vmul.f32 1.0, %v603
        %v605 = vrcp.pop %v566
        %v606 = vmul.f32 1.0, %v605
        %v607 = vrcp.pop %v567
        %v608 = vmul.f32 1.0, %v607
        %v609 = vrcp.pop %v568
        %v610 = vmul.f32 1.0, %v609
        %v611 = vrcp.pop %v569
        %v612 = vmul.f32 1.0, %v611
        %v613 = vrcp.pop %v570
        %v614 = vmul.f32 1.0, %v613
        %v615 = vrcp.pop %v571
        %v616 = vmul.f32 1.0, %v615
        %v617 = vrcp.pop %v572
        %v618 = vmul.f32 1.0, %v617
        %v619 = vrcp.pop %v573
        %v620 = vmul.f32 1.0, %v619
        %v621 = vrcp.pop %v574
        %v622 = vmul.f32 1.0, %v621
        %v623 = vrcp.pop %v575
        %v624 = vmul.f32 1.0, %v623
        %v625 = vrcp.pop %v576
        %v626 = vmul.f32 1.0, %v625
        %v627 = vrcp.pop %v577
        %v628 = vmul.f32 1.0, %v627
        %v629 = vrcp.pop %v578
        %v630 = vmul.f32 1.0, %v629
        %v631 = vrcp.pop %v579
        %v632 = vmul.f32 1.0, %v631
        %v633 = vrcp.pop %v580
        %v634 = vmul.f32 1.0, %v633
        %v635 = vrcp.pop %v581
        %v636 = vmul.f32 1.0, %v635
        %v637 = vrcp.pop %v582
        %v638 = vmul.f32 1.0, %v637
        %v639 = vrcp.pop %v583
        %v640 = vmul.f32 1.0, %v639
        %v641 = vrcp.pop %v584
        %v642 = vmul.f32 1.0, %v641
        %v643 = vrcp.pop %v585
        %v644 = vmul.f32 1.0, %v643
        %v645 = vrcp.pop %v586
        %v646 = vmul.f32 1.0, %v645
        %v647 = vmul.f32 %v437, %v588
        %v648 = vmul.f32 %v438, %v590
        %v649 = vmul.f32 %v439, %v592
        %v650 = vmul.f32 %v440, %v594
        %v651 = vmul.f32 %v441, %v596
        %v652 = vmul.f32 %v442, %v598
        %v653 = vmul.f32 %v443, %v600
        %v654 = vmul.f32 %v444, %v602
        %v655 = vmul.f32 %v445, %v604
        %v656 = vmul.f32 %v446, %v606
        %v657 = vmul.f32 %v447, %v608
        %v658 = vmul.f32 %v448, %v610
        %v659 = vmul.f32 %v449, %v612
        %v660 = vmul.f32 %v450, %v614
        %v661 = vmul.f32 %v451, %v616
        %v662 = vmul.f32 %v452, %v618
        %v663 = vmul.f32 %v453, %v620
        %v664 = vmul.f32 %v454, %v622
        %v665 = vmul.f32 %v455, %v624
        %v666 = vmul.f32 %v456, %v626
        %v667 = vmul.f32 %v457, %v628
        %v668 = vmul.f32 %v458, %v630
        %v669 = vmul.f32 %v459, %v632
        %v670 = vmul.f32 %v460, %v634
        %v671 = vmul.f32 %v461, %v636
        %v672 = vmul.f32 %v462, %v638
        %v673 = vmul.f32 %v463, %v640
        %v674 = vmul.f32 %v464, %v642
        %v675 = vmul.f32 %v465, %v644
        %v676 = vmul.f32 %v466, %v646
        %v677 = vstv %s360
        %v678 = vadd.s32 %v677, 1
        %v679 = vadd.s32 %v677, 2
        %v680 = vadd.s32 %v677, 3
        %v681 = vadd.s32 %v677, 4
        %v682 = vadd.s32 %v677, 5
        %v683 = vadd.s32 %v677, 6
        %v684 = vadd.s32 %v677, 7
        %v685 = vadd.s32 %v677, 8
        %v686 = vadd.s32 %v677, 9
        %v687 = vlaneseq
        %v688 = vshrl.u32 %v687, 7
        %v689 = vadd.s32 %v688, 8
        %v690 = vadd.s32 %v688, 16
        %vm691 = vcmp.ge.s32.totalorder %v677, 1
        %vm692 = vcmp.ge.s32.totalorder %v678, 1
        %vm693 = vcmp.ge.s32.totalorder %v679, 1
        %vm694 = vcmp.ge.s32.totalorder %v680, 1
        %vm695 = vcmp.ge.s32.totalorder %v681, 1
        %vm696 = vcmp.ge.s32.totalorder %v682, 1
        %vm697 = vcmp.ge.s32.totalorder %v683, 1
        %vm698 = vcmp.ge.s32.totalorder %v684, 1
        %vm699 = vcmp.ge.s32.totalorder %v685, 1
        %vm700 = vcmp.ge.s32.totalorder %v686, 1
        %vm701 = vcmp.le.s32.totalorder %v677, 16
        %vm702 = vcmp.le.s32.totalorder %v678, 16
        %vm703 = vcmp.le.s32.totalorder %v679, 16
        %vm704 = vcmp.le.s32.totalorder %v680, 16
        %vm705 = vcmp.le.s32.totalorder %v681, 16
        %vm706 = vcmp.le.s32.totalorder %v682, 16
        %vm707 = vcmp.le.s32.totalorder %v683, 16
        %vm708 = vcmp.le.s32.totalorder %v684, 16
        %vm709 = vcmp.le.s32.totalorder %v685, 16
        %vm710 = vcmp.le.s32.totalorder %v686, 16
        %vm711 = vmand %vm691, %vm701
        %vm712 = vmand %vm692, %vm702
        %vm713 = vmand %vm693, %vm703
        %vm714 = vmand %vm694, %vm704
        %vm715 = vmand %vm695, %vm705
        %vm716 = vmand %vm696, %vm706
        %vm717 = vmand %vm697, %vm707
        %vm718 = vmand %vm698, %vm708
        %vm719 = vmand %vm699, %vm709
        %vm720 = vmand %vm700, %vm710
        %vm721 = vcmp.ge.s32.totalorder %v688, 1
        %vm722 = vcmp.ge.s32.totalorder %v689, 1
        %vm723 = vcmp.ge.s32.totalorder %v690, 1
        %vm724 = vmand %vm711, %vm721
        %vm725 = vmand %vm711, %vm722
        %vm726 = vmand %vm711, %vm723
        %vm727 = vmand %vm712, %vm721
        %vm728 = vmand %vm712, %vm722
        %vm729 = vmand %vm712, %vm723
        %vm730 = vmand %vm713, %vm721
        %vm731 = vmand %vm713, %vm722
        %vm732 = vmand %vm713, %vm723
        %vm733 = vmand %vm714, %vm721
        %vm734 = vmand %vm714, %vm722
        %vm735 = vmand %vm714, %vm723
        %vm736 = vmand %vm715, %vm721
        %vm737 = vmand %vm715, %vm722
        %vm738 = vmand %vm715, %vm723
        %vm739 = vmand %vm716, %vm721
        %vm740 = vmand %vm716, %vm722
        %vm741 = vmand %vm716, %vm723
        %vm742 = vmand %vm717, %vm721
        %vm743 = vmand %vm717, %vm722
        %vm744 = vmand %vm717, %vm723
        %vm745 = vmand %vm718, %vm721
        %vm746 = vmand %vm718, %vm722
        %vm747 = vmand %vm718, %vm723
        %vm748 = vmand %vm719, %vm721
        %vm749 = vmand %vm719, %vm722
        %vm750 = vmand %vm719, %vm723
        %vm751 = vmand %vm720, %vm721
        %vm752 = vmand %vm720, %vm722
        %vm753 = vmand %vm720, %vm723
        %vm754 = vcmp.le.s32.totalorder %v688, 16
        %vm755 = vcmp.le.s32.totalorder %v689, 16
        %vm756 = vcmp.le.s32.totalorder %v690, 16
        %vm757 = vmand %vm724, %vm754
        %vm758 = vmand %vm725, %vm755
        %vm759 = vmand %vm726, %vm756
        %vm760 = vmand %vm727, %vm754
        %vm761 = vmand %vm728, %vm755
        %vm762 = vmand %vm729, %vm756
        %vm763 = vmand %vm730, %vm754
        %vm764 = vmand %vm731, %vm755
        %vm765 = vmand %vm732, %vm756
        %vm766 = vmand %vm733, %vm754
        %vm767 = vmand %vm734, %vm755
        %vm768 = vmand %vm735, %vm756
        %vm769 = vmand %vm736, %vm754
        %vm770 = vmand %vm737, %vm755
        %vm771 = vmand %vm738, %vm756
        %vm772 = vmand %vm739, %vm754
        %vm773 = vmand %vm740, %vm755
        %vm774 = vmand %vm741, %vm756
        %vm775 = vmand %vm742, %vm754
        %vm776 = vmand %vm743, %vm755
        %vm777 = vmand %vm744, %vm756
        %vm778 = vmand %vm745, %vm754
        %vm779 = vmand %vm746, %vm755
        %vm780 = vmand %vm747, %vm756
        %vm781 = vmand %vm748, %vm754
        %vm782 = vmand %vm749, %vm755
        %vm783 = vmand %vm750, %vm756
        %vm784 = vmand %vm751, %vm754
        %vm785 = vmand %vm752, %vm755
        %vm786 = vmand %vm753, %vm756
        %v787 = vsel %vm757, %v647, 0.0
        %v788 = vsel %vm758, %v648, 0.0
        %v789 = vsel %vm759, %v649, 0.0
        %v790 = vsel %vm760, %v650, 0.0
        %v791 = vsel %vm761, %v651, 0.0
        %v792 = vsel %vm762, %v652, 0.0
        %v793 = vsel %vm763, %v653, 0.0
        %v794 = vsel %vm764, %v654, 0.0
        %v795 = vsel %vm765, %v655, 0.0
        %v796 = vsel %vm766, %v656, 0.0
        %v797 = vsel %vm767, %v657, 0.0
        %v798 = vsel %vm768, %v658, 0.0
        %v799 = vsel %vm769, %v659, 0.0
        %v800 = vsel %vm770, %v660, 0.0
        %v801 = vsel %vm771, %v661, 0.0
        %v802 = vsel %vm772, %v662, 0.0
        %v803 = vsel %vm773, %v663, 0.0
        %v804 = vsel %vm774, %v664, 0.0
        %v805 = vsel %vm775, %v665, 0.0
        %v806 = vsel %vm776, %v666, 0.0
        %v807 = vsel %vm777, %v667, 0.0
        %v808 = vsel %vm778, %v668, 0.0
        %v809 = vsel %vm779, %v669, 0.0
        %v810 = vsel %vm780, %v670, 0.0
        %v811 = vsel %vm781, %v671, 0.0
        %v812 = vsel %vm782, %v672, 0.0
        %v813 = vsel %vm783, %v673, 0.0
        %v814 = vsel %vm784, %v674, 0.0
        %v815 = vsel %vm785, %v675, 0.0
        %v816 = vsel %vm786, %v676, 0.0
        %v817 = vpack.c.bf16 %v788, %v787
        %v818 = vpack.c.bf16 %v789, %v789
        %v819 = vpack.c.bf16 %v791, %v790
        %v820 = vpack.c.bf16 %v792, %v792
        %v821 = vpack.c.bf16 %v794, %v793
        %v822 = vpack.c.bf16 %v795, %v795
        %v823 = vpack.c.bf16 %v797, %v796
        %v824 = vpack.c.bf16 %v798, %v798
        %v825 = vpack.c.bf16 %v800, %v799
        %v826 = vpack.c.bf16 %v801, %v801
        %v827 = vpack.c.bf16 %v803, %v802
        %v828 = vpack.c.bf16 %v804, %v804
        %v829 = vpack.c.bf16 %v806, %v805
        %v830 = vpack.c.bf16 %v807, %v807
        %v831 = vpack.c.bf16 %v809, %v808
        %v832 = vpack.c.bf16 %v810, %v810
        %v833 = vpack.c.bf16 %v812, %v811
        %v834 = vpack.c.bf16 %v813, %v813
        %v835 = vpack.c.bf16 %v815, %v814
        %v836 = vpack.c.bf16 %v816, %v816
        %v837 = vld [vmem:[%s3] sm:$0xf]
        %v838 = vld [vmem:[%s3 + $0x4] sm:$0xf]
        %v839 = vld [vmem:[%s3 + $0x8] sm:$0xf]
        %v840 = vld [vmem:[%s3 + $0xc] sm:$0xf]
        %v841 = vld [vmem:[%s3 + $0x10] sm:$0xf]
        %v842 = vld [vmem:[%s3 + $0x14] sm:$0xf]
        %v843 = vld [vmem:[%s3 + $0x18] sm:$0xf]
        %v844 = vld [vmem:[%s3 + $0x1c] sm:$0xf]
        %v845 = vld [vmem:[%s3 + $0x20] sm:$0xf]
        %v846 = vld [vmem:[%s3 + $0x24] sm:$0xf]
        %v847 = vld [vmem:[%s3 + $0x28] sm:$0xf]
        %v848 = vld [vmem:[%s3 + $0x2c] sm:$0xf]
        %v849 = vld [vmem:[%s3 + $0x30] sm:$0xf]
        %v850 = vld [vmem:[%s3 + $0x34] sm:$0xf]
        %v851 = vld [vmem:[%s3 + $0x38] sm:$0xf]
        %v852 = vld [vmem:[%s3 + $0x3c] sm:$0xf]
        %vm853 = vsmask.f32 7424
        %v855 = vshrl.u32 %v817, 16
        %v857 = vshll.u32 %v817, 16
        %v859 = vrot.slane %v857, 1
        %v860 = vor.u32 %v855, %v859
        %v862 = vshll.u32 %v818, 16
        %v864 = vrot.slane %v862, 1
        %v865 = vsel %vm853, %v860, %v864
        %v867 = vshrl.u32 %v819, 16
        %v869 = vshll.u32 %v819, 16
        %v871 = vrot.slane %v869, 1
        %v872 = vor.u32 %v867, %v871
        %v874 = vshll.u32 %v820, 16
        %v876 = vrot.slane %v874, 1
        %v877 = vsel %vm853, %v872, %v876
        %v879 = vshrl.u32 %v821, 16
        %v881 = vshll.u32 %v821, 16
        %v883 = vrot.slane %v881, 1
        %v884 = vor.u32 %v879, %v883
        %v886 = vshll.u32 %v822, 16
        %v888 = vrot.slane %v886, 1
        %v889 = vsel %vm853, %v884, %v888
        %v891 = vshrl.u32 %v823, 16
        %v893 = vshll.u32 %v823, 16
        %v895 = vrot.slane %v893, 1
        %v896 = vor.u32 %v891, %v895
        %v898 = vshll.u32 %v824, 16
        %v900 = vrot.slane %v898, 1
        %v901 = vsel %vm853, %v896, %v900
        %v903 = vshrl.u32 %v825, 16
        %v905 = vshll.u32 %v825, 16
        %v907 = vrot.slane %v905, 1
        %v908 = vor.u32 %v903, %v907
        %v910 = vshll.u32 %v826, 16
        %v912 = vrot.slane %v910, 1
        %v913 = vsel %vm853, %v908, %v912
        %v915 = vshrl.u32 %v827, 16
        %v917 = vshll.u32 %v827, 16
        %v919 = vrot.slane %v917, 1
        %v920 = vor.u32 %v915, %v919
        %v922 = vshll.u32 %v828, 16
        %v924 = vrot.slane %v922, 1
        %v925 = vsel %vm853, %v920, %v924
        %v927 = vshrl.u32 %v829, 16
        %v929 = vshll.u32 %v829, 16
        %v931 = vrot.slane %v929, 1
        %v932 = vor.u32 %v927, %v931
        %v934 = vshll.u32 %v830, 16
        %v936 = vrot.slane %v934, 1
        %v937 = vsel %vm853, %v932, %v936
        %v939 = vshrl.u32 %v831, 16
        %v941 = vshll.u32 %v831, 16
        %v943 = vrot.slane %v941, 1
        %v944 = vor.u32 %v939, %v943
        %v946 = vshll.u32 %v832, 16
        %v948 = vrot.slane %v946, 1
        %v949 = vsel %vm853, %v944, %v948
        %s958 = scalar_lea.vmem %s3, 64
        %v959 = vld [vmem:[%s958] sm:$0xf]
        %v960 = vld [vmem:[%s958 + $0x4] sm:$0xf]
        %v961 = vld [vmem:[%s958 + $0x8] sm:$0xf]
        %v962 = vld [vmem:[%s958 + $0xc] sm:$0xf]
        %v963 = vld [vmem:[%s958 + $0x10] sm:$0xf]
        %v964 = vld [vmem:[%s958 + $0x14] sm:$0xf]
        %v965 = vld [vmem:[%s958 + $0x18] sm:$0xf]
        %v966 = vld [vmem:[%s958 + $0x1c] sm:$0xf]
        %v967 = vld [vmem:[%s958 + $0x20] sm:$0xf]
        %v968 = vld [vmem:[%s958 + $0x24] sm:$0xf]
        %v969 = vld [vmem:[%s958 + $0x28] sm:$0xf]
        %v970 = vld [vmem:[%s958 + $0x2c] sm:$0xf]
        %v971 = vld [vmem:[%s958 + $0x30] sm:$0xf]
        %v972 = vld [vmem:[%s958 + $0x34] sm:$0xf]
        %v973 = vld [vmem:[%s958 + $0x38] sm:$0xf]
        %v974 = vld [vmem:[%s958 + $0x3c] sm:$0xf]
        %v991 = vunpack.c.l.b16 %v959
        %v992 = vunpack.c.l.b16 %v960
        %v993 = vunpack.c.l.b16 %v961
        %v994 = vunpack.c.l.b16 %v962
        %v995 = vunpack.c.l.b16 %v963
        %v996 = vunpack.c.l.b16 %v964
        %v997 = vunpack.c.l.b16 %v965
        %v998 = vunpack.c.l.b16 %v966
        %v999 = vunpack.c.l.b16 %v967
        %v1000 = vunpack.c.l.b16 %v968
        %v1001 = vunpack.c.l.b16 %v969
        %v1002 = vunpack.c.l.b16 %v970
        %v1003 = vunpack.c.l.b16 %v971
        %v1004 = vunpack.c.l.b16 %v972
        %v1005 = vunpack.c.l.b16 %v973
        %v1006 = vunpack.c.l.b16 %v974
        %v1007 = vpack.c.b16 %v992, %v991
        %v1008 = vpack.c.b16 %v994, %v993
        %v1009 = vpack.c.b16 %v996, %v995
        %v1010 = vpack.c.b16 %v998, %v997
        %v1011 = vpack.c.b16 %v1000, %v999
        %v1012 = vpack.c.b16 %v1002, %v1001
        %v1013 = vpack.c.b16 %v1004, %v1003
        %v1014 = vpack.c.b16 %v1006, %v1005
        %1023 = vmatprep.subr.bf16.mxu0 0
        %1024 = vmatpush1.bf16.msra.mxu0 %v1014
        %1025 = vmatprep.subr.bf16.mxu0 0
        %1026 = vmatpush1.bf16.msra.mxu0 %v1013
        %1027 = vmatprep.subr.bf16.mxu0 0
        %1028 = vmatpush1.bf16.msra.mxu0 %v1012
        %1029 = vmatprep.subr.bf16.mxu0 0
        %1030 = vmatpush1.bf16.msra.mxu0 %v1011
        %1031 = vmatprep.subr.bf16.mxu0 0
        %1032 = vmatpush1.bf16.msra.mxu0 %v1010
        %1033 = vmatprep.subr.bf16.mxu0 0
        %1034 = vmatpush1.bf16.msra.mxu0 %v1009
        %1035 = vmatprep.subr.bf16.mxu0 0
        %1036 = vmatpush1.bf16.msra.mxu0 %v1008
        %1037 = vmatprep.subr.bf16.mxu0 0
        %1038 = vmatpush1.bf16.msra.mxu0 %v1007
        %1039 = vmatprep.subr.bf16.mxu0 0
        %1040 = vmatpush2.bf16.msra.mxu0 0
        %1041 = vmatprep.subr.bf16.mxu0 0
        %1042 = vmatpush2.bf16.msra.mxu0 0
        %1043 = vmatprep.subr.bf16.mxu0 0
        %1044 = vmatpush2.bf16.msra.mxu0 0
        %1045 = vmatprep.subr.bf16.mxu0 0
        %1046 = vmatpush2.bf16.msra.mxu0 0
        %1047 = vmatprep.subr.bf16.mxu0 0
        %1048 = vmatpush2.bf16.msra.mxu0 0
        %1049 = vmatprep.subr.bf16.mxu0 0
        %1050 = vmatpush2.bf16.msra.mxu0 0
        %1051 = vmatprep.subr.bf16.mxu0 0
        %1052 = vmatpush2.bf16.msra.mxu0 0
        %1053 = vmatprep.subr.bf16.mxu0 0
        %1054 = vmatpush2.bf16.msra.mxu0 0
        %1055 = vmatprep.mubr.bf16.mxu0 0
        %1056 = vmatmul.mubr.bf16.gmra.mxu0 %v865
        %v1057 = vpop.f32.mrf.mxu0
        %v1058 = vadd.f32 0.0, %v1057
        %v1059 = vpop.f32.mrf.mxu0
        %v1060 = vpop.f32.mrf.mxu0
        %v1061 = vadd.f32 0.0, %v1060
        %v1062 = vpop.f32.mrf.mxu0
        %1063 = vmatprep.mubr.bf16.mxu0 0
        %1064 = vmatmul.mubr.bf16.gmra.mxu0 %v877
        %v1065 = vpop.f32.mrf.mxu0
        %v1066 = vadd.f32 0.0, %v1065
        %v1067 = vpop.f32.mrf.mxu0
        %v1068 = vpop.f32.mrf.mxu0
        %v1069 = vadd.f32 0.0, %v1068
        %v1070 = vpop.f32.mrf.mxu0
        %1071 = vmatprep.mubr.bf16.mxu0 0
        %1072 = vmatmul.mubr.bf16.gmra.mxu0 %v889
        %v1073 = vpop.f32.mrf.mxu0
        %v1074 = vadd.f32 0.0, %v1073
        %v1075 = vpop.f32.mrf.mxu0
        %v1076 = vpop.f32.mrf.mxu0
        %v1077 = vadd.f32 0.0, %v1076
        %v1078 = vpop.f32.mrf.mxu0
        %1079 = vmatprep.mubr.bf16.mxu0 0
        %1080 = vmatmul.mubr.bf16.gmra.mxu0 %v901
        %v1081 = vpop.f32.mrf.mxu0
        %v1082 = vadd.f32 0.0, %v1081
        %v1083 = vpop.f32.mrf.mxu0
        %v1084 = vpop.f32.mrf.mxu0
        %v1085 = vadd.f32 0.0, %v1084
        %v1086 = vpop.f32.mrf.mxu0
        %1087 = vmatprep.mubr.bf16.mxu0 0
        %1088 = vmatmul.mubr.bf16.gmra.mxu0 %v913
        %v1089 = vpop.f32.mrf.mxu0
        %v1090 = vadd.f32 0.0, %v1089
        %v1091 = vpop.f32.mrf.mxu0
        %v1092 = vpop.f32.mrf.mxu0
        %v1093 = vadd.f32 0.0, %v1092
        %v1094 = vpop.f32.mrf.mxu0
        %1095 = vmatprep.mubr.bf16.mxu0 0
        %1096 = vmatmul.mubr.bf16.gmra.mxu0 %v925
        %v1097 = vpop.f32.mrf.mxu0
        %v1098 = vadd.f32 0.0, %v1097
        %v1099 = vpop.f32.mrf.mxu0
        %v1100 = vpop.f32.mrf.mxu0
        %v1101 = vadd.f32 0.0, %v1100
        %v1102 = vpop.f32.mrf.mxu0
        %1103 = vmatprep.mubr.bf16.mxu0 0
        %1104 = vmatmul.mubr.bf16.gmra.mxu0 %v937
        %v1105 = vpop.f32.mrf.mxu0
        %v1106 = vadd.f32 0.0, %v1105
        %v1107 = vpop.f32.mrf.mxu0
        %v1108 = vpop.f32.mrf.mxu0
        %v1109 = vadd.f32 0.0, %v1108
        %v1110 = vpop.f32.mrf.mxu0
        %1111 = vmatprep.mubr.bf16.mxu0 0
        %1112 = vmatmul.mubr.bf16.gmra.mxu0 %v949
        %v1113 = vpop.f32.mrf.mxu0
        %v1114 = vadd.f32 0.0, %v1113
        %v1115 = vpop.f32.mrf.mxu0
        %v1116 = vpop.f32.mrf.mxu0
        %v1117 = vadd.f32 0.0, %v1116
        %v1118 = vpop.f32.mrf.mxu0
        %1119 = vdwg.mxu0
        %v1136 = vunpack.c.l.b16 %v837
        %v1137 = vunpack.c.l.b16 %v838
        %v1138 = vunpack.c.l.b16 %v839
        %v1139 = vunpack.c.l.b16 %v840
        %v1140 = vunpack.c.l.b16 %v841
        %v1141 = vunpack.c.l.b16 %v842
        %v1142 = vunpack.c.l.b16 %v843
        %v1143 = vunpack.c.l.b16 %v844
        %v1144 = vunpack.c.l.b16 %v845
        %v1145 = vunpack.c.l.b16 %v846
        %v1146 = vunpack.c.l.b16 %v847
        %v1147 = vunpack.c.l.b16 %v848
        %v1148 = vunpack.c.l.b16 %v849
        %v1149 = vunpack.c.l.b16 %v850
        %v1150 = vunpack.c.l.b16 %v851
        %v1151 = vunpack.c.l.b16 %v852
        %v1152 = vpack.c.b16 %v1137, %v1136
        %v1153 = vpack.c.b16 %v1139, %v1138
        %v1154 = vpack.c.b16 %v1141, %v1140
        %v1155 = vpack.c.b16 %v1143, %v1142
        %v1156 = vpack.c.b16 %v1145, %v1144
        %v1157 = vpack.c.b16 %v1147, %v1146
        %v1158 = vpack.c.b16 %v1149, %v1148
        %v1159 = vpack.c.b16 %v1151, %v1150
        %1168 = vmatprep.subr.bf16.mxu0 0
        %1169 = vmatpush1.bf16.msra.mxu0 %v1159
        %1170 = vmatprep.subr.bf16.mxu0 0
        %1171 = vmatpush1.bf16.msra.mxu0 %v1158
        %1172 = vmatprep.subr.bf16.mxu0 0
        %1173 = vmatpush1.bf16.msra.mxu0 %v1157
        %1174 = vmatprep.subr.bf16.mxu0 0
        %1175 = vmatpush1.bf16.msra.mxu0 %v1156
        %1176 = vmatprep.subr.bf16.mxu0 0
        %1177 = vmatpush1.bf16.msra.mxu0 %v1155
        %1178 = vmatprep.subr.bf16.mxu0 0
        %1179 = vmatpush1.bf16.msra.mxu0 %v1154
        %1180 = vmatprep.subr.bf16.mxu0 0
        %1181 = vmatpush1.bf16.msra.mxu0 %v1153
        %1182 = vmatprep.subr.bf16.mxu0 0
        %1183 = vmatpush1.bf16.msra.mxu0 %v1152
        %1184 = vmatprep.subr.bf16.mxu0 0
        %1185 = vmatpush2.bf16.msra.mxu0 0
        %1186 = vmatprep.subr.bf16.mxu0 0
        %1187 = vmatpush2.bf16.msra.mxu0 0
        %1188 = vmatprep.subr.bf16.mxu0 0
        %1189 = vmatpush2.bf16.msra.mxu0 0
        %1190 = vmatprep.subr.bf16.mxu0 0
        %1191 = vmatpush2.bf16.msra.mxu0 0
        %1192 = vmatprep.subr.bf16.mxu0 0
        %1193 = vmatpush2.bf16.msra.mxu0 0
        %1194 = vmatprep.subr.bf16.mxu0 0
        %1195 = vmatpush2.bf16.msra.mxu0 0
        %1196 = vmatprep.subr.bf16.mxu0 0
        %1197 = vmatpush2.bf16.msra.mxu0 0
        %1198 = vmatprep.subr.bf16.mxu0 0
        %1199 = vmatpush2.bf16.msra.mxu0 0
        %1200 = vmatprep.mubr.bf16.mxu0 0
        %1201 = vmatmul.mubr.bf16.gmra.mxu0 %v817
        %v1202 = vpop.f32.mrf.mxu0
        %v1203 = vadd.f32 %v1058, %v1202
        %v1204 = vpop.f32.mrf.mxu0
        %v1205 = vpop.f32.mrf.mxu0
        %v1206 = vadd.f32 %v1061, %v1205
        %v1207 = vpop.f32.mrf.mxu0
        %1208 = vmatprep.mubr.bf16.mxu0 0
        %1209 = vmatmul.mubr.bf16.gmra.mxu0 %v819
        %v1210 = vpop.f32.mrf.mxu0
        %v1211 = vadd.f32 %v1066, %v1210
        %v1212 = vpop.f32.mrf.mxu0
        %v1213 = vpop.f32.mrf.mxu0
        %v1214 = vadd.f32 %v1069, %v1213
        %v1215 = vpop.f32.mrf.mxu0
        %1216 = vmatprep.mubr.bf16.mxu0 0
        %1217 = vmatmul.mubr.bf16.gmra.mxu0 %v821
        %v1218 = vpop.f32.mrf.mxu0
        %v1219 = vadd.f32 %v1074, %v1218
        %v1220 = vpop.f32.mrf.mxu0
        %v1221 = vpop.f32.mrf.mxu0
        %v1222 = vadd.f32 %v1077, %v1221
        %v1223 = vpop.f32.mrf.mxu0
        %1224 = vmatprep.mubr.bf16.mxu0 0
        %1225 = vmatmul.mubr.bf16.gmra.mxu0 %v823
        %v1226 = vpop.f32.mrf.mxu0
        %v1227 = vadd.f32 %v1082, %v1226
        %v1228 = vpop.f32.mrf.mxu0
        %v1229 = vpop.f32.mrf.mxu0
        %v1230 = vadd.f32 %v1085, %v1229
        %v1231 = vpop.f32.mrf.mxu0
        %1232 = vmatprep.mubr.bf16.mxu0 0
        %1233 = vmatmul.mubr.bf16.gmra.mxu0 %v825
        %v1234 = vpop.f32.mrf.mxu0
        %v1235 = vadd.f32 %v1090, %v1234
        %v1236 = vpop.f32.mrf.mxu0
        %v1237 = vpop.f32.mrf.mxu0
        %v1238 = vadd.f32 %v1093, %v1237
        %v1239 = vpop.f32.mrf.mxu0
        %1240 = vmatprep.mubr.bf16.mxu0 0
        %1241 = vmatmul.mubr.bf16.gmra.mxu0 %v827
        %v1242 = vpop.f32.mrf.mxu0
        %v1243 = vadd.f32 %v1098, %v1242
        %v1244 = vpop.f32.mrf.mxu0
        %v1245 = vpop.f32.mrf.mxu0
        %v1246 = vadd.f32 %v1101, %v1245
        %v1247 = vpop.f32.mrf.mxu0
        %1248 = vmatprep.mubr.bf16.mxu0 0
        %1249 = vmatmul.mubr.bf16.gmra.mxu0 %v829
        %v1250 = vpop.f32.mrf.mxu0
        %v1251 = vadd.f32 %v1106, %v1250
        %v1252 = vpop.f32.mrf.mxu0
        %v1253 = vpop.f32.mrf.mxu0
        %v1254 = vadd.f32 %v1109, %v1253
        %v1255 = vpop.f32.mrf.mxu0
        %1256 = vmatprep.mubr.bf16.mxu0 0
        %1257 = vmatmul.mubr.bf16.gmra.mxu0 %v831
        %v1258 = vpop.f32.mrf.mxu0
        %v1259 = vadd.f32 %v1114, %v1258
        %v1260 = vpop.f32.mrf.mxu0
        %v1261 = vpop.f32.mrf.mxu0
        %v1262 = vadd.f32 %v1117, %v1261
        %v1263 = vpop.f32.mrf.mxu0
        %1264 = vdwg.mxu0
        %vm1281 = vcmask 1046528
        %v1282 = vrot.slane %v817, 1
        %v1283 = vrot.slane %v818, 1
        %v1284 = vsel %vm1281, %v1282, %v1283
        %v1285 = vrot.slane %v819, 1
        %v1286 = vrot.slane %v820, 1
        %v1287 = vsel %vm1281, %v1285, %v1286
        %v1288 = vrot.slane %v821, 1
        %v1289 = vrot.slane %v822, 1
        %v1290 = vsel %vm1281, %v1288, %v1289
        %v1291 = vrot.slane %v823, 1
        %v1292 = vrot.slane %v824, 1
        %v1293 = vsel %vm1281, %v1291, %v1292
        %v1294 = vrot.slane %v825, 1
        %v1295 = vrot.slane %v826, 1
        %v1296 = vsel %vm1281, %v1294, %v1295
        %v1297 = vrot.slane %v827, 1
        %v1298 = vrot.slane %v828, 1
        %v1299 = vsel %vm1281, %v1297, %v1298
        %v1300 = vrot.slane %v829, 1
        %v1301 = vrot.slane %v830, 1
        %v1302 = vsel %vm1281, %v1300, %v1301
        %v1303 = vrot.slane %v831, 1
        %v1304 = vrot.slane %v832, 1
        %v1305 = vsel %vm1281, %v1303, %v1304
        %s1314 = scalar_lea.vmem %s3, 128
        %v1315 = vld [vmem:[%s1314] sm:$0xf]
        %v1316 = vld [vmem:[%s1314 + $0x4] sm:$0xf]
        %v1317 = vld [vmem:[%s1314 + $0x8] sm:$0xf]
        %v1318 = vld [vmem:[%s1314 + $0xc] sm:$0xf]
        %v1319 = vld [vmem:[%s1314 + $0x10] sm:$0xf]
        %v1320 = vld [vmem:[%s1314 + $0x14] sm:$0xf]
        %v1321 = vld [vmem:[%s1314 + $0x18] sm:$0xf]
        %v1322 = vld [vmem:[%s1314 + $0x1c] sm:$0xf]
        %v1323 = vld [vmem:[%s1314 + $0x20] sm:$0xf]
        %v1324 = vld [vmem:[%s1314 + $0x24] sm:$0xf]
        %v1325 = vld [vmem:[%s1314 + $0x28] sm:$0xf]
        %v1326 = vld [vmem:[%s1314 + $0x2c] sm:$0xf]
        %v1327 = vld [vmem:[%s1314 + $0x30] sm:$0xf]
        %v1328 = vld [vmem:[%s1314 + $0x34] sm:$0xf]
        %v1329 = vld [vmem:[%s1314 + $0x38] sm:$0xf]
        %v1330 = vld [vmem:[%s1314 + $0x3c] sm:$0xf]
        %v1347 = vunpack.c.l.b16 %v1315
        %v1348 = vunpack.c.l.b16 %v1316
        %v1349 = vunpack.c.l.b16 %v1317
        %v1350 = vunpack.c.l.b16 %v1318
        %v1351 = vunpack.c.l.b16 %v1319
        %v1352 = vunpack.c.l.b16 %v1320
        %v1353 = vunpack.c.l.b16 %v1321
        %v1354 = vunpack.c.l.b16 %v1322
        %v1355 = vunpack.c.l.b16 %v1323
        %v1356 = vunpack.c.l.b16 %v1324
        %v1357 = vunpack.c.l.b16 %v1325
        %v1358 = vunpack.c.l.b16 %v1326
        %v1359 = vunpack.c.l.b16 %v1327
        %v1360 = vunpack.c.l.b16 %v1328
        %v1361 = vunpack.c.l.b16 %v1329
        %v1362 = vunpack.c.l.b16 %v1330
        %v1363 = vpack.c.b16 %v1348, %v1347
        %v1364 = vpack.c.b16 %v1350, %v1349
        %v1365 = vpack.c.b16 %v1352, %v1351
        %v1366 = vpack.c.b16 %v1354, %v1353
        %v1367 = vpack.c.b16 %v1356, %v1355
        %v1368 = vpack.c.b16 %v1358, %v1357
        %v1369 = vpack.c.b16 %v1360, %v1359
        %v1370 = vpack.c.b16 %v1362, %v1361
        %1379 = vmatprep.subr.bf16.mxu0 0
        %1380 = vmatpush1.bf16.msra.mxu0 %v1370
        %1381 = vmatprep.subr.bf16.mxu0 0
        %1382 = vmatpush1.bf16.msra.mxu0 %v1369
        %1383 = vmatprep.subr.bf16.mxu0 0
        %1384 = vmatpush1.bf16.msra.mxu0 %v1368
        %1385 = vmatprep.subr.bf16.mxu0 0
        %1386 = vmatpush1.bf16.msra.mxu0 %v1367
        %1387 = vmatprep.subr.bf16.mxu0 0
        %1388 = vmatpush1.bf16.msra.mxu0 %v1366
        %1389 = vmatprep.subr.bf16.mxu0 0
        %1390 = vmatpush1.bf16.msra.mxu0 %v1365
        %1391 = vmatprep.subr.bf16.mxu0 0
        %1392 = vmatpush1.bf16.msra.mxu0 %v1364
        %1393 = vmatprep.subr.bf16.mxu0 0
        %1394 = vmatpush1.bf16.msra.mxu0 %v1363
        %1395 = vmatprep.subr.bf16.mxu0 0
        %1396 = vmatpush2.bf16.msra.mxu0 0
        %1397 = vmatprep.subr.bf16.mxu0 0
        %1398 = vmatpush2.bf16.msra.mxu0 0
        %1399 = vmatprep.subr.bf16.mxu0 0
        %1400 = vmatpush2.bf16.msra.mxu0 0
        %1401 = vmatprep.subr.bf16.mxu0 0
        %1402 = vmatpush2.bf16.msra.mxu0 0
        %1403 = vmatprep.subr.bf16.mxu0 0
        %1404 = vmatpush2.bf16.msra.mxu0 0
        %1405 = vmatprep.subr.bf16.mxu0 0
        %1406 = vmatpush2.bf16.msra.mxu0 0
        %1407 = vmatprep.subr.bf16.mxu0 0
        %1408 = vmatpush2.bf16.msra.mxu0 0
        %1409 = vmatprep.subr.bf16.mxu0 0
        %1410 = vmatpush2.bf16.msra.mxu0 0
        %1411 = vmatprep.mubr.bf16.mxu0 0
        %1412 = vmatmul.mubr.bf16.gmra.mxu0 %v1284
        %v1413 = vpop.f32.mrf.mxu0
        %v1414 = vadd.f32 0.0, %v1413
        %v1415 = vpop.f32.mrf.mxu0
        %v1416 = vpop.f32.mrf.mxu0
        %v1417 = vadd.f32 0.0, %v1416
        %v1418 = vpop.f32.mrf.mxu0
        %1419 = vmatprep.mubr.bf16.mxu0 0
        %1420 = vmatmul.mubr.bf16.gmra.mxu0 %v1287
        %v1421 = vpop.f32.mrf.mxu0
        %v1422 = vadd.f32 0.0, %v1421
        %v1423 = vpop.f32.mrf.mxu0
        %v1424 = vpop.f32.mrf.mxu0
        %v1425 = vadd.f32 0.0, %v1424
        %v1426 = vpop.f32.mrf.mxu0
        %1427 = vmatprep.mubr.bf16.mxu0 0
        %1428 = vmatmul.mubr.bf16.gmra.mxu0 %v1290
        %v1429 = vpop.f32.mrf.mxu0
        %v1430 = vadd.f32 0.0, %v1429
        %v1431 = vpop.f32.mrf.mxu0
        %v1432 = vpop.f32.mrf.mxu0
        %v1433 = vadd.f32 0.0, %v1432
        %v1434 = vpop.f32.mrf.mxu0
        %1435 = vmatprep.mubr.bf16.mxu0 0
        %1436 = vmatmul.mubr.bf16.gmra.mxu0 %v1293
        %v1437 = vpop.f32.mrf.mxu0
        %v1438 = vadd.f32 0.0, %v1437
        %v1439 = vpop.f32.mrf.mxu0
        %v1440 = vpop.f32.mrf.mxu0
        %v1441 = vadd.f32 0.0, %v1440
        %v1442 = vpop.f32.mrf.mxu0
        %1443 = vmatprep.mubr.bf16.mxu0 0
        %1444 = vmatmul.mubr.bf16.gmra.mxu0 %v1296
        %v1445 = vpop.f32.mrf.mxu0
        %v1446 = vadd.f32 0.0, %v1445
        %v1447 = vpop.f32.mrf.mxu0
        %v1448 = vpop.f32.mrf.mxu0
        %v1449 = vadd.f32 0.0, %v1448
        %v1450 = vpop.f32.mrf.mxu0
        %1451 = vmatprep.mubr.bf16.mxu0 0
        %1452 = vmatmul.mubr.bf16.gmra.mxu0 %v1299
        %v1453 = vpop.f32.mrf.mxu0
        %v1454 = vadd.f32 0.0, %v1453
        %v1455 = vpop.f32.mrf.mxu0
        %v1456 = vpop.f32.mrf.mxu0
        %v1457 = vadd.f32 0.0, %v1456
        %v1458 = vpop.f32.mrf.mxu0
        %1459 = vmatprep.mubr.bf16.mxu0 0
        %1460 = vmatmul.mubr.bf16.gmra.mxu0 %v1302
        %v1461 = vpop.f32.mrf.mxu0
        %v1462 = vadd.f32 0.0, %v1461
        %v1463 = vpop.f32.mrf.mxu0
        %v1464 = vpop.f32.mrf.mxu0
        %v1465 = vadd.f32 0.0, %v1464
        %v1466 = vpop.f32.mrf.mxu0
        %1467 = vmatprep.mubr.bf16.mxu0 0
        %1468 = vmatmul.mubr.bf16.gmra.mxu0 %v1305
        %v1469 = vpop.f32.mrf.mxu0
        %v1470 = vadd.f32 0.0, %v1469
        %v1471 = vpop.f32.mrf.mxu0
        %v1472 = vpop.f32.mrf.mxu0
        %v1473 = vadd.f32 0.0, %v1472
        %v1474 = vpop.f32.mrf.mxu0
        %1475 = vdwg.mxu0
        %v1476 = vadd.f32 %v1203, %v1414
        %v1477 = vadd.f32 %v1206, %v1417
        %v1478 = vadd.f32 %v1211, %v1422
        %v1479 = vadd.f32 %v1214, %v1425
        %v1480 = vadd.f32 %v1219, %v1430
        %v1481 = vadd.f32 %v1222, %v1433
        %v1482 = vadd.f32 %v1227, %v1438
        %v1483 = vadd.f32 %v1230, %v1441
        %v1484 = vadd.f32 %v1235, %v1446
        %v1485 = vadd.f32 %v1238, %v1449
        %v1486 = vadd.f32 %v1243, %v1454
        %v1487 = vadd.f32 %v1246, %v1457
        %v1488 = vadd.f32 %v1251, %v1462
        %v1489 = vadd.f32 %v1254, %v1465
        %v1490 = vadd.f32 %v1259, %v1470
        %v1491 = vadd.f32 %v1262, %v1473
        %s1492 = scalar_lea.vmem %s3, 192
        %v1493 = vld [vmem:[%s1492] sm:$0xf]
        %v1494 = vld [vmem:[%s1492 + $0x4] sm:$0xf]
        %v1495 = vld [vmem:[%s1492 + $0x8] sm:$0xf]
        %v1496 = vld [vmem:[%s1492 + $0xc] sm:$0xf]
        %v1497 = vld [vmem:[%s1492 + $0x10] sm:$0xf]
        %v1498 = vld [vmem:[%s1492 + $0x14] sm:$0xf]
        %v1499 = vld [vmem:[%s1492 + $0x18] sm:$0xf]
        %v1500 = vld [vmem:[%s1492 + $0x1c] sm:$0xf]
        %v1501 = vld [vmem:[%s1492 + $0x20] sm:$0xf]
        %v1502 = vld [vmem:[%s1492 + $0x24] sm:$0xf]
        %v1503 = vld [vmem:[%s1492 + $0x28] sm:$0xf]
        %v1504 = vld [vmem:[%s1492 + $0x2c] sm:$0xf]
        %v1505 = vld [vmem:[%s1492 + $0x30] sm:$0xf]
        %v1506 = vld [vmem:[%s1492 + $0x34] sm:$0xf]
        %v1507 = vld [vmem:[%s1492 + $0x38] sm:$0xf]
        %v1508 = vld [vmem:[%s1492 + $0x3c] sm:$0xf]
        %v1525 = vunpack.c.l.b16 %v1493
        %v1526 = vunpack.c.l.b16 %v1494
        %v1527 = vunpack.c.l.b16 %v1495
        %v1528 = vunpack.c.l.b16 %v1496
        %v1529 = vunpack.c.l.b16 %v1497
        %v1530 = vunpack.c.l.b16 %v1498
        %v1531 = vunpack.c.l.b16 %v1499
        %v1532 = vunpack.c.l.b16 %v1500
        %v1533 = vunpack.c.l.b16 %v1501
        %v1534 = vunpack.c.l.b16 %v1502
        %v1535 = vunpack.c.l.b16 %v1503
        %v1536 = vunpack.c.l.b16 %v1504
        %v1537 = vunpack.c.l.b16 %v1505
        %v1538 = vunpack.c.l.b16 %v1506
        %v1539 = vunpack.c.l.b16 %v1507
        %v1540 = vunpack.c.l.b16 %v1508
        %v1541 = vpack.c.b16 %v1526, %v1525
        %v1542 = vpack.c.b16 %v1528, %v1527
        %v1543 = vpack.c.b16 %v1530, %v1529
        %v1544 = vpack.c.b16 %v1532, %v1531
        %v1545 = vpack.c.b16 %v1534, %v1533
        %v1546 = vpack.c.b16 %v1536, %v1535
        %v1547 = vpack.c.b16 %v1538, %v1537
        %v1548 = vpack.c.b16 %v1540, %v1539
        %1557 = vmatprep.subr.bf16.mxu0 0
        %1558 = vmatpush1.bf16.msra.mxu0 %v1548
        %1559 = vmatprep.subr.bf16.mxu0 0
        %1560 = vmatpush1.bf16.msra.mxu0 %v1547
        %1561 = vmatprep.subr.bf16.mxu0 0
        %1562 = vmatpush1.bf16.msra.mxu0 %v1546
        %1563 = vmatprep.subr.bf16.mxu0 0
        %1564 = vmatpush1.bf16.msra.mxu0 %v1545
        %1565 = vmatprep.subr.bf16.mxu0 0
        %1566 = vmatpush1.bf16.msra.mxu0 %v1544
        %1567 = vmatprep.subr.bf16.mxu0 0
        %1568 = vmatpush1.bf16.msra.mxu0 %v1543
        %1569 = vmatprep.subr.bf16.mxu0 0
        %1570 = vmatpush1.bf16.msra.mxu0 %v1542
        %1571 = vmatprep.subr.bf16.mxu0 0
        %1572 = vmatpush1.bf16.msra.mxu0 %v1541
        %1573 = vmatprep.subr.bf16.mxu0 0
        %1574 = vmatpush2.bf16.msra.mxu0 0
        %1575 = vmatprep.subr.bf16.mxu0 0
        %1576 = vmatpush2.bf16.msra.mxu0 0
        %1577 = vmatprep.subr.bf16.mxu0 0
        %1578 = vmatpush2.bf16.msra.mxu0 0
        %1579 = vmatprep.subr.bf16.mxu0 0
        %1580 = vmatpush2.bf16.msra.mxu0 0
        %1581 = vmatprep.subr.bf16.mxu0 0
        %1582 = vmatpush2.bf16.msra.mxu0 0
        %1583 = vmatprep.subr.bf16.mxu0 0
        %1584 = vmatpush2.bf16.msra.mxu0 0
        %1585 = vmatprep.subr.bf16.mxu0 0
        %1586 = vmatpush2.bf16.msra.mxu0 0
        %1587 = vmatprep.subr.bf16.mxu0 0
        %1588 = vmatpush2.bf16.msra.mxu0 0
        %1589 = vmatprep.mubr.bf16.mxu0 0
        %1590 = vmatmul.mubr.bf16.gmra.mxu0 %v819
        %v1591 = vpop.f32.mrf.mxu0
        %v1592 = vadd.f32 0.0, %v1591
        %v1593 = vpop.f32.mrf.mxu0
        %v1594 = vpop.f32.mrf.mxu0
        %v1595 = vadd.f32 0.0, %v1594
        %v1596 = vpop.f32.mrf.mxu0
        %1597 = vmatprep.mubr.bf16.mxu0 0
        %1598 = vmatmul.mubr.bf16.gmra.mxu0 %v821
        %v1599 = vpop.f32.mrf.mxu0
        %v1600 = vadd.f32 0.0, %v1599
        %v1601 = vpop.f32.mrf.mxu0
        %v1602 = vpop.f32.mrf.mxu0
        %v1603 = vadd.f32 0.0, %v1602
        %v1604 = vpop.f32.mrf.mxu0
        %1605 = vmatprep.mubr.bf16.mxu0 0
        %1606 = vmatmul.mubr.bf16.gmra.mxu0 %v823
        %v1607 = vpop.f32.mrf.mxu0
        %v1608 = vadd.f32 0.0, %v1607
        %v1609 = vpop.f32.mrf.mxu0
        %v1610 = vpop.f32.mrf.mxu0
        %v1611 = vadd.f32 0.0, %v1610
        %v1612 = vpop.f32.mrf.mxu0
        %1613 = vmatprep.mubr.bf16.mxu0 0
        %1614 = vmatmul.mubr.bf16.gmra.mxu0 %v825
        %v1615 = vpop.f32.mrf.mxu0
        %v1616 = vadd.f32 0.0, %v1615
        %v1617 = vpop.f32.mrf.mxu0
        %v1618 = vpop.f32.mrf.mxu0
        %v1619 = vadd.f32 0.0, %v1618
        %v1620 = vpop.f32.mrf.mxu0
        %1621 = vmatprep.mubr.bf16.mxu0 0
        %1622 = vmatmul.mubr.bf16.gmra.mxu0 %v827
        %v1623 = vpop.f32.mrf.mxu0
        %v1624 = vadd.f32 0.0, %v1623
        %v1625 = vpop.f32.mrf.mxu0
        %v1626 = vpop.f32.mrf.mxu0
        %v1627 = vadd.f32 0.0, %v1626
        %v1628 = vpop.f32.mrf.mxu0
        %1629 = vmatprep.mubr.bf16.mxu0 0
        %1630 = vmatmul.mubr.bf16.gmra.mxu0 %v829
        %v1631 = vpop.f32.mrf.mxu0
        %v1632 = vadd.f32 0.0, %v1631
        %v1633 = vpop.f32.mrf.mxu0
        %v1634 = vpop.f32.mrf.mxu0
        %v1635 = vadd.f32 0.0, %v1634
        %v1636 = vpop.f32.mrf.mxu0
        %1637 = vmatprep.mubr.bf16.mxu0 0
        %1638 = vmatmul.mubr.bf16.gmra.mxu0 %v831
        %v1639 = vpop.f32.mrf.mxu0
        %v1640 = vadd.f32 0.0, %v1639
        %v1641 = vpop.f32.mrf.mxu0
        %v1642 = vpop.f32.mrf.mxu0
        %v1643 = vadd.f32 0.0, %v1642
        %v1644 = vpop.f32.mrf.mxu0
        %1645 = vmatprep.mubr.bf16.mxu0 0
        %1646 = vmatmul.mubr.bf16.gmra.mxu0 %v833
        %v1647 = vpop.f32.mrf.mxu0
        %v1648 = vadd.f32 0.0, %v1647
        %v1649 = vpop.f32.mrf.mxu0
        %v1650 = vpop.f32.mrf.mxu0
        %v1651 = vadd.f32 0.0, %v1650
        %v1652 = vpop.f32.mrf.mxu0
        %1653 = vdwg.mxu0
        %v1654 = vadd.f32 %v1476, %v1592
        %v1655 = vadd.f32 %v1477, %v1595
        %v1656 = vadd.f32 %v1478, %v1600
        %v1657 = vadd.f32 %v1479, %v1603
        %v1658 = vadd.f32 %v1480, %v1608
        %v1659 = vadd.f32 %v1481, %v1611
        %v1660 = vadd.f32 %v1482, %v1616
        %v1661 = vadd.f32 %v1483, %v1619
        %v1662 = vadd.f32 %v1484, %v1624
        %v1663 = vadd.f32 %v1485, %v1627
        %v1664 = vadd.f32 %v1486, %v1632
        %v1665 = vadd.f32 %v1487, %v1635
        %v1666 = vadd.f32 %v1488, %v1640
        %v1667 = vadd.f32 %v1489, %v1643
        %v1668 = vadd.f32 %v1490, %v1648
        %v1669 = vadd.f32 %v1491, %v1651
        %v1671 = vshrl.u32 %v833, 16
        %v1673 = vshll.u32 %v833, 16
        %v1675 = vrot.slane %v1673, 1
        %v1676 = vor.u32 %v1671, %v1675
        %v1678 = vshll.u32 %v834, 16
        %v1680 = vrot.slane %v1678, 1
        %v1681 = vsel %vm853, %v1676, %v1680
        %s1683 = scalar_lea.vmem %s3, 256
        %v1684 = vld [vmem:[%s1683] sm:$0xf]
        %v1685 = vld [vmem:[%s1683 + $0x4] sm:$0xf]
        %v1686 = vld [vmem:[%s1683 + $0x8] sm:$0xf]
        %v1687 = vld [vmem:[%s1683 + $0xc] sm:$0xf]
        %v1688 = vld [vmem:[%s1683 + $0x10] sm:$0xf]
        %v1689 = vld [vmem:[%s1683 + $0x14] sm:$0xf]
        %v1690 = vld [vmem:[%s1683 + $0x18] sm:$0xf]
        %v1691 = vld [vmem:[%s1683 + $0x1c] sm:$0xf]
        %v1692 = vld [vmem:[%s1683 + $0x20] sm:$0xf]
        %v1693 = vld [vmem:[%s1683 + $0x24] sm:$0xf]
        %v1694 = vld [vmem:[%s1683 + $0x28] sm:$0xf]
        %v1695 = vld [vmem:[%s1683 + $0x2c] sm:$0xf]
        %v1696 = vld [vmem:[%s1683 + $0x30] sm:$0xf]
        %v1697 = vld [vmem:[%s1683 + $0x34] sm:$0xf]
        %v1698 = vld [vmem:[%s1683 + $0x38] sm:$0xf]
        %v1699 = vld [vmem:[%s1683 + $0x3c] sm:$0xf]
        %v1716 = vunpack.c.l.b16 %v1684
        %v1717 = vunpack.c.l.b16 %v1685
        %v1718 = vunpack.c.l.b16 %v1686
        %v1719 = vunpack.c.l.b16 %v1687
        %v1720 = vunpack.c.l.b16 %v1688
        %v1721 = vunpack.c.l.b16 %v1689
        %v1722 = vunpack.c.l.b16 %v1690
        %v1723 = vunpack.c.l.b16 %v1691
        %v1724 = vunpack.c.l.b16 %v1692
        %v1725 = vunpack.c.l.b16 %v1693
        %v1726 = vunpack.c.l.b16 %v1694
        %v1727 = vunpack.c.l.b16 %v1695
        %v1728 = vunpack.c.l.b16 %v1696
        %v1729 = vunpack.c.l.b16 %v1697
        %v1730 = vunpack.c.l.b16 %v1698
        %v1731 = vunpack.c.l.b16 %v1699
        %v1732 = vpack.c.b16 %v1717, %v1716
        %v1733 = vpack.c.b16 %v1719, %v1718
        %v1734 = vpack.c.b16 %v1721, %v1720
        %v1735 = vpack.c.b16 %v1723, %v1722
        %v1736 = vpack.c.b16 %v1725, %v1724
        %v1737 = vpack.c.b16 %v1727, %v1726
        %v1738 = vpack.c.b16 %v1729, %v1728
        %v1739 = vpack.c.b16 %v1731, %v1730
        %1748 = vmatprep.subr.bf16.mxu0 0
        %1749 = vmatpush1.bf16.msra.mxu0 %v1739
        %1750 = vmatprep.subr.bf16.mxu0 0
        %1751 = vmatpush1.bf16.msra.mxu0 %v1738
        %1752 = vmatprep.subr.bf16.mxu0 0
        %1753 = vmatpush1.bf16.msra.mxu0 %v1737
        %1754 = vmatprep.subr.bf16.mxu0 0
        %1755 = vmatpush1.bf16.msra.mxu0 %v1736
        %1756 = vmatprep.subr.bf16.mxu0 0
        %1757 = vmatpush1.bf16.msra.mxu0 %v1735
        %1758 = vmatprep.subr.bf16.mxu0 0
        %1759 = vmatpush1.bf16.msra.mxu0 %v1734
        %1760 = vmatprep.subr.bf16.mxu0 0
        %1761 = vmatpush1.bf16.msra.mxu0 %v1733
        %1762 = vmatprep.subr.bf16.mxu0 0
        %1763 = vmatpush1.bf16.msra.mxu0 %v1732
        %1764 = vmatprep.subr.bf16.mxu0 0
        %1765 = vmatpush2.bf16.msra.mxu0 0
        %1766 = vmatprep.subr.bf16.mxu0 0
        %1767 = vmatpush2.bf16.msra.mxu0 0
        %1768 = vmatprep.subr.bf16.mxu0 0
        %1769 = vmatpush2.bf16.msra.mxu0 0
        %1770 = vmatprep.subr.bf16.mxu0 0
        %1771 = vmatpush2.bf16.msra.mxu0 0
        %1772 = vmatprep.subr.bf16.mxu0 0
        %1773 = vmatpush2.bf16.msra.mxu0 0
        %1774 = vmatprep.subr.bf16.mxu0 0
        %1775 = vmatpush2.bf16.msra.mxu0 0
        %1776 = vmatprep.subr.bf16.mxu0 0
        %1777 = vmatpush2.bf16.msra.mxu0 0
        %1778 = vmatprep.subr.bf16.mxu0 0
        %1779 = vmatpush2.bf16.msra.mxu0 0
        %1780 = vmatprep.mubr.bf16.mxu0 0
        %1781 = vmatmul.mubr.bf16.gmra.mxu0 %v877
        %v1782 = vpop.f32.mrf.mxu0
        %v1783 = vadd.f32 0.0, %v1782
        %v1784 = vpop.f32.mrf.mxu0
        %v1785 = vpop.f32.mrf.mxu0
        %v1786 = vadd.f32 0.0, %v1785
        %v1787 = vpop.f32.mrf.mxu0
        %1788 = vmatprep.mubr.bf16.mxu0 0
        %1789 = vmatmul.mubr.bf16.gmra.mxu0 %v889
        %v1790 = vpop.f32.mrf.mxu0
        %v1791 = vadd.f32 0.0, %v1790
        %v1792 = vpop.f32.mrf.mxu0
        %v1793 = vpop.f32.mrf.mxu0
        %v1794 = vadd.f32 0.0, %v1793
        %v1795 = vpop.f32.mrf.mxu0
        %1796 = vmatprep.mubr.bf16.mxu0 0
        %1797 = vmatmul.mubr.bf16.gmra.mxu0 %v901
        %v1798 = vpop.f32.mrf.mxu0
        %v1799 = vadd.f32 0.0, %v1798
        %v1800 = vpop.f32.mrf.mxu0
        %v1801 = vpop.f32.mrf.mxu0
        %v1802 = vadd.f32 0.0, %v1801
        %v1803 = vpop.f32.mrf.mxu0
        %1804 = vmatprep.mubr.bf16.mxu0 0
        %1805 = vmatmul.mubr.bf16.gmra.mxu0 %v913
        %v1806 = vpop.f32.mrf.mxu0
        %v1807 = vadd.f32 0.0, %v1806
        %v1808 = vpop.f32.mrf.mxu0
        %v1809 = vpop.f32.mrf.mxu0
        %v1810 = vadd.f32 0.0, %v1809
        %v1811 = vpop.f32.mrf.mxu0
        %1812 = vmatprep.mubr.bf16.mxu0 0
        %1813 = vmatmul.mubr.bf16.gmra.mxu0 %v925
        %v1814 = vpop.f32.mrf.mxu0
        %v1815 = vadd.f32 0.0, %v1814
        %v1816 = vpop.f32.mrf.mxu0
        %v1817 = vpop.f32.mrf.mxu0
        %v1818 = vadd.f32 0.0, %v1817
        %v1819 = vpop.f32.mrf.mxu0
        %1820 = vmatprep.mubr.bf16.mxu0 0
        %1821 = vmatmul.mubr.bf16.gmra.mxu0 %v937
        %v1822 = vpop.f32.mrf.mxu0
        %v1823 = vadd.f32 0.0, %v1822
        %v1824 = vpop.f32.mrf.mxu0
        %v1825 = vpop.f32.mrf.mxu0
        %v1826 = vadd.f32 0.0, %v1825
        %v1827 = vpop.f32.mrf.mxu0
        %1828 = vmatprep.mubr.bf16.mxu0 0
        %1829 = vmatmul.mubr.bf16.gmra.mxu0 %v949
        %v1830 = vpop.f32.mrf.mxu0
        %v1831 = vadd.f32 0.0, %v1830
        %v1832 = vpop.f32.mrf.mxu0
        %v1833 = vpop.f32.mrf.mxu0
        %v1834 = vadd.f32 0.0, %v1833
        %v1835 = vpop.f32.mrf.mxu0
        %1836 = vmatprep.mubr.bf16.mxu0 0
        %1837 = vmatmul.mubr.bf16.gmra.mxu0 %v1681
        %v1838 = vpop.f32.mrf.mxu0
        %v1839 = vadd.f32 0.0, %v1838
        %v1840 = vpop.f32.mrf.mxu0
        %v1841 = vpop.f32.mrf.mxu0
        %v1842 = vadd.f32 0.0, %v1841
        %v1843 = vpop.f32.mrf.mxu0
        %1844 = vdwg.mxu0
        %v1845 = vadd.f32 %v1654, %v1783
        %v1846 = vadd.f32 %v1655, %v1786
        %v1847 = vadd.f32 %v1656, %v1791
        %v1848 = vadd.f32 %v1657, %v1794
        %v1849 = vadd.f32 %v1658, %v1799
        %v1850 = vadd.f32 %v1659, %v1802
        %v1851 = vadd.f32 %v1660, %v1807
        %v1852 = vadd.f32 %v1661, %v1810
        %v1853 = vadd.f32 %v1662, %v1815
        %v1854 = vadd.f32 %v1663, %v1818
        %v1855 = vadd.f32 %v1664, %v1823
        %v1856 = vadd.f32 %v1665, %v1826
        %v1857 = vadd.f32 %v1666, %v1831
        %v1858 = vadd.f32 %v1667, %v1834
        %v1859 = vadd.f32 %v1668, %v1839
        %v1860 = vadd.f32 %v1669, %v1842
        %v1863 = vrot.slane %v833, 1
        %v1864 = vrot.slane %v834, 1
        %v1865 = vsel %vm1281, %v1863, %v1864
        %s1867 = scalar_lea.vmem %s3, 320
        %v1868 = vld [vmem:[%s1867] sm:$0xf]
        %v1869 = vld [vmem:[%s1867 + $0x4] sm:$0xf]
        %v1870 = vld [vmem:[%s1867 + $0x8] sm:$0xf]
        %v1871 = vld [vmem:[%s1867 + $0xc] sm:$0xf]
        %v1872 = vld [vmem:[%s1867 + $0x10] sm:$0xf]
        %v1873 = vld [vmem:[%s1867 + $0x14] sm:$0xf]
        %v1874 = vld [vmem:[%s1867 + $0x18] sm:$0xf]
        %v1875 = vld [vmem:[%s1867 + $0x1c] sm:$0xf]
        %v1876 = vld [vmem:[%s1867 + $0x20] sm:$0xf]
        %v1877 = vld [vmem:[%s1867 + $0x24] sm:$0xf]
        %v1878 = vld [vmem:[%s1867 + $0x28] sm:$0xf]
        %v1879 = vld [vmem:[%s1867 + $0x2c] sm:$0xf]
        %v1880 = vld [vmem:[%s1867 + $0x30] sm:$0xf]
        %v1881 = vld [vmem:[%s1867 + $0x34] sm:$0xf]
        %v1882 = vld [vmem:[%s1867 + $0x38] sm:$0xf]
        %v1883 = vld [vmem:[%s1867 + $0x3c] sm:$0xf]
        %v1900 = vunpack.c.l.b16 %v1868
        %v1901 = vunpack.c.l.b16 %v1869
        %v1902 = vunpack.c.l.b16 %v1870
        %v1903 = vunpack.c.l.b16 %v1871
        %v1904 = vunpack.c.l.b16 %v1872
        %v1905 = vunpack.c.l.b16 %v1873
        %v1906 = vunpack.c.l.b16 %v1874
        %v1907 = vunpack.c.l.b16 %v1875
        %v1908 = vunpack.c.l.b16 %v1876
        %v1909 = vunpack.c.l.b16 %v1877
        %v1910 = vunpack.c.l.b16 %v1878
        %v1911 = vunpack.c.l.b16 %v1879
        %v1912 = vunpack.c.l.b16 %v1880
        %v1913 = vunpack.c.l.b16 %v1881
        %v1914 = vunpack.c.l.b16 %v1882
        %v1915 = vunpack.c.l.b16 %v1883
        %v1916 = vpack.c.b16 %v1901, %v1900
        %v1917 = vpack.c.b16 %v1903, %v1902
        %v1918 = vpack.c.b16 %v1905, %v1904
        %v1919 = vpack.c.b16 %v1907, %v1906
        %v1920 = vpack.c.b16 %v1909, %v1908
        %v1921 = vpack.c.b16 %v1911, %v1910
        %v1922 = vpack.c.b16 %v1913, %v1912
        %v1923 = vpack.c.b16 %v1915, %v1914
        %1932 = vmatprep.subr.bf16.mxu0 0
        %1933 = vmatpush1.bf16.msra.mxu0 %v1923
        %1934 = vmatprep.subr.bf16.mxu0 0
        %1935 = vmatpush1.bf16.msra.mxu0 %v1922
        %1936 = vmatprep.subr.bf16.mxu0 0
        %1937 = vmatpush1.bf16.msra.mxu0 %v1921
        %1938 = vmatprep.subr.bf16.mxu0 0
        %1939 = vmatpush1.bf16.msra.mxu0 %v1920
        %1940 = vmatprep.subr.bf16.mxu0 0
        %1941 = vmatpush1.bf16.msra.mxu0 %v1919
        %1942 = vmatprep.subr.bf16.mxu0 0
        %1943 = vmatpush1.bf16.msra.mxu0 %v1918
        %1944 = vmatprep.subr.bf16.mxu0 0
        %1945 = vmatpush1.bf16.msra.mxu0 %v1917
        %1946 = vmatprep.subr.bf16.mxu0 0
        %1947 = vmatpush1.bf16.msra.mxu0 %v1916
        %1948 = vmatprep.subr.bf16.mxu0 0
        %1949 = vmatpush2.bf16.msra.mxu0 0
        %1950 = vmatprep.subr.bf16.mxu0 0
        %1951 = vmatpush2.bf16.msra.mxu0 0
        %1952 = vmatprep.subr.bf16.mxu0 0
        %1953 = vmatpush2.bf16.msra.mxu0 0
        %1954 = vmatprep.subr.bf16.mxu0 0
        %1955 = vmatpush2.bf16.msra.mxu0 0
        %1956 = vmatprep.subr.bf16.mxu0 0
        %1957 = vmatpush2.bf16.msra.mxu0 0
        %1958 = vmatprep.subr.bf16.mxu0 0
        %1959 = vmatpush2.bf16.msra.mxu0 0
        %1960 = vmatprep.subr.bf16.mxu0 0
        %1961 = vmatpush2.bf16.msra.mxu0 0
        %1962 = vmatprep.subr.bf16.mxu0 0
        %1963 = vmatpush2.bf16.msra.mxu0 0
        %1964 = vmatprep.mubr.bf16.mxu0 0
        %1965 = vmatmul.mubr.bf16.gmra.mxu0 %v1287
        %v1966 = vpop.f32.mrf.mxu0
        %v1967 = vadd.f32 0.0, %v1966
        %v1968 = vpop.f32.mrf.mxu0
        %v1969 = vpop.f32.mrf.mxu0
        %v1970 = vadd.f32 0.0, %v1969
        %v1971 = vpop.f32.mrf.mxu0
        %1972 = vmatprep.mubr.bf16.mxu0 0
        %1973 = vmatmul.mubr.bf16.gmra.mxu0 %v1290
        %v1974 = vpop.f32.mrf.mxu0
        %v1975 = vadd.f32 0.0, %v1974
        %v1976 = vpop.f32.mrf.mxu0
        %v1977 = vpop.f32.mrf.mxu0
        %v1978 = vadd.f32 0.0, %v1977
        %v1979 = vpop.f32.mrf.mxu0
        %1980 = vmatprep.mubr.bf16.mxu0 0
        %1981 = vmatmul.mubr.bf16.gmra.mxu0 %v1293
        %v1982 = vpop.f32.mrf.mxu0
        %v1983 = vadd.f32 0.0, %v1982
        %v1984 = vpop.f32.mrf.mxu0
        %v1985 = vpop.f32.mrf.mxu0
        %v1986 = vadd.f32 0.0, %v1985
        %v1987 = vpop.f32.mrf.mxu0
        %1988 = vmatprep.mubr.bf16.mxu0 0
        %1989 = vmatmul.mubr.bf16.gmra.mxu0 %v1296
        %v1990 = vpop.f32.mrf.mxu0
        %v1991 = vadd.f32 0.0, %v1990
        %v1992 = vpop.f32.mrf.mxu0
        %v1993 = vpop.f32.mrf.mxu0
        %v1994 = vadd.f32 0.0, %v1993
        %v1995 = vpop.f32.mrf.mxu0
        %1996 = vmatprep.mubr.bf16.mxu0 0
        %1997 = vmatmul.mubr.bf16.gmra.mxu0 %v1299
        %v1998 = vpop.f32.mrf.mxu0
        %v1999 = vadd.f32 0.0, %v1998
        %v2000 = vpop.f32.mrf.mxu0
        %v2001 = vpop.f32.mrf.mxu0
        %v2002 = vadd.f32 0.0, %v2001
        %v2003 = vpop.f32.mrf.mxu0
        %2004 = vmatprep.mubr.bf16.mxu0 0
        %2005 = vmatmul.mubr.bf16.gmra.mxu0 %v1302
        %v2006 = vpop.f32.mrf.mxu0
        %v2007 = vadd.f32 0.0, %v2006
        %v2008 = vpop.f32.mrf.mxu0
        %v2009 = vpop.f32.mrf.mxu0
        %v2010 = vadd.f32 0.0, %v2009
        %v2011 = vpop.f32.mrf.mxu0
        %2012 = vmatprep.mubr.bf16.mxu0 0
        %2013 = vmatmul.mubr.bf16.gmra.mxu0 %v1305
        %v2014 = vpop.f32.mrf.mxu0
        %v2015 = vadd.f32 0.0, %v2014
        %v2016 = vpop.f32.mrf.mxu0
        %v2017 = vpop.f32.mrf.mxu0
        %v2018 = vadd.f32 0.0, %v2017
        %v2019 = vpop.f32.mrf.mxu0
        %2020 = vmatprep.mubr.bf16.mxu0 0
        %2021 = vmatmul.mubr.bf16.gmra.mxu0 %v1865
        %v2022 = vpop.f32.mrf.mxu0
        %v2023 = vadd.f32 0.0, %v2022
        %v2024 = vpop.f32.mrf.mxu0
        %v2025 = vpop.f32.mrf.mxu0
        %v2026 = vadd.f32 0.0, %v2025
        %v2027 = vpop.f32.mrf.mxu0
        %2028 = vdwg.mxu0
        %v2029 = vadd.f32 %v1845, %v1967
        %v2030 = vadd.f32 %v1846, %v1970
        %v2031 = vadd.f32 %v1847, %v1975
        %v2032 = vadd.f32 %v1848, %v1978
        %v2033 = vadd.f32 %v1849, %v1983
        %v2034 = vadd.f32 %v1850, %v1986
        %v2035 = vadd.f32 %v1851, %v1991
        %v2036 = vadd.f32 %v1852, %v1994
        %v2037 = vadd.f32 %v1853, %v1999
        %v2038 = vadd.f32 %v1854, %v2002
        %v2039 = vadd.f32 %v1855, %v2007
        %v2040 = vadd.f32 %v1856, %v2010
        %v2041 = vadd.f32 %v1857, %v2015
        %v2042 = vadd.f32 %v1858, %v2018
        %v2043 = vadd.f32 %v1859, %v2023
        %v2044 = vadd.f32 %v1860, %v2026
        %s2045 = scalar_lea.vmem %s3, 384
        %v2046 = vld [vmem:[%s2045] sm:$0xf]
        %v2047 = vld [vmem:[%s2045 + $0x4] sm:$0xf]
        %v2048 = vld [vmem:[%s2045 + $0x8] sm:$0xf]
        %v2049 = vld [vmem:[%s2045 + $0xc] sm:$0xf]
        %v2050 = vld [vmem:[%s2045 + $0x10] sm:$0xf]
        %v2051 = vld [vmem:[%s2045 + $0x14] sm:$0xf]
        %v2052 = vld [vmem:[%s2045 + $0x18] sm:$0xf]
        %v2053 = vld [vmem:[%s2045 + $0x1c] sm:$0xf]
        %v2054 = vld [vmem:[%s2045 + $0x20] sm:$0xf]
        %v2055 = vld [vmem:[%s2045 + $0x24] sm:$0xf]
        %v2056 = vld [vmem:[%s2045 + $0x28] sm:$0xf]
        %v2057 = vld [vmem:[%s2045 + $0x2c] sm:$0xf]
        %v2058 = vld [vmem:[%s2045 + $0x30] sm:$0xf]
        %v2059 = vld [vmem:[%s2045 + $0x34] sm:$0xf]
        %v2060 = vld [vmem:[%s2045 + $0x38] sm:$0xf]
        %v2061 = vld [vmem:[%s2045 + $0x3c] sm:$0xf]
        %v2078 = vunpack.c.l.b16 %v2046
        %v2079 = vunpack.c.l.b16 %v2047
        %v2080 = vunpack.c.l.b16 %v2048
        %v2081 = vunpack.c.l.b16 %v2049
        %v2082 = vunpack.c.l.b16 %v2050
        %v2083 = vunpack.c.l.b16 %v2051
        %v2084 = vunpack.c.l.b16 %v2052
        %v2085 = vunpack.c.l.b16 %v2053
        %v2086 = vunpack.c.l.b16 %v2054
        %v2087 = vunpack.c.l.b16 %v2055
        %v2088 = vunpack.c.l.b16 %v2056
        %v2089 = vunpack.c.l.b16 %v2057
        %v2090 = vunpack.c.l.b16 %v2058
        %v2091 = vunpack.c.l.b16 %v2059
        %v2092 = vunpack.c.l.b16 %v2060
        %v2093 = vunpack.c.l.b16 %v2061
        %v2094 = vpack.c.b16 %v2079, %v2078
        %v2095 = vpack.c.b16 %v2081, %v2080
        %v2096 = vpack.c.b16 %v2083, %v2082
        %v2097 = vpack.c.b16 %v2085, %v2084
        %v2098 = vpack.c.b16 %v2087, %v2086
        %v2099 = vpack.c.b16 %v2089, %v2088
        %v2100 = vpack.c.b16 %v2091, %v2090
        %v2101 = vpack.c.b16 %v2093, %v2092
        %2110 = vmatprep.subr.bf16.mxu0 0
        %2111 = vmatpush1.bf16.msra.mxu0 %v2101
        %2112 = vmatprep.subr.bf16.mxu0 0
        %2113 = vmatpush1.bf16.msra.mxu0 %v2100
        %2114 = vmatprep.subr.bf16.mxu0 0
        %2115 = vmatpush1.bf16.msra.mxu0 %v2099
        %2116 = vmatprep.subr.bf16.mxu0 0
        %2117 = vmatpush1.bf16.msra.mxu0 %v2098
        %2118 = vmatprep.subr.bf16.mxu0 0
        %2119 = vmatpush1.bf16.msra.mxu0 %v2097
        %2120 = vmatprep.subr.bf16.mxu0 0
        %2121 = vmatpush1.bf16.msra.mxu0 %v2096
        %2122 = vmatprep.subr.bf16.mxu0 0
        %2123 = vmatpush1.bf16.msra.mxu0 %v2095
        %2124 = vmatprep.subr.bf16.mxu0 0
        %2125 = vmatpush1.bf16.msra.mxu0 %v2094
        %2126 = vmatprep.subr.bf16.mxu0 0
        %2127 = vmatpush2.bf16.msra.mxu0 0
        %2128 = vmatprep.subr.bf16.mxu0 0
        %2129 = vmatpush2.bf16.msra.mxu0 0
        %2130 = vmatprep.subr.bf16.mxu0 0
        %2131 = vmatpush2.bf16.msra.mxu0 0
        %2132 = vmatprep.subr.bf16.mxu0 0
        %2133 = vmatpush2.bf16.msra.mxu0 0
        %2134 = vmatprep.subr.bf16.mxu0 0
        %2135 = vmatpush2.bf16.msra.mxu0 0
        %2136 = vmatprep.subr.bf16.mxu0 0
        %2137 = vmatpush2.bf16.msra.mxu0 0
        %2138 = vmatprep.subr.bf16.mxu0 0
        %2139 = vmatpush2.bf16.msra.mxu0 0
        %2140 = vmatprep.subr.bf16.mxu0 0
        %2141 = vmatpush2.bf16.msra.mxu0 0
        %2142 = vmatprep.mubr.bf16.mxu0 0
        %2143 = vmatmul.mubr.bf16.gmra.mxu0 %v821
        %v2144 = vpop.f32.mrf.mxu0
        %v2145 = vadd.f32 0.0, %v2144
        %v2146 = vpop.f32.mrf.mxu0
        %v2147 = vpop.f32.mrf.mxu0
        %v2148 = vadd.f32 0.0, %v2147
        %v2149 = vpop.f32.mrf.mxu0
        %2150 = vmatprep.mubr.bf16.mxu0 0
        %2151 = vmatmul.mubr.bf16.gmra.mxu0 %v823
        %v2152 = vpop.f32.mrf.mxu0
        %v2153 = vadd.f32 0.0, %v2152
        %v2154 = vpop.f32.mrf.mxu0
        %v2155 = vpop.f32.mrf.mxu0
        %v2156 = vadd.f32 0.0, %v2155
        %v2157 = vpop.f32.mrf.mxu0
        %2158 = vmatprep.mubr.bf16.mxu0 0
        %2159 = vmatmul.mubr.bf16.gmra.mxu0 %v825
        %v2160 = vpop.f32.mrf.mxu0
        %v2161 = vadd.f32 0.0, %v2160
        %v2162 = vpop.f32.mrf.mxu0
        %v2163 = vpop.f32.mrf.mxu0
        %v2164 = vadd.f32 0.0, %v2163
        %v2165 = vpop.f32.mrf.mxu0
        %2166 = vmatprep.mubr.bf16.mxu0 0
        %2167 = vmatmul.mubr.bf16.gmra.mxu0 %v827
        %v2168 = vpop.f32.mrf.mxu0
        %v2169 = vadd.f32 0.0, %v2168
        %v2170 = vpop.f32.mrf.mxu0
        %v2171 = vpop.f32.mrf.mxu0
        %v2172 = vadd.f32 0.0, %v2171
        %v2173 = vpop.f32.mrf.mxu0
        %2174 = vmatprep.mubr.bf16.mxu0 0
        %2175 = vmatmul.mubr.bf16.gmra.mxu0 %v829
        %v2176 = vpop.f32.mrf.mxu0
        %v2177 = vadd.f32 0.0, %v2176
        %v2178 = vpop.f32.mrf.mxu0
        %v2179 = vpop.f32.mrf.mxu0
        %v2180 = vadd.f32 0.0, %v2179
        %v2181 = vpop.f32.mrf.mxu0
        %2182 = vmatprep.mubr.bf16.mxu0 0
        %2183 = vmatmul.mubr.bf16.gmra.mxu0 %v831
        %v2184 = vpop.f32.mrf.mxu0
        %v2185 = vadd.f32 0.0, %v2184
        %v2186 = vpop.f32.mrf.mxu0
        %v2187 = vpop.f32.mrf.mxu0
        %v2188 = vadd.f32 0.0, %v2187
        %v2189 = vpop.f32.mrf.mxu0
        %2190 = vmatprep.mubr.bf16.mxu0 0
        %2191 = vmatmul.mubr.bf16.gmra.mxu0 %v833
        %v2192 = vpop.f32.mrf.mxu0
        %v2193 = vadd.f32 0.0, %v2192
        %v2194 = vpop.f32.mrf.mxu0
        %v2195 = vpop.f32.mrf.mxu0
        %v2196 = vadd.f32 0.0, %v2195
        %v2197 = vpop.f32.mrf.mxu0
        %2198 = vmatprep.mubr.bf16.mxu0 0
        %2199 = vmatmul.mubr.bf16.gmra.mxu0 %v835
        %v2200 = vpop.f32.mrf.mxu0
        %v2201 = vadd.f32 0.0, %v2200
        %v2202 = vpop.f32.mrf.mxu0
        %v2203 = vpop.f32.mrf.mxu0
        %v2204 = vadd.f32 0.0, %v2203
        %v2205 = vpop.f32.mrf.mxu0
        %2206 = vdwg.mxu0
        %v2207 = vadd.f32 %v2029, %v2145
        %v2208 = vadd.f32 %v2030, %v2148
        %v2209 = vadd.f32 %v2031, %v2153
        %v2210 = vadd.f32 %v2032, %v2156
        %v2211 = vadd.f32 %v2033, %v2161
        %v2212 = vadd.f32 %v2034, %v2164
        %v2213 = vadd.f32 %v2035, %v2169
        %v2214 = vadd.f32 %v2036, %v2172
        %v2215 = vadd.f32 %v2037, %v2177
        %v2216 = vadd.f32 %v2038, %v2180
        %v2217 = vadd.f32 %v2039, %v2185
        %v2218 = vadd.f32 %v2040, %v2188
        %v2219 = vadd.f32 %v2041, %v2193
        %v2220 = vadd.f32 %v2042, %v2196
        %v2221 = vadd.f32 %v2043, %v2201
        %v2222 = vadd.f32 %v2044, %v2204
        %v2224 = vshrl.u32 %v835, 16
        %v2226 = vshll.u32 %v835, 16
        %v2228 = vrot.slane %v2226, 1
        %v2229 = vor.u32 %v2224, %v2228
        %v2231 = vshll.u32 %v836, 16
        %v2233 = vrot.slane %v2231, 1
        %v2234 = vsel %vm853, %v2229, %v2233
        %s2236 = scalar_lea.vmem %s3, 448
        %v2237 = vld [vmem:[%s2236] sm:$0xf]
        %v2238 = vld [vmem:[%s2236 + $0x4] sm:$0xf]
        %v2239 = vld [vmem:[%s2236 + $0x8] sm:$0xf]
        %v2240 = vld [vmem:[%s2236 + $0xc] sm:$0xf]
        %v2241 = vld [vmem:[%s2236 + $0x10] sm:$0xf]
        %v2242 = vld [vmem:[%s2236 + $0x14] sm:$0xf]
        %v2243 = vld [vmem:[%s2236 + $0x18] sm:$0xf]
        %v2244 = vld [vmem:[%s2236 + $0x1c] sm:$0xf]
        %v2245 = vld [vmem:[%s2236 + $0x20] sm:$0xf]
        %v2246 = vld [vmem:[%s2236 + $0x24] sm:$0xf]
        %v2247 = vld [vmem:[%s2236 + $0x28] sm:$0xf]
        %v2248 = vld [vmem:[%s2236 + $0x2c] sm:$0xf]
        %v2249 = vld [vmem:[%s2236 + $0x30] sm:$0xf]
        %v2250 = vld [vmem:[%s2236 + $0x34] sm:$0xf]
        %v2251 = vld [vmem:[%s2236 + $0x38] sm:$0xf]
        %v2252 = vld [vmem:[%s2236 + $0x3c] sm:$0xf]
        %v2269 = vunpack.c.l.b16 %v2237
        %v2270 = vunpack.c.l.b16 %v2238
        %v2271 = vunpack.c.l.b16 %v2239
        %v2272 = vunpack.c.l.b16 %v2240
        %v2273 = vunpack.c.l.b16 %v2241
        %v2274 = vunpack.c.l.b16 %v2242
        %v2275 = vunpack.c.l.b16 %v2243
        %v2276 = vunpack.c.l.b16 %v2244
        %v2277 = vunpack.c.l.b16 %v2245
        %v2278 = vunpack.c.l.b16 %v2246
        %v2279 = vunpack.c.l.b16 %v2247
        %v2280 = vunpack.c.l.b16 %v2248
        %v2281 = vunpack.c.l.b16 %v2249
        %v2282 = vunpack.c.l.b16 %v2250
        %v2283 = vunpack.c.l.b16 %v2251
        %v2284 = vunpack.c.l.b16 %v2252
        %v2285 = vpack.c.b16 %v2270, %v2269
        %v2286 = vpack.c.b16 %v2272, %v2271
        %v2287 = vpack.c.b16 %v2274, %v2273
        %v2288 = vpack.c.b16 %v2276, %v2275
        %v2289 = vpack.c.b16 %v2278, %v2277
        %v2290 = vpack.c.b16 %v2280, %v2279
        %v2291 = vpack.c.b16 %v2282, %v2281
        %v2292 = vpack.c.b16 %v2284, %v2283
        %2301 = vmatprep.subr.bf16.mxu0 0
        %2302 = vmatpush1.bf16.msra.mxu0 %v2292
        %2303 = vmatprep.subr.bf16.mxu0 0
        %2304 = vmatpush1.bf16.msra.mxu0 %v2291
        %2305 = vmatprep.subr.bf16.mxu0 0
        %2306 = vmatpush1.bf16.msra.mxu0 %v2290
        %2307 = vmatprep.subr.bf16.mxu0 0
        %2308 = vmatpush1.bf16.msra.mxu0 %v2289
        %2309 = vmatprep.subr.bf16.mxu0 0
        %2310 = vmatpush1.bf16.msra.mxu0 %v2288
        %2311 = vmatprep.subr.bf16.mxu0 0
        %2312 = vmatpush1.bf16.msra.mxu0 %v2287
        %2313 = vmatprep.subr.bf16.mxu0 0
        %2314 = vmatpush1.bf16.msra.mxu0 %v2286
        %2315 = vmatprep.subr.bf16.mxu0 0
        %2316 = vmatpush1.bf16.msra.mxu0 %v2285
        %2317 = vmatprep.subr.bf16.mxu0 0
        %2318 = vmatpush2.bf16.msra.mxu0 0
        %2319 = vmatprep.subr.bf16.mxu0 0
        %2320 = vmatpush2.bf16.msra.mxu0 0
        %2321 = vmatprep.subr.bf16.mxu0 0
        %2322 = vmatpush2.bf16.msra.mxu0 0
        %2323 = vmatprep.subr.bf16.mxu0 0
        %2324 = vmatpush2.bf16.msra.mxu0 0
        %2325 = vmatprep.subr.bf16.mxu0 0
        %2326 = vmatpush2.bf16.msra.mxu0 0
        %2327 = vmatprep.subr.bf16.mxu0 0
        %2328 = vmatpush2.bf16.msra.mxu0 0
        %2329 = vmatprep.subr.bf16.mxu0 0
        %2330 = vmatpush2.bf16.msra.mxu0 0
        %2331 = vmatprep.subr.bf16.mxu0 0
        %2332 = vmatpush2.bf16.msra.mxu0 0
        %2333 = vmatprep.mubr.bf16.mxu0 0
        %2334 = vmatmul.mubr.bf16.gmra.mxu0 %v889
        %v2335 = vpop.f32.mrf.mxu0
        %v2336 = vadd.f32 0.0, %v2335
        %v2337 = vpop.f32.mrf.mxu0
        %v2338 = vpop.f32.mrf.mxu0
        %v2339 = vadd.f32 0.0, %v2338
        %v2340 = vpop.f32.mrf.mxu0
        %2341 = vmatprep.mubr.bf16.mxu0 0
        %2342 = vmatmul.mubr.bf16.gmra.mxu0 %v901
        %v2343 = vpop.f32.mrf.mxu0
        %v2344 = vadd.f32 0.0, %v2343
        %v2345 = vpop.f32.mrf.mxu0
        %v2346 = vpop.f32.mrf.mxu0
        %v2347 = vadd.f32 0.0, %v2346
        %v2348 = vpop.f32.mrf.mxu0
        %2349 = vmatprep.mubr.bf16.mxu0 0
        %2350 = vmatmul.mubr.bf16.gmra.mxu0 %v913
        %v2351 = vpop.f32.mrf.mxu0
        %v2352 = vadd.f32 0.0, %v2351
        %v2353 = vpop.f32.mrf.mxu0
        %v2354 = vpop.f32.mrf.mxu0
        %v2355 = vadd.f32 0.0, %v2354
        %v2356 = vpop.f32.mrf.mxu0
        %2357 = vmatprep.mubr.bf16.mxu0 0
        %2358 = vmatmul.mubr.bf16.gmra.mxu0 %v925
        %v2359 = vpop.f32.mrf.mxu0
        %v2360 = vadd.f32 0.0, %v2359
        %v2361 = vpop.f32.mrf.mxu0
        %v2362 = vpop.f32.mrf.mxu0
        %v2363 = vadd.f32 0.0, %v2362
        %v2364 = vpop.f32.mrf.mxu0
        %2365 = vmatprep.mubr.bf16.mxu0 0
        %2366 = vmatmul.mubr.bf16.gmra.mxu0 %v937
        %v2367 = vpop.f32.mrf.mxu0
        %v2368 = vadd.f32 0.0, %v2367
        %v2369 = vpop.f32.mrf.mxu0
        %v2370 = vpop.f32.mrf.mxu0
        %v2371 = vadd.f32 0.0, %v2370
        %v2372 = vpop.f32.mrf.mxu0
        %2373 = vmatprep.mubr.bf16.mxu0 0
        %2374 = vmatmul.mubr.bf16.gmra.mxu0 %v949
        %v2375 = vpop.f32.mrf.mxu0
        %v2376 = vadd.f32 0.0, %v2375
        %v2377 = vpop.f32.mrf.mxu0
        %v2378 = vpop.f32.mrf.mxu0
        %v2379 = vadd.f32 0.0, %v2378
        %v2380 = vpop.f32.mrf.mxu0
        %2381 = vmatprep.mubr.bf16.mxu0 0
        %2382 = vmatmul.mubr.bf16.gmra.mxu0 %v1681
        %v2383 = vpop.f32.mrf.mxu0
        %v2384 = vadd.f32 0.0, %v2383
        %v2385 = vpop.f32.mrf.mxu0
        %v2386 = vpop.f32.mrf.mxu0
        %v2387 = vadd.f32 0.0, %v2386
        %v2388 = vpop.f32.mrf.mxu0
        %2389 = vmatprep.mubr.bf16.mxu0 0
        %2390 = vmatmul.mubr.bf16.gmra.mxu0 %v2234
        %v2391 = vpop.f32.mrf.mxu0
        %v2392 = vadd.f32 0.0, %v2391
        %v2393 = vpop.f32.mrf.mxu0
        %v2394 = vpop.f32.mrf.mxu0
        %v2395 = vadd.f32 0.0, %v2394
        %v2396 = vpop.f32.mrf.mxu0
        %2397 = vdwg.mxu0
        %v2398 = vadd.f32 %v2207, %v2336
        %v2399 = vadd.f32 %v2208, %v2339
        %v2400 = vadd.f32 %v2209, %v2344
        %v2401 = vadd.f32 %v2210, %v2347
        %v2402 = vadd.f32 %v2211, %v2352
        %v2403 = vadd.f32 %v2212, %v2355
        %v2404 = vadd.f32 %v2213, %v2360
        %v2405 = vadd.f32 %v2214, %v2363
        %v2406 = vadd.f32 %v2215, %v2368
        %v2407 = vadd.f32 %v2216, %v2371
        %v2408 = vadd.f32 %v2217, %v2376
        %v2409 = vadd.f32 %v2218, %v2379
        %v2410 = vadd.f32 %v2219, %v2384
        %v2411 = vadd.f32 %v2220, %v2387
        %v2412 = vadd.f32 %v2221, %v2392
        %v2413 = vadd.f32 %v2222, %v2395
        %v2416 = vrot.slane %v835, 1
        %v2417 = vrot.slane %v836, 1
        %v2418 = vsel %vm1281, %v2416, %v2417
        %s2420 = scalar_lea.vmem %s3, 512
        %v2421 = vld [vmem:[%s2420] sm:$0xf]
        %v2422 = vld [vmem:[%s2420 + $0x4] sm:$0xf]
        %v2423 = vld [vmem:[%s2420 + $0x8] sm:$0xf]
        %v2424 = vld [vmem:[%s2420 + $0xc] sm:$0xf]
        %v2425 = vld [vmem:[%s2420 + $0x10] sm:$0xf]
        %v2426 = vld [vmem:[%s2420 + $0x14] sm:$0xf]
        %v2427 = vld [vmem:[%s2420 + $0x18] sm:$0xf]
        %v2428 = vld [vmem:[%s2420 + $0x1c] sm:$0xf]
        %v2429 = vld [vmem:[%s2420 + $0x20] sm:$0xf]
        %v2430 = vld [vmem:[%s2420 + $0x24] sm:$0xf]
        %v2431 = vld [vmem:[%s2420 + $0x28] sm:$0xf]
        %v2432 = vld [vmem:[%s2420 + $0x2c] sm:$0xf]
        %v2433 = vld [vmem:[%s2420 + $0x30] sm:$0xf]
        %v2434 = vld [vmem:[%s2420 + $0x34] sm:$0xf]
        %v2435 = vld [vmem:[%s2420 + $0x38] sm:$0xf]
        %v2436 = vld [vmem:[%s2420 + $0x3c] sm:$0xf]
        %v2453 = vunpack.c.l.b16 %v2421
        %v2454 = vunpack.c.l.b16 %v2422
        %v2455 = vunpack.c.l.b16 %v2423
        %v2456 = vunpack.c.l.b16 %v2424
        %v2457 = vunpack.c.l.b16 %v2425
        %v2458 = vunpack.c.l.b16 %v2426
        %v2459 = vunpack.c.l.b16 %v2427
        %v2460 = vunpack.c.l.b16 %v2428
        %v2461 = vunpack.c.l.b16 %v2429
        %v2462 = vunpack.c.l.b16 %v2430
        %v2463 = vunpack.c.l.b16 %v2431
        %v2464 = vunpack.c.l.b16 %v2432
        %v2465 = vunpack.c.l.b16 %v2433
        %v2466 = vunpack.c.l.b16 %v2434
        %v2467 = vunpack.c.l.b16 %v2435
        %v2468 = vunpack.c.l.b16 %v2436
        %v2469 = vpack.c.b16 %v2454, %v2453
        %v2470 = vpack.c.b16 %v2456, %v2455
        %v2471 = vpack.c.b16 %v2458, %v2457
        %v2472 = vpack.c.b16 %v2460, %v2459
        %v2473 = vpack.c.b16 %v2462, %v2461
        %v2474 = vpack.c.b16 %v2464, %v2463
        %v2475 = vpack.c.b16 %v2466, %v2465
        %v2476 = vpack.c.b16 %v2468, %v2467
        %2485 = vmatprep.subr.bf16.mxu0 0
        %2486 = vmatpush1.bf16.msra.mxu0 %v2476
        %2487 = vmatprep.subr.bf16.mxu0 0
        %2488 = vmatpush1.bf16.msra.mxu0 %v2475
        %2489 = vmatprep.subr.bf16.mxu0 0
        %2490 = vmatpush1.bf16.msra.mxu0 %v2474
        %2491 = vmatprep.subr.bf16.mxu0 0
        %2492 = vmatpush1.bf16.msra.mxu0 %v2473
        %2493 = vmatprep.subr.bf16.mxu0 0
        %2494 = vmatpush1.bf16.msra.mxu0 %v2472
        %2495 = vmatprep.subr.bf16.mxu0 0
        %2496 = vmatpush1.bf16.msra.mxu0 %v2471
        %2497 = vmatprep.subr.bf16.mxu0 0
        %2498 = vmatpush1.bf16.msra.mxu0 %v2470
        %2499 = vmatprep.subr.bf16.mxu0 0
        %2500 = vmatpush1.bf16.msra.mxu0 %v2469
        %2501 = vmatprep.subr.bf16.mxu0 0
        %2502 = vmatpush2.bf16.msra.mxu0 0
        %2503 = vmatprep.subr.bf16.mxu0 0
        %2504 = vmatpush2.bf16.msra.mxu0 0
        %2505 = vmatprep.subr.bf16.mxu0 0
        %2506 = vmatpush2.bf16.msra.mxu0 0
        %2507 = vmatprep.subr.bf16.mxu0 0
        %2508 = vmatpush2.bf16.msra.mxu0 0
        %2509 = vmatprep.subr.bf16.mxu0 0
        %2510 = vmatpush2.bf16.msra.mxu0 0
        %2511 = vmatprep.subr.bf16.mxu0 0
        %2512 = vmatpush2.bf16.msra.mxu0 0
        %2513 = vmatprep.subr.bf16.mxu0 0
        %2514 = vmatpush2.bf16.msra.mxu0 0
        %2515 = vmatprep.subr.bf16.mxu0 0
        %2516 = vmatpush2.bf16.msra.mxu0 0
        %2517 = vmatprep.mubr.bf16.mxu0 0
        %2518 = vmatmul.mubr.bf16.gmra.mxu0 %v1290
        %v2519 = vpop.f32.mrf.mxu0
        %v2520 = vadd.f32 0.0, %v2519
        %v2521 = vpop.f32.mrf.mxu0
        %v2522 = vpop.f32.mrf.mxu0
        %v2523 = vadd.f32 0.0, %v2522
        %v2524 = vpop.f32.mrf.mxu0
        %2525 = vmatprep.mubr.bf16.mxu0 0
        %2526 = vmatmul.mubr.bf16.gmra.mxu0 %v1293
        %v2527 = vpop.f32.mrf.mxu0
        %v2528 = vadd.f32 0.0, %v2527
        %v2529 = vpop.f32.mrf.mxu0
        %v2530 = vpop.f32.mrf.mxu0
        %v2531 = vadd.f32 0.0, %v2530
        %v2532 = vpop.f32.mrf.mxu0
        %2533 = vmatprep.mubr.bf16.mxu0 0
        %2534 = vmatmul.mubr.bf16.gmra.mxu0 %v1296
        %v2535 = vpop.f32.mrf.mxu0
        %v2536 = vadd.f32 0.0, %v2535
        %v2537 = vpop.f32.mrf.mxu0
        %v2538 = vpop.f32.mrf.mxu0
        %v2539 = vadd.f32 0.0, %v2538
        %v2540 = vpop.f32.mrf.mxu0
        %2541 = vmatprep.mubr.bf16.mxu0 0
        %2542 = vmatmul.mubr.bf16.gmra.mxu0 %v1299
        %v2543 = vpop.f32.mrf.mxu0
        %v2544 = vadd.f32 0.0, %v2543
        %v2545 = vpop.f32.mrf.mxu0
        %v2546 = vpop.f32.mrf.mxu0
        %v2547 = vadd.f32 0.0, %v2546
        %v2548 = vpop.f32.mrf.mxu0
        %2549 = vmatprep.mubr.bf16.mxu0 0
        %2550 = vmatmul.mubr.bf16.gmra.mxu0 %v1302
        %v2551 = vpop.f32.mrf.mxu0
        %v2552 = vadd.f32 0.0, %v2551
        %v2553 = vpop.f32.mrf.mxu0
        %v2554 = vpop.f32.mrf.mxu0
        %v2555 = vadd.f32 0.0, %v2554
        %v2556 = vpop.f32.mrf.mxu0
        %2557 = vmatprep.mubr.bf16.mxu0 0
        %2558 = vmatmul.mubr.bf16.gmra.mxu0 %v1305
        %v2559 = vpop.f32.mrf.mxu0
        %v2560 = vadd.f32 0.0, %v2559
        %v2561 = vpop.f32.mrf.mxu0
        %v2562 = vpop.f32.mrf.mxu0
        %v2563 = vadd.f32 0.0, %v2562
        %v2564 = vpop.f32.mrf.mxu0
        %2565 = vmatprep.mubr.bf16.mxu0 0
        %2566 = vmatmul.mubr.bf16.gmra.mxu0 %v1865
        %v2567 = vpop.f32.mrf.mxu0
        %v2568 = vadd.f32 0.0, %v2567
        %v2569 = vpop.f32.mrf.mxu0
        %v2570 = vpop.f32.mrf.mxu0
        %v2571 = vadd.f32 0.0, %v2570
        %v2572 = vpop.f32.mrf.mxu0
        %2573 = vmatprep.mubr.bf16.mxu0 0
        %2574 = vmatmul.mubr.bf16.gmra.mxu0 %v2418
        %v2575 = vpop.f32.mrf.mxu0
        %v2576 = vadd.f32 0.0, %v2575
        %v2577 = vpop.f32.mrf.mxu0
        %v2578 = vpop.f32.mrf.mxu0
        %v2579 = vadd.f32 0.0, %v2578
        %v2580 = vpop.f32.mrf.mxu0
        %2581 = vdwg.mxu0
        %v2582 = vadd.f32 %v2398, %v2520
        %v2583 = vadd.f32 %v2399, %v2523
        %v2584 = vadd.f32 %v2400, %v2528
        %v2585 = vadd.f32 %v2401, %v2531
        %v2586 = vadd.f32 %v2402, %v2536
        %v2587 = vadd.f32 %v2403, %v2539
        %v2588 = vadd.f32 %v2404, %v2544
        %v2589 = vadd.f32 %v2405, %v2547
        %v2590 = vadd.f32 %v2406, %v2552
        %v2591 = vadd.f32 %v2407, %v2555
        %v2592 = vadd.f32 %v2408, %v2560
        %v2593 = vadd.f32 %v2409, %v2563
        %v2594 = vadd.f32 %v2410, %v2568
        %v2595 = vadd.f32 %v2411, %v2571
        %v2596 = vadd.f32 %v2412, %v2576
        %v2597 = vadd.f32 %v2413, %v2579
        %v2598 = vld [vmem:[%s356] sm:$0xff]
        %v2599 = vld [vmem:[%s356 + $0x8] sm:$0xff]
        %v2600 = vld [vmem:[%s356 + $0x10] sm:$0xff]
        %v2601 = vld [vmem:[%s356 + $0x18] sm:$0xff]
        %v2602 = vld [vmem:[%s356 + $0x20] sm:$0xff]
        %v2603 = vld [vmem:[%s356 + $0x28] sm:$0xff]
        %v2604 = vld [vmem:[%s356 + $0x30] sm:$0xff]
        %v2605 = vld [vmem:[%s356 + $0x38] sm:$0xff]
        %v2606 = vld [vmem:[%s356 + $0x40] sm:$0xff]
        %v2607 = vld [vmem:[%s356 + $0x48] sm:$0xff]
        %v2608 = vld [vmem:[%s356 + $0x50] sm:$0xff]
        %v2609 = vld [vmem:[%s356 + $0x58] sm:$0xff]
        %v2610 = vld [vmem:[%s356 + $0x60] sm:$0xff]
        %v2611 = vld [vmem:[%s356 + $0x68] sm:$0xff]
        %v2612 = vld [vmem:[%s356 + $0x70] sm:$0xff]
        %v2613 = vld [vmem:[%s356 + $0x78] sm:$0xff]
        %v2614 = vpack.c.bf16 %v2599, %v2598
        %v2615 = vpack.c.bf16 %v2601, %v2600
        %v2616 = vpack.c.bf16 %v2603, %v2602
        %v2617 = vpack.c.bf16 %v2605, %v2604
        %v2618 = vpack.c.bf16 %v2607, %v2606
        %v2619 = vpack.c.bf16 %v2609, %v2608
        %v2620 = vpack.c.bf16 %v2611, %v2610
        %v2621 = vpack.c.bf16 %v2613, %v2612
        %v2622 = vld [vmem:[%s6] sm:$0xf]
        %v2623 = vld [vmem:[%s6 + $0x4] sm:$0xf]
        %v2624 = vld [vmem:[%s6 + $0x8] sm:$0xf]
        %v2625 = vld [vmem:[%s6 + $0xc] sm:$0xf]
        %v2626 = vld [vmem:[%s6 + $0x10] sm:$0xf]
        %v2627 = vld [vmem:[%s6 + $0x14] sm:$0xf]
        %v2628 = vld [vmem:[%s6 + $0x18] sm:$0xf]
        %v2629 = vld [vmem:[%s6 + $0x1c] sm:$0xf]
        %v2638 = vunpack.c.l.b16 %v2622
        %v2639 = vunpack.c.l.b16 %v2623
        %v2640 = vunpack.c.l.b16 %v2624
        %v2641 = vunpack.c.l.b16 %v2625
        %v2642 = vunpack.c.l.b16 %v2626
        %v2643 = vunpack.c.l.b16 %v2627
        %v2644 = vunpack.c.l.b16 %v2628
        %v2645 = vunpack.c.l.b16 %v2629
        %v2646 = vpack.c.b16 %v2639, %v2638
        %v2647 = vpack.c.b16 %v2641, %v2640
        %v2648 = vpack.c.b16 %v2643, %v2642
        %v2649 = vpack.c.b16 %v2645, %v2644
        %vm2654 = vcmask 523264
        %v2656 = vsel %vm2654, %v2614, 0
        %v2659 = vsel %vm2654, %v2615, 0
        %v2662 = vsel %vm2654, %v2616, 0
        %v2665 = vsel %vm2654, %v2617, 0
        %v2668 = vsel %vm2654, %v2618, 0
        %v2671 = vsel %vm2654, %v2619, 0
        %v2674 = vsel %vm2654, %v2620, 0
        %v2677 = vsel %vm2654, %v2621, 0
        %2679 = vmatprep.subr.bf16.mxu0 0
        %2680 = vmatpush1.bf16.msra.mxu0 0
        %2681 = vmatprep.subr.bf16.mxu0 0
        %2682 = vmatpush1.bf16.msra.mxu0 0
        %2683 = vmatprep.subr.bf16.mxu0 0
        %2684 = vmatpush1.bf16.msra.mxu0 0
        %2685 = vmatprep.subr.bf16.mxu0 0
        %2686 = vmatpush1.bf16.msra.mxu0 0
        %2687 = vmatprep.subr.bf16.mxu0 0
        %2688 = vmatpush1.bf16.msra.mxu0 %v2649
        %2689 = vmatprep.subr.bf16.mxu0 0
        %2690 = vmatpush1.bf16.msra.mxu0 %v2648
        %2691 = vmatprep.subr.bf16.mxu0 0
        %2692 = vmatpush1.bf16.msra.mxu0 %v2647
        %2693 = vmatprep.subr.bf16.mxu0 0
        %2694 = vmatpush1.bf16.msra.mxu0 %v2646
        %2695 = vmatprep.subr.bf16.mxu0 0
        %2696 = vmatpush2.bf16.msra.mxu0 0
        %2697 = vmatprep.subr.bf16.mxu0 0
        %2698 = vmatpush2.bf16.msra.mxu0 0
        %2699 = vmatprep.subr.bf16.mxu0 0
        %2700 = vmatpush2.bf16.msra.mxu0 0
        %2701 = vmatprep.subr.bf16.mxu0 0
        %2702 = vmatpush2.bf16.msra.mxu0 0
        %2703 = vmatprep.subr.bf16.mxu0 0
        %2704 = vmatpush2.bf16.msra.mxu0 0
        %2705 = vmatprep.subr.bf16.mxu0 0
        %2706 = vmatpush2.bf16.msra.mxu0 0
        %2707 = vmatprep.subr.bf16.mxu0 0
        %2708 = vmatpush2.bf16.msra.mxu0 0
        %2709 = vmatprep.subr.bf16.mxu0 0
        %2710 = vmatpush2.bf16.msra.mxu0 0
        %2711 = vmatprep.mubr.bf16.mxu0 0
        %2712 = vmatmul.mubr.bf16.gmra.mxu0 %v2656
        %v2713 = vpop.f32.mrf.mxu0
        %v2714 = vadd.f32 0.0, %v2713
        %v2715 = vpop.f32.mrf.mxu0
        %v2716 = vpop.f32.mrf.mxu0
        %v2717 = vadd.f32 0.0, %v2716
        %v2718 = vpop.f32.mrf.mxu0
        %2719 = vmatprep.mubr.bf16.mxu0 0
        %2720 = vmatmul.mubr.bf16.gmra.mxu0 %v2659
        %v2721 = vpop.f32.mrf.mxu0
        %v2722 = vadd.f32 0.0, %v2721
        %v2723 = vpop.f32.mrf.mxu0
        %v2724 = vpop.f32.mrf.mxu0
        %v2725 = vadd.f32 0.0, %v2724
        %v2726 = vpop.f32.mrf.mxu0
        %2727 = vmatprep.mubr.bf16.mxu0 0
        %2728 = vmatmul.mubr.bf16.gmra.mxu0 %v2662
        %v2729 = vpop.f32.mrf.mxu0
        %v2730 = vadd.f32 0.0, %v2729
        %v2731 = vpop.f32.mrf.mxu0
        %v2732 = vpop.f32.mrf.mxu0
        %v2733 = vadd.f32 0.0, %v2732
        %v2734 = vpop.f32.mrf.mxu0
        %2735 = vmatprep.mubr.bf16.mxu0 0
        %2736 = vmatmul.mubr.bf16.gmra.mxu0 %v2665
        %v2737 = vpop.f32.mrf.mxu0
        %v2738 = vadd.f32 0.0, %v2737
        %v2739 = vpop.f32.mrf.mxu0
        %v2740 = vpop.f32.mrf.mxu0
        %v2741 = vadd.f32 0.0, %v2740
        %v2742 = vpop.f32.mrf.mxu0
        %2743 = vmatprep.mubr.bf16.mxu0 0
        %2744 = vmatmul.mubr.bf16.gmra.mxu0 %v2668
        %v2745 = vpop.f32.mrf.mxu0
        %v2746 = vadd.f32 0.0, %v2745
        %v2747 = vpop.f32.mrf.mxu0
        %v2748 = vpop.f32.mrf.mxu0
        %v2749 = vadd.f32 0.0, %v2748
        %v2750 = vpop.f32.mrf.mxu0
        %2751 = vmatprep.mubr.bf16.mxu0 0
        %2752 = vmatmul.mubr.bf16.gmra.mxu0 %v2671
        %v2753 = vpop.f32.mrf.mxu0
        %v2754 = vadd.f32 0.0, %v2753
        %v2755 = vpop.f32.mrf.mxu0
        %v2756 = vpop.f32.mrf.mxu0
        %v2757 = vadd.f32 0.0, %v2756
        %v2758 = vpop.f32.mrf.mxu0
        %2759 = vmatprep.mubr.bf16.mxu0 0
        %2760 = vmatmul.mubr.bf16.gmra.mxu0 %v2674
        %v2761 = vpop.f32.mrf.mxu0
        %v2762 = vadd.f32 0.0, %v2761
        %v2763 = vpop.f32.mrf.mxu0
        %v2764 = vpop.f32.mrf.mxu0
        %v2765 = vadd.f32 0.0, %v2764
        %v2766 = vpop.f32.mrf.mxu0
        %2767 = vmatprep.mubr.bf16.mxu0 0
        %2768 = vmatmul.mubr.bf16.gmra.mxu0 %v2677
        %v2769 = vpop.f32.mrf.mxu0
        %v2770 = vadd.f32 0.0, %v2769
        %v2771 = vpop.f32.mrf.mxu0
        %v2772 = vpop.f32.mrf.mxu0
        %v2773 = vadd.f32 0.0, %v2772
        %v2774 = vpop.f32.mrf.mxu0
        %2775 = vdwg.mxu0
        %v2776 = vadd.f32 %v2582, %v2714
        %v2777 = vadd.f32 %v2583, %v2717
        %v2778 = vadd.f32 %v2584, %v2722
        %v2779 = vadd.f32 %v2585, %v2725
        %v2780 = vadd.f32 %v2586, %v2730
        %v2781 = vadd.f32 %v2587, %v2733
        %v2782 = vadd.f32 %v2588, %v2738
        %v2783 = vadd.f32 %v2589, %v2741
        %v2784 = vadd.f32 %v2590, %v2746
        %v2785 = vadd.f32 %v2591, %v2749
        %v2786 = vadd.f32 %v2592, %v2754
        %v2787 = vadd.f32 %v2593, %v2757
        %v2788 = vadd.f32 %v2594, %v2762
        %v2789 = vadd.f32 %v2595, %v2765
        %v2790 = vadd.f32 %v2596, %v2770
        %v2791 = vadd.f32 %v2597, %v2773
        %v2792 = vld [vmem:[%s4] sm:$0x1]
        %v2794 = vlaneseq
        %v2795 = vshrl.u32 %v2794, 7
        %v2796 = vsub.s32 0, %v2795
        %v2797 = vrot.slane %v2792, %v2796
        %v2799 = vadd.f32 %v2776, %v2797
        %v2800 = vadd.f32 %v2777, %v2797
        %v2801 = vadd.f32 %v2778, %v2797
        %v2802 = vadd.f32 %v2779, %v2797
        %v2803 = vadd.f32 %v2780, %v2797
        %v2804 = vadd.f32 %v2781, %v2797
        %v2805 = vadd.f32 %v2782, %v2797
        %v2806 = vadd.f32 %v2783, %v2797
        %v2807 = vadd.f32 %v2784, %v2797
        %v2808 = vadd.f32 %v2785, %v2797
        %v2809 = vadd.f32 %v2786, %v2797
        %v2810 = vadd.f32 %v2787, %v2797
        %v2811 = vadd.f32 %v2788, %v2797
        %v2812 = vadd.f32 %v2789, %v2797
        %v2813 = vadd.f32 %v2790, %v2797
        %v2814 = vadd.f32 %v2791, %v2797
        %2815 = vst [vmem:[%s335] sm:$0xff] %v2799
        %2816 = vst [vmem:[%s335 + $0x8] sm:$0xff] %v2800
        %2817 = vst [vmem:[%s335 + $0x10] sm:$0xff] %v2801
        %2818 = vst [vmem:[%s335 + $0x18] sm:$0xff] %v2802
        %2819 = vst [vmem:[%s335 + $0x20] sm:$0xff] %v2803
        %2820 = vst [vmem:[%s335 + $0x28] sm:$0xff] %v2804
        %2821 = vst [vmem:[%s335 + $0x30] sm:$0xff] %v2805
        %2822 = vst [vmem:[%s335 + $0x38] sm:$0xff] %v2806
        %2823 = vst [vmem:[%s335 + $0x40] sm:$0xff] %v2807
        %2824 = vst [vmem:[%s335 + $0x48] sm:$0xff] %v2808
        %2825 = vst [vmem:[%s335 + $0x50] sm:$0xff] %v2809
        %2826 = vst [vmem:[%s335 + $0x58] sm:$0xff] %v2810
        %2827 = vst [vmem:[%s335 + $0x60] sm:$0xff] %v2811
        %2828 = vst [vmem:[%s335 + $0x68] sm:$0xff] %v2812
        %2829 = vst [vmem:[%s335 + $0x70] sm:$0xff] %v2813
        %2830 = vst [vmem:[%s335 + $0x78] sm:$0xff] %v2814
        %s2831 = sand.u32 %s212, 1
        %s2832 = scalar_lea.sflag [#allocation3], %s2831
        %s2833 = sand.u32 %s212, 1
        %s2834 = smul.addr %s2833, 128
        %s2835 = scalar_lea.vmem [#allocation2], %s2834
        // Predicated region
        $region49: #{resnet_block.7} parent=47 // pred_check
          %p2836 = pneg %p222
        $region50: #{resnet_block.7} parent=47 // pred_check_branch
          %2838 = sbr.rel (%p2836) target = $region52
        $region51: #{resnet_block.7} parent=47 // pred_region
          %s2839 = smul.u32 8, %s26
          %s2841 = ssub.s32 2048, 2048
          %2842 = vsyncadd %s2832, %s2841
          %s2843 = smul.addr %s2839, 2
          %s2844 = smul.addr %s25, 32
          %s2845 = sadd.s32 %s2843, %s2844
          %s2846 = smul.addr %s2845, 128
          %s2847 = scalar_lea.hbm %s7, %s2846
          %s2848 = sshll.u32 %s2835, 4
          %s2849 = int_to_ptr.vmem [resolvable:$true] %s2848
          %2854 = dma.vmem_to_hbm [thread:$0]  %s2849, 2048, %s2847, %s2832, 128, 128, 8
        $region52: #{resnet_block.7} parent=47 // pred_fallthru
          _
      $region48: #{resnet_block.7} parent=5 // pred_fallthru
        _
      %p2855 = scmp.le.s32.totalorder 2, %s16
      // Predicated region
      $region53: #{resnet_block.7} parent=5 // pred_check
        %p2856 = pneg %p2855
      $region54: #{resnet_block.7} parent=5 // pred_check_branch
        %2858 = sbr.rel (%p2856) target = $region56
      $region55: #{resnet_block.7} parent=5 // pred_region
        %s2859 = ssub.s32 %s16, 2
        // Predicated region
        $region57: #{resnet_block.7} parent=55 // pred_check
          %p2860 = pneg %p228
        $region58: #{resnet_block.7} parent=55 // pred_check_branch
          %2862 = sbr.rel (%p2860) target = $region60
        $region59: #{resnet_block.7} parent=55 // pred_region
          %s2863 = sand.u32 %s213, 1
          %s2864 = scalar_lea.sflag [#allocation3], %s2863
          %s2865 = sand.u32 %s213, 1
          %s2866 = smul.addr %s2865, 128
          %s2867 = scalar_lea.vmem [#allocation2], %s2866
          %2868 = dma.done %s2864, 2048
        $region60: #{resnet_block.7} parent=55 // pred_fallthru
          _
      $region56: #{resnet_block.7} parent=5 // pred_fallthru
        _
    $region6: #{resnet_block.7} parent=1 // loop_footer
      %s20 = sadd.s32 1, %s16
    $region7: #{resnet_block.7} parent=1 // loop_footer_branch
      %15 = sbr.rel target = $region3
    $region8: #{resnet_block.7} parent=1 // loop_exit
      _
    %2869 = vsyncpa [#allocation3], 1
    %s2870 = scalar_lea.sflag [#allocation3], 1
    %2871 = vsyncpa %s2870, 1

</llo_original>
